<compile_context>
chip_gen: v5e
topology: v5e:2x2
jax: 0.10.0
libtpu: 0.0.40
codegen_flags: <defaults>
</compile_context>

<pallas_src>
import functools

import jax
import jax.numpy as jnp
from jax.experimental import pallas as pl
from jax.experimental.pallas import tpu as pltpu

EPS = 1e-5
VMEM_LIMIT = 48 * 1024 * 1024


def _compiler_params():
    # Every grid below is 1-D over the batch dimension.
    return pltpu.CompilerParams(dimension_semantics=("parallel",),
                                vmem_limit_bytes=VMEM_LIMIT)


# --------------------------------------------------------------------------
# Kernels
# --------------------------------------------------------------------------
def _fused_matmul_kernel(*refs, n_x, widths, in_relu, out_relu):
    """o = post_affine( [relu?] pre_affine(cat(xs)) @ W ), one image per step.

    The channel concat never materializes: each feature slab multiplies its own
    row block of W and the partial products are accumulated in f32.
    """
    xs = refs[:n_x]
    w_ref, isc_ref, ish_ref, osc_ref, osh_ref, o_ref = refs[n_x:n_x + 6]
    acc = None
    off = 0
    for i in range(n_x):
        ci = widths[i]
        xi = xs[i][...] * isc_ref[:, off:off + ci] + ish_ref[:, off:off + ci]
        if in_relu:
            xi = jnp.maximum(xi, 0.0)
        p = jnp.dot(xi, w_ref[off:off + ci, :],
                    preferred_element_type=jnp.float32)
        acc = p if acc is None else acc + p
        off += ci
    y = acc * osc_ref[...] + osh_ref[...]
    if out_relu:
        y = jnp.maximum(y, 0.0)
    o_ref[...] = y


def _dense_layer_kernel(*refs, n_x, widths, h, w, gr):
    """One fully fused _DenseLayer, one image per grid step.

      bott = relu(bn2( relu(bn1(cat(prev))) @ W1 ))          (1x1 conv)
      new  = conv3x3_pad1(bott)                              (3x3 conv)

    The 3x3 conv writes the bottleneck into a zero-halo padded flat slab
    ((h+2)*(w+2), 128) -- halo-only init, no tap masks -- then runs one wide-N
    packed matmul (N = 9*growth >= 256) and combines the 9 shifted 32-channel
    column groups with adds.
    """
    xs = refs[:n_x]
    (w1_ref, s1_ref, b1_ref, s2_ref, b2_ref, w2p_ref, o_ref, pad_ref) = refs[n_x:]
    bn_ch = w1_ref.shape[1]
    wp = w + 2                                   # padded row length

    # ---- 1x1 bottleneck, accumulated per feature slab (no concat). ----------
    acc = None
    off = 0
    for i in range(n_x):
        ci = widths[i]
        xi = jnp.maximum(xs[i][...] * s1_ref[:, off:off + ci]
                         + b1_ref[:, off:off + ci], 0.0)
        p = jnp.dot(xi, w1_ref[off:off + ci, :],
                    preferred_element_type=jnp.float32)
        acc = p if acc is None else acc + p
        off += ci
    bott = jnp.maximum(acc * s2_ref[...] + b2_ref[...], 0.0)    # (h*w, bn_ch)

    # ---- scatter into zero-halo padded slab (halo-only init). ---------------
    pad_ref[0:wp + 1, :] = jnp.zeros((wp + 1, bn_ch), jnp.float32)
    for y in range(h - 1):
        base = (y + 1) * wp + w + 1
        pad_ref[base:base + 2, :] = jnp.zeros((2, bn_ch), jnp.float32)
    tail = (h + 1) * wp - 1
    pad_ref[tail:(h + 2) * wp, :] = jnp.zeros((wp + 1, bn_ch), jnp.float32)
    for y in range(h):
        dst = (y + 1) * wp + 1
        pad_ref[dst:dst + w, :] = bott[y * w:(y + 1) * w, :]

    # ---- packed 3x3 conv: one wide matmul + 9 shifted adds per output row. --
    ypad = jnp.dot(pad_ref[...], w2p_ref[...],
                   preferred_element_type=jnp.float32)
    for y in range(h):
        row = None
        for ky in range(3):
            for kx in range(3):
                k = ky * 3 + kx
                src = (y + ky) * wp + kx
                t = ypad[src:src + w, k * gr:(k + 1) * gr]
                row = t if row is None else row + t
        o_ref[y * w:(y + 1) * w, :] = row


def _maxfilter2x2_kernel(x_ref, o_ref, pad_ref, *, ph, pw):
    """Dense (stride-1) 2x2 max filter over a (-inf) halo-padded image."""
    h, w, c = x_ref.shape
    hp, wpad = h + 2 * ph, w + 2 * pw
    if ph:
        z = jnp.full((ph, wpad, c), -jnp.inf, jnp.float32)
        pad_ref[0:ph, :, :] = z
        pad_ref[hp - ph:hp, :, :] = z
    if pw:
        z = jnp.full((h, pw, c), -jnp.inf, jnp.float32)
        pad_ref[ph:ph + h, 0:pw, :] = z
        pad_ref[ph:ph + h, wpad - pw:wpad, :] = z
    pad_ref[ph:ph + h, pw:pw + w, :] = x_ref[...]
    xp = pad_ref[...]
    o_ref[...] = jnp.maximum(
        jnp.maximum(xp[0:hp - 1, 0:wpad - 1, :], xp[0:hp - 1, 1:wpad, :]),
        jnp.maximum(xp[1:hp, 0:wpad - 1, :], xp[1:hp, 1:wpad, :]))


def _affine_concat_kernel(*refs, n_x, widths):
    """norm5: per-channel scale/shift applied while concatenating the final
    block's feature slabs into one lane-dense output slab (single store)."""
    xs = refs[:n_x]
    s_ref, b_ref, o_ref = refs[n_x:]
    parts = []
    off = 0
    for i in range(n_x):
        ci = widths[i]
        parts.append(xs[i][...] * s_ref[:, off:off + ci]
                     + b_ref[:, off:off + ci])
        off += ci
    o_ref[...] = jnp.concatenate(parts, axis=-1)


# --------------------------------------------------------------------------
# pallas_call wrappers
# --------------------------------------------------------------------------
def _slab_specs(widths, hw):
    return [pl.BlockSpec((None, hw, ci), lambda i: (i, 0, 0)) for ci in widths]


def fused_matmul(xs, widths, w, in_scale=None, in_shift=None, in_relu=False,
                 out_scale=None, out_shift=None, out_relu=False):
    n, hw, _ = xs[0].shape
    k_tot = sum(widths)
    n_out = w.shape[1]
    if in_scale is None:
        in_scale = jnp.ones((k_tot,), jnp.float32)
        in_shift = jnp.zeros((k_tot,), jnp.float32)
    if out_scale is None:
        out_scale = jnp.ones((n_out,), jnp.float32)
        out_shift = jnp.zeros((n_out,), jnp.float32)
    kernel = functools.partial(_fused_matmul_kernel, n_x=len(xs),
                               widths=tuple(widths), in_relu=in_relu,
                               out_relu=out_relu)
    in_specs = (_slab_specs(widths, hw) +
                [pl.BlockSpec((k_tot, n_out), lambda i: (0, 0)),
                 pl.BlockSpec((1, k_tot), lambda i: (0, 0)),
                 pl.BlockSpec((1, k_tot), lambda i: (0, 0)),
                 pl.BlockSpec((1, n_out), lambda i: (0, 0)),
                 pl.BlockSpec((1, n_out), lambda i: (0, 0))])
    return pl.pallas_call(
        kernel,
        out_shape=jax.ShapeDtypeStruct((n, hw, n_out), jnp.float32),
        grid=(n,),
        in_specs=in_specs,
        out_specs=pl.BlockSpec((None, hw, n_out), lambda i: (i, 0, 0)),
        compiler_params=_compiler_params(),
    )(*xs, w.astype(jnp.float32),
      in_scale.reshape(1, k_tot).astype(jnp.float32),
      in_shift.reshape(1, k_tot).astype(jnp.float32),
      out_scale.reshape(1, n_out).astype(jnp.float32),
      out_shift.reshape(1, n_out).astype(jnp.float32))


def dense_layer(xs, widths, h, w, w1, s1, b1, s2, b2, w2p):
    n, hw, _ = xs[0].shape
    k_tot = sum(widths)
    bn_ch = w1.shape[1]
    gr = w2p.shape[1] // 9
    kernel = functools.partial(_dense_layer_kernel, n_x=len(xs),
                               widths=tuple(widths), h=h, w=w, gr=gr)
    in_specs = (_slab_specs(widths, hw) +
                [pl.BlockSpec((k_tot, bn_ch), lambda i: (0, 0)),
                 pl.BlockSpec((1, k_tot), lambda i: (0, 0)),
                 pl.BlockSpec((1, k_tot), lambda i: (0, 0)),
                 pl.BlockSpec((1, bn_ch), lambda i: (0, 0)),
                 pl.BlockSpec((1, bn_ch), lambda i: (0, 0)),
                 pl.BlockSpec((bn_ch, 9 * gr), lambda i: (0, 0))])
    return pl.pallas_call(
        kernel,
        out_shape=jax.ShapeDtypeStruct((n, hw, gr), jnp.float32),
        grid=(n,),
        in_specs=in_specs,
        out_specs=pl.BlockSpec((None, hw, gr), lambda i: (i, 0, 0)),
        scratch_shapes=[pltpu.VMEM(((h + 2) * (w + 2), bn_ch), jnp.float32)],
        compiler_params=_compiler_params(),
    )(*xs, w1.astype(jnp.float32),
      s1.reshape(1, k_tot).astype(jnp.float32),
      b1.reshape(1, k_tot).astype(jnp.float32),
      s2.reshape(1, bn_ch).astype(jnp.float32),
      b2.reshape(1, bn_ch).astype(jnp.float32),
      w2p.astype(jnp.float32))


def maxpool2x2(x_nhwc, sh, sw, ph, pw):
    n, h, w, c = x_nhwc.shape
    hp, wpad = h + 2 * ph, w + 2 * pw
    ho = (h + 2 * ph - 2) // sh + 1
    wo = (w + 2 * pw - 2) // sw + 1
    kernel = functools.partial(_maxfilter2x2_kernel, ph=ph, pw=pw)
    mf = pl.pallas_call(
        kernel,
        out_shape=jax.ShapeDtypeStruct((n, hp - 1, wpad - 1, c), jnp.float32),
        grid=(n,),
        in_specs=[pl.BlockSpec((None, h, w, c), lambda i: (i, 0, 0, 0))],
        out_specs=pl.BlockSpec((None, hp - 1, wpad - 1, c),
                               lambda i: (i, 0, 0, 0)),
        scratch_shapes=[pltpu.VMEM((hp, wpad, c), jnp.float32)],
        compiler_params=_compiler_params(),
    )(x_nhwc)
    # TODO(synk): the stride-(sh,sw) anchor decimation remains an XLA strided
    # slice; only the 2x2 window maxima run in Pallas.
    return mf[:, ::sh, ::sw, :][:, :ho, :wo, :]


def affine_concat(xs, widths, scale, shift):
    n, hw, _ = xs[0].shape
    c_tot = sum(widths)
    kernel = functools.partial(_affine_concat_kernel, n_x=len(xs),
                               widths=tuple(widths))
    in_specs = (_slab_specs(widths, hw) +
                [pl.BlockSpec((1, c_tot), lambda i: (0, 0)),
                 pl.BlockSpec((1, c_tot), lambda i: (0, 0))])
    return pl.pallas_call(
        kernel,
        out_shape=jax.ShapeDtypeStruct((n, hw, c_tot), jnp.float32),
        grid=(n,),
        in_specs=in_specs,
        out_specs=pl.BlockSpec((None, hw, c_tot), lambda i: (i, 0, 0)),
        compiler_params=_compiler_params(),
    )(*xs, scale.reshape(1, c_tot).astype(jnp.float32),
      shift.reshape(1, c_tot).astype(jnp.float32))


# --------------------------------------------------------------------------
# Helpers
# --------------------------------------------------------------------------
def _fold_bn(p):
    gamma, beta, mean, var = p
    scale = gamma / jnp.sqrt(var + EPS)
    shift = beta - mean * scale
    return scale, shift


# --------------------------------------------------------------------------
# DenseNet forward (Pallas)
# --------------------------------------------------------------------------
def densenet_pallas(x_nchw, params, block_config):
    n, c_in, h0, w0 = x_nchw.shape
    x = jnp.transpose(x_nchw, (0, 2, 3, 1))          # single entry transpose

    # conv0 (3x3 / stride 2 / pad 1) + norm0 + relu0, fused into one MXU kernel.
    # TODO(synk): the stride-2 patch extraction (im2col) stays in XLA; it only
    # touches the tiny 3-channel input.
    ho = (h0 + 2 - 3) // 2 + 1
    wo = (w0 + 2 - 3) // 2 + 1
    xp = jnp.pad(x, ((0, 0), (1, 1), (1, 1), (0, 0)))
    cols = [xp[:, ky:ky + 2 * ho - 1:2, kx:kx + 2 * wo - 1:2, :]
            for ky in range(3) for kx in range(3)]
    xcol = jnp.concatenate(cols, axis=-1).reshape(n, ho * wo, 9 * c_in)
    w0c = jnp.transpose(params['conv0'], (2, 3, 1, 0)).reshape(9 * c_in, -1)
    s0, b0 = _fold_bn(params['norm0'])
    c0 = w0c.shape[1]
    feat = fused_matmul([xcol], [9 * c_in], w0c,
                        out_scale=s0, out_shift=b0, out_relu=True)

    # pool0: MaxPool2d(kernel=2, stride=2, padding=1)
    f4 = maxpool2x2(feat.reshape(n, ho, wo, c0), 2, 2, 1, 1)
    _, hc, wc, _ = f4.shape
    feats = [f4.reshape(n, hc * wc, c0)]
    widths = [c0]

    for bi, num_layers in enumerate(block_config):
        for li in range(num_layers):
            lp = params['block%d' % bi]['layer%d' % li]
            s1, b1 = _fold_bn(lp['norm1'])
            s2, b2 = _fold_bn(lp['norm2'])
            w1 = lp['conv1'][:, :, 0, 0].T                        # (Cin, bn*gr)
            gr, bn_ch = lp['conv2'].shape[0], lp['conv2'].shape[1]
            w2p = jnp.transpose(lp['conv2'], (1, 2, 3, 0)).reshape(bn_ch, 9 * gr)
            new = dense_layer(feats, widths, hc, wc, w1, s1, b1, s2, b2, w2p)
            feats.append(new)
            widths.append(gr)
        if bi != len(block_config) - 1:
            tp = params['trans%d' % bi]
            st, bt = _fold_bn(tp['norm'])
            wt = tp['conv'][:, :, 0, 0].T
            ct = wt.shape[1]
            y = fused_matmul(feats, widths, wt, in_scale=st, in_shift=bt,
                             in_relu=True)
            y4 = maxpool2x2(y.reshape(n, hc, wc, ct), 2, 1, 0, 1)
            _, hc, wc, _ = y4.shape
            feats = [y4.reshape(n, hc * wc, ct)]
            widths = [ct]

    s5, b5 = _fold_bn(params['norm5'])
    out = affine_concat(feats, widths, s5, b5)
    out4 = out.reshape(n, hc, wc, sum(widths))
    return jnp.transpose(out4, (0, 3, 1, 2))          # single exit transpose


# --------------------------------------------------------------------------
# Pure-JAX reference (mirrors the PyTorch module, eval-mode BN)
# --------------------------------------------------------------------------
def densenet_ref(x, params, block_config):
    relu = lambda z: jnp.maximum(z, 0.0)

    def bn(z, p):
        s, sh = _fold_bn(p)
        return z * s[None, :, None, None] + sh[None, :, None, None]

    def conv(z, w, stride, pad):
        return jax.lax.conv_general_dilated(
            z, w, window_strides=(stride, stride),
            padding=((pad, pad), (pad, pad)),
            dimension_numbers=('NCHW', 'OIHW', 'NCHW'),
            precision=jax.lax.Precision.HIGHEST)

    def maxpool(z, strides, pads):
        return jax.lax.reduce_window(
            z, -jnp.inf, jax.lax.max, (1, 1, 2, 2), (1, 1) + strides,
            ((0, 0), (0, 0), (pads[0], pads[0]), (pads[1], pads[1])))

    z = conv(x, params['conv0'], 2, 1)
    z = relu(bn(z, params['norm0']))
    z = maxpool(z, (2, 2), (1, 1))
    for bi, num_layers in enumerate(block_config):
        feats = [z]
        for li in range(num_layers):
            lp = params['block%d' % bi]['layer%d' % li]
            cc = jnp.concatenate(feats, axis=1)
            bott = conv(relu(bn(cc, lp['norm1'])), lp['conv1'], 1, 0)
            feats.append(conv(relu(bn(bott, lp['norm2'])), lp['conv2'], 1, 1))
        z = jnp.concatenate(feats, axis=1)
        if bi != len(block_config) - 1:
            tp = params['trans%d' % bi]
            z = conv(relu(bn(z, tp['norm'])), tp['conv'], 1, 0)
            z = maxpool(z, (2, 1), (0, 1))
    return bn(z, params['norm5'])


# --------------------------------------------------------------------------
# Parameter construction
# --------------------------------------------------------------------------
def make_params(key, input_channel, num_init_features, growth_rate, bn_size,
                block_config):
    keys = iter(jax.random.split(key, 1024))

    def conv_w(cout, cin, k):
        std = (2.0 / (cin * k * k)) ** 0.5
        return std * jax.random.normal(next(keys), (cout, cin, k, k), jnp.float32)

    def bn_p(c):
        gamma = 1.0 + 0.1 * jax.random.normal(next(keys), (c,), jnp.float32)
        beta = 0.1 * jax.random.normal(next(keys), (c,), jnp.float32)
        mean = 0.1 * jax.random.normal(next(keys), (c,), jnp.float32)
        var = 1.0 + 0.1 * jnp.abs(jax.random.normal(next(keys), (c,), jnp.float32))
        return (gamma, beta, mean, var)

    params = {'conv0': conv_w(num_init_features, input_channel, 3),
              'norm0': bn_p(num_init_features)}
    nf = num_init_features
    for bi, nl in enumerate(block_config):
        blk = {}
        for li in range(nl):
            cin = nf + li * growth_rate
            blk['layer%d' % li] = {
                'norm1': bn_p(cin),
                'conv1': conv_w(bn_size * growth_rate, cin, 1),
                'norm2': bn_p(bn_size * growth_rate),
                'conv2': conv_w(growth_rate, bn_size * growth_rate, 3),
            }
        params['block%d' % bi] = blk
        nf = nf + nl * growth_rate
        if bi != len(block_config) - 1:
            params['trans%d' % bi] = {'norm': bn_p(nf),
                                      'conv': conv_w(nf // 2, nf, 1)}
            nf //= 2
    params['norm5'] = bn_p(nf)
    return params


if __name__ == "__main__":
    key = jax.random.PRNGKey(0)
    N, C_IN, H, W = 2, 3, 16, 16            # smallest spatial size surviving
    growth_rate, num_init_features, bn_size = 32, 64, 4   # pool0 + 2 transitions
    block_config = (2, 2, 2)

    k_x, k_p = jax.random.split(key)
    x = jax.random.normal(k_x, (N, C_IN, H, W), dtype=jnp.float32)
    params = make_params(k_p, C_IN, num_init_features, growth_rate, bn_size,
                         block_config)

    fwd = jax.jit(functools.partial(densenet_pallas, block_config=block_config))
    out = jax.block_until_ready(fwd(x, params))

    ref_fn = jax.jit(functools.partial(densenet_ref, block_config=block_config))
    ref = jax.block_until_ready(ref_fn(x, params))

    assert out.shape == ref.shape, (out.shape, ref.shape)
    err = float(jnp.max(jnp.abs(out - ref)))
    scale = float(jnp.max(jnp.abs(ref))) + 1e-6
    assert err <= 2e-3 * scale + 2e-3, f"mismatch: max abs err {err}, scale {scale}"

    print("KERNEL_OK")
</pallas_src>

<mosaic_0001>
module attributes {stable_mosaic.version = 11 : i64} {
  func.func @_maxfilter2x2_kernel(%arg0: i32, %arg1: memref<1x8x8x64xf32, #tpu.memory_space<vmem>>, %arg2: memref<1x9x9x64xf32, #tpu.memory_space<vmem>>, %arg3: memref<10x10x64xf32, #tpu.memory_space<vmem>>) attributes {dimension_semantics = [#tpu.dimension_semantics<parallel>], iteration_bounds = array<i64: 2>, scalar_prefetch = 0 : i64, scratch_operands = 1 : i64, tpu.core_type = #tpu.core_type<tc>, window_params = [{transform_indices = @transform_0, window_bounds = array<i64: 1, 8, 8, 64>}, {transform_indices = @transform_1, window_bounds = array<i64: 1, 9, 9, 64>}]} {
    %cst = arith.constant 0xFF800000 : f32
    %0 = vector.broadcast %cst : f32 to vector<1x10x64xf32>
    %c0 = arith.constant 0 : index
    %c0_0 = arith.constant 0 : index
    %c0_1 = arith.constant 0 : index
    %1 = vector.load %arg3[%c0, %c0_0, %c0_1] : memref<10x10x64xf32, #tpu.memory_space<vmem>>, vector<1x10x64xf32>
    tpu.vector_store %arg3[%c0, %c0_0, %c0_1], %0 {strides = array<i32>} : memref<10x10x64xf32, #tpu.memory_space<vmem>>, vector<1x10x64xf32>,
    %c9 = arith.constant 9 : index
    %c0_2 = arith.constant 0 : index
    %c0_3 = arith.constant 0 : index
    %2 = vector.load %arg3[%c9, %c0_2, %c0_3] : memref<10x10x64xf32, #tpu.memory_space<vmem>>, vector<1x10x64xf32>
    tpu.vector_store %arg3[%c9, %c0_2, %c0_3], %0 {strides = array<i32>} : memref<10x10x64xf32, #tpu.memory_space<vmem>>, vector<1x10x64xf32>,
    %cst_4 = arith.constant 0xFF800000 : f32
    %3 = vector.broadcast %cst_4 : f32 to vector<8x1x64xf32>
    %c1 = arith.constant 1 : index
    %c0_5 = arith.constant 0 : index
    %c0_6 = arith.constant 0 : index
    %4 = vector.load %arg3[%c1, %c0_5, %c0_6] : memref<10x10x64xf32, #tpu.memory_space<vmem>>, vector<8x1x64xf32>
    tpu.vector_store %arg3[%c1, %c0_5, %c0_6], %3 {strides = array<i32>} : memref<10x10x64xf32, #tpu.memory_space<vmem>>, vector<8x1x64xf32>,
    %c1_7 = arith.constant 1 : index
    %c9_8 = arith.constant 9 : index
    %c0_9 = arith.constant 0 : index
    %5 = vector.load %arg3[%c1_7, %c9_8, %c0_9] : memref<10x10x64xf32, #tpu.memory_space<vmem>>, vector<8x1x64xf32>
    tpu.vector_store %arg3[%c1_7, %c9_8, %c0_9], %3 {strides = array<i32>} : memref<10x10x64xf32, #tpu.memory_space<vmem>>, vector<8x1x64xf32>,
    %c0_10 = arith.constant 0 : index
    %c0_11 = arith.constant 0 : index
    %c0_12 = arith.constant 0 : index
    %c0_13 = arith.constant 0 : index
    %6 = vector.load %arg1[%c0_10, %c0_11, %c0_12, %c0_13] : memref<1x8x8x64xf32, #tpu.memory_space<vmem>>, vector<1x8x8x64xf32>
    %7 = vector.shape_cast %6 : vector<1x8x8x64xf32> to vector<8x8x64xf32>
    %c1_14 = arith.constant 1 : index
    %c1_15 = arith.constant 1 : index
    %c0_16 = arith.constant 0 : index
    %8 = vector.load %arg3[%c1_14, %c1_15, %c0_16] : memref<10x10x64xf32, #tpu.memory_space<vmem>>, vector<8x8x64xf32>
    tpu.vector_store %arg3[%c1_14, %c1_15, %c0_16], %7 {strides = array<i32>} : memref<10x10x64xf32, #tpu.memory_space<vmem>>, vector<8x8x64xf32>,
    %c0_17 = arith.constant 0 : index
    %c0_18 = arith.constant 0 : index
    %c0_19 = arith.constant 0 : index
    %9 = vector.load %arg3[%c0_17, %c0_18, %c0_19] : memref<10x10x64xf32, #tpu.memory_space<vmem>>, vector<10x10x64xf32>
    %10 = vector.extract_strided_slice %9 {offsets = [0, 0, 0], sizes = [9, 9, 64], strides = [1, 1, 1]} : vector<10x10x64xf32> to vector<9x9x64xf32>
    %11 = vector.extract_strided_slice %9 {offsets = [0, 1, 0], sizes = [9, 9, 64], strides = [1, 1, 1]} : vector<10x10x64xf32> to vector<9x9x64xf32>
    %12 = arith.maximumf %10, %11 : vector<9x9x64xf32>
    %13 = vector.extract_strided_slice %9 {offsets = [1, 0, 0], sizes = [9, 9, 64], strides = [1, 1, 1]} : vector<10x10x64xf32> to vector<9x9x64xf32>
    %14 = vector.extract_strided_slice %9 {offsets = [1, 1, 0], sizes = [9, 9, 64], strides = [1, 1, 1]} : vector<10x10x64xf32> to vector<9x9x64xf32>
    %15 = arith.maximumf %13, %14 : vector<9x9x64xf32>
    %16 = arith.maximumf %12, %15 : vector<9x9x64xf32>
    %c0_20 = arith.constant 0 : index
    %c0_21 = arith.constant 0 : index
    %c0_22 = arith.constant 0 : index
    %c0_23 = arith.constant 0 : index
    %17 = vector.load %arg2[%c0_20, %c0_21, %c0_22, %c0_23] : memref<1x9x9x64xf32, #tpu.memory_space<vmem>>, vector<1x9x9x64xf32>
    %18 = vector.shape_cast %17 : vector<1x9x9x64xf32> to vector<9x9x64xf32>
    %19 = vector.shape_cast %16 : vector<9x9x64xf32> to vector<1x9x9x64xf32>
    tpu.vector_store %arg2[%c0_20, %c0_21, %c0_22, %c0_23], %19 {strides = array<i32>} : memref<1x9x9x64xf32, #tpu.memory_space<vmem>>, vector<1x9x9x64xf32>,
    return
  }
  func.func @transform_0(%arg0: i32) -> (i32, i32, i32, i32) {
    %c0_i32 = arith.constant 0 : i32
    %c0_i32_0 = arith.constant 0 : i32
    %c0_i32_1 = arith.constant 0 : i32
    %c0_i32_2 = arith.constant 0 : i32
    return %arg0, %c0_i32, %c0_i32_0, %c0_i32_1 : i32, i32, i32, i32
  }
  func.func @transform_1(%arg0: i32) -> (i32, i32, i32, i32) {
    %c0_i32 = arith.constant 0 : i32
    %c0_i32_0 = arith.constant 0 : i32
    %c0_i32_1 = arith.constant 0 : i32
    %c0_i32_2 = arith.constant 0 : i32
    return %arg0, %c0_i32, %c0_i32_0, %c0_i32_1 : i32, i32, i32, i32
  }
}

module attributes {stable_mosaic.version = 11 : i64} {
  func.func @_fused_matmul_kernel(%arg0: i32, %arg1: memref<1x64x27xf32, #tpu.memory_space<vmem>>, %arg2: memref<27x64xf32, #tpu.memory_space<vmem>>, %arg3: memref<1x27xf32, #tpu.memory_space<vmem>>, %arg4: memref<1x27xf32, #tpu.memory_space<vmem>>, %arg5: memref<1x64xf32, #tpu.memory_space<vmem>>, %arg6: memref<1x64xf32, #tpu.memory_space<vmem>>, %arg7: memref<1x64x64xf32, #tpu.memory_space<vmem>>) attributes {dimension_semantics = [#tpu.dimension_semantics<parallel>], iteration_bounds = array<i64: 2>, scalar_prefetch = 0 : i64, scratch_operands = 0 : i64, tpu.core_type = #tpu.core_type<tc>, window_params = [{transform_indices = @transform_0, window_bounds = array<i64: 1, 64, 27>}, {pipeline_mode = #tpu.pipeline_mode<synchronous>, transform_indices = @transform_1, window_bounds = array<i64: 27, 64>}, {pipeline_mode = #tpu.pipeline_mode<synchronous>, transform_indices = @transform_2, window_bounds = array<i64: 1, 27>}, {pipeline_mode = #tpu.pipeline_mode<synchronous>, transform_indices = @transform_3, window_bounds = array<i64: 1, 27>}, {pipeline_mode = #tpu.pipeline_mode<synchronous>, transform_indices = @transform_4, window_bounds = array<i64: 1, 64>}, {pipeline_mode = #tpu.pipeline_mode<synchronous>, transform_indices = @transform_5, window_bounds = array<i64: 1, 64>}, {transform_indices = @transform_6, window_bounds = array<i64: 1, 64, 64>}]} {
    %c0 = arith.constant 0 : index
    %c0_0 = arith.constant 0 : index
    %c0_1 = arith.constant 0 : index
    %0 = vector.load %arg1[%c0, %c0_0, %c0_1] : memref<1x64x27xf32, #tpu.memory_space<vmem>>, vector<1x64x27xf32>
    %1 = vector.shape_cast %0 : vector<1x64x27xf32> to vector<64x27xf32>
    %c0_2 = arith.constant 0 : index
    %c0_3 = arith.constant 0 : index
    %2 = vector.load %arg3[%c0_2, %c0_3] : memref<1x27xf32, #tpu.memory_space<vmem>>, vector<1x27xf32>
    %3 = vector.broadcast %2 : vector<1x27xf32> to vector<64x27xf32>
    %4 = arith.mulf %1, %3 : vector<64x27xf32>
    %c0_4 = arith.constant 0 : index
    %c0_5 = arith.constant 0 : index
    %5 = vector.load %arg4[%c0_4, %c0_5] : memref<1x27xf32, #tpu.memory_space<vmem>>, vector<1x27xf32>
    %6 = vector.broadcast %5 : vector<1x27xf32> to vector<64x27xf32>
    %7 = arith.addf %4, %6 : vector<64x27xf32>
    %c0_6 = arith.constant 0 : index
    %c0_7 = arith.constant 0 : index
    %8 = vector.load %arg2[%c0_6, %c0_7] : memref<27x64xf32, #tpu.memory_space<vmem>>, vector<27x64xf32>
    %cst = arith.constant dense<0.000000e+00> : vector<64x64xf32>
    %9 = tpu.matmul %7, %8, %cst {dimension_numbers = #tpu.dot_dimension_numbers<[1], [0], [0], [1], [0, 0, 1, 1], [], []>} : vector<64x27xf32>, vector<27x64xf32>, vector<64x64xf32> -> vector<64x64xf32>
    %c0_8 = arith.constant 0 : index
    %c0_9 = arith.constant 0 : index
    %10 = vector.load %arg5[%c0_8, %c0_9] : memref<1x64xf32, #tpu.memory_space<vmem>>, vector<1x64xf32>
    %11 = vector.broadcast %10 : vector<1x64xf32> to vector<64x64xf32>
    %12 = arith.mulf %9, %11 : vector<64x64xf32>
    %c0_10 = arith.constant 0 : index
    %c0_11 = arith.constant 0 : index
    %13 = vector.load %arg6[%c0_10, %c0_11] : memref<1x64xf32, #tpu.memory_space<vmem>>, vector<1x64xf32>
    %14 = vector.broadcast %13 : vector<1x64xf32> to vector<64x64xf32>
    %15 = arith.addf %12, %14 : vector<64x64xf32>
    %cst_12 = arith.constant 0.000000e+00 : f32
    %16 = vector.broadcast %cst_12 : f32 to vector<64x64xf32>
    %17 = arith.maximumf %15, %16 : vector<64x64xf32>
    %c0_13 = arith.constant 0 : index
    %c0_14 = arith.constant 0 : index
    %c0_15 = arith.constant 0 : index
    %18 = vector.load %arg7[%c0_13, %c0_14, %c0_15] : memref<1x64x64xf32, #tpu.memory_space<vmem>>, vector<1x64x64xf32>
    %19 = vector.shape_cast %18 : vector<1x64x64xf32> to vector<64x64xf32>
    %20 = vector.shape_cast %17 : vector<64x64xf32> to vector<1x64x64xf32>
    tpu.vector_store %arg7[%c0_13, %c0_14, %c0_15], %20 {strides = array<i32>} : memref<1x64x64xf32, #tpu.memory_space<vmem>>, vector<1x64x64xf32>,
    return
  }
  func.func @transform_0(%arg0: i32) -> (i32, i32, i32) {
    %c0_i32 = arith.constant 0 : i32
    %c0_i32_0 = arith.constant 0 : i32
    %c0_i32_1 = arith.constant 0 : i32
    return %arg0, %c0_i32, %c0_i32_0 : i32, i32, i32
  }
  func.func @transform_1(%arg0: i32) -> (i32, i32) {
    %c0_i32 = arith.constant 0 : i32
    %c0_i32_0 = arith.constant 0 : i32
    %c0_i32_1 = arith.constant 0 : i32
    return %c0_i32, %c0_i32_0 : i32, i32
  }
  func.func @transform_2(%arg0: i32) -> (i32, i32) {
    %c0_i32 = arith.constant 0 : i32
    %c0_i32_0 = arith.constant 0 : i32
    %c0_i32_1 = arith.constant 0 : i32
    return %c0_i32, %c0_i32_0 : i32, i32
  }
  func.func @transform_3(%arg0: i32) -> (i32, i32) {
    %c0_i32 = arith.constant 0 : i32
    %c0_i32_0 = arith.constant 0 : i32
    %c0_i32_1 = arith.constant 0 : i32
    return %c0_i32, %c0_i32_0 : i32, i32
  }
  func.func @transform_4(%arg0: i32) -> (i32, i32) {
    %c0_i32 = arith.constant 0 : i32
    %c0_i32_0 = arith.constant 0 : i32
    %c0_i32_1 = arith.constant 0 : i32
    return %c0_i32, %c0_i32_0 : i32, i32
  }
  func.func @transform_5(%arg0: i32) -> (i32, i32) {
    %c0_i32 = arith.constant 0 : i32
    %c0_i32_0 = arith.constant 0 : i32
    %c0_i32_1 = arith.constant 0 : i32
    return %c0_i32, %c0_i32_0 : i32, i32
  }
  func.func @transform_6(%arg0: i32) -> (i32, i32, i32) {
    %c0_i32 = arith.constant 0 : i32
    %c0_i32_0 = arith.constant 0 : i32
    %c0_i32_1 = arith.constant 0 : i32
    return %arg0, %c0_i32, %c0_i32_0 : i32, i32, i32
  }
}

module attributes {stable_mosaic.version = 11 : i64} {
  func.func @_dense_layer_kernel(%arg0: i32, %arg1: memref<1x25x64xf32, #tpu.memory_space<vmem>>, %arg2: memref<64x128xf32, #tpu.memory_space<vmem>>, %arg3: memref<1x64xf32, #tpu.memory_space<vmem>>, %arg4: memref<1x64xf32, #tpu.memory_space<vmem>>, %arg5: memref<1x128xf32, #tpu.memory_space<vmem>>, %arg6: memref<1x128xf32, #tpu.memory_space<vmem>>, %arg7: memref<128x288xf32, #tpu.memory_space<vmem>>, %arg8: memref<1x25x32xf32, #tpu.memory_space<vmem>>, %arg9: memref<49x128xf32, #tpu.memory_space<vmem>>) attributes {dimension_semantics = [#tpu.dimension_semantics<parallel>], iteration_bounds = array<i64: 2>, scalar_prefetch = 0 : i64, scratch_operands = 1 : i64, tpu.core_type = #tpu.core_type<tc>, window_params = [{transform_indices = @transform_0, window_bounds = array<i64: 1, 25, 64>}, {pipeline_mode = #tpu.pipeline_mode<synchronous>, transform_indices = @transform_1, window_bounds = array<i64: 64, 128>}, {pipeline_mode = #tpu.pipeline_mode<synchronous>, transform_indices = @transform_2, window_bounds = array<i64: 1, 64>}, {pipeline_mode = #tpu.pipeline_mode<synchronous>, transform_indices = @transform_3, window_bounds = array<i64: 1, 64>}, {pipeline_mode = #tpu.pipeline_mode<synchronous>, transform_indices = @transform_4, window_bounds = array<i64: 1, 128>}, {pipeline_mode = #tpu.pipeline_mode<synchronous>, transform_indices = @transform_5, window_bounds = array<i64: 1, 128>}, {pipeline_mode = #tpu.pipeline_mode<synchronous>, transform_indices = @transform_6, window_bounds = array<i64: 128, 288>}, {transform_indices = @transform_7, window_bounds = array<i64: 1, 25, 32>}]} {
    %c0 = arith.constant 0 : index
    %c0_0 = arith.constant 0 : index
    %c0_1 = arith.constant 0 : index
    %0 = vector.load %arg1[%c0, %c0_0, %c0_1] : memref<1x25x64xf32, #tpu.memory_space<vmem>>, vector<1x25x64xf32>
    %1 = vector.shape_cast %0 : vector<1x25x64xf32> to vector<25x64xf32>
    %c0_2 = arith.constant 0 : index
    %c0_3 = arith.constant 0 : index
    %2 = vector.load %arg3[%c0_2, %c0_3] : memref<1x64xf32, #tpu.memory_space<vmem>>, vector<1x64xf32>
    %3 = vector.broadcast %2 : vector<1x64xf32> to vector<25x64xf32>
    %4 = arith.mulf %1, %3 : vector<25x64xf32>
    %c0_4 = arith.constant 0 : index
    %c0_5 = arith.constant 0 : index
    %5 = vector.load %arg4[%c0_4, %c0_5] : memref<1x64xf32, #tpu.memory_space<vmem>>, vector<1x64xf32>
    %6 = vector.broadcast %5 : vector<1x64xf32> to vector<25x64xf32>
    %7 = arith.addf %4, %6 : vector<25x64xf32>
    %cst = arith.constant 0.000000e+00 : f32
    %8 = vector.broadcast %cst : f32 to vector<25x64xf32>
    %9 = arith.maximumf %7, %8 : vector<25x64xf32>
    %c0_6 = arith.constant 0 : index
    %c0_7 = arith.constant 0 : index
    %10 = vector.load %arg2[%c0_6, %c0_7] : memref<64x128xf32, #tpu.memory_space<vmem>>, vector<64x128xf32>
    %cst_8 = arith.constant dense<0.000000e+00> : vector<25x128xf32>
    %11 = tpu.matmul %9, %10, %cst_8 {dimension_numbers = #tpu.dot_dimension_numbers<[1], [0], [0], [1], [0, 0, 1, 1], [], []>} : vector<25x64xf32>, vector<64x128xf32>, vector<25x128xf32> -> vector<25x128xf32>
    %c0_9 = arith.constant 0 : index
    %c0_10 = arith.constant 0 : index
    %12 = vector.load %arg5[%c0_9, %c0_10] : memref<1x128xf32, #tpu.memory_space<vmem>>, vector<1x128xf32>
    %13 = vector.broadcast %12 : vector<1x128xf32> to vector<25x128xf32>
    %14 = arith.mulf %11, %13 : vector<25x128xf32>
    %c0_11 = arith.constant 0 : index
    %c0_12 = arith.constant 0 : index
    %15 = vector.load %arg6[%c0_11, %c0_12] : memref<1x128xf32, #tpu.memory_space<vmem>>, vector<1x128xf32>
    %16 = vector.broadcast %15 : vector<1x128xf32> to vector<25x128xf32>
    %17 = arith.addf %14, %16 : vector<25x128xf32>
    %cst_13 = arith.constant 0.000000e+00 : f32
    %18 = vector.broadcast %cst_13 : f32 to vector<25x128xf32>
    %19 = arith.maximumf %17, %18 : vector<25x128xf32>
    %cst_14 = arith.constant 0.000000e+00 : f32
    %20 = vector.broadcast %cst_14 : f32 to vector<8x128xf32>
    %c0_15 = arith.constant 0 : index
    %c0_16 = arith.constant 0 : index
    %21 = vector.load %arg9[%c0_15, %c0_16] : memref<49x128xf32, #tpu.memory_space<vmem>>, vector<8x128xf32>
    tpu.vector_store %arg9[%c0_15, %c0_16], %20 {strides = array<i32>} : memref<49x128xf32, #tpu.memory_space<vmem>>, vector<8x128xf32>,
    %cst_17 = arith.constant 0.000000e+00 : f32
    %22 = vector.broadcast %cst_17 : f32 to vector<2x128xf32>
    %c13 = arith.constant 13 : index
    %c0_18 = arith.constant 0 : index
    %23 = vector.load %arg9[%c13, %c0_18] : memref<49x128xf32, #tpu.memory_space<vmem>>, vector<2x128xf32>
    tpu.vector_store %arg9[%c13, %c0_18], %22 {strides = array<i32>} : memref<49x128xf32, #tpu.memory_space<vmem>>, vector<2x128xf32>,
    %cst_19 = arith.constant 0.000000e+00 : f32
    %24 = vector.broadcast %cst_19 : f32 to vector<2x128xf32>
    %c20 = arith.constant 20 : index
    %c0_20 = arith.constant 0 : index
    %25 = vector.load %arg9[%c20, %c0_20] : memref<49x128xf32, #tpu.memory_space<vmem>>, vector<2x128xf32>
    tpu.vector_store %arg9[%c20, %c0_20], %24 {strides = array<i32>} : memref<49x128xf32, #tpu.memory_space<vmem>>, vector<2x128xf32>,
    %cst_21 = arith.constant 0.000000e+00 : f32
    %26 = vector.broadcast %cst_21 : f32 to vector<2x128xf32>
    %c27 = arith.constant 27 : index
    %c0_22 = arith.constant 0 : index
    %27 = vector.load %arg9[%c27, %c0_22] : memref<49x128xf32, #tpu.memory_space<vmem>>, vector<2x128xf32>
    tpu.vector_store %arg9[%c27, %c0_22], %26 {strides = array<i32>} : memref<49x128xf32, #tpu.memory_space<vmem>>, vector<2x128xf32>,
    %cst_23 = arith.constant 0.000000e+00 : f32
    %28 = vector.broadcast %cst_23 : f32 to vector<2x128xf32>
    %c34 = arith.constant 34 : index
    %c0_24 = arith.constant 0 : index
    %29 = vector.load %arg9[%c34, %c0_24] : memref<49x128xf32, #tpu.memory_space<vmem>>, vector<2x128xf32>
    tpu.vector_store %arg9[%c34, %c0_24], %28 {strides = array<i32>} : memref<49x128xf32, #tpu.memory_space<vmem>>, vector<2x128xf32>,
    %cst_25 = arith.constant 0.000000e+00 : f32
    %30 = vector.broadcast %cst_25 : f32 to vector<8x128xf32>
    %c41 = arith.constant 41 : index
    %c0_26 = arith.constant 0 : index
    %31 = vector.load %arg9[%c41, %c0_26] : memref<49x128xf32, #tpu.memory_space<vmem>>, vector<8x128xf32>
    tpu.vector_store %arg9[%c41, %c0_26], %30 {strides = array<i32>} : memref<49x128xf32, #tpu.memory_space<vmem>>, vector<8x128xf32>,
    %32 = vector.extract_strided_slice %19 {offsets = [0, 0], sizes = [5, 128], strides = [1, 1]} : vector<25x128xf32> to vector<5x128xf32>
    %c8 = arith.constant 8 : index
    %c0_27 = arith.constant 0 : index
    %33 = vector.load %arg9[%c8, %c0_27] : memref<49x128xf32, #tpu.memory_space<vmem>>, vector<5x128xf32>
    tpu.vector_store %arg9[%c8, %c0_27], %32 {strides = array<i32>} : memref<49x128xf32, #tpu.memory_space<vmem>>, vector<5x128xf32>,
    %34 = vector.extract_strided_slice %19 {offsets = [5, 0], sizes = [5, 128], strides = [1, 1]} : vector<25x128xf32> to vector<5x128xf32>
    %c15 = arith.constant 15 : index
    %c0_28 = arith.constant 0 : index
    %35 = vector.load %arg9[%c15, %c0_28] : memref<49x128xf32, #tpu.memory_space<vmem>>, vector<5x128xf32>
    tpu.vector_store %arg9[%c15, %c0_28], %34 {strides = array<i32>} : memref<49x128xf32, #tpu.memory_space<vmem>>, vector<5x128xf32>,
    %36 = vector.extract_strided_slice %19 {offsets = [10, 0], sizes = [5, 128], strides = [1, 1]} : vector<25x128xf32> to vector<5x128xf32>
    %c22 = arith.constant 22 : index
    %c0_29 = arith.constant 0 : index
    %37 = vector.load %arg9[%c22, %c0_29] : memref<49x128xf32, #tpu.memory_space<vmem>>, vector<5x128xf32>
    tpu.vector_store %arg9[%c22, %c0_29], %36 {strides = array<i32>} : memref<49x128xf32, #tpu.memory_space<vmem>>, vector<5x128xf32>,
    %38 = vector.extract_strided_slice %19 {offsets = [15, 0], sizes = [5, 128], strides = [1, 1]} : vector<25x128xf32> to vector<5x128xf32>
    %c29 = arith.constant 29 : index
    %c0_30 = arith.constant 0 : index
    %39 = vector.load %arg9[%c29, %c0_30] : memref<49x128xf32, #tpu.memory_space<vmem>>, vector<5x128xf32>
    tpu.vector_store %arg9[%c29, %c0_30], %38 {strides = array<i32>} : memref<49x128xf32, #tpu.memory_space<vmem>>, vector<5x128xf32>,
    %40 = vector.extract_strided_slice %19 {offsets = [20, 0], sizes = [5, 128], strides = [1, 1]} : vector<25x128xf32> to vector<5x128xf32>
    %c36 = arith.constant 36 : index
    %c0_31 = arith.constant 0 : index
    %41 = vector.load %arg9[%c36, %c0_31] : memref<49x128xf32, #tpu.memory_space<vmem>>, vector<5x128xf32>
    tpu.vector_store %arg9[%c36, %c0_31], %40 {strides = array<i32>} : memref<49x128xf32, #tpu.memory_space<vmem>>, vector<5x128xf32>,
    %c0_32 = arith.constant 0 : index
    %c0_33 = arith.constant 0 : index
    %42 = vector.load %arg9[%c0_32, %c0_33] : memref<49x128xf32, #tpu.memory_space<vmem>>, vector<49x128xf32>
    %c0_34 = arith.constant 0 : index
    %c0_35 = arith.constant 0 : index
    %43 = vector.load %arg7[%c0_34, %c0_35] : memref<128x288xf32, #tpu.memory_space<vmem>>, vector<128x288xf32>
    %cst_36 = arith.constant dense<0.000000e+00> : vector<49x288xf32>
    %44 = tpu.matmul %42, %43, %cst_36 {dimension_numbers = #tpu.dot_dimension_numbers<[1], [0], [0], [1], [0, 0, 1, 1], [], []>} : vector<49x128xf32>, vector<128x288xf32>, vector<49x288xf32> -> vector<49x288xf32>
    %45 = vector.extract_strided_slice %44 {offsets = [0, 0], sizes = [5, 32], strides = [1, 1]} : vector<49x288xf32> to vector<5x32xf32>
    %46 = vector.extract_strided_slice %44 {offsets = [1, 32], sizes = [5, 32], strides = [1, 1]} : vector<49x288xf32> to vector<5x32xf32>
    %47 = arith.addf %45, %46 : vector<5x32xf32>
    %48 = vector.extract_strided_slice %44 {offsets = [2, 64], sizes = [5, 32], strides = [1, 1]} : vector<49x288xf32> to vector<5x32xf32>
    %49 = arith.addf %47, %48 : vector<5x32xf32>
    %50 = vector.extract_strided_slice %44 {offsets = [7, 96], sizes = [5, 32], strides = [1, 1]} : vector<49x288xf32> to vector<5x32xf32>
    %51 = arith.addf %49, %50 : vector<5x32xf32>
    %52 = vector.extract_strided_slice %44 {offsets = [8, 128], sizes = [5, 32], strides = [1, 1]} : vector<49x288xf32> to vector<5x32xf32>
    %53 = arith.addf %51, %52 : vector<5x32xf32>
    %54 = vector.extract_strided_slice %44 {offsets = [9, 160], sizes = [5, 32], strides = [1, 1]} : vector<49x288xf32> to vector<5x32xf32>
    %55 = arith.addf %53, %54 : vector<5x32xf32>
    %56 = vector.extract_strided_slice %44 {offsets = [14, 192], sizes = [5, 32], strides = [1, 1]} : vector<49x288xf32> to vector<5x32xf32>
    %57 = arith.addf %55, %56 : vector<5x32xf32>
    %58 = vector.extract_strided_slice %44 {offsets = [15, 224], sizes = [5, 32], strides = [1, 1]} : vector<49x288xf32> to vector<5x32xf32>
    %59 = arith.addf %57, %58 : vector<5x32xf32>
    %60 = vector.extract_strided_slice %44 {offsets = [16, 256], sizes = [5, 32], strides = [1, 1]} : vector<49x288xf32> to vector<5x32xf32>
    %61 = arith.addf %59, %60 : vector<5x32xf32>
    %c0_37 = arith.constant 0 : index
    %c0_38 = arith.constant 0 : index
    %c0_39 = arith.constant 0 : index
    %62 = vector.load %arg8[%c0_37, %c0_38, %c0_39] : memref<1x25x32xf32, #tpu.memory_space<vmem>>, vector<1x5x32xf32>
    %63 = vector.shape_cast %62 : vector<1x5x32xf32> to vector<5x32xf32>
    %64 = vector.shape_cast %61 : vector<5x32xf32> to vector<1x5x32xf32>
    tpu.vector_store %arg8[%c0_37, %c0_38, %c0_39], %64 {strides = array<i32>} : memref<1x25x32xf32, #tpu.memory_space<vmem>>, vector<1x5x32xf32>,
    %65 = vector.extract_strided_slice %44 {offsets = [7, 0], sizes = [5, 32], strides = [1, 1]} : vector<49x288xf32> to vector<5x32xf32>
    %66 = vector.extract_strided_slice %44 {offsets = [8, 32], sizes = [5, 32], strides = [1, 1]} : vector<49x288xf32> to vector<5x32xf32>
    %67 = arith.addf %65, %66 : vector<5x32xf32>
    %68 = vector.extract_strided_slice %44 {offsets = [9, 64], sizes = [5, 32], strides = [1, 1]} : vector<49x288xf32> to vector<5x32xf32>
    %69 = arith.addf %67, %68 : vector<5x32xf32>
    %70 = vector.extract_strided_slice %44 {offsets = [14, 96], sizes = [5, 32], strides = [1, 1]} : vector<49x288xf32> to vector<5x32xf32>
    %71 = arith.addf %69, %70 : vector<5x32xf32>
    %72 = vector.extract_strided_slice %44 {offsets = [15, 128], sizes = [5, 32], strides = [1, 1]} : vector<49x288xf32> to vector<5x32xf32>
    %73 = arith.addf %71, %72 : vector<5x32xf32>
    %74 = vector.extract_strided_slice %44 {offsets = [16, 160], sizes = [5, 32], strides = [1, 1]} : vector<49x288xf32> to vector<5x32xf32>
    %75 = arith.addf %73, %74 : vector<5x32xf32>
    %76 = vector.extract_strided_slice %44 {offsets = [21, 192], sizes = [5, 32], strides = [1, 1]} : vector<49x288xf32> to vector<5x32xf32>
    %77 = arith.addf %75, %76 : vector<5x32xf32>
    %78 = vector.extract_strided_slice %44 {offsets = [22, 224], sizes = [5, 32], strides = [1, 1]} : vector<49x288xf32> to vector<5x32xf32>
    %79 = arith.addf %77, %78 : vector<5x32xf32>
    %80 = vector.extract_strided_slice %44 {offsets = [23, 256], sizes = [5, 32], strides = [1, 1]} : vector<49x288xf32> to vector<5x32xf32>
    %81 = arith.addf %79, %80 : vector<5x32xf32>
    %c0_40 = arith.constant 0 : index
    %c5 = arith.constant 5 : index
    %c0_41 = arith.constant 0 : index
    %82 = vector.load %arg8[%c0_40, %c5, %c0_41] : memref<1x25x32xf32, #tpu.memory_space<vmem>>, vector<1x5x32xf32>
    %83 = vector.shape_cast %82 : vector<1x5x32xf32> to vector<5x32xf32>
    %84 = vector.shape_cast %81 : vector<5x32xf32> to vector<1x5x32xf32>
    tpu.vector_store %arg8[%c0_40, %c5, %c0_41], %84 {strides = array<i32>} : memref<1x25x32xf32, #tpu.memory_space<vmem>>, vector<1x5x32xf32>,
    %85 = vector.extract_strided_slice %44 {offsets = [14, 0], sizes = [5, 32], strides = [1, 1]} : vector<49x288xf32> to vector<5x32xf32>
    %86 = vector.extract_strided_slice %44 {offsets = [15, 32], sizes = [5, 32], strides = [1, 1]} : vector<49x288xf32> to vector<5x32xf32>
    %87 = arith.addf %85, %86 : vector<5x32xf32>
    %88 = vector.extract_strided_slice %44 {offsets = [16, 64], sizes = [5, 32], strides = [1, 1]} : vector<49x288xf32> to vector<5x32xf32>
    %89 = arith.addf %87, %88 : vector<5x32xf32>
    %90 = vector.extract_strided_slice %44 {offsets = [21, 96], sizes = [5, 32], strides = [1, 1]} : vector<49x288xf32> to vector<5x32xf32>
    %91 = arith.addf %89, %90 : vector<5x32xf32>
    %92 = vector.extract_strided_slice %44 {offsets = [22, 128], sizes = [5, 32], strides = [1, 1]} : vector<49x288xf32> to vector<5x32xf32>
    %93 = arith.addf %91, %92 : vector<5x32xf32>
    %94 = vector.extract_strided_slice %44 {offsets = [23, 160], sizes = [5, 32], strides = [1, 1]} : vector<49x288xf32> to vector<5x32xf32>
    %95 = arith.addf %93, %94 : vector<5x32xf32>
    %96 = vector.extract_strided_slice %44 {offsets = [28, 192], sizes = [5, 32], strides = [1, 1]} : vector<49x288xf32> to vector<5x32xf32>
    %97 = arith.addf %95, %96 : vector<5x32xf32>
    %98 = vector.extract_strided_slice %44 {offsets = [29, 224], sizes = [5, 32], strides = [1, 1]} : vector<49x288xf32> to vector<5x32xf32>
    %99 = arith.addf %97, %98 : vector<5x32xf32>
    %100 = vector.extract_strided_slice %44 {offsets = [30, 256], sizes = [5, 32], strides = [1, 1]} : vector<49x288xf32> to vector<5x32xf32>
    %101 = arith.addf %99, %100 : vector<5x32xf32>
    %c0_42 = arith.constant 0 : index
    %c10 = arith.constant 10 : index
    %c0_43 = arith.constant 0 : index
    %102 = vector.load %arg8[%c0_42, %c10, %c0_43] : memref<1x25x32xf32, #tpu.memory_space<vmem>>, vector<1x5x32xf32>
    %103 = vector.shape_cast %102 : vector<1x5x32xf32> to vector<5x32xf32>
    %104 = vector.shape_cast %101 : vector<5x32xf32> to vector<1x5x32xf32>
    tpu.vector_store %arg8[%c0_42, %c10, %c0_43], %104 {strides = array<i32>} : memref<1x25x32xf32, #tpu.memory_space<vmem>>, vector<1x5x32xf32>,
    %105 = vector.extract_strided_slice %44 {offsets = [21, 0], sizes = [5, 32], strides = [1, 1]} : vector<49x288xf32> to vector<5x32xf32>
    %106 = vector.extract_strided_slice %44 {offsets = [22, 32], sizes = [5, 32], strides = [1, 1]} : vector<49x288xf32> to vector<5x32xf32>
    %107 = arith.addf %105, %106 : vector<5x32xf32>
    %108 = vector.extract_strided_slice %44 {offsets = [23, 64], sizes = [5, 32], strides = [1, 1]} : vector<49x288xf32> to vector<5x32xf32>
    %109 = arith.addf %107, %108 : vector<5x32xf32>
    %110 = vector.extract_strided_slice %44 {offsets = [28, 96], sizes = [5, 32], strides = [1, 1]} : vector<49x288xf32> to vector<5x32xf32>
    %111 = arith.addf %109, %110 : vector<5x32xf32>
    %112 = vector.extract_strided_slice %44 {offsets = [29, 128], sizes = [5, 32], strides = [1, 1]} : vector<49x288xf32> to vector<5x32xf32>
    %113 = arith.addf %111, %112 : vector<5x32xf32>
    %114 = vector.extract_strided_slice %44 {offsets = [30, 160], sizes = [5, 32], strides = [1, 1]} : vector<49x288xf32> to vector<5x32xf32>
    %115 = arith.addf %113, %114 : vector<5x32xf32>
    %116 = vector.extract_strided_slice %44 {offsets = [35, 192], sizes = [5, 32], strides = [1, 1]} : vector<49x288xf32> to vector<5x32xf32>
    %117 = arith.addf %115, %116 : vector<5x32xf32>
    %118 = vector.extract_strided_slice %44 {offsets = [36, 224], sizes = [5, 32], strides = [1, 1]} : vector<49x288xf32> to vector<5x32xf32>
    %119 = arith.addf %117, %118 : vector<5x32xf32>
    %120 = vector.extract_strided_slice %44 {offsets = [37, 256], sizes = [5, 32], strides = [1, 1]} : vector<49x288xf32> to vector<5x32xf32>
    %121 = arith.addf %119, %120 : vector<5x32xf32>
    %c0_44 = arith.constant 0 : index
    %c15_45 = arith.constant 15 : index
    %c0_46 = arith.constant 0 : index
    %122 = vector.load %arg8[%c0_44, %c15_45, %c0_46] : memref<1x25x32xf32, #tpu.memory_space<vmem>>, vector<1x5x32xf32>
    %123 = vector.shape_cast %122 : vector<1x5x32xf32> to vector<5x32xf32>
    %124 = vector.shape_cast %121 : vector<5x32xf32> to vector<1x5x32xf32>
    tpu.vector_store %arg8[%c0_44, %c15_45, %c0_46], %124 {strides = array<i32>} : memref<1x25x32xf32, #tpu.memory_space<vmem>>, vector<1x5x32xf32>,
    %125 = vector.extract_strided_slice %44 {offsets = [28, 0], sizes = [5, 32], strides = [1, 1]} : vector<49x288xf32> to vector<5x32xf32>
    %126 = vector.extract_strided_slice %44 {offsets = [29, 32], sizes = [5, 32], strides = [1, 1]} : vector<49x288xf32> to vector<5x32xf32>
    %127 = arith.addf %125, %126 : vector<5x32xf32>
    %128 = vector.extract_strided_slice %44 {offsets = [30, 64], sizes = [5, 32], strides = [1, 1]} : vector<49x288xf32> to vector<5x32xf32>
    %129 = arith.addf %127, %128 : vector<5x32xf32>
    %130 = vector.extract_strided_slice %44 {offsets = [35, 96], sizes = [5, 32], strides = [1, 1]} : vector<49x288xf32> to vector<5x32xf32>
    %131 = arith.addf %129, %130 : vector<5x32xf32>
    %132 = vector.extract_strided_slice %44 {offsets = [36, 128], sizes = [5, 32], strides = [1, 1]} : vector<49x288xf32> to vector<5x32xf32>
    %133 = arith.addf %131, %132 : vector<5x32xf32>
    %134 = vector.extract_strided_slice %44 {offsets = [37, 160], sizes = [5, 32], strides = [1, 1]} : vector<49x288xf32> to vector<5x32xf32>
    %135 = arith.addf %133, %134 : vector<5x32xf32>
    %136 = vector.extract_strided_slice %44 {offsets = [42, 192], sizes = [5, 32], strides = [1, 1]} : vector<49x288xf32> to vector<5x32xf32>
    %137 = arith.addf %135, %136 : vector<5x32xf32>
    %138 = vector.extract_strided_slice %44 {offsets = [43, 224], sizes = [5, 32], strides = [1, 1]} : vector<49x288xf32> to vector<5x32xf32>
    %139 = arith.addf %137, %138 : vector<5x32xf32>
    %140 = vector.extract_strided_slice %44 {offsets = [44, 256], sizes = [5, 32], strides = [1, 1]} : vector<49x288xf32> to vector<5x32xf32>
    %141 = arith.addf %139, %140 : vector<5x32xf32>
    %c0_47 = arith.constant 0 : index
    %c20_48 = arith.constant 20 : index
    %c0_49 = arith.constant 0 : index
    %142 = vector.load %arg8[%c0_47, %c20_48, %c0_49] : memref<1x25x32xf32, #tpu.memory_space<vmem>>, vector<1x5x32xf32>
    %143 = vector.shape_cast %142 : vector<1x5x32xf32> to vector<5x32xf32>
    %144 = vector.shape_cast %141 : vector<5x32xf32> to vector<1x5x32xf32>
    tpu.vector_store %arg8[%c0_47, %c20_48, %c0_49], %144 {strides = array<i32>} : memref<1x25x32xf32, #tpu.memory_space<vmem>>, vector<1x5x32xf32>,
    return
  }
  func.func @transform_0(%arg0: i32) -> (i32, i32, i32) {
    %c0_i32 = arith.constant 0 : i32
    %c0_i32_0 = arith.constant 0 : i32
    %c0_i32_1 = arith.constant 0 : i32
    return %arg0, %c0_i32, %c0_i32_0 : i32, i32, i32
  }
  func.func @transform_1(%arg0: i32) -> (i32, i32) {
    %c0_i32 = arith.constant 0 : i32
    %c0_i32_0 = arith.constant 0 : i32
    %c0_i32_1 = arith.constant 0 : i32
    return %c0_i32, %c0_i32_0 : i32, i32
  }
  func.func @transform_2(%arg0: i32) -> (i32, i32) {
    %c0_i32 = arith.constant 0 : i32
    %c0_i32_0 = arith.constant 0 : i32
    %c0_i32_1 = arith.constant 0 : i32
    return %c0_i32, %c0_i32_0 : i32, i32
  }
  func.func @transform_3(%arg0: i32) -> (i32, i32) {
    %c0_i32 = arith.constant 0 : i32
    %c0_i32_0 = arith.constant 0 : i32
    %c0_i32_1 = arith.constant 0 : i32
    return %c0_i32, %c0_i32_0 : i32, i32
  }
  func.func @transform_4(%arg0: i32) -> (i32, i32) {
    %c0_i32 = arith.constant 0 : i32
    %c0_i32_0 = arith.constant 0 : i32
    %c0_i32_1 = arith.constant 0 : i32
    return %c0_i32, %c0_i32_0 : i32, i32
  }
  func.func @transform_5(%arg0: i32) -> (i32, i32) {
    %c0_i32 = arith.constant 0 : i32
    %c0_i32_0 = arith.constant 0 : i32
    %c0_i32_1 = arith.constant 0 : i32
    return %c0_i32, %c0_i32_0 : i32, i32
  }
  func.func @transform_6(%arg0: i32) -> (i32, i32) {
    %c0_i32 = arith.constant 0 : i32
    %c0_i32_0 = arith.constant 0 : i32
    %c0_i32_1 = arith.constant 0 : i32
    return %c0_i32, %c0_i32_0 : i32, i32
  }
  func.func @transform_7(%arg0: i32) -> (i32, i32, i32) {
    %c0_i32 = arith.constant 0 : i32
    %c0_i32_0 = arith.constant 0 : i32
    %c0_i32_1 = arith.constant 0 : i32
    return %arg0, %c0_i32, %c0_i32_0 : i32, i32, i32
  }
}

module attributes {stable_mosaic.version = 11 : i64} {
  func.func @_dense_layer_kernel(%arg0: i32, %arg1: memref<1x25x64xf32, #tpu.memory_space<vmem>>, %arg2: memref<1x25x32xf32, #tpu.memory_space<vmem>>, %arg3: memref<96x128xf32, #tpu.memory_space<vmem>>, %arg4: memref<1x96xf32, #tpu.memory_space<vmem>>, %arg5: memref<1x96xf32, #tpu.memory_space<vmem>>, %arg6: memref<1x128xf32, #tpu.memory_space<vmem>>, %arg7: memref<1x128xf32, #tpu.memory_space<vmem>>, %arg8: memref<128x288xf32, #tpu.memory_space<vmem>>, %arg9: memref<1x25x32xf32, #tpu.memory_space<vmem>>, %arg10: memref<49x128xf32, #tpu.memory_space<vmem>>) attributes {dimension_semantics = [#tpu.dimension_semantics<parallel>], iteration_bounds = array<i64: 2>, scalar_prefetch = 0 : i64, scratch_operands = 1 : i64, tpu.core_type = #tpu.core_type<tc>, window_params = [{transform_indices = @transform_0, window_bounds = array<i64: 1, 25, 64>}, {transform_indices = @transform_1, window_bounds = array<i64: 1, 25, 32>}, {pipeline_mode = #tpu.pipeline_mode<synchronous>, transform_indices = @transform_2, window_bounds = array<i64: 96, 128>}, {pipeline_mode = #tpu.pipeline_mode<synchronous>, transform_indices = @transform_3, window_bounds = array<i64: 1, 96>}, {pipeline_mode = #tpu.pipeline_mode<synchronous>, transform_indices = @transform_4, window_bounds = array<i64: 1, 96>}, {pipeline_mode = #tpu.pipeline_mode<synchronous>, transform_indices = @transform_5, window_bounds = array<i64: 1, 128>}, {pipeline_mode = #tpu.pipeline_mode<synchronous>, transform_indices = @transform_6, window_bounds = array<i64: 1, 128>}, {pipeline_mode = #tpu.pipeline_mode<synchronous>, transform_indices = @transform_7, window_bounds = array<i64: 128, 288>}, {transform_indices = @transform_8, window_bounds = array<i64: 1, 25, 32>}]} {
    %c0 = arith.constant 0 : index
    %c0_0 = arith.constant 0 : index
    %c0_1 = arith.constant 0 : index
    %0 = vector.load %arg1[%c0, %c0_0, %c0_1] : memref<1x25x64xf32, #tpu.memory_space<vmem>>, vector<1x25x64xf32>
    %1 = vector.shape_cast %0 : vector<1x25x64xf32> to vector<25x64xf32>
    %c0_2 = arith.constant 0 : index
    %c0_3 = arith.constant 0 : index
    %2 = vector.load %arg4[%c0_2, %c0_3] : memref<1x96xf32, #tpu.memory_space<vmem>>, vector<1x64xf32>
    %3 = vector.broadcast %2 : vector<1x64xf32> to vector<25x64xf32>
    %4 = arith.mulf %1, %3 : vector<25x64xf32>
    %c0_4 = arith.constant 0 : index
    %c0_5 = arith.constant 0 : index
    %5 = vector.load %arg5[%c0_4, %c0_5] : memref<1x96xf32, #tpu.memory_space<vmem>>, vector<1x64xf32>
    %6 = vector.broadcast %5 : vector<1x64xf32> to vector<25x64xf32>
    %7 = arith.addf %4, %6 : vector<25x64xf32>
    %cst = arith.constant 0.000000e+00 : f32
    %8 = vector.broadcast %cst : f32 to vector<25x64xf32>
    %9 = arith.maximumf %7, %8 : vector<25x64xf32>
    %c0_6 = arith.constant 0 : index
    %c0_7 = arith.constant 0 : index
    %10 = vector.load %arg3[%c0_6, %c0_7] : memref<96x128xf32, #tpu.memory_space<vmem>>, vector<64x128xf32>
    %cst_8 = arith.constant dense<0.000000e+00> : vector<25x128xf32>
    %11 = tpu.matmul %9, %10, %cst_8 {dimension_numbers = #tpu.dot_dimension_numbers<[1], [0], [0], [1], [0, 0, 1, 1], [], []>} : vector<25x64xf32>, vector<64x128xf32>, vector<25x128xf32> -> vector<25x128xf32>
    %c0_9 = arith.constant 0 : index
    %c0_10 = arith.constant 0 : index
    %c0_11 = arith.constant 0 : index
    %12 = vector.load %arg2[%c0_9, %c0_10, %c0_11] : memref<1x25x32xf32, #tpu.memory_space<vmem>>, vector<1x25x32xf32>
    %13 = vector.shape_cast %12 : vector<1x25x32xf32> to vector<25x32xf32>
    %c0_12 = arith.constant 0 : index
    %c64 = arith.constant 64 : index
    %14 = vector.load %arg4[%c0_12, %c64] : memref<1x96xf32, #tpu.memory_space<vmem>>, vector<1x32xf32>
    %15 = vector.broadcast %14 : vector<1x32xf32> to vector<25x32xf32>
    %16 = arith.mulf %13, %15 : vector<25x32xf32>
    %c0_13 = arith.constant 0 : index
    %c64_14 = arith.constant 64 : index
    %17 = vector.load %arg5[%c0_13, %c64_14] : memref<1x96xf32, #tpu.memory_space<vmem>>, vector<1x32xf32>
    %18 = vector.broadcast %17 : vector<1x32xf32> to vector<25x32xf32>
    %19 = arith.addf %16, %18 : vector<25x32xf32>
    %cst_15 = arith.constant 0.000000e+00 : f32
    %20 = vector.broadcast %cst_15 : f32 to vector<25x32xf32>
    %21 = arith.maximumf %19, %20 : vector<25x32xf32>
    %c64_16 = arith.constant 64 : index
    %c0_17 = arith.constant 0 : index
    %22 = vector.load %arg3[%c64_16, %c0_17] : memref<96x128xf32, #tpu.memory_space<vmem>>, vector<32x128xf32>
    %cst_18 = arith.constant dense<0.000000e+00> : vector<25x128xf32>
    %23 = tpu.matmul %21, %22, %cst_18 {dimension_numbers = #tpu.dot_dimension_numbers<[1], [0], [0], [1], [0, 0, 1, 1], [], []>} : vector<25x32xf32>, vector<32x128xf32>, vector<25x128xf32> -> vector<25x128xf32>
    %24 = arith.addf %11, %23 : vector<25x128xf32>
    %c0_19 = arith.constant 0 : index
    %c0_20 = arith.constant 0 : index
    %25 = vector.load %arg6[%c0_19, %c0_20] : memref<1x128xf32, #tpu.memory_space<vmem>>, vector<1x128xf32>
    %26 = vector.broadcast %25 : vector<1x128xf32> to vector<25x128xf32>
    %27 = arith.mulf %24, %26 : vector<25x128xf32>
    %c0_21 = arith.constant 0 : index
    %c0_22 = arith.constant 0 : index
    %28 = vector.load %arg7[%c0_21, %c0_22] : memref<1x128xf32, #tpu.memory_space<vmem>>, vector<1x128xf32>
    %29 = vector.broadcast %28 : vector<1x128xf32> to vector<25x128xf32>
    %30 = arith.addf %27, %29 : vector<25x128xf32>
    %cst_23 = arith.constant 0.000000e+00 : f32
    %31 = vector.broadcast %cst_23 : f32 to vector<25x128xf32>
    %32 = arith.maximumf %30, %31 : vector<25x128xf32>
    %cst_24 = arith.constant 0.000000e+00 : f32
    %33 = vector.broadcast %cst_24 : f32 to vector<8x128xf32>
    %c0_25 = arith.constant 0 : index
    %c0_26 = arith.constant 0 : index
    %34 = vector.load %arg10[%c0_25, %c0_26] : memref<49x128xf32, #tpu.memory_space<vmem>>, vector<8x128xf32>
    tpu.vector_store %arg10[%c0_25, %c0_26], %33 {strides = array<i32>} : memref<49x128xf32, #tpu.memory_space<vmem>>, vector<8x128xf32>,
    %cst_27 = arith.constant 0.000000e+00 : f32
    %35 = vector.broadcast %cst_27 : f32 to vector<2x128xf32>
    %c13 = arith.constant 13 : index
    %c0_28 = arith.constant 0 : index
    %36 = vector.load %arg10[%c13, %c0_28] : memref<49x128xf32, #tpu.memory_space<vmem>>, vector<2x128xf32>
    tpu.vector_store %arg10[%c13, %c0_28], %35 {strides = array<i32>} : memref<49x128xf32, #tpu.memory_space<vmem>>, vector<2x128xf32>,
    %cst_29 = arith.constant 0.000000e+00 : f32
    %37 = vector.broadcast %cst_29 : f32 to vector<2x128xf32>
    %c20 = arith.constant 20 : index
    %c0_30 = arith.constant 0 : index
    %38 = vector.load %arg10[%c20, %c0_30] : memref<49x128xf32, #tpu.memory_space<vmem>>, vector<2x128xf32>
    tpu.vector_store %arg10[%c20, %c0_30], %37 {strides = array<i32>} : memref<49x128xf32, #tpu.memory_space<vmem>>, vector<2x128xf32>,
    %cst_31 = arith.constant 0.000000e+00 : f32
    %39 = vector.broadcast %cst_31 : f32 to vector<2x128xf32>
    %c27 = arith.constant 27 : index
    %c0_32 = arith.constant 0 : index
    %40 = vector.load %arg10[%c27, %c0_32] : memref<49x128xf32, #tpu.memory_space<vmem>>, vector<2x128xf32>
    tpu.vector_store %arg10[%c27, %c0_32], %39 {strides = array<i32>} : memref<49x128xf32, #tpu.memory_space<vmem>>, vector<2x128xf32>,
    %cst_33 = arith.constant 0.000000e+00 : f32
    %41 = vector.broadcast %cst_33 : f32 to vector<2x128xf32>
    %c34 = arith.constant 34 : index
    %c0_34 = arith.constant 0 : index
    %42 = vector.load %arg10[%c34, %c0_34] : memref<49x128xf32, #tpu.memory_space<vmem>>, vector<2x128xf32>
    tpu.vector_store %arg10[%c34, %c0_34], %41 {strides = array<i32>} : memref<49x128xf32, #tpu.memory_space<vmem>>, vector<2x128xf32>,
    %cst_35 = arith.constant 0.000000e+00 : f32
    %43 = vector.broadcast %cst_35 : f32 to vector<8x128xf32>
    %c41 = arith.constant 41 : index
    %c0_36 = arith.constant 0 : index
    %44 = vector.load %arg10[%c41, %c0_36] : memref<49x128xf32, #tpu.memory_space<vmem>>, vector<8x128xf32>
    tpu.vector_store %arg10[%c41, %c0_36], %43 {strides = array<i32>} : memref<49x128xf32, #tpu.memory_space<vmem>>, vector<8x128xf32>,
    %45 = vector.extract_strided_slice %32 {offsets = [0, 0], sizes = [5, 128], strides = [1, 1]} : vector<25x128xf32> to vector<5x128xf32>
    %c8 = arith.constant 8 : index
    %c0_37 = arith.constant 0 : index
    %46 = vector.load %arg10[%c8, %c0_37] : memref<49x128xf32, #tpu.memory_space<vmem>>, vector<5x128xf32>
    tpu.vector_store %arg10[%c8, %c0_37], %45 {strides = array<i32>} : memref<49x128xf32, #tpu.memory_space<vmem>>, vector<5x128xf32>,
    %47 = vector.extract_strided_slice %32 {offsets = [5, 0], sizes = [5, 128], strides = [1, 1]} : vector<25x128xf32> to vector<5x128xf32>
    %c15 = arith.constant 15 : index
    %c0_38 = arith.constant 0 : index
    %48 = vector.load %arg10[%c15, %c0_38] : memref<49x128xf32, #tpu.memory_space<vmem>>, vector<5x128xf32>
    tpu.vector_store %arg10[%c15, %c0_38], %47 {strides = array<i32>} : memref<49x128xf32, #tpu.memory_space<vmem>>, vector<5x128xf32>,
    %49 = vector.extract_strided_slice %32 {offsets = [10, 0], sizes = [5, 128], strides = [1, 1]} : vector<25x128xf32> to vector<5x128xf32>
    %c22 = arith.constant 22 : index
    %c0_39 = arith.constant 0 : index
    %50 = vector.load %arg10[%c22, %c0_39] : memref<49x128xf32, #tpu.memory_space<vmem>>, vector<5x128xf32>
    tpu.vector_store %arg10[%c22, %c0_39], %49 {strides = array<i32>} : memref<49x128xf32, #tpu.memory_space<vmem>>, vector<5x128xf32>,
    %51 = vector.extract_strided_slice %32 {offsets = [15, 0], sizes = [5, 128], strides = [1, 1]} : vector<25x128xf32> to vector<5x128xf32>
    %c29 = arith.constant 29 : index
    %c0_40 = arith.constant 0 : index
    %52 = vector.load %arg10[%c29, %c0_40] : memref<49x128xf32, #tpu.memory_space<vmem>>, vector<5x128xf32>
    tpu.vector_store %arg10[%c29, %c0_40], %51 {strides = array<i32>} : memref<49x128xf32, #tpu.memory_space<vmem>>, vector<5x128xf32>,
    %53 = vector.extract_strided_slice %32 {offsets = [20, 0], sizes = [5, 128], strides = [1, 1]} : vector<25x128xf32> to vector<5x128xf32>
    %c36 = arith.constant 36 : index
    %c0_41 = arith.constant 0 : index
    %54 = vector.load %arg10[%c36, %c0_41] : memref<49x128xf32, #tpu.memory_space<vmem>>, vector<5x128xf32>
    tpu.vector_store %arg10[%c36, %c0_41], %53 {strides = array<i32>} : memref<49x128xf32, #tpu.memory_space<vmem>>, vector<5x128xf32>,
    %c0_42 = arith.constant 0 : index
    %c0_43 = arith.constant 0 : index
    %55 = vector.load %arg10[%c0_42, %c0_43] : memref<49x128xf32, #tpu.memory_space<vmem>>, vector<49x128xf32>
    %c0_44 = arith.constant 0 : index
    %c0_45 = arith.constant 0 : index
    %56 = vector.load %arg8[%c0_44, %c0_45] : memref<128x288xf32, #tpu.memory_space<vmem>>, vector<128x288xf32>
    %cst_46 = arith.constant dense<0.000000e+00> : vector<49x288xf32>
    %57 = tpu.matmul %55, %56, %cst_46 {dimension_numbers = #tpu.dot_dimension_numbers<[1], [0], [0], [1], [0, 0, 1, 1], [], []>} : vector<49x128xf32>, vector<128x288xf32>, vector<49x288xf32> -> vector<49x288xf32>
    %58 = vector.extract_strided_slice %57 {offsets = [0, 0], sizes = [5, 32], strides = [1, 1]} : vector<49x288xf32> to vector<5x32xf32>
    %59 = vector.extract_strided_slice %57 {offsets = [1, 32], sizes = [5, 32], strides = [1, 1]} : vector<49x288xf32> to vector<5x32xf32>
    %60 = arith.addf %58, %59 : vector<5x32xf32>
    %61 = vector.extract_strided_slice %57 {offsets = [2, 64], sizes = [5, 32], strides = [1, 1]} : vector<49x288xf32> to vector<5x32xf32>
    %62 = arith.addf %60, %61 : vector<5x32xf32>
    %63 = vector.extract_strided_slice %57 {offsets = [7, 96], sizes = [5, 32], strides = [1, 1]} : vector<49x288xf32> to vector<5x32xf32>
    %64 = arith.addf %62, %63 : vector<5x32xf32>
    %65 = vector.extract_strided_slice %57 {offsets = [8, 128], sizes = [5, 32], strides = [1, 1]} : vector<49x288xf32> to vector<5x32xf32>
    %66 = arith.addf %64, %65 : vector<5x32xf32>
    %67 = vector.extract_strided_slice %57 {offsets = [9, 160], sizes = [5, 32], strides = [1, 1]} : vector<49x288xf32> to vector<5x32xf32>
    %68 = arith.addf %66, %67 : vector<5x32xf32>
    %69 = vector.extract_strided_slice %57 {offsets = [14, 192], sizes = [5, 32], strides = [1, 1]} : vector<49x288xf32> to vector<5x32xf32>
    %70 = arith.addf %68, %69 : vector<5x32xf32>
    %71 = vector.extract_strided_slice %57 {offsets = [15, 224], sizes = [5, 32], strides = [1, 1]} : vector<49x288xf32> to vector<5x32xf32>
    %72 = arith.addf %70, %71 : vector<5x32xf32>
    %73 = vector.extract_strided_slice %57 {offsets = [16, 256], sizes = [5, 32], strides = [1, 1]} : vector<49x288xf32> to vector<5x32xf32>
    %74 = arith.addf %72, %73 : vector<5x32xf32>
    %c0_47 = arith.constant 0 : index
    %c0_48 = arith.constant 0 : index
    %c0_49 = arith.constant 0 : index
    %75 = vector.load %arg9[%c0_47, %c0_48, %c0_49] : memref<1x25x32xf32, #tpu.memory_space<vmem>>, vector<1x5x32xf32>
    %76 = vector.shape_cast %75 : vector<1x5x32xf32> to vector<5x32xf32>
    %77 = vector.shape_cast %74 : vector<5x32xf32> to vector<1x5x32xf32>
    tpu.vector_store %arg9[%c0_47, %c0_48, %c0_49], %77 {strides = array<i32>} : memref<1x25x32xf32, #tpu.memory_space<vmem>>, vector<1x5x32xf32>,
    %78 = vector.extract_strided_slice %57 {offsets = [7, 0], sizes = [5, 32], strides = [1, 1]} : vector<49x288xf32> to vector<5x32xf32>
    %79 = vector.extract_strided_slice %57 {offsets = [8, 32], sizes = [5, 32], strides = [1, 1]} : vector<49x288xf32> to vector<5x32xf32>
    %80 = arith.addf %78, %79 : vector<5x32xf32>
    %81 = vector.extract_strided_slice %57 {offsets = [9, 64], sizes = [5, 32], strides = [1, 1]} : vector<49x288xf32> to vector<5x32xf32>
    %82 = arith.addf %80, %81 : vector<5x32xf32>
    %83 = vector.extract_strided_slice %57 {offsets = [14, 96], sizes = [5, 32], strides = [1, 1]} : vector<49x288xf32> to vector<5x32xf32>
    %84 = arith.addf %82, %83 : vector<5x32xf32>
    %85 = vector.extract_strided_slice %57 {offsets = [15, 128], sizes = [5, 32], strides = [1, 1]} : vector<49x288xf32> to vector<5x32xf32>
    %86 = arith.addf %84, %85 : vector<5x32xf32>
    %87 = vector.extract_strided_slice %57 {offsets = [16, 160], sizes = [5, 32], strides = [1, 1]} : vector<49x288xf32> to vector<5x32xf32>
    %88 = arith.addf %86, %87 : vector<5x32xf32>
    %89 = vector.extract_strided_slice %57 {offsets = [21, 192], sizes = [5, 32], strides = [1, 1]} : vector<49x288xf32> to vector<5x32xf32>
    %90 = arith.addf %88, %89 : vector<5x32xf32>
    %91 = vector.extract_strided_slice %57 {offsets = [22, 224], sizes = [5, 32], strides = [1, 1]} : vector<49x288xf32> to vector<5x32xf32>
    %92 = arith.addf %90, %91 : vector<5x32xf32>
    %93 = vector.extract_strided_slice %57 {offsets = [23, 256], sizes = [5, 32], strides = [1, 1]} : vector<49x288xf32> to vector<5x32xf32>
    %94 = arith.addf %92, %93 : vector<5x32xf32>
    %c0_50 = arith.constant 0 : index
    %c5 = arith.constant 5 : index
    %c0_51 = arith.constant 0 : index
    %95 = vector.load %arg9[%c0_50, %c5, %c0_51] : memref<1x25x32xf32, #tpu.memory_space<vmem>>, vector<1x5x32xf32>
    %96 = vector.shape_cast %95 : vector<1x5x32xf32> to vector<5x32xf32>
    %97 = vector.shape_cast %94 : vector<5x32xf32> to vector<1x5x32xf32>
    tpu.vector_store %arg9[%c0_50, %c5, %c0_51], %97 {strides = array<i32>} : memref<1x25x32xf32, #tpu.memory_space<vmem>>, vector<1x5x32xf32>,
    %98 = vector.extract_strided_slice %57 {offsets = [14, 0], sizes = [5, 32], strides = [1, 1]} : vector<49x288xf32> to vector<5x32xf32>
    %99 = vector.extract_strided_slice %57 {offsets = [15, 32], sizes = [5, 32], strides = [1, 1]} : vector<49x288xf32> to vector<5x32xf32>
    %100 = arith.addf %98, %99 : vector<5x32xf32>
    %101 = vector.extract_strided_slice %57 {offsets = [16, 64], sizes = [5, 32], strides = [1, 1]} : vector<49x288xf32> to vector<5x32xf32>
    %102 = arith.addf %100, %101 : vector<5x32xf32>
    %103 = vector.extract_strided_slice %57 {offsets = [21, 96], sizes = [5, 32], strides = [1, 1]} : vector<49x288xf32> to vector<5x32xf32>
    %104 = arith.addf %102, %103 : vector<5x32xf32>
    %105 = vector.extract_strided_slice %57 {offsets = [22, 128], sizes = [5, 32], strides = [1, 1]} : vector<49x288xf32> to vector<5x32xf32>
    %106 = arith.addf %104, %105 : vector<5x32xf32>
    %107 = vector.extract_strided_slice %57 {offsets = [23, 160], sizes = [5, 32], strides = [1, 1]} : vector<49x288xf32> to vector<5x32xf32>
    %108 = arith.addf %106, %107 : vector<5x32xf32>
    %109 = vector.extract_strided_slice %57 {offsets = [28, 192], sizes = [5, 32], strides = [1, 1]} : vector<49x288xf32> to vector<5x32xf32>
    %110 = arith.addf %108, %109 : vector<5x32xf32>
    %111 = vector.extract_strided_slice %57 {offsets = [29, 224], sizes = [5, 32], strides = [1, 1]} : vector<49x288xf32> to vector<5x32xf32>
    %112 = arith.addf %110, %111 : vector<5x32xf32>
    %113 = vector.extract_strided_slice %57 {offsets = [30, 256], sizes = [5, 32], strides = [1, 1]} : vector<49x288xf32> to vector<5x32xf32>
    %114 = arith.addf %112, %113 : vector<5x32xf32>
    %c0_52 = arith.constant 0 : index
    %c10 = arith.constant 10 : index
    %c0_53 = arith.constant 0 : index
    %115 = vector.load %arg9[%c0_52, %c10, %c0_53] : memref<1x25x32xf32, #tpu.memory_space<vmem>>, vector<1x5x32xf32>
    %116 = vector.shape_cast %115 : vector<1x5x32xf32> to vector<5x32xf32>
    %117 = vector.shape_cast %114 : vector<5x32xf32> to vector<1x5x32xf32>
    tpu.vector_store %arg9[%c0_52, %c10, %c0_53], %117 {strides = array<i32>} : memref<1x25x32xf32, #tpu.memory_space<vmem>>, vector<1x5x32xf32>,
    %118 = vector.extract_strided_slice %57 {offsets = [21, 0], sizes = [5, 32], strides = [1, 1]} : vector<49x288xf32> to vector<5x32xf32>
    %119 = vector.extract_strided_slice %57 {offsets = [22, 32], sizes = [5, 32], strides = [1, 1]} : vector<49x288xf32> to vector<5x32xf32>
    %120 = arith.addf %118, %119 : vector<5x32xf32>
    %121 = vector.extract_strided_slice %57 {offsets = [23, 64], sizes = [5, 32], strides = [1, 1]} : vector<49x288xf32> to vector<5x32xf32>
    %122 = arith.addf %120, %121 : vector<5x32xf32>
    %123 = vector.extract_strided_slice %57 {offsets = [28, 96], sizes = [5, 32], strides = [1, 1]} : vector<49x288xf32> to vector<5x32xf32>
    %124 = arith.addf %122, %123 : vector<5x32xf32>
    %125 = vector.extract_strided_slice %57 {offsets = [29, 128], sizes = [5, 32], strides = [1, 1]} : vector<49x288xf32> to vector<5x32xf32>
    %126 = arith.addf %124, %125 : vector<5x32xf32>
    %127 = vector.extract_strided_slice %57 {offsets = [30, 160], sizes = [5, 32], strides = [1, 1]} : vector<49x288xf32> to vector<5x32xf32>
    %128 = arith.addf %126, %127 : vector<5x32xf32>
    %129 = vector.extract_strided_slice %57 {offsets = [35, 192], sizes = [5, 32], strides = [1, 1]} : vector<49x288xf32> to vector<5x32xf32>
    %130 = arith.addf %128, %129 : vector<5x32xf32>
    %131 = vector.extract_strided_slice %57 {offsets = [36, 224], sizes = [5, 32], strides = [1, 1]} : vector<49x288xf32> to vector<5x32xf32>
    %132 = arith.addf %130, %131 : vector<5x32xf32>
    %133 = vector.extract_strided_slice %57 {offsets = [37, 256], sizes = [5, 32], strides = [1, 1]} : vector<49x288xf32> to vector<5x32xf32>
    %134 = arith.addf %132, %133 : vector<5x32xf32>
    %c0_54 = arith.constant 0 : index
    %c15_55 = arith.constant 15 : index
    %c0_56 = arith.constant 0 : index
    %135 = vector.load %arg9[%c0_54, %c15_55, %c0_56] : memref<1x25x32xf32, #tpu.memory_space<vmem>>, vector<1x5x32xf32>
    %136 = vector.shape_cast %135 : vector<1x5x32xf32> to vector<5x32xf32>
    %137 = vector.shape_cast %134 : vector<5x32xf32> to vector<1x5x32xf32>
    tpu.vector_store %arg9[%c0_54, %c15_55, %c0_56], %137 {strides = array<i32>} : memref<1x25x32xf32, #tpu.memory_space<vmem>>, vector<1x5x32xf32>,
    %138 = vector.extract_strided_slice %57 {offsets = [28, 0], sizes = [5, 32], strides = [1, 1]} : vector<49x288xf32> to vector<5x32xf32>
    %139 = vector.extract_strided_slice %57 {offsets = [29, 32], sizes = [5, 32], strides = [1, 1]} : vector<49x288xf32> to vector<5x32xf32>
    %140 = arith.addf %138, %139 : vector<5x32xf32>
    %141 = vector.extract_strided_slice %57 {offsets = [30, 64], sizes = [5, 32], strides = [1, 1]} : vector<49x288xf32> to vector<5x32xf32>
    %142 = arith.addf %140, %141 : vector<5x32xf32>
    %143 = vector.extract_strided_slice %57 {offsets = [35, 96], sizes = [5, 32], strides = [1, 1]} : vector<49x288xf32> to vector<5x32xf32>
    %144 = arith.addf %142, %143 : vector<5x32xf32>
    %145 = vector.extract_strided_slice %57 {offsets = [36, 128], sizes = [5, 32], strides = [1, 1]} : vector<49x288xf32> to vector<5x32xf32>
    %146 = arith.addf %144, %145 : vector<5x32xf32>
    %147 = vector.extract_strided_slice %57 {offsets = [37, 160], sizes = [5, 32], strides = [1, 1]} : vector<49x288xf32> to vector<5x32xf32>
    %148 = arith.addf %146, %147 : vector<5x32xf32>
    %149 = vector.extract_strided_slice %57 {offsets = [42, 192], sizes = [5, 32], strides = [1, 1]} : vector<49x288xf32> to vector<5x32xf32>
    %150 = arith.addf %148, %149 : vector<5x32xf32>
    %151 = vector.extract_strided_slice %57 {offsets = [43, 224], sizes = [5, 32], strides = [1, 1]} : vector<49x288xf32> to vector<5x32xf32>
    %152 = arith.addf %150, %151 : vector<5x32xf32>
    %153 = vector.extract_strided_slice %57 {offsets = [44, 256], sizes = [5, 32], strides = [1, 1]} : vector<49x288xf32> to vector<5x32xf32>
    %154 = arith.addf %152, %153 : vector<5x32xf32>
    %c0_57 = arith.constant 0 : index
    %c20_58 = arith.constant 20 : index
    %c0_59 = arith.constant 0 : index
    %155 = vector.load %arg9[%c0_57, %c20_58, %c0_59] : memref<1x25x32xf32, #tpu.memory_space<vmem>>, vector<1x5x32xf32>
    %156 = vector.shape_cast %155 : vector<1x5x32xf32> to vector<5x32xf32>
    %157 = vector.shape_cast %154 : vector<5x32xf32> to vector<1x5x32xf32>
    tpu.vector_store %arg9[%c0_57, %c20_58, %c0_59], %157 {strides = array<i32>} : memref<1x25x32xf32, #tpu.memory_space<vmem>>, vector<1x5x32xf32>,
    return
  }
  func.func @transform_0(%arg0: i32) -> (i32, i32, i32) {
    %c0_i32 = arith.constant 0 : i32
    %c0_i32_0 = arith.constant 0 : i32
    %c0_i32_1 = arith.constant 0 : i32
    return %arg0, %c0_i32, %c0_i32_0 : i32, i32, i32
  }
  func.func @transform_1(%arg0: i32) -> (i32, i32, i32) {
    %c0_i32 = arith.constant 0 : i32
    %c0_i32_0 = arith.constant 0 : i32
    %c0_i32_1 = arith.constant 0 : i32
    return %arg0, %c0_i32, %c0_i32_0 : i32, i32, i32
  }
  func.func @transform_2(%arg0: i32) -> (i32, i32) {
    %c0_i32 = arith.constant 0 : i32
    %c0_i32_0 = arith.constant 0 : i32
    %c0_i32_1 = arith.constant 0 : i32
    return %c0_i32, %c0_i32_0 : i32, i32
  }
  func.func @transform_3(%arg0: i32) -> (i32, i32) {
    %c0_i32 = arith.constant 0 : i32
    %c0_i32_0 = arith.constant 0 : i32
    %c0_i32_1 = arith.constant 0 : i32
    return %c0_i32, %c0_i32_0 : i32, i32
  }
  func.func @transform_4(%arg0: i32) -> (i32, i32) {
    %c0_i32 = arith.constant 0 : i32
    %c0_i32_0 = arith.constant 0 : i32
    %c0_i32_1 = arith.constant 0 : i32
    return %c0_i32, %c0_i32_0 : i32, i32
  }
  func.func @transform_5(%arg0: i32) -> (i32, i32) {
    %c0_i32 = arith.constant 0 : i32
    %c0_i32_0 = arith.constant 0 : i32
    %c0_i32_1 = arith.constant 0 : i32
    return %c0_i32, %c0_i32_0 : i32, i32
  }
  func.func @transform_6(%arg0: i32) -> (i32, i32) {
    %c0_i32 = arith.constant 0 : i32
    %c0_i32_0 = arith.constant 0 : i32
    %c0_i32_1 = arith.constant 0 : i32
    return %c0_i32, %c0_i32_0 : i32, i32
  }
  func.func @transform_7(%arg0: i32) -> (i32, i32) {
    %c0_i32 = arith.constant 0 : i32
    %c0_i32_0 = arith.constant 0 : i32
    %c0_i32_1 = arith.constant 0 : i32
    return %c0_i32, %c0_i32_0 : i32, i32
  }
  func.func @transform_8(%arg0: i32) -> (i32, i32, i32) {
    %c0_i32 = arith.constant 0 : i32
    %c0_i32_0 = arith.constant 0 : i32
    %c0_i32_1 = arith.constant 0 : i32
    return %arg0, %c0_i32, %c0_i32_0 : i32, i32, i32
  }
}

module attributes {stable_mosaic.version = 11 : i64} {
  func.func @_fused_matmul_kernel(%arg0: i32, %arg1: memref<1x25x64xf32, #tpu.memory_space<vmem>>, %arg2: memref<1x25x32xf32, #tpu.memory_space<vmem>>, %arg3: memref<1x25x32xf32, #tpu.memory_space<vmem>>, %arg4: memref<128x64xf32, #tpu.memory_space<vmem>>, %arg5: memref<1x128xf32, #tpu.memory_space<vmem>>, %arg6: memref<1x128xf32, #tpu.memory_space<vmem>>, %arg7: memref<1x64xf32, #tpu.memory_space<vmem>>, %arg8: memref<1x64xf32, #tpu.memory_space<vmem>>, %arg9: memref<1x25x64xf32, #tpu.memory_space<vmem>>) attributes {dimension_semantics = [#tpu.dimension_semantics<parallel>], iteration_bounds = array<i64: 2>, scalar_prefetch = 0 : i64, scratch_operands = 0 : i64, tpu.core_type = #tpu.core_type<tc>, window_params = [{transform_indices = @transform_0, window_bounds = array<i64: 1, 25, 64>}, {transform_indices = @transform_1, window_bounds = array<i64: 1, 25, 32>}, {transform_indices = @transform_2, window_bounds = array<i64: 1, 25, 32>}, {pipeline_mode = #tpu.pipeline_mode<synchronous>, transform_indices = @transform_3, window_bounds = array<i64: 128, 64>}, {pipeline_mode = #tpu.pipeline_mode<synchronous>, transform_indices = @transform_4, window_bounds = array<i64: 1, 128>}, {pipeline_mode = #tpu.pipeline_mode<synchronous>, transform_indices = @transform_5, window_bounds = array<i64: 1, 128>}, {pipeline_mode = #tpu.pipeline_mode<synchronous>, transform_indices = @transform_6, window_bounds = array<i64: 1, 64>}, {pipeline_mode = #tpu.pipeline_mode<synchronous>, transform_indices = @transform_7, window_bounds = array<i64: 1, 64>}, {transform_indices = @transform_8, window_bounds = array<i64: 1, 25, 64>}]} {
    %c0 = arith.constant 0 : index
    %c0_0 = arith.constant 0 : index
    %c0_1 = arith.constant 0 : index
    %0 = vector.load %arg1[%c0, %c0_0, %c0_1] : memref<1x25x64xf32, #tpu.memory_space<vmem>>, vector<1x25x64xf32>
    %1 = vector.shape_cast %0 : vector<1x25x64xf32> to vector<25x64xf32>
    %c0_2 = arith.constant 0 : index
    %c0_3 = arith.constant 0 : index
    %2 = vector.load %arg5[%c0_2, %c0_3] : memref<1x128xf32, #tpu.memory_space<vmem>>, vector<1x64xf32>
    %3 = vector.broadcast %2 : vector<1x64xf32> to vector<25x64xf32>
    %4 = arith.mulf %1, %3 : vector<25x64xf32>
    %c0_4 = arith.constant 0 : index
    %c0_5 = arith.constant 0 : index
    %5 = vector.load %arg6[%c0_4, %c0_5] : memref<1x128xf32, #tpu.memory_space<vmem>>, vector<1x64xf32>
    %6 = vector.broadcast %5 : vector<1x64xf32> to vector<25x64xf32>
    %7 = arith.addf %4, %6 : vector<25x64xf32>
    %cst = arith.constant 0.000000e+00 : f32
    %8 = vector.broadcast %cst : f32 to vector<25x64xf32>
    %9 = arith.maximumf %7, %8 : vector<25x64xf32>
    %c0_6 = arith.constant 0 : index
    %c0_7 = arith.constant 0 : index
    %10 = vector.load %arg4[%c0_6, %c0_7] : memref<128x64xf32, #tpu.memory_space<vmem>>, vector<64x64xf32>
    %cst_8 = arith.constant dense<0.000000e+00> : vector<25x64xf32>
    %11 = tpu.matmul %9, %10, %cst_8 {dimension_numbers = #tpu.dot_dimension_numbers<[1], [0], [0], [1], [0, 0, 1, 1], [], []>} : vector<25x64xf32>, vector<64x64xf32>, vector<25x64xf32> -> vector<25x64xf32>
    %c0_9 = arith.constant 0 : index
    %c0_10 = arith.constant 0 : index
    %c0_11 = arith.constant 0 : index
    %12 = vector.load %arg2[%c0_9, %c0_10, %c0_11] : memref<1x25x32xf32, #tpu.memory_space<vmem>>, vector<1x25x32xf32>
    %13 = vector.shape_cast %12 : vector<1x25x32xf32> to vector<25x32xf32>
    %c0_12 = arith.constant 0 : index
    %c64 = arith.constant 64 : index
    %14 = vector.load %arg5[%c0_12, %c64] : memref<1x128xf32, #tpu.memory_space<vmem>>, vector<1x32xf32>
    %15 = vector.broadcast %14 : vector<1x32xf32> to vector<25x32xf32>
    %16 = arith.mulf %13, %15 : vector<25x32xf32>
    %c0_13 = arith.constant 0 : index
    %c64_14 = arith.constant 64 : index
    %17 = vector.load %arg6[%c0_13, %c64_14] : memref<1x128xf32, #tpu.memory_space<vmem>>, vector<1x32xf32>
    %18 = vector.broadcast %17 : vector<1x32xf32> to vector<25x32xf32>
    %19 = arith.addf %16, %18 : vector<25x32xf32>
    %cst_15 = arith.constant 0.000000e+00 : f32
    %20 = vector.broadcast %cst_15 : f32 to vector<25x32xf32>
    %21 = arith.maximumf %19, %20 : vector<25x32xf32>
    %c64_16 = arith.constant 64 : index
    %c0_17 = arith.constant 0 : index
    %22 = vector.load %arg4[%c64_16, %c0_17] : memref<128x64xf32, #tpu.memory_space<vmem>>, vector<32x64xf32>
    %cst_18 = arith.constant dense<0.000000e+00> : vector<25x64xf32>
    %23 = tpu.matmul %21, %22, %cst_18 {dimension_numbers = #tpu.dot_dimension_numbers<[1], [0], [0], [1], [0, 0, 1, 1], [], []>} : vector<25x32xf32>, vector<32x64xf32>, vector<25x64xf32> -> vector<25x64xf32>
    %24 = arith.addf %11, %23 : vector<25x64xf32>
    %c0_19 = arith.constant 0 : index
    %c0_20 = arith.constant 0 : index
    %c0_21 = arith.constant 0 : index
    %25 = vector.load %arg3[%c0_19, %c0_20, %c0_21] : memref<1x25x32xf32, #tpu.memory_space<vmem>>, vector<1x25x32xf32>
    %26 = vector.shape_cast %25 : vector<1x25x32xf32> to vector<25x32xf32>
    %c0_22 = arith.constant 0 : index
    %c96 = arith.constant 96 : index
    %27 = vector.load %arg5[%c0_22, %c96] : memref<1x128xf32, #tpu.memory_space<vmem>>, vector<1x32xf32>
    %28 = vector.broadcast %27 : vector<1x32xf32> to vector<25x32xf32>
    %29 = arith.mulf %26, %28 : vector<25x32xf32>
    %c0_23 = arith.constant 0 : index
    %c96_24 = arith.constant 96 : index
    %30 = vector.load %arg6[%c0_23, %c96_24] : memref<1x128xf32, #tpu.memory_space<vmem>>, vector<1x32xf32>
    %31 = vector.broadcast %30 : vector<1x32xf32> to vector<25x32xf32>
    %32 = arith.addf %29, %31 : vector<25x32xf32>
    %cst_25 = arith.constant 0.000000e+00 : f32
    %33 = vector.broadcast %cst_25 : f32 to vector<25x32xf32>
    %34 = arith.maximumf %32, %33 : vector<25x32xf32>
    %c96_26 = arith.constant 96 : index
    %c0_27 = arith.constant 0 : index
    %35 = vector.load %arg4[%c96_26, %c0_27] : memref<128x64xf32, #tpu.memory_space<vmem>>, vector<32x64xf32>
    %cst_28 = arith.constant dense<0.000000e+00> : vector<25x64xf32>
    %36 = tpu.matmul %34, %35, %cst_28 {dimension_numbers = #tpu.dot_dimension_numbers<[1], [0], [0], [1], [0, 0, 1, 1], [], []>} : vector<25x32xf32>, vector<32x64xf32>, vector<25x64xf32> -> vector<25x64xf32>
    %37 = arith.addf %24, %36 : vector<25x64xf32>
    %c0_29 = arith.constant 0 : index
    %c0_30 = arith.constant 0 : index
    %38 = vector.load %arg7[%c0_29, %c0_30] : memref<1x64xf32, #tpu.memory_space<vmem>>, vector<1x64xf32>
    %39 = vector.broadcast %38 : vector<1x64xf32> to vector<25x64xf32>
    %40 = arith.mulf %37, %39 : vector<25x64xf32>
    %c0_31 = arith.constant 0 : index
    %c0_32 = arith.constant 0 : index
    %41 = vector.load %arg8[%c0_31, %c0_32] : memref<1x64xf32, #tpu.memory_space<vmem>>, vector<1x64xf32>
    %42 = vector.broadcast %41 : vector<1x64xf32> to vector<25x64xf32>
    %43 = arith.addf %40, %42 : vector<25x64xf32>
    %c0_33 = arith.constant 0 : index
    %c0_34 = arith.constant 0 : index
    %c0_35 = arith.constant 0 : index
    %44 = vector.load %arg9[%c0_33, %c0_34, %c0_35] : memref<1x25x64xf32, #tpu.memory_space<vmem>>, vector<1x25x64xf32>
    %45 = vector.shape_cast %44 : vector<1x25x64xf32> to vector<25x64xf32>
    %46 = vector.shape_cast %43 : vector<25x64xf32> to vector<1x25x64xf32>
    tpu.vector_store %arg9[%c0_33, %c0_34, %c0_35], %46 {strides = array<i32>} : memref<1x25x64xf32, #tpu.memory_space<vmem>>, vector<1x25x64xf32>,
    return
  }
  func.func @transform_0(%arg0: i32) -> (i32, i32, i32) {
    %c0_i32 = arith.constant 0 : i32
    %c0_i32_0 = arith.constant 0 : i32
    %c0_i32_1 = arith.constant 0 : i32
    return %arg0, %c0_i32, %c0_i32_0 : i32, i32, i32
  }
  func.func @transform_1(%arg0: i32) -> (i32, i32, i32) {
    %c0_i32 = arith.constant 0 : i32
    %c0_i32_0 = arith.constant 0 : i32
    %c0_i32_1 = arith.constant 0 : i32
    return %arg0, %c0_i32, %c0_i32_0 : i32, i32, i32
  }
  func.func @transform_2(%arg0: i32) -> (i32, i32, i32) {
    %c0_i32 = arith.constant 0 : i32
    %c0_i32_0 = arith.constant 0 : i32
    %c0_i32_1 = arith.constant 0 : i32
    return %arg0, %c0_i32, %c0_i32_0 : i32, i32, i32
  }
  func.func @transform_3(%arg0: i32) -> (i32, i32) {
    %c0_i32 = arith.constant 0 : i32
    %c0_i32_0 = arith.constant 0 : i32
    %c0_i32_1 = arith.constant 0 : i32
    return %c0_i32, %c0_i32_0 : i32, i32
  }
  func.func @transform_4(%arg0: i32) -> (i32, i32) {
    %c0_i32 = arith.constant 0 : i32
    %c0_i32_0 = arith.constant 0 : i32
    %c0_i32_1 = arith.constant 0 : i32
    return %c0_i32, %c0_i32_0 : i32, i32
  }
  func.func @transform_5(%arg0: i32) -> (i32, i32) {
    %c0_i32 = arith.constant 0 : i32
    %c0_i32_0 = arith.constant 0 : i32
    %c0_i32_1 = arith.constant 0 : i32
    return %c0_i32, %c0_i32_0 : i32, i32
  }
  func.func @transform_6(%arg0: i32) -> (i32, i32) {
    %c0_i32 = arith.constant 0 : i32
    %c0_i32_0 = arith.constant 0 : i32
    %c0_i32_1 = arith.constant 0 : i32
    return %c0_i32, %c0_i32_0 : i32, i32
  }
  func.func @transform_7(%arg0: i32) -> (i32, i32) {
    %c0_i32 = arith.constant 0 : i32
    %c0_i32_0 = arith.constant 0 : i32
    %c0_i32_1 = arith.constant 0 : i32
    return %c0_i32, %c0_i32_0 : i32, i32
  }
  func.func @transform_8(%arg0: i32) -> (i32, i32, i32) {
    %c0_i32 = arith.constant 0 : i32
    %c0_i32_0 = arith.constant 0 : i32
    %c0_i32_1 = arith.constant 0 : i32
    return %arg0, %c0_i32, %c0_i32_0 : i32, i32, i32
  }
}

module attributes {stable_mosaic.version = 11 : i64} {
  func.func @_maxfilter2x2_kernel(%arg0: i32, %arg1: memref<1x5x5x64xf32, #tpu.memory_space<vmem>>, %arg2: memref<1x4x6x64xf32, #tpu.memory_space<vmem>>, %arg3: memref<5x7x64xf32, #tpu.memory_space<vmem>>) attributes {dimension_semantics = [#tpu.dimension_semantics<parallel>], iteration_bounds = array<i64: 2>, scalar_prefetch = 0 : i64, scratch_operands = 1 : i64, tpu.core_type = #tpu.core_type<tc>, window_params = [{transform_indices = @transform_0, window_bounds = array<i64: 1, 5, 5, 64>}, {transform_indices = @transform_1, window_bounds = array<i64: 1, 4, 6, 64>}]} {
    %cst = arith.constant 0xFF800000 : f32
    %0 = vector.broadcast %cst : f32 to vector<5x1x64xf32>
    %c0 = arith.constant 0 : index
    %c0_0 = arith.constant 0 : index
    %c0_1 = arith.constant 0 : index
    %1 = vector.load %arg3[%c0, %c0_0, %c0_1] : memref<5x7x64xf32, #tpu.memory_space<vmem>>, vector<5x1x64xf32>
    tpu.vector_store %arg3[%c0, %c0_0, %c0_1], %0 {strides = array<i32>} : memref<5x7x64xf32, #tpu.memory_space<vmem>>, vector<5x1x64xf32>,
    %c0_2 = arith.constant 0 : index
    %c6 = arith.constant 6 : index
    %c0_3 = arith.constant 0 : index
    %2 = vector.load %arg3[%c0_2, %c6, %c0_3] : memref<5x7x64xf32, #tpu.memory_space<vmem>>, vector<5x1x64xf32>
    tpu.vector_store %arg3[%c0_2, %c6, %c0_3], %0 {strides = array<i32>} : memref<5x7x64xf32, #tpu.memory_space<vmem>>, vector<5x1x64xf32>,
    %c0_4 = arith.constant 0 : index
    %c0_5 = arith.constant 0 : index
    %c0_6 = arith.constant 0 : index
    %c0_7 = arith.constant 0 : index
    %3 = vector.load %arg1[%c0_4, %c0_5, %c0_6, %c0_7] : memref<1x5x5x64xf32, #tpu.memory_space<vmem>>, vector<1x5x5x64xf32>
    %4 = vector.shape_cast %3 : vector<1x5x5x64xf32> to vector<5x5x64xf32>
    %c0_8 = arith.constant 0 : index
    %c1 = arith.constant 1 : index
    %c0_9 = arith.constant 0 : index
    %5 = vector.load %arg3[%c0_8, %c1, %c0_9] : memref<5x7x64xf32, #tpu.memory_space<vmem>>, vector<5x5x64xf32>
    tpu.vector_store %arg3[%c0_8, %c1, %c0_9], %4 {strides = array<i32>} : memref<5x7x64xf32, #tpu.memory_space<vmem>>, vector<5x5x64xf32>,
    %c0_10 = arith.constant 0 : index
    %c0_11 = arith.constant 0 : index
    %c0_12 = arith.constant 0 : index
    %6 = vector.load %arg3[%c0_10, %c0_11, %c0_12] : memref<5x7x64xf32, #tpu.memory_space<vmem>>, vector<5x7x64xf32>
    %7 = vector.extract_strided_slice %6 {offsets = [0, 0, 0], sizes = [4, 6, 64], strides = [1, 1, 1]} : vector<5x7x64xf32> to vector<4x6x64xf32>
    %8 = vector.extract_strided_slice %6 {offsets = [0, 1, 0], sizes = [4, 6, 64], strides = [1, 1, 1]} : vector<5x7x64xf32> to vector<4x6x64xf32>
    %9 = arith.maximumf %7, %8 : vector<4x6x64xf32>
    %10 = vector.extract_strided_slice %6 {offsets = [1, 0, 0], sizes = [4, 6, 64], strides = [1, 1, 1]} : vector<5x7x64xf32> to vector<4x6x64xf32>
    %11 = vector.extract_strided_slice %6 {offsets = [1, 1, 0], sizes = [4, 6, 64], strides = [1, 1, 1]} : vector<5x7x64xf32> to vector<4x6x64xf32>
    %12 = arith.maximumf %10, %11 : vector<4x6x64xf32>
    %13 = arith.maximumf %9, %12 : vector<4x6x64xf32>
    %c0_13 = arith.constant 0 : index
    %c0_14 = arith.constant 0 : index
    %c0_15 = arith.constant 0 : index
    %c0_16 = arith.constant 0 : index
    %14 = vector.load %arg2[%c0_13, %c0_14, %c0_15, %c0_16] : memref<1x4x6x64xf32, #tpu.memory_space<vmem>>, vector<1x4x6x64xf32>
    %15 = vector.shape_cast %14 : vector<1x4x6x64xf32> to vector<4x6x64xf32>
    %16 = vector.shape_cast %13 : vector<4x6x64xf32> to vector<1x4x6x64xf32>
    tpu.vector_store %arg2[%c0_13, %c0_14, %c0_15, %c0_16], %16 {strides = array<i32>} : memref<1x4x6x64xf32, #tpu.memory_space<vmem>>, vector<1x4x6x64xf32>,
    return
  }
  func.func @transform_0(%arg0: i32) -> (i32, i32, i32, i32) {
    %c0_i32 = arith.constant 0 : i32
    %c0_i32_0 = arith.constant 0 : i32
    %c0_i32_1 = arith.constant 0 : i32
    %c0_i32_2 = arith.constant 0 : i32
    return %arg0, %c0_i32, %c0_i32_0, %c0_i32_1 : i32, i32, i32, i32
  }
  func.func @transform_1(%arg0: i32) -> (i32, i32, i32, i32) {
    %c0_i32 = arith.constant 0 : i32
    %c0_i32_0 = arith.constant 0 : i32
    %c0_i32_1 = arith.constant 0 : i32
    %c0_i32_2 = arith.constant 0 : i32
    return %arg0, %c0_i32, %c0_i32_0, %c0_i32_1 : i32, i32, i32, i32
  }
}

module attributes {stable_mosaic.version = 11 : i64} {
  func.func @_dense_layer_kernel(%arg0: i32, %arg1: memref<1x12x64xf32, #tpu.memory_space<vmem>>, %arg2: memref<64x128xf32, #tpu.memory_space<vmem>>, %arg3: memref<1x64xf32, #tpu.memory_space<vmem>>, %arg4: memref<1x64xf32, #tpu.memory_space<vmem>>, %arg5: memref<1x128xf32, #tpu.memory_space<vmem>>, %arg6: memref<1x128xf32, #tpu.memory_space<vmem>>, %arg7: memref<128x288xf32, #tpu.memory_space<vmem>>, %arg8: memref<1x12x32xf32, #tpu.memory_space<vmem>>, %arg9: memref<32x128xf32, #tpu.memory_space<vmem>>) attributes {dimension_semantics = [#tpu.dimension_semantics<parallel>], iteration_bounds = array<i64: 2>, scalar_prefetch = 0 : i64, scratch_operands = 1 : i64, tpu.core_type = #tpu.core_type<tc>, window_params = [{transform_indices = @transform_0, window_bounds = array<i64: 1, 12, 64>}, {pipeline_mode = #tpu.pipeline_mode<synchronous>, transform_indices = @transform_1, window_bounds = array<i64: 64, 128>}, {pipeline_mode = #tpu.pipeline_mode<synchronous>, transform_indices = @transform_2, window_bounds = array<i64: 1, 64>}, {pipeline_mode = #tpu.pipeline_mode<synchronous>, transform_indices = @transform_3, window_bounds = array<i64: 1, 64>}, {pipeline_mode = #tpu.pipeline_mode<synchronous>, transform_indices = @transform_4, window_bounds = array<i64: 1, 128>}, {pipeline_mode = #tpu.pipeline_mode<synchronous>, transform_indices = @transform_5, window_bounds = array<i64: 1, 128>}, {pipeline_mode = #tpu.pipeline_mode<synchronous>, transform_indices = @transform_6, window_bounds = array<i64: 128, 288>}, {transform_indices = @transform_7, window_bounds = array<i64: 1, 12, 32>}]} {
    %c0 = arith.constant 0 : index
    %c0_0 = arith.constant 0 : index
    %c0_1 = arith.constant 0 : index
    %0 = vector.load %arg1[%c0, %c0_0, %c0_1] : memref<1x12x64xf32, #tpu.memory_space<vmem>>, vector<1x12x64xf32>
    %1 = vector.shape_cast %0 : vector<1x12x64xf32> to vector<12x64xf32>
    %c0_2 = arith.constant 0 : index
    %c0_3 = arith.constant 0 : index
    %2 = vector.load %arg3[%c0_2, %c0_3] : memref<1x64xf32, #tpu.memory_space<vmem>>, vector<1x64xf32>
    %3 = vector.broadcast %2 : vector<1x64xf32> to vector<12x64xf32>
    %4 = arith.mulf %1, %3 : vector<12x64xf32>
    %c0_4 = arith.constant 0 : index
    %c0_5 = arith.constant 0 : index
    %5 = vector.load %arg4[%c0_4, %c0_5] : memref<1x64xf32, #tpu.memory_space<vmem>>, vector<1x64xf32>
    %6 = vector.broadcast %5 : vector<1x64xf32> to vector<12x64xf32>
    %7 = arith.addf %4, %6 : vector<12x64xf32>
    %cst = arith.constant 0.000000e+00 : f32
    %8 = vector.broadcast %cst : f32 to vector<12x64xf32>
    %9 = arith.maximumf %7, %8 : vector<12x64xf32>
    %c0_6 = arith.constant 0 : index
    %c0_7 = arith.constant 0 : index
    %10 = vector.load %arg2[%c0_6, %c0_7] : memref<64x128xf32, #tpu.memory_space<vmem>>, vector<64x128xf32>
    %cst_8 = arith.constant dense<0.000000e+00> : vector<12x128xf32>
    %11 = tpu.matmul %9, %10, %cst_8 {dimension_numbers = #tpu.dot_dimension_numbers<[1], [0], [0], [1], [0, 0, 1, 1], [], []>} : vector<12x64xf32>, vector<64x128xf32>, vector<12x128xf32> -> vector<12x128xf32>
    %c0_9 = arith.constant 0 : index
    %c0_10 = arith.constant 0 : index
    %12 = vector.load %arg5[%c0_9, %c0_10] : memref<1x128xf32, #tpu.memory_space<vmem>>, vector<1x128xf32>
    %13 = vector.broadcast %12 : vector<1x128xf32> to vector<12x128xf32>
    %14 = arith.mulf %11, %13 : vector<12x128xf32>
    %c0_11 = arith.constant 0 : index
    %c0_12 = arith.constant 0 : index
    %15 = vector.load %arg6[%c0_11, %c0_12] : memref<1x128xf32, #tpu.memory_space<vmem>>, vector<1x128xf32>
    %16 = vector.broadcast %15 : vector<1x128xf32> to vector<12x128xf32>
    %17 = arith.addf %14, %16 : vector<12x128xf32>
    %cst_13 = arith.constant 0.000000e+00 : f32
    %18 = vector.broadcast %cst_13 : f32 to vector<12x128xf32>
    %19 = arith.maximumf %17, %18 : vector<12x128xf32>
    %cst_14 = arith.constant 0.000000e+00 : f32
    %20 = vector.broadcast %cst_14 : f32 to vector<9x128xf32>
    %c0_15 = arith.constant 0 : index
    %c0_16 = arith.constant 0 : index
    %21 = vector.load %arg9[%c0_15, %c0_16] : memref<32x128xf32, #tpu.memory_space<vmem>>, vector<9x128xf32>
    tpu.vector_store %arg9[%c0_15, %c0_16], %20 {strides = array<i32>} : memref<32x128xf32, #tpu.memory_space<vmem>>, vector<9x128xf32>,
    %cst_17 = arith.constant 0.000000e+00 : f32
    %22 = vector.broadcast %cst_17 : f32 to vector<2x128xf32>
    %c15 = arith.constant 15 : index
    %c0_18 = arith.constant 0 : index
    %23 = vector.load %arg9[%c15, %c0_18] : memref<32x128xf32, #tpu.memory_space<vmem>>, vector<2x128xf32>
    tpu.vector_store %arg9[%c15, %c0_18], %22 {strides = array<i32>} : memref<32x128xf32, #tpu.memory_space<vmem>>, vector<2x128xf32>,
    %cst_19 = arith.constant 0.000000e+00 : f32
    %24 = vector.broadcast %cst_19 : f32 to vector<9x128xf32>
    %c23 = arith.constant 23 : index
    %c0_20 = arith.constant 0 : index
    %25 = vector.load %arg9[%c23, %c0_20] : memref<32x128xf32, #tpu.memory_space<vmem>>, vector<9x128xf32>
    tpu.vector_store %arg9[%c23, %c0_20], %24 {strides = array<i32>} : memref<32x128xf32, #tpu.memory_space<vmem>>, vector<9x128xf32>,
    %26 = vector.extract_strided_slice %19 {offsets = [0, 0], sizes = [6, 128], strides = [1, 1]} : vector<12x128xf32> to vector<6x128xf32>
    %c9 = arith.constant 9 : index
    %c0_21 = arith.constant 0 : index
    %27 = vector.load %arg9[%c9, %c0_21] : memref<32x128xf32, #tpu.memory_space<vmem>>, vector<6x128xf32>
    tpu.vector_store %arg9[%c9, %c0_21], %26 {strides = array<i32>} : memref<32x128xf32, #tpu.memory_space<vmem>>, vector<6x128xf32>,
    %28 = vector.extract_strided_slice %19 {offsets = [6, 0], sizes = [6, 128], strides = [1, 1]} : vector<12x128xf32> to vector<6x128xf32>
    %c17 = arith.constant 17 : index
    %c0_22 = arith.constant 0 : index
    %29 = vector.load %arg9[%c17, %c0_22] : memref<32x128xf32, #tpu.memory_space<vmem>>, vector<6x128xf32>
    tpu.vector_store %arg9[%c17, %c0_22], %28 {strides = array<i32>} : memref<32x128xf32, #tpu.memory_space<vmem>>, vector<6x128xf32>,
    %c0_23 = arith.constant 0 : index
    %c0_24 = arith.constant 0 : index
    %30 = vector.load %arg9[%c0_23, %c0_24] : memref<32x128xf32, #tpu.memory_space<vmem>>, vector<32x128xf32>
    %c0_25 = arith.constant 0 : index
    %c0_26 = arith.constant 0 : index
    %31 = vector.load %arg7[%c0_25, %c0_26] : memref<128x288xf32, #tpu.memory_space<vmem>>, vector<128x288xf32>
    %cst_27 = arith.constant dense<0.000000e+00> : vector<32x288xf32>
    %32 = tpu.matmul %30, %31, %cst_27 {dimension_numbers = #tpu.dot_dimension_numbers<[1], [0], [0], [1], [0, 0, 1, 1], [], []>} : vector<32x128xf32>, vector<128x288xf32>, vector<32x288xf32> -> vector<32x288xf32>
    %33 = vector.extract_strided_slice %32 {offsets = [0, 0], sizes = [6, 32], strides = [1, 1]} : vector<32x288xf32> to vector<6x32xf32>
    %34 = vector.extract_strided_slice %32 {offsets = [1, 32], sizes = [6, 32], strides = [1, 1]} : vector<32x288xf32> to vector<6x32xf32>
    %35 = arith.addf %33, %34 : vector<6x32xf32>
    %36 = vector.extract_strided_slice %32 {offsets = [2, 64], sizes = [6, 32], strides = [1, 1]} : vector<32x288xf32> to vector<6x32xf32>
    %37 = arith.addf %35, %36 : vector<6x32xf32>
    %38 = vector.extract_strided_slice %32 {offsets = [8, 96], sizes = [6, 32], strides = [1, 1]} : vector<32x288xf32> to vector<6x32xf32>
    %39 = arith.addf %37, %38 : vector<6x32xf32>
    %40 = vector.extract_strided_slice %32 {offsets = [9, 128], sizes = [6, 32], strides = [1, 1]} : vector<32x288xf32> to vector<6x32xf32>
    %41 = arith.addf %39, %40 : vector<6x32xf32>
    %42 = vector.extract_strided_slice %32 {offsets = [10, 160], sizes = [6, 32], strides = [1, 1]} : vector<32x288xf32> to vector<6x32xf32>
    %43 = arith.addf %41, %42 : vector<6x32xf32>
    %44 = vector.extract_strided_slice %32 {offsets = [16, 192], sizes = [6, 32], strides = [1, 1]} : vector<32x288xf32> to vector<6x32xf32>
    %45 = arith.addf %43, %44 : vector<6x32xf32>
    %46 = vector.extract_strided_slice %32 {offsets = [17, 224], sizes = [6, 32], strides = [1, 1]} : vector<32x288xf32> to vector<6x32xf32>
    %47 = arith.addf %45, %46 : vector<6x32xf32>
    %48 = vector.extract_strided_slice %32 {offsets = [18, 256], sizes = [6, 32], strides = [1, 1]} : vector<32x288xf32> to vector<6x32xf32>
    %49 = arith.addf %47, %48 : vector<6x32xf32>
    %c0_28 = arith.constant 0 : index
    %c0_29 = arith.constant 0 : index
    %c0_30 = arith.constant 0 : index
    %50 = vector.load %arg8[%c0_28, %c0_29, %c0_30] : memref<1x12x32xf32, #tpu.memory_space<vmem>>, vector<1x6x32xf32>
    %51 = vector.shape_cast %50 : vector<1x6x32xf32> to vector<6x32xf32>
    %52 = vector.shape_cast %49 : vector<6x32xf32> to vector<1x6x32xf32>
    tpu.vector_store %arg8[%c0_28, %c0_29, %c0_30], %52 {strides = array<i32>} : memref<1x12x32xf32, #tpu.memory_space<vmem>>, vector<1x6x32xf32>,
    %53 = vector.extract_strided_slice %32 {offsets = [8, 0], sizes = [6, 32], strides = [1, 1]} : vector<32x288xf32> to vector<6x32xf32>
    %54 = vector.extract_strided_slice %32 {offsets = [9, 32], sizes = [6, 32], strides = [1, 1]} : vector<32x288xf32> to vector<6x32xf32>
    %55 = arith.addf %53, %54 : vector<6x32xf32>
    %56 = vector.extract_strided_slice %32 {offsets = [10, 64], sizes = [6, 32], strides = [1, 1]} : vector<32x288xf32> to vector<6x32xf32>
    %57 = arith.addf %55, %56 : vector<6x32xf32>
    %58 = vector.extract_strided_slice %32 {offsets = [16, 96], sizes = [6, 32], strides = [1, 1]} : vector<32x288xf32> to vector<6x32xf32>
    %59 = arith.addf %57, %58 : vector<6x32xf32>
    %60 = vector.extract_strided_slice %32 {offsets = [17, 128], sizes = [6, 32], strides = [1, 1]} : vector<32x288xf32> to vector<6x32xf32>
    %61 = arith.addf %59, %60 : vector<6x32xf32>
    %62 = vector.extract_strided_slice %32 {offsets = [18, 160], sizes = [6, 32], strides = [1, 1]} : vector<32x288xf32> to vector<6x32xf32>
    %63 = arith.addf %61, %62 : vector<6x32xf32>
    %64 = vector.extract_strided_slice %32 {offsets = [24, 192], sizes = [6, 32], strides = [1, 1]} : vector<32x288xf32> to vector<6x32xf32>
    %65 = arith.addf %63, %64 : vector<6x32xf32>
    %66 = vector.extract_strided_slice %32 {offsets = [25, 224], sizes = [6, 32], strides = [1, 1]} : vector<32x288xf32> to vector<6x32xf32>
    %67 = arith.addf %65, %66 : vector<6x32xf32>
    %68 = vector.extract_strided_slice %32 {offsets = [26, 256], sizes = [6, 32], strides = [1, 1]} : vector<32x288xf32> to vector<6x32xf32>
    %69 = arith.addf %67, %68 : vector<6x32xf32>
    %c0_31 = arith.constant 0 : index
    %c6 = arith.constant 6 : index
    %c0_32 = arith.constant 0 : index
    %70 = vector.load %arg8[%c0_31, %c6, %c0_32] : memref<1x12x32xf32, #tpu.memory_space<vmem>>, vector<1x6x32xf32>
    %71 = vector.shape_cast %70 : vector<1x6x32xf32> to vector<6x32xf32>
    %72 = vector.shape_cast %69 : vector<6x32xf32> to vector<1x6x32xf32>
    tpu.vector_store %arg8[%c0_31, %c6, %c0_32], %72 {strides = array<i32>} : memref<1x12x32xf32, #tpu.memory_space<vmem>>, vector<1x6x32xf32>,
    return
  }
  func.func @transform_0(%arg0: i32) -> (i32, i32, i32) {
    %c0_i32 = arith.constant 0 : i32
    %c0_i32_0 = arith.constant 0 : i32
    %c0_i32_1 = arith.constant 0 : i32
    return %arg0, %c0_i32, %c0_i32_0 : i32, i32, i32
  }
  func.func @transform_1(%arg0: i32) -> (i32, i32) {
    %c0_i32 = arith.constant 0 : i32
    %c0_i32_0 = arith.constant 0 : i32
    %c0_i32_1 = arith.constant 0 : i32
    return %c0_i32, %c0_i32_0 : i32, i32
  }
  func.func @transform_2(%arg0: i32) -> (i32, i32) {
    %c0_i32 = arith.constant 0 : i32
    %c0_i32_0 = arith.constant 0 : i32
    %c0_i32_1 = arith.constant 0 : i32
    return %c0_i32, %c0_i32_0 : i32, i32
  }
  func.func @transform_3(%arg0: i32) -> (i32, i32) {
    %c0_i32 = arith.constant 0 : i32
    %c0_i32_0 = arith.constant 0 : i32
    %c0_i32_1 = arith.constant 0 : i32
    return %c0_i32, %c0_i32_0 : i32, i32
  }
  func.func @transform_4(%arg0: i32) -> (i32, i32) {
    %c0_i32 = arith.constant 0 : i32
    %c0_i32_0 = arith.constant 0 : i32
    %c0_i32_1 = arith.constant 0 : i32
    return %c0_i32, %c0_i32_0 : i32, i32
  }
  func.func @transform_5(%arg0: i32) -> (i32, i32) {
    %c0_i32 = arith.constant 0 : i32
    %c0_i32_0 = arith.constant 0 : i32
    %c0_i32_1 = arith.constant 0 : i32
    return %c0_i32, %c0_i32_0 : i32, i32
  }
  func.func @transform_6(%arg0: i32) -> (i32, i32) {
    %c0_i32 = arith.constant 0 : i32
    %c0_i32_0 = arith.constant 0 : i32
    %c0_i32_1 = arith.constant 0 : i32
    return %c0_i32, %c0_i32_0 : i32, i32
  }
  func.func @transform_7(%arg0: i32) -> (i32, i32, i32) {
    %c0_i32 = arith.constant 0 : i32
    %c0_i32_0 = arith.constant 0 : i32
    %c0_i32_1 = arith.constant 0 : i32
    return %arg0, %c0_i32, %c0_i32_0 : i32, i32, i32
  }
}

module attributes {stable_mosaic.version = 11 : i64} {
  func.func @_dense_layer_kernel(%arg0: i32, %arg1: memref<1x12x64xf32, #tpu.memory_space<vmem>>, %arg2: memref<1x12x32xf32, #tpu.memory_space<vmem>>, %arg3: memref<96x128xf32, #tpu.memory_space<vmem>>, %arg4: memref<1x96xf32, #tpu.memory_space<vmem>>, %arg5: memref<1x96xf32, #tpu.memory_space<vmem>>, %arg6: memref<1x128xf32, #tpu.memory_space<vmem>>, %arg7: memref<1x128xf32, #tpu.memory_space<vmem>>, %arg8: memref<128x288xf32, #tpu.memory_space<vmem>>, %arg9: memref<1x12x32xf32, #tpu.memory_space<vmem>>, %arg10: memref<32x128xf32, #tpu.memory_space<vmem>>) attributes {dimension_semantics = [#tpu.dimension_semantics<parallel>], iteration_bounds = array<i64: 2>, scalar_prefetch = 0 : i64, scratch_operands = 1 : i64, tpu.core_type = #tpu.core_type<tc>, window_params = [{transform_indices = @transform_0, window_bounds = array<i64: 1, 12, 64>}, {transform_indices = @transform_1, window_bounds = array<i64: 1, 12, 32>}, {pipeline_mode = #tpu.pipeline_mode<synchronous>, transform_indices = @transform_2, window_bounds = array<i64: 96, 128>}, {pipeline_mode = #tpu.pipeline_mode<synchronous>, transform_indices = @transform_3, window_bounds = array<i64: 1, 96>}, {pipeline_mode = #tpu.pipeline_mode<synchronous>, transform_indices = @transform_4, window_bounds = array<i64: 1, 96>}, {pipeline_mode = #tpu.pipeline_mode<synchronous>, transform_indices = @transform_5, window_bounds = array<i64: 1, 128>}, {pipeline_mode = #tpu.pipeline_mode<synchronous>, transform_indices = @transform_6, window_bounds = array<i64: 1, 128>}, {pipeline_mode = #tpu.pipeline_mode<synchronous>, transform_indices = @transform_7, window_bounds = array<i64: 128, 288>}, {transform_indices = @transform_8, window_bounds = array<i64: 1, 12, 32>}]} {
    %c0 = arith.constant 0 : index
    %c0_0 = arith.constant 0 : index
    %c0_1 = arith.constant 0 : index
    %0 = vector.load %arg1[%c0, %c0_0, %c0_1] : memref<1x12x64xf32, #tpu.memory_space<vmem>>, vector<1x12x64xf32>
    %1 = vector.shape_cast %0 : vector<1x12x64xf32> to vector<12x64xf32>
    %c0_2 = arith.constant 0 : index
    %c0_3 = arith.constant 0 : index
    %2 = vector.load %arg4[%c0_2, %c0_3] : memref<1x96xf32, #tpu.memory_space<vmem>>, vector<1x64xf32>
    %3 = vector.broadcast %2 : vector<1x64xf32> to vector<12x64xf32>
    %4 = arith.mulf %1, %3 : vector<12x64xf32>
    %c0_4 = arith.constant 0 : index
    %c0_5 = arith.constant 0 : index
    %5 = vector.load %arg5[%c0_4, %c0_5] : memref<1x96xf32, #tpu.memory_space<vmem>>, vector<1x64xf32>
    %6 = vector.broadcast %5 : vector<1x64xf32> to vector<12x64xf32>
    %7 = arith.addf %4, %6 : vector<12x64xf32>
    %cst = arith.constant 0.000000e+00 : f32
    %8 = vector.broadcast %cst : f32 to vector<12x64xf32>
    %9 = arith.maximumf %7, %8 : vector<12x64xf32>
    %c0_6 = arith.constant 0 : index
    %c0_7 = arith.constant 0 : index
    %10 = vector.load %arg3[%c0_6, %c0_7] : memref<96x128xf32, #tpu.memory_space<vmem>>, vector<64x128xf32>
    %cst_8 = arith.constant dense<0.000000e+00> : vector<12x128xf32>
    %11 = tpu.matmul %9, %10, %cst_8 {dimension_numbers = #tpu.dot_dimension_numbers<[1], [0], [0], [1], [0, 0, 1, 1], [], []>} : vector<12x64xf32>, vector<64x128xf32>, vector<12x128xf32> -> vector<12x128xf32>
    %c0_9 = arith.constant 0 : index
    %c0_10 = arith.constant 0 : index
    %c0_11 = arith.constant 0 : index
    %12 = vector.load %arg2[%c0_9, %c0_10, %c0_11] : memref<1x12x32xf32, #tpu.memory_space<vmem>>, vector<1x12x32xf32>
    %13 = vector.shape_cast %12 : vector<1x12x32xf32> to vector<12x32xf32>
    %c0_12 = arith.constant 0 : index
    %c64 = arith.constant 64 : index
    %14 = vector.load %arg4[%c0_12, %c64] : memref<1x96xf32, #tpu.memory_space<vmem>>, vector<1x32xf32>
    %15 = vector.broadcast %14 : vector<1x32xf32> to vector<12x32xf32>
    %16 = arith.mulf %13, %15 : vector<12x32xf32>
    %c0_13 = arith.constant 0 : index
    %c64_14 = arith.constant 64 : index
    %17 = vector.load %arg5[%c0_13, %c64_14] : memref<1x96xf32, #tpu.memory_space<vmem>>, vector<1x32xf32>
    %18 = vector.broadcast %17 : vector<1x32xf32> to vector<12x32xf32>
    %19 = arith.addf %16, %18 : vector<12x32xf32>
    %cst_15 = arith.constant 0.000000e+00 : f32
    %20 = vector.broadcast %cst_15 : f32 to vector<12x32xf32>
    %21 = arith.maximumf %19, %20 : vector<12x32xf32>
    %c64_16 = arith.constant 64 : index
    %c0_17 = arith.constant 0 : index
    %22 = vector.load %arg3[%c64_16, %c0_17] : memref<96x128xf32, #tpu.memory_space<vmem>>, vector<32x128xf32>
    %cst_18 = arith.constant dense<0.000000e+00> : vector<12x128xf32>
    %23 = tpu.matmul %21, %22, %cst_18 {dimension_numbers = #tpu.dot_dimension_numbers<[1], [0], [0], [1], [0, 0, 1, 1], [], []>} : vector<12x32xf32>, vector<32x128xf32>, vector<12x128xf32> -> vector<12x128xf32>
    %24 = arith.addf %11, %23 : vector<12x128xf32>
    %c0_19 = arith.constant 0 : index
    %c0_20 = arith.constant 0 : index
    %25 = vector.load %arg6[%c0_19, %c0_20] : memref<1x128xf32, #tpu.memory_space<vmem>>, vector<1x128xf32>
    %26 = vector.broadcast %25 : vector<1x128xf32> to vector<12x128xf32>
    %27 = arith.mulf %24, %26 : vector<12x128xf32>
    %c0_21 = arith.constant 0 : index
    %c0_22 = arith.constant 0 : index
    %28 = vector.load %arg7[%c0_21, %c0_22] : memref<1x128xf32, #tpu.memory_space<vmem>>, vector<1x128xf32>
    %29 = vector.broadcast %28 : vector<1x128xf32> to vector<12x128xf32>
    %30 = arith.addf %27, %29 : vector<12x128xf32>
    %cst_23 = arith.constant 0.000000e+00 : f32
    %31 = vector.broadcast %cst_23 : f32 to vector<12x128xf32>
    %32 = arith.maximumf %30, %31 : vector<12x128xf32>
    %cst_24 = arith.constant 0.000000e+00 : f32
    %33 = vector.broadcast %cst_24 : f32 to vector<9x128xf32>
    %c0_25 = arith.constant 0 : index
    %c0_26 = arith.constant 0 : index
    %34 = vector.load %arg10[%c0_25, %c0_26] : memref<32x128xf32, #tpu.memory_space<vmem>>, vector<9x128xf32>
    tpu.vector_store %arg10[%c0_25, %c0_26], %33 {strides = array<i32>} : memref<32x128xf32, #tpu.memory_space<vmem>>, vector<9x128xf32>,
    %cst_27 = arith.constant 0.000000e+00 : f32
    %35 = vector.broadcast %cst_27 : f32 to vector<2x128xf32>
    %c15 = arith.constant 15 : index
    %c0_28 = arith.constant 0 : index
    %36 = vector.load %arg10[%c15, %c0_28] : memref<32x128xf32, #tpu.memory_space<vmem>>, vector<2x128xf32>
    tpu.vector_store %arg10[%c15, %c0_28], %35 {strides = array<i32>} : memref<32x128xf32, #tpu.memory_space<vmem>>, vector<2x128xf32>,
    %cst_29 = arith.constant 0.000000e+00 : f32
    %37 = vector.broadcast %cst_29 : f32 to vector<9x128xf32>
    %c23 = arith.constant 23 : index
    %c0_30 = arith.constant 0 : index
    %38 = vector.load %arg10[%c23, %c0_30] : memref<32x128xf32, #tpu.memory_space<vmem>>, vector<9x128xf32>
    tpu.vector_store %arg10[%c23, %c0_30], %37 {strides = array<i32>} : memref<32x128xf32, #tpu.memory_space<vmem>>, vector<9x128xf32>,
    %39 = vector.extract_strided_slice %32 {offsets = [0, 0], sizes = [6, 128], strides = [1, 1]} : vector<12x128xf32> to vector<6x128xf32>
    %c9 = arith.constant 9 : index
    %c0_31 = arith.constant 0 : index
    %40 = vector.load %arg10[%c9, %c0_31] : memref<32x128xf32, #tpu.memory_space<vmem>>, vector<6x128xf32>
    tpu.vector_store %arg10[%c9, %c0_31], %39 {strides = array<i32>} : memref<32x128xf32, #tpu.memory_space<vmem>>, vector<6x128xf32>,
    %41 = vector.extract_strided_slice %32 {offsets = [6, 0], sizes = [6, 128], strides = [1, 1]} : vector<12x128xf32> to vector<6x128xf32>
    %c17 = arith.constant 17 : index
    %c0_32 = arith.constant 0 : index
    %42 = vector.load %arg10[%c17, %c0_32] : memref<32x128xf32, #tpu.memory_space<vmem>>, vector<6x128xf32>
    tpu.vector_store %arg10[%c17, %c0_32], %41 {strides = array<i32>} : memref<32x128xf32, #tpu.memory_space<vmem>>, vector<6x128xf32>,
    %c0_33 = arith.constant 0 : index
    %c0_34 = arith.constant 0 : index
    %43 = vector.load %arg10[%c0_33, %c0_34] : memref<32x128xf32, #tpu.memory_space<vmem>>, vector<32x128xf32>
    %c0_35 = arith.constant 0 : index
    %c0_36 = arith.constant 0 : index
    %44 = vector.load %arg8[%c0_35, %c0_36] : memref<128x288xf32, #tpu.memory_space<vmem>>, vector<128x288xf32>
    %cst_37 = arith.constant dense<0.000000e+00> : vector<32x288xf32>
    %45 = tpu.matmul %43, %44, %cst_37 {dimension_numbers = #tpu.dot_dimension_numbers<[1], [0], [0], [1], [0, 0, 1, 1], [], []>} : vector<32x128xf32>, vector<128x288xf32>, vector<32x288xf32> -> vector<32x288xf32>
    %46 = vector.extract_strided_slice %45 {offsets = [0, 0], sizes = [6, 32], strides = [1, 1]} : vector<32x288xf32> to vector<6x32xf32>
    %47 = vector.extract_strided_slice %45 {offsets = [1, 32], sizes = [6, 32], strides = [1, 1]} : vector<32x288xf32> to vector<6x32xf32>
    %48 = arith.addf %46, %47 : vector<6x32xf32>
    %49 = vector.extract_strided_slice %45 {offsets = [2, 64], sizes = [6, 32], strides = [1, 1]} : vector<32x288xf32> to vector<6x32xf32>
    %50 = arith.addf %48, %49 : vector<6x32xf32>
    %51 = vector.extract_strided_slice %45 {offsets = [8, 96], sizes = [6, 32], strides = [1, 1]} : vector<32x288xf32> to vector<6x32xf32>
    %52 = arith.addf %50, %51 : vector<6x32xf32>
    %53 = vector.extract_strided_slice %45 {offsets = [9, 128], sizes = [6, 32], strides = [1, 1]} : vector<32x288xf32> to vector<6x32xf32>
    %54 = arith.addf %52, %53 : vector<6x32xf32>
    %55 = vector.extract_strided_slice %45 {offsets = [10, 160], sizes = [6, 32], strides = [1, 1]} : vector<32x288xf32> to vector<6x32xf32>
    %56 = arith.addf %54, %55 : vector<6x32xf32>
    %57 = vector.extract_strided_slice %45 {offsets = [16, 192], sizes = [6, 32], strides = [1, 1]} : vector<32x288xf32> to vector<6x32xf32>
    %58 = arith.addf %56, %57 : vector<6x32xf32>
    %59 = vector.extract_strided_slice %45 {offsets = [17, 224], sizes = [6, 32], strides = [1, 1]} : vector<32x288xf32> to vector<6x32xf32>
    %60 = arith.addf %58, %59 : vector<6x32xf32>
    %61 = vector.extract_strided_slice %45 {offsets = [18, 256], sizes = [6, 32], strides = [1, 1]} : vector<32x288xf32> to vector<6x32xf32>
    %62 = arith.addf %60, %61 : vector<6x32xf32>
    %c0_38 = arith.constant 0 : index
    %c0_39 = arith.constant 0 : index
    %c0_40 = arith.constant 0 : index
    %63 = vector.load %arg9[%c0_38, %c0_39, %c0_40] : memref<1x12x32xf32, #tpu.memory_space<vmem>>, vector<1x6x32xf32>
    %64 = vector.shape_cast %63 : vector<1x6x32xf32> to vector<6x32xf32>
    %65 = vector.shape_cast %62 : vector<6x32xf32> to vector<1x6x32xf32>
    tpu.vector_store %arg9[%c0_38, %c0_39, %c0_40], %65 {strides = array<i32>} : memref<1x12x32xf32, #tpu.memory_space<vmem>>, vector<1x6x32xf32>,
    %66 = vector.extract_strided_slice %45 {offsets = [8, 0], sizes = [6, 32], strides = [1, 1]} : vector<32x288xf32> to vector<6x32xf32>
    %67 = vector.extract_strided_slice %45 {offsets = [9, 32], sizes = [6, 32], strides = [1, 1]} : vector<32x288xf32> to vector<6x32xf32>
    %68 = arith.addf %66, %67 : vector<6x32xf32>
    %69 = vector.extract_strided_slice %45 {offsets = [10, 64], sizes = [6, 32], strides = [1, 1]} : vector<32x288xf32> to vector<6x32xf32>
    %70 = arith.addf %68, %69 : vector<6x32xf32>
    %71 = vector.extract_strided_slice %45 {offsets = [16, 96], sizes = [6, 32], strides = [1, 1]} : vector<32x288xf32> to vector<6x32xf32>
    %72 = arith.addf %70, %71 : vector<6x32xf32>
    %73 = vector.extract_strided_slice %45 {offsets = [17, 128], sizes = [6, 32], strides = [1, 1]} : vector<32x288xf32> to vector<6x32xf32>
    %74 = arith.addf %72, %73 : vector<6x32xf32>
    %75 = vector.extract_strided_slice %45 {offsets = [18, 160], sizes = [6, 32], strides = [1, 1]} : vector<32x288xf32> to vector<6x32xf32>
    %76 = arith.addf %74, %75 : vector<6x32xf32>
    %77 = vector.extract_strided_slice %45 {offsets = [24, 192], sizes = [6, 32], strides = [1, 1]} : vector<32x288xf32> to vector<6x32xf32>
    %78 = arith.addf %76, %77 : vector<6x32xf32>
    %79 = vector.extract_strided_slice %45 {offsets = [25, 224], sizes = [6, 32], strides = [1, 1]} : vector<32x288xf32> to vector<6x32xf32>
    %80 = arith.addf %78, %79 : vector<6x32xf32>
    %81 = vector.extract_strided_slice %45 {offsets = [26, 256], sizes = [6, 32], strides = [1, 1]} : vector<32x288xf32> to vector<6x32xf32>
    %82 = arith.addf %80, %81 : vector<6x32xf32>
    %c0_41 = arith.constant 0 : index
    %c6 = arith.constant 6 : index
    %c0_42 = arith.constant 0 : index
    %83 = vector.load %arg9[%c0_41, %c6, %c0_42] : memref<1x12x32xf32, #tpu.memory_space<vmem>>, vector<1x6x32xf32>
    %84 = vector.shape_cast %83 : vector<1x6x32xf32> to vector<6x32xf32>
    %85 = vector.shape_cast %82 : vector<6x32xf32> to vector<1x6x32xf32>
    tpu.vector_store %arg9[%c0_41, %c6, %c0_42], %85 {strides = array<i32>} : memref<1x12x32xf32, #tpu.memory_space<vmem>>, vector<1x6x32xf32>,
    return
  }
  func.func @transform_0(%arg0: i32) -> (i32, i32, i32) {
    %c0_i32 = arith.constant 0 : i32
    %c0_i32_0 = arith.constant 0 : i32
    %c0_i32_1 = arith.constant 0 : i32
    return %arg0, %c0_i32, %c0_i32_0 : i32, i32, i32
  }
  func.func @transform_1(%arg0: i32) -> (i32, i32, i32) {
    %c0_i32 = arith.constant 0 : i32
    %c0_i32_0 = arith.constant 0 : i32
    %c0_i32_1 = arith.constant 0 : i32
    return %arg0, %c0_i32, %c0_i32_0 : i32, i32, i32
  }
  func.func @transform_2(%arg0: i32) -> (i32, i32) {
    %c0_i32 = arith.constant 0 : i32
    %c0_i32_0 = arith.constant 0 : i32
    %c0_i32_1 = arith.constant 0 : i32
    return %c0_i32, %c0_i32_0 : i32, i32
  }
  func.func @transform_3(%arg0: i32) -> (i32, i32) {
    %c0_i32 = arith.constant 0 : i32
    %c0_i32_0 = arith.constant 0 : i32
    %c0_i32_1 = arith.constant 0 : i32
    return %c0_i32, %c0_i32_0 : i32, i32
  }
  func.func @transform_4(%arg0: i32) -> (i32, i32) {
    %c0_i32 = arith.constant 0 : i32
    %c0_i32_0 = arith.constant 0 : i32
    %c0_i32_1 = arith.constant 0 : i32
    return %c0_i32, %c0_i32_0 : i32, i32
  }
  func.func @transform_5(%arg0: i32) -> (i32, i32) {
    %c0_i32 = arith.constant 0 : i32
    %c0_i32_0 = arith.constant 0 : i32
    %c0_i32_1 = arith.constant 0 : i32
    return %c0_i32, %c0_i32_0 : i32, i32
  }
  func.func @transform_6(%arg0: i32) -> (i32, i32) {
    %c0_i32 = arith.constant 0 : i32
    %c0_i32_0 = arith.constant 0 : i32
    %c0_i32_1 = arith.constant 0 : i32
    return %c0_i32, %c0_i32_0 : i32, i32
  }
  func.func @transform_7(%arg0: i32) -> (i32, i32) {
    %c0_i32 = arith.constant 0 : i32
    %c0_i32_0 = arith.constant 0 : i32
    %c0_i32_1 = arith.constant 0 : i32
    return %c0_i32, %c0_i32_0 : i32, i32
  }
  func.func @transform_8(%arg0: i32) -> (i32, i32, i32) {
    %c0_i32 = arith.constant 0 : i32
    %c0_i32_0 = arith.constant 0 : i32
    %c0_i32_1 = arith.constant 0 : i32
    return %arg0, %c0_i32, %c0_i32_0 : i32, i32, i32
  }
}

module attributes {stable_mosaic.version = 11 : i64} {
  func.func @_fused_matmul_kernel(%arg0: i32, %arg1: memref<1x12x64xf32, #tpu.memory_space<vmem>>, %arg2: memref<1x12x32xf32, #tpu.memory_space<vmem>>, %arg3: memref<1x12x32xf32, #tpu.memory_space<vmem>>, %arg4: memref<128x64xf32, #tpu.memory_space<vmem>>, %arg5: memref<1x128xf32, #tpu.memory_space<vmem>>, %arg6: memref<1x128xf32, #tpu.memory_space<vmem>>, %arg7: memref<1x64xf32, #tpu.memory_space<vmem>>, %arg8: memref<1x64xf32, #tpu.memory_space<vmem>>, %arg9: memref<1x12x64xf32, #tpu.memory_space<vmem>>) attributes {dimension_semantics = [#tpu.dimension_semantics<parallel>], iteration_bounds = array<i64: 2>, scalar_prefetch = 0 : i64, scratch_operands = 0 : i64, tpu.core_type = #tpu.core_type<tc>, window_params = [{transform_indices = @transform_0, window_bounds = array<i64: 1, 12, 64>}, {transform_indices = @transform_1, window_bounds = array<i64: 1, 12, 32>}, {transform_indices = @transform_2, window_bounds = array<i64: 1, 12, 32>}, {pipeline_mode = #tpu.pipeline_mode<synchronous>, transform_indices = @transform_3, window_bounds = array<i64: 128, 64>}, {pipeline_mode = #tpu.pipeline_mode<synchronous>, transform_indices = @transform_4, window_bounds = array<i64: 1, 128>}, {pipeline_mode = #tpu.pipeline_mode<synchronous>, transform_indices = @transform_5, window_bounds = array<i64: 1, 128>}, {pipeline_mode = #tpu.pipeline_mode<synchronous>, transform_indices = @transform_6, window_bounds = array<i64: 1, 64>}, {pipeline_mode = #tpu.pipeline_mode<synchronous>, transform_indices = @transform_7, window_bounds = array<i64: 1, 64>}, {transform_indices = @transform_8, window_bounds = array<i64: 1, 12, 64>}]} {
    %c0 = arith.constant 0 : index
    %c0_0 = arith.constant 0 : index
    %c0_1 = arith.constant 0 : index
    %0 = vector.load %arg1[%c0, %c0_0, %c0_1] : memref<1x12x64xf32, #tpu.memory_space<vmem>>, vector<1x12x64xf32>
    %1 = vector.shape_cast %0 : vector<1x12x64xf32> to vector<12x64xf32>
    %c0_2 = arith.constant 0 : index
    %c0_3 = arith.constant 0 : index
    %2 = vector.load %arg5[%c0_2, %c0_3] : memref<1x128xf32, #tpu.memory_space<vmem>>, vector<1x64xf32>
    %3 = vector.broadcast %2 : vector<1x64xf32> to vector<12x64xf32>
    %4 = arith.mulf %1, %3 : vector<12x64xf32>
    %c0_4 = arith.constant 0 : index
    %c0_5 = arith.constant 0 : index
    %5 = vector.load %arg6[%c0_4, %c0_5] : memref<1x128xf32, #tpu.memory_space<vmem>>, vector<1x64xf32>
    %6 = vector.broadcast %5 : vector<1x64xf32> to vector<12x64xf32>
    %7 = arith.addf %4, %6 : vector<12x64xf32>
    %cst = arith.constant 0.000000e+00 : f32
    %8 = vector.broadcast %cst : f32 to vector<12x64xf32>
    %9 = arith.maximumf %7, %8 : vector<12x64xf32>
    %c0_6 = arith.constant 0 : index
    %c0_7 = arith.constant 0 : index
    %10 = vector.load %arg4[%c0_6, %c0_7] : memref<128x64xf32, #tpu.memory_space<vmem>>, vector<64x64xf32>
    %cst_8 = arith.constant dense<0.000000e+00> : vector<12x64xf32>
    %11 = tpu.matmul %9, %10, %cst_8 {dimension_numbers = #tpu.dot_dimension_numbers<[1], [0], [0], [1], [0, 0, 1, 1], [], []>} : vector<12x64xf32>, vector<64x64xf32>, vector<12x64xf32> -> vector<12x64xf32>
    %c0_9 = arith.constant 0 : index
    %c0_10 = arith.constant 0 : index
    %c0_11 = arith.constant 0 : index
    %12 = vector.load %arg2[%c0_9, %c0_10, %c0_11] : memref<1x12x32xf32, #tpu.memory_space<vmem>>, vector<1x12x32xf32>
    %13 = vector.shape_cast %12 : vector<1x12x32xf32> to vector<12x32xf32>
    %c0_12 = arith.constant 0 : index
    %c64 = arith.constant 64 : index
    %14 = vector.load %arg5[%c0_12, %c64] : memref<1x128xf32, #tpu.memory_space<vmem>>, vector<1x32xf32>
    %15 = vector.broadcast %14 : vector<1x32xf32> to vector<12x32xf32>
    %16 = arith.mulf %13, %15 : vector<12x32xf32>
    %c0_13 = arith.constant 0 : index
    %c64_14 = arith.constant 64 : index
    %17 = vector.load %arg6[%c0_13, %c64_14] : memref<1x128xf32, #tpu.memory_space<vmem>>, vector<1x32xf32>
    %18 = vector.broadcast %17 : vector<1x32xf32> to vector<12x32xf32>
    %19 = arith.addf %16, %18 : vector<12x32xf32>
    %cst_15 = arith.constant 0.000000e+00 : f32
    %20 = vector.broadcast %cst_15 : f32 to vector<12x32xf32>
    %21 = arith.maximumf %19, %20 : vector<12x32xf32>
    %c64_16 = arith.constant 64 : index
    %c0_17 = arith.constant 0 : index
    %22 = vector.load %arg4[%c64_16, %c0_17] : memref<128x64xf32, #tpu.memory_space<vmem>>, vector<32x64xf32>
    %cst_18 = arith.constant dense<0.000000e+00> : vector<12x64xf32>
    %23 = tpu.matmul %21, %22, %cst_18 {dimension_numbers = #tpu.dot_dimension_numbers<[1], [0], [0], [1], [0, 0, 1, 1], [], []>} : vector<12x32xf32>, vector<32x64xf32>, vector<12x64xf32> -> vector<12x64xf32>
    %24 = arith.addf %11, %23 : vector<12x64xf32>
    %c0_19 = arith.constant 0 : index
    %c0_20 = arith.constant 0 : index
    %c0_21 = arith.constant 0 : index
    %25 = vector.load %arg3[%c0_19, %c0_20, %c0_21] : memref<1x12x32xf32, #tpu.memory_space<vmem>>, vector<1x12x32xf32>
    %26 = vector.shape_cast %25 : vector<1x12x32xf32> to vector<12x32xf32>
    %c0_22 = arith.constant 0 : index
    %c96 = arith.constant 96 : index
    %27 = vector.load %arg5[%c0_22, %c96] : memref<1x128xf32, #tpu.memory_space<vmem>>, vector<1x32xf32>
    %28 = vector.broadcast %27 : vector<1x32xf32> to vector<12x32xf32>
    %29 = arith.mulf %26, %28 : vector<12x32xf32>
    %c0_23 = arith.constant 0 : index
    %c96_24 = arith.constant 96 : index
    %30 = vector.load %arg6[%c0_23, %c96_24] : memref<1x128xf32, #tpu.memory_space<vmem>>, vector<1x32xf32>
    %31 = vector.broadcast %30 : vector<1x32xf32> to vector<12x32xf32>
    %32 = arith.addf %29, %31 : vector<12x32xf32>
    %cst_25 = arith.constant 0.000000e+00 : f32
    %33 = vector.broadcast %cst_25 : f32 to vector<12x32xf32>
    %34 = arith.maximumf %32, %33 : vector<12x32xf32>
    %c96_26 = arith.constant 96 : index
    %c0_27 = arith.constant 0 : index
    %35 = vector.load %arg4[%c96_26, %c0_27] : memref<128x64xf32, #tpu.memory_space<vmem>>, vector<32x64xf32>
    %cst_28 = arith.constant dense<0.000000e+00> : vector<12x64xf32>
    %36 = tpu.matmul %34, %35, %cst_28 {dimension_numbers = #tpu.dot_dimension_numbers<[1], [0], [0], [1], [0, 0, 1, 1], [], []>} : vector<12x32xf32>, vector<32x64xf32>, vector<12x64xf32> -> vector<12x64xf32>
    %37 = arith.addf %24, %36 : vector<12x64xf32>
    %c0_29 = arith.constant 0 : index
    %c0_30 = arith.constant 0 : index
    %38 = vector.load %arg7[%c0_29, %c0_30] : memref<1x64xf32, #tpu.memory_space<vmem>>, vector<1x64xf32>
    %39 = vector.broadcast %38 : vector<1x64xf32> to vector<12x64xf32>
    %40 = arith.mulf %37, %39 : vector<12x64xf32>
    %c0_31 = arith.constant 0 : index
    %c0_32 = arith.constant 0 : index
    %41 = vector.load %arg8[%c0_31, %c0_32] : memref<1x64xf32, #tpu.memory_space<vmem>>, vector<1x64xf32>
    %42 = vector.broadcast %41 : vector<1x64xf32> to vector<12x64xf32>
    %43 = arith.addf %40, %42 : vector<12x64xf32>
    %c0_33 = arith.constant 0 : index
    %c0_34 = arith.constant 0 : index
    %c0_35 = arith.constant 0 : index
    %44 = vector.load %arg9[%c0_33, %c0_34, %c0_35] : memref<1x12x64xf32, #tpu.memory_space<vmem>>, vector<1x12x64xf32>
    %45 = vector.shape_cast %44 : vector<1x12x64xf32> to vector<12x64xf32>
    %46 = vector.shape_cast %43 : vector<12x64xf32> to vector<1x12x64xf32>
    tpu.vector_store %arg9[%c0_33, %c0_34, %c0_35], %46 {strides = array<i32>} : memref<1x12x64xf32, #tpu.memory_space<vmem>>, vector<1x12x64xf32>,
    return
  }
  func.func @transform_0(%arg0: i32) -> (i32, i32, i32) {
    %c0_i32 = arith.constant 0 : i32
    %c0_i32_0 = arith.constant 0 : i32
    %c0_i32_1 = arith.constant 0 : i32
    return %arg0, %c0_i32, %c0_i32_0 : i32, i32, i32
  }
  func.func @transform_1(%arg0: i32) -> (i32, i32, i32) {
    %c0_i32 = arith.constant 0 : i32
    %c0_i32_0 = arith.constant 0 : i32
    %c0_i32_1 = arith.constant 0 : i32
    return %arg0, %c0_i32, %c0_i32_0 : i32, i32, i32
  }
  func.func @transform_2(%arg0: i32) -> (i32, i32, i32) {
    %c0_i32 = arith.constant 0 : i32
    %c0_i32_0 = arith.constant 0 : i32
    %c0_i32_1 = arith.constant 0 : i32
    return %arg0, %c0_i32, %c0_i32_0 : i32, i32, i32
  }
  func.func @transform_3(%arg0: i32) -> (i32, i32) {
    %c0_i32 = arith.constant 0 : i32
    %c0_i32_0 = arith.constant 0 : i32
    %c0_i32_1 = arith.constant 0 : i32
    return %c0_i32, %c0_i32_0 : i32, i32
  }
  func.func @transform_4(%arg0: i32) -> (i32, i32) {
    %c0_i32 = arith.constant 0 : i32
    %c0_i32_0 = arith.constant 0 : i32
    %c0_i32_1 = arith.constant 0 : i32
    return %c0_i32, %c0_i32_0 : i32, i32
  }
  func.func @transform_5(%arg0: i32) -> (i32, i32) {
    %c0_i32 = arith.constant 0 : i32
    %c0_i32_0 = arith.constant 0 : i32
    %c0_i32_1 = arith.constant 0 : i32
    return %c0_i32, %c0_i32_0 : i32, i32
  }
  func.func @transform_6(%arg0: i32) -> (i32, i32) {
    %c0_i32 = arith.constant 0 : i32
    %c0_i32_0 = arith.constant 0 : i32
    %c0_i32_1 = arith.constant 0 : i32
    return %c0_i32, %c0_i32_0 : i32, i32
  }
  func.func @transform_7(%arg0: i32) -> (i32, i32) {
    %c0_i32 = arith.constant 0 : i32
    %c0_i32_0 = arith.constant 0 : i32
    %c0_i32_1 = arith.constant 0 : i32
    return %c0_i32, %c0_i32_0 : i32, i32
  }
  func.func @transform_8(%arg0: i32) -> (i32, i32, i32) {
    %c0_i32 = arith.constant 0 : i32
    %c0_i32_0 = arith.constant 0 : i32
    %c0_i32_1 = arith.constant 0 : i32
    return %arg0, %c0_i32, %c0_i32_0 : i32, i32, i32
  }
}

module attributes {stable_mosaic.version = 11 : i64} {
  func.func @_maxfilter2x2_kernel(%arg0: i32, %arg1: memref<1x2x6x64xf32, #tpu.memory_space<vmem>>, %arg2: memref<1x1x7x64xf32, #tpu.memory_space<vmem>>, %arg3: memref<2x8x64xf32, #tpu.memory_space<vmem>>) attributes {dimension_semantics = [#tpu.dimension_semantics<parallel>], iteration_bounds = array<i64: 2>, scalar_prefetch = 0 : i64, scratch_operands = 1 : i64, tpu.core_type = #tpu.core_type<tc>, window_params = [{transform_indices = @transform_0, window_bounds = array<i64: 1, 2, 6, 64>}, {transform_indices = @transform_1, window_bounds = array<i64: 1, 1, 7, 64>}]} {
    %cst = arith.constant 0xFF800000 : f32
    %0 = vector.broadcast %cst : f32 to vector<2x1x64xf32>
    %c0 = arith.constant 0 : index
    %c0_0 = arith.constant 0 : index
    %c0_1 = arith.constant 0 : index
    %1 = vector.load %arg3[%c0, %c0_0, %c0_1] : memref<2x8x64xf32, #tpu.memory_space<vmem>>, vector<2x1x64xf32>
    tpu.vector_store %arg3[%c0, %c0_0, %c0_1], %0 {strides = array<i32>} : memref<2x8x64xf32, #tpu.memory_space<vmem>>, vector<2x1x64xf32>,
    %c0_2 = arith.constant 0 : index
    %c7 = arith.constant 7 : index
    %c0_3 = arith.constant 0 : index
    %2 = vector.load %arg3[%c0_2, %c7, %c0_3] : memref<2x8x64xf32, #tpu.memory_space<vmem>>, vector<2x1x64xf32>
    tpu.vector_store %arg3[%c0_2, %c7, %c0_3], %0 {strides = array<i32>} : memref<2x8x64xf32, #tpu.memory_space<vmem>>, vector<2x1x64xf32>,
    %c0_4 = arith.constant 0 : index
    %c0_5 = arith.constant 0 : index
    %c0_6 = arith.constant 0 : index
    %c0_7 = arith.constant 0 : index
    %3 = vector.load %arg1[%c0_4, %c0_5, %c0_6, %c0_7] : memref<1x2x6x64xf32, #tpu.memory_space<vmem>>, vector<1x2x6x64xf32>
    %4 = vector.shape_cast %3 : vector<1x2x6x64xf32> to vector<2x6x64xf32>
    %c0_8 = arith.constant 0 : index
    %c1 = arith.constant 1 : index
    %c0_9 = arith.constant 0 : index
    %5 = vector.load %arg3[%c0_8, %c1, %c0_9] : memref<2x8x64xf32, #tpu.memory_space<vmem>>, vector<2x6x64xf32>
    tpu.vector_store %arg3[%c0_8, %c1, %c0_9], %4 {strides = array<i32>} : memref<2x8x64xf32, #tpu.memory_space<vmem>>, vector<2x6x64xf32>,
    %c0_10 = arith.constant 0 : index
    %c0_11 = arith.constant 0 : index
    %c0_12 = arith.constant 0 : index
    %6 = vector.load %arg3[%c0_10, %c0_11, %c0_12] : memref<2x8x64xf32, #tpu.memory_space<vmem>>, vector<2x8x64xf32>
    %7 = vector.extract_strided_slice %6 {offsets = [0, 0, 0], sizes = [1, 7, 64], strides = [1, 1, 1]} : vector<2x8x64xf32> to vector<1x7x64xf32>
    %8 = vector.extract_strided_slice %6 {offsets = [0, 1, 0], sizes = [1, 7, 64], strides = [1, 1, 1]} : vector<2x8x64xf32> to vector<1x7x64xf32>
    %9 = arith.maximumf %7, %8 : vector<1x7x64xf32>
    %10 = vector.extract_strided_slice %6 {offsets = [1, 0, 0], sizes = [1, 7, 64], strides = [1, 1, 1]} : vector<2x8x64xf32> to vector<1x7x64xf32>
    %11 = vector.extract_strided_slice %6 {offsets = [1, 1, 0], sizes = [1, 7, 64], strides = [1, 1, 1]} : vector<2x8x64xf32> to vector<1x7x64xf32>
    %12 = arith.maximumf %10, %11 : vector<1x7x64xf32>
    %13 = arith.maximumf %9, %12 : vector<1x7x64xf32>
    %c0_13 = arith.constant 0 : index
    %c0_14 = arith.constant 0 : index
    %c0_15 = arith.constant 0 : index
    %c0_16 = arith.constant 0 : index
    %14 = vector.load %arg2[%c0_13, %c0_14, %c0_15, %c0_16] : memref<1x1x7x64xf32, #tpu.memory_space<vmem>>, vector<1x1x7x64xf32>
    %15 = vector.shape_cast %14 : vector<1x1x7x64xf32> to vector<1x7x64xf32>
    %16 = vector.shape_cast %13 : vector<1x7x64xf32> to vector<1x1x7x64xf32>
    tpu.vector_store %arg2[%c0_13, %c0_14, %c0_15, %c0_16], %16 {strides = array<i32>} : memref<1x1x7x64xf32, #tpu.memory_space<vmem>>, vector<1x1x7x64xf32>,
    return
  }
  func.func @transform_0(%arg0: i32) -> (i32, i32, i32, i32) {
    %c0_i32 = arith.constant 0 : i32
    %c0_i32_0 = arith.constant 0 : i32
    %c0_i32_1 = arith.constant 0 : i32
    %c0_i32_2 = arith.constant 0 : i32
    return %arg0, %c0_i32, %c0_i32_0, %c0_i32_1 : i32, i32, i32, i32
  }
  func.func @transform_1(%arg0: i32) -> (i32, i32, i32, i32) {
    %c0_i32 = arith.constant 0 : i32
    %c0_i32_0 = arith.constant 0 : i32
    %c0_i32_1 = arith.constant 0 : i32
    %c0_i32_2 = arith.constant 0 : i32
    return %arg0, %c0_i32, %c0_i32_0, %c0_i32_1 : i32, i32, i32, i32
  }
}

module attributes {stable_mosaic.version = 11 : i64} {
  func.func @_dense_layer_kernel(%arg0: i32, %arg1: memref<1x7x64xf32, #tpu.memory_space<vmem>>, %arg2: memref<64x128xf32, #tpu.memory_space<vmem>>, %arg3: memref<1x64xf32, #tpu.memory_space<vmem>>, %arg4: memref<1x64xf32, #tpu.memory_space<vmem>>, %arg5: memref<1x128xf32, #tpu.memory_space<vmem>>, %arg6: memref<1x128xf32, #tpu.memory_space<vmem>>, %arg7: memref<128x288xf32, #tpu.memory_space<vmem>>, %arg8: memref<1x7x32xf32, #tpu.memory_space<vmem>>, %arg9: memref<27x128xf32, #tpu.memory_space<vmem>>) attributes {dimension_semantics = [#tpu.dimension_semantics<parallel>], iteration_bounds = array<i64: 2>, scalar_prefetch = 0 : i64, scratch_operands = 1 : i64, tpu.core_type = #tpu.core_type<tc>, window_params = [{transform_indices = @transform_0, window_bounds = array<i64: 1, 7, 64>}, {pipeline_mode = #tpu.pipeline_mode<synchronous>, transform_indices = @transform_1, window_bounds = array<i64: 64, 128>}, {pipeline_mode = #tpu.pipeline_mode<synchronous>, transform_indices = @transform_2, window_bounds = array<i64: 1, 64>}, {pipeline_mode = #tpu.pipeline_mode<synchronous>, transform_indices = @transform_3, window_bounds = array<i64: 1, 64>}, {pipeline_mode = #tpu.pipeline_mode<synchronous>, transform_indices = @transform_4, window_bounds = array<i64: 1, 128>}, {pipeline_mode = #tpu.pipeline_mode<synchronous>, transform_indices = @transform_5, window_bounds = array<i64: 1, 128>}, {pipeline_mode = #tpu.pipeline_mode<synchronous>, transform_indices = @transform_6, window_bounds = array<i64: 128, 288>}, {transform_indices = @transform_7, window_bounds = array<i64: 1, 7, 32>}]} {
    %c0 = arith.constant 0 : index
    %c0_0 = arith.constant 0 : index
    %c0_1 = arith.constant 0 : index
    %0 = vector.load %arg1[%c0, %c0_0, %c0_1] : memref<1x7x64xf32, #tpu.memory_space<vmem>>, vector<1x7x64xf32>
    %1 = vector.shape_cast %0 : vector<1x7x64xf32> to vector<7x64xf32>
    %c0_2 = arith.constant 0 : index
    %c0_3 = arith.constant 0 : index
    %2 = vector.load %arg3[%c0_2, %c0_3] : memref<1x64xf32, #tpu.memory_space<vmem>>, vector<1x64xf32>
    %3 = vector.broadcast %2 : vector<1x64xf32> to vector<7x64xf32>
    %4 = arith.mulf %1, %3 : vector<7x64xf32>
    %c0_4 = arith.constant 0 : index
    %c0_5 = arith.constant 0 : index
    %5 = vector.load %arg4[%c0_4, %c0_5] : memref<1x64xf32, #tpu.memory_space<vmem>>, vector<1x64xf32>
    %6 = vector.broadcast %5 : vector<1x64xf32> to vector<7x64xf32>
    %7 = arith.addf %4, %6 : vector<7x64xf32>
    %cst = arith.constant 0.000000e+00 : f32
    %8 = vector.broadcast %cst : f32 to vector<7x64xf32>
    %9 = arith.maximumf %7, %8 : vector<7x64xf32>
    %c0_6 = arith.constant 0 : index
    %c0_7 = arith.constant 0 : index
    %10 = vector.load %arg2[%c0_6, %c0_7] : memref<64x128xf32, #tpu.memory_space<vmem>>, vector<64x128xf32>
    %cst_8 = arith.constant dense<0.000000e+00> : vector<7x128xf32>
    %11 = tpu.matmul %9, %10, %cst_8 {dimension_numbers = #tpu.dot_dimension_numbers<[1], [0], [0], [1], [0, 0, 1, 1], [], []>} : vector<7x64xf32>, vector<64x128xf32>, vector<7x128xf32> -> vector<7x128xf32>
    %c0_9 = arith.constant 0 : index
    %c0_10 = arith.constant 0 : index
    %12 = vector.load %arg5[%c0_9, %c0_10] : memref<1x128xf32, #tpu.memory_space<vmem>>, vector<1x128xf32>
    %13 = vector.broadcast %12 : vector<1x128xf32> to vector<7x128xf32>
    %14 = arith.mulf %11, %13 : vector<7x128xf32>
    %c0_11 = arith.constant 0 : index
    %c0_12 = arith.constant 0 : index
    %15 = vector.load %arg6[%c0_11, %c0_12] : memref<1x128xf32, #tpu.memory_space<vmem>>, vector<1x128xf32>
    %16 = vector.broadcast %15 : vector<1x128xf32> to vector<7x128xf32>
    %17 = arith.addf %14, %16 : vector<7x128xf32>
    %cst_13 = arith.constant 0.000000e+00 : f32
    %18 = vector.broadcast %cst_13 : f32 to vector<7x128xf32>
    %19 = arith.maximumf %17, %18 : vector<7x128xf32>
    %cst_14 = arith.constant 0.000000e+00 : f32
    %20 = vector.broadcast %cst_14 : f32 to vector<10x128xf32>
    %c0_15 = arith.constant 0 : index
    %c0_16 = arith.constant 0 : index
    %21 = vector.load %arg9[%c0_15, %c0_16] : memref<27x128xf32, #tpu.memory_space<vmem>>, vector<10x128xf32>
    tpu.vector_store %arg9[%c0_15, %c0_16], %20 {strides = array<i32>} : memref<27x128xf32, #tpu.memory_space<vmem>>, vector<10x128xf32>,
    %cst_17 = arith.constant 0.000000e+00 : f32
    %22 = vector.broadcast %cst_17 : f32 to vector<10x128xf32>
    %c17 = arith.constant 17 : index
    %c0_18 = arith.constant 0 : index
    %23 = vector.load %arg9[%c17, %c0_18] : memref<27x128xf32, #tpu.memory_space<vmem>>, vector<10x128xf32>
    tpu.vector_store %arg9[%c17, %c0_18], %22 {strides = array<i32>} : memref<27x128xf32, #tpu.memory_space<vmem>>, vector<10x128xf32>,
    %c10 = arith.constant 10 : index
    %c0_19 = arith.constant 0 : index
    %24 = vector.load %arg9[%c10, %c0_19] : memref<27x128xf32, #tpu.memory_space<vmem>>, vector<7x128xf32>
    tpu.vector_store %arg9[%c10, %c0_19], %19 {strides = array<i32>} : memref<27x128xf32, #tpu.memory_space<vmem>>, vector<7x128xf32>,
    %c0_20 = arith.constant 0 : index
    %c0_21 = arith.constant 0 : index
    %25 = vector.load %arg9[%c0_20, %c0_21] : memref<27x128xf32, #tpu.memory_space<vmem>>, vector<27x128xf32>
    %c0_22 = arith.constant 0 : index
    %c0_23 = arith.constant 0 : index
    %26 = vector.load %arg7[%c0_22, %c0_23] : memref<128x288xf32, #tpu.memory_space<vmem>>, vector<128x288xf32>
    %cst_24 = arith.constant dense<0.000000e+00> : vector<27x288xf32>
    %27 = tpu.matmul %25, %26, %cst_24 {dimension_numbers = #tpu.dot_dimension_numbers<[1], [0], [0], [1], [0, 0, 1, 1], [], []>} : vector<27x128xf32>, vector<128x288xf32>, vector<27x288xf32> -> vector<27x288xf32>
    %28 = vector.extract_strided_slice %27 {offsets = [0, 0], sizes = [7, 32], strides = [1, 1]} : vector<27x288xf32> to vector<7x32xf32>
    %29 = vector.extract_strided_slice %27 {offsets = [1, 32], sizes = [7, 32], strides = [1, 1]} : vector<27x288xf32> to vector<7x32xf32>
    %30 = arith.addf %28, %29 : vector<7x32xf32>
    %31 = vector.extract_strided_slice %27 {offsets = [2, 64], sizes = [7, 32], strides = [1, 1]} : vector<27x288xf32> to vector<7x32xf32>
    %32 = arith.addf %30, %31 : vector<7x32xf32>
    %33 = vector.extract_strided_slice %27 {offsets = [9, 96], sizes = [7, 32], strides = [1, 1]} : vector<27x288xf32> to vector<7x32xf32>
    %34 = arith.addf %32, %33 : vector<7x32xf32>
    %35 = vector.extract_strided_slice %27 {offsets = [10, 128], sizes = [7, 32], strides = [1, 1]} : vector<27x288xf32> to vector<7x32xf32>
    %36 = arith.addf %34, %35 : vector<7x32xf32>
    %37 = vector.extract_strided_slice %27 {offsets = [11, 160], sizes = [7, 32], strides = [1, 1]} : vector<27x288xf32> to vector<7x32xf32>
    %38 = arith.addf %36, %37 : vector<7x32xf32>
    %39 = vector.extract_strided_slice %27 {offsets = [18, 192], sizes = [7, 32], strides = [1, 1]} : vector<27x288xf32> to vector<7x32xf32>
    %40 = arith.addf %38, %39 : vector<7x32xf32>
    %41 = vector.extract_strided_slice %27 {offsets = [19, 224], sizes = [7, 32], strides = [1, 1]} : vector<27x288xf32> to vector<7x32xf32>
    %42 = arith.addf %40, %41 : vector<7x32xf32>
    %43 = vector.extract_strided_slice %27 {offsets = [20, 256], sizes = [7, 32], strides = [1, 1]} : vector<27x288xf32> to vector<7x32xf32>
    %44 = arith.addf %42, %43 : vector<7x32xf32>
    %c0_25 = arith.constant 0 : index
    %c0_26 = arith.constant 0 : index
    %c0_27 = arith.constant 0 : index
    %45 = vector.load %arg8[%c0_25, %c0_26, %c0_27] : memref<1x7x32xf32, #tpu.memory_space<vmem>>, vector<1x7x32xf32>
    %46 = vector.shape_cast %45 : vector<1x7x32xf32> to vector<7x32xf32>
    %47 = vector.shape_cast %44 : vector<7x32xf32> to vector<1x7x32xf32>
    tpu.vector_store %arg8[%c0_25, %c0_26, %c0_27], %47 {strides = array<i32>} : memref<1x7x32xf32, #tpu.memory_space<vmem>>, vector<1x7x32xf32>,
    return
  }
  func.func @transform_0(%arg0: i32) -> (i32, i32, i32) {
    %c0_i32 = arith.constant 0 : i32
    %c0_i32_0 = arith.constant 0 : i32
    %c0_i32_1 = arith.constant 0 : i32
    return %arg0, %c0_i32, %c0_i32_0 : i32, i32, i32
  }
  func.func @transform_1(%arg0: i32) -> (i32, i32) {
    %c0_i32 = arith.constant 0 : i32
    %c0_i32_0 = arith.constant 0 : i32
    %c0_i32_1 = arith.constant 0 : i32
    return %c0_i32, %c0_i32_0 : i32, i32
  }
  func.func @transform_2(%arg0: i32) -> (i32, i32) {
    %c0_i32 = arith.constant 0 : i32
    %c0_i32_0 = arith.constant 0 : i32
    %c0_i32_1 = arith.constant 0 : i32
    return %c0_i32, %c0_i32_0 : i32, i32
  }
  func.func @transform_3(%arg0: i32) -> (i32, i32) {
    %c0_i32 = arith.constant 0 : i32
    %c0_i32_0 = arith.constant 0 : i32
    %c0_i32_1 = arith.constant 0 : i32
    return %c0_i32, %c0_i32_0 : i32, i32
  }
  func.func @transform_4(%arg0: i32) -> (i32, i32) {
    %c0_i32 = arith.constant 0 : i32
    %c0_i32_0 = arith.constant 0 : i32
    %c0_i32_1 = arith.constant 0 : i32
    return %c0_i32, %c0_i32_0 : i32, i32
  }
  func.func @transform_5(%arg0: i32) -> (i32, i32) {
    %c0_i32 = arith.constant 0 : i32
    %c0_i32_0 = arith.constant 0 : i32
    %c0_i32_1 = arith.constant 0 : i32
    return %c0_i32, %c0_i32_0 : i32, i32
  }
  func.func @transform_6(%arg0: i32) -> (i32, i32) {
    %c0_i32 = arith.constant 0 : i32
    %c0_i32_0 = arith.constant 0 : i32
    %c0_i32_1 = arith.constant 0 : i32
    return %c0_i32, %c0_i32_0 : i32, i32
  }
  func.func @transform_7(%arg0: i32) -> (i32, i32, i32) {
    %c0_i32 = arith.constant 0 : i32
    %c0_i32_0 = arith.constant 0 : i32
    %c0_i32_1 = arith.constant 0 : i32
    return %arg0, %c0_i32, %c0_i32_0 : i32, i32, i32
  }
}

module attributes {stable_mosaic.version = 11 : i64} {
  func.func @_dense_layer_kernel(%arg0: i32, %arg1: memref<1x7x64xf32, #tpu.memory_space<vmem>>, %arg2: memref<1x7x32xf32, #tpu.memory_space<vmem>>, %arg3: memref<96x128xf32, #tpu.memory_space<vmem>>, %arg4: memref<1x96xf32, #tpu.memory_space<vmem>>, %arg5: memref<1x96xf32, #tpu.memory_space<vmem>>, %arg6: memref<1x128xf32, #tpu.memory_space<vmem>>, %arg7: memref<1x128xf32, #tpu.memory_space<vmem>>, %arg8: memref<128x288xf32, #tpu.memory_space<vmem>>, %arg9: memref<1x7x32xf32, #tpu.memory_space<vmem>>, %arg10: memref<27x128xf32, #tpu.memory_space<vmem>>) attributes {dimension_semantics = [#tpu.dimension_semantics<parallel>], iteration_bounds = array<i64: 2>, scalar_prefetch = 0 : i64, scratch_operands = 1 : i64, tpu.core_type = #tpu.core_type<tc>, window_params = [{transform_indices = @transform_0, window_bounds = array<i64: 1, 7, 64>}, {transform_indices = @transform_1, window_bounds = array<i64: 1, 7, 32>}, {pipeline_mode = #tpu.pipeline_mode<synchronous>, transform_indices = @transform_2, window_bounds = array<i64: 96, 128>}, {pipeline_mode = #tpu.pipeline_mode<synchronous>, transform_indices = @transform_3, window_bounds = array<i64: 1, 96>}, {pipeline_mode = #tpu.pipeline_mode<synchronous>, transform_indices = @transform_4, window_bounds = array<i64: 1, 96>}, {pipeline_mode = #tpu.pipeline_mode<synchronous>, transform_indices = @transform_5, window_bounds = array<i64: 1, 128>}, {pipeline_mode = #tpu.pipeline_mode<synchronous>, transform_indices = @transform_6, window_bounds = array<i64: 1, 128>}, {pipeline_mode = #tpu.pipeline_mode<synchronous>, transform_indices = @transform_7, window_bounds = array<i64: 128, 288>}, {transform_indices = @transform_8, window_bounds = array<i64: 1, 7, 32>}]} {
    %c0 = arith.constant 0 : index
    %c0_0 = arith.constant 0 : index
    %c0_1 = arith.constant 0 : index
    %0 = vector.load %arg1[%c0, %c0_0, %c0_1] : memref<1x7x64xf32, #tpu.memory_space<vmem>>, vector<1x7x64xf32>
    %1 = vector.shape_cast %0 : vector<1x7x64xf32> to vector<7x64xf32>
    %c0_2 = arith.constant 0 : index
    %c0_3 = arith.constant 0 : index
    %2 = vector.load %arg4[%c0_2, %c0_3] : memref<1x96xf32, #tpu.memory_space<vmem>>, vector<1x64xf32>
    %3 = vector.broadcast %2 : vector<1x64xf32> to vector<7x64xf32>
    %4 = arith.mulf %1, %3 : vector<7x64xf32>
    %c0_4 = arith.constant 0 : index
    %c0_5 = arith.constant 0 : index
    %5 = vector.load %arg5[%c0_4, %c0_5] : memref<1x96xf32, #tpu.memory_space<vmem>>, vector<1x64xf32>
    %6 = vector.broadcast %5 : vector<1x64xf32> to vector<7x64xf32>
    %7 = arith.addf %4, %6 : vector<7x64xf32>
    %cst = arith.constant 0.000000e+00 : f32
    %8 = vector.broadcast %cst : f32 to vector<7x64xf32>
    %9 = arith.maximumf %7, %8 : vector<7x64xf32>
    %c0_6 = arith.constant 0 : index
    %c0_7 = arith.constant 0 : index
    %10 = vector.load %arg3[%c0_6, %c0_7] : memref<96x128xf32, #tpu.memory_space<vmem>>, vector<64x128xf32>
    %cst_8 = arith.constant dense<0.000000e+00> : vector<7x128xf32>
    %11 = tpu.matmul %9, %10, %cst_8 {dimension_numbers = #tpu.dot_dimension_numbers<[1], [0], [0], [1], [0, 0, 1, 1], [], []>} : vector<7x64xf32>, vector<64x128xf32>, vector<7x128xf32> -> vector<7x128xf32>
    %c0_9 = arith.constant 0 : index
    %c0_10 = arith.constant 0 : index
    %c0_11 = arith.constant 0 : index
    %12 = vector.load %arg2[%c0_9, %c0_10, %c0_11] : memref<1x7x32xf32, #tpu.memory_space<vmem>>, vector<1x7x32xf32>
    %13 = vector.shape_cast %12 : vector<1x7x32xf32> to vector<7x32xf32>
    %c0_12 = arith.constant 0 : index
    %c64 = arith.constant 64 : index
    %14 = vector.load %arg4[%c0_12, %c64] : memref<1x96xf32, #tpu.memory_space<vmem>>, vector<1x32xf32>
    %15 = vector.broadcast %14 : vector<1x32xf32> to vector<7x32xf32>
    %16 = arith.mulf %13, %15 : vector<7x32xf32>
    %c0_13 = arith.constant 0 : index
    %c64_14 = arith.constant 64 : index
    %17 = vector.load %arg5[%c0_13, %c64_14] : memref<1x96xf32, #tpu.memory_space<vmem>>, vector<1x32xf32>
    %18 = vector.broadcast %17 : vector<1x32xf32> to vector<7x32xf32>
    %19 = arith.addf %16, %18 : vector<7x32xf32>
    %cst_15 = arith.constant 0.000000e+00 : f32
    %20 = vector.broadcast %cst_15 : f32 to vector<7x32xf32>
    %21 = arith.maximumf %19, %20 : vector<7x32xf32>
    %c64_16 = arith.constant 64 : index
    %c0_17 = arith.constant 0 : index
    %22 = vector.load %arg3[%c64_16, %c0_17] : memref<96x128xf32, #tpu.memory_space<vmem>>, vector<32x128xf32>
    %cst_18 = arith.constant dense<0.000000e+00> : vector<7x128xf32>
    %23 = tpu.matmul %21, %22, %cst_18 {dimension_numbers = #tpu.dot_dimension_numbers<[1], [0], [0], [1], [0, 0, 1, 1], [], []>} : vector<7x32xf32>, vector<32x128xf32>, vector<7x128xf32> -> vector<7x128xf32>
    %24 = arith.addf %11, %23 : vector<7x128xf32>
    %c0_19 = arith.constant 0 : index
    %c0_20 = arith.constant 0 : index
    %25 = vector.load %arg6[%c0_19, %c0_20] : memref<1x128xf32, #tpu.memory_space<vmem>>, vector<1x128xf32>
    %26 = vector.broadcast %25 : vector<1x128xf32> to vector<7x128xf32>
    %27 = arith.mulf %24, %26 : vector<7x128xf32>
    %c0_21 = arith.constant 0 : index
    %c0_22 = arith.constant 0 : index
    %28 = vector.load %arg7[%c0_21, %c0_22] : memref<1x128xf32, #tpu.memory_space<vmem>>, vector<1x128xf32>
    %29 = vector.broadcast %28 : vector<1x128xf32> to vector<7x128xf32>
    %30 = arith.addf %27, %29 : vector<7x128xf32>
    %cst_23 = arith.constant 0.000000e+00 : f32
    %31 = vector.broadcast %cst_23 : f32 to vector<7x128xf32>
    %32 = arith.maximumf %30, %31 : vector<7x128xf32>
    %cst_24 = arith.constant 0.000000e+00 : f32
    %33 = vector.broadcast %cst_24 : f32 to vector<10x128xf32>
    %c0_25 = arith.constant 0 : index
    %c0_26 = arith.constant 0 : index
    %34 = vector.load %arg10[%c0_25, %c0_26] : memref<27x128xf32, #tpu.memory_space<vmem>>, vector<10x128xf32>
    tpu.vector_store %arg10[%c0_25, %c0_26], %33 {strides = array<i32>} : memref<27x128xf32, #tpu.memory_space<vmem>>, vector<10x128xf32>,
    %cst_27 = arith.constant 0.000000e+00 : f32
    %35 = vector.broadcast %cst_27 : f32 to vector<10x128xf32>
    %c17 = arith.constant 17 : index
    %c0_28 = arith.constant 0 : index
    %36 = vector.load %arg10[%c17, %c0_28] : memref<27x128xf32, #tpu.memory_space<vmem>>, vector<10x128xf32>
    tpu.vector_store %arg10[%c17, %c0_28], %35 {strides = array<i32>} : memref<27x128xf32, #tpu.memory_space<vmem>>, vector<10x128xf32>,
    %c10 = arith.constant 10 : index
    %c0_29 = arith.constant 0 : index
    %37 = vector.load %arg10[%c10, %c0_29] : memref<27x128xf32, #tpu.memory_space<vmem>>, vector<7x128xf32>
    tpu.vector_store %arg10[%c10, %c0_29], %32 {strides = array<i32>} : memref<27x128xf32, #tpu.memory_space<vmem>>, vector<7x128xf32>,
    %c0_30 = arith.constant 0 : index
    %c0_31 = arith.constant 0 : index
    %38 = vector.load %arg10[%c0_30, %c0_31] : memref<27x128xf32, #tpu.memory_space<vmem>>, vector<27x128xf32>
    %c0_32 = arith.constant 0 : index
    %c0_33 = arith.constant 0 : index
    %39 = vector.load %arg8[%c0_32, %c0_33] : memref<128x288xf32, #tpu.memory_space<vmem>>, vector<128x288xf32>
    %cst_34 = arith.constant dense<0.000000e+00> : vector<27x288xf32>
    %40 = tpu.matmul %38, %39, %cst_34 {dimension_numbers = #tpu.dot_dimension_numbers<[1], [0], [0], [1], [0, 0, 1, 1], [], []>} : vector<27x128xf32>, vector<128x288xf32>, vector<27x288xf32> -> vector<27x288xf32>
    %41 = vector.extract_strided_slice %40 {offsets = [0, 0], sizes = [7, 32], strides = [1, 1]} : vector<27x288xf32> to vector<7x32xf32>
    %42 = vector.extract_strided_slice %40 {offsets = [1, 32], sizes = [7, 32], strides = [1, 1]} : vector<27x288xf32> to vector<7x32xf32>
    %43 = arith.addf %41, %42 : vector<7x32xf32>
    %44 = vector.extract_strided_slice %40 {offsets = [2, 64], sizes = [7, 32], strides = [1, 1]} : vector<27x288xf32> to vector<7x32xf32>
    %45 = arith.addf %43, %44 : vector<7x32xf32>
    %46 = vector.extract_strided_slice %40 {offsets = [9, 96], sizes = [7, 32], strides = [1, 1]} : vector<27x288xf32> to vector<7x32xf32>
    %47 = arith.addf %45, %46 : vector<7x32xf32>
    %48 = vector.extract_strided_slice %40 {offsets = [10, 128], sizes = [7, 32], strides = [1, 1]} : vector<27x288xf32> to vector<7x32xf32>
    %49 = arith.addf %47, %48 : vector<7x32xf32>
    %50 = vector.extract_strided_slice %40 {offsets = [11, 160], sizes = [7, 32], strides = [1, 1]} : vector<27x288xf32> to vector<7x32xf32>
    %51 = arith.addf %49, %50 : vector<7x32xf32>
    %52 = vector.extract_strided_slice %40 {offsets = [18, 192], sizes = [7, 32], strides = [1, 1]} : vector<27x288xf32> to vector<7x32xf32>
    %53 = arith.addf %51, %52 : vector<7x32xf32>
    %54 = vector.extract_strided_slice %40 {offsets = [19, 224], sizes = [7, 32], strides = [1, 1]} : vector<27x288xf32> to vector<7x32xf32>
    %55 = arith.addf %53, %54 : vector<7x32xf32>
    %56 = vector.extract_strided_slice %40 {offsets = [20, 256], sizes = [7, 32], strides = [1, 1]} : vector<27x288xf32> to vector<7x32xf32>
    %57 = arith.addf %55, %56 : vector<7x32xf32>
    %c0_35 = arith.constant 0 : index
    %c0_36 = arith.constant 0 : index
    %c0_37 = arith.constant 0 : index
    %58 = vector.load %arg9[%c0_35, %c0_36, %c0_37] : memref<1x7x32xf32, #tpu.memory_space<vmem>>, vector<1x7x32xf32>
    %59 = vector.shape_cast %58 : vector<1x7x32xf32> to vector<7x32xf32>
    %60 = vector.shape_cast %57 : vector<7x32xf32> to vector<1x7x32xf32>
    tpu.vector_store %arg9[%c0_35, %c0_36, %c0_37], %60 {strides = array<i32>} : memref<1x7x32xf32, #tpu.memory_space<vmem>>, vector<1x7x32xf32>,
    return
  }
  func.func @transform_0(%arg0: i32) -> (i32, i32, i32) {
    %c0_i32 = arith.constant 0 : i32
    %c0_i32_0 = arith.constant 0 : i32
    %c0_i32_1 = arith.constant 0 : i32
    return %arg0, %c0_i32, %c0_i32_0 : i32, i32, i32
  }
  func.func @transform_1(%arg0: i32) -> (i32, i32, i32) {
    %c0_i32 = arith.constant 0 : i32
    %c0_i32_0 = arith.constant 0 : i32
    %c0_i32_1 = arith.constant 0 : i32
    return %arg0, %c0_i32, %c0_i32_0 : i32, i32, i32
  }
  func.func @transform_2(%arg0: i32) -> (i32, i32) {
    %c0_i32 = arith.constant 0 : i32
    %c0_i32_0 = arith.constant 0 : i32
    %c0_i32_1 = arith.constant 0 : i32
    return %c0_i32, %c0_i32_0 : i32, i32
  }
  func.func @transform_3(%arg0: i32) -> (i32, i32) {
    %c0_i32 = arith.constant 0 : i32
    %c0_i32_0 = arith.constant 0 : i32
    %c0_i32_1 = arith.constant 0 : i32
    return %c0_i32, %c0_i32_0 : i32, i32
  }
  func.func @transform_4(%arg0: i32) -> (i32, i32) {
    %c0_i32 = arith.constant 0 : i32
    %c0_i32_0 = arith.constant 0 : i32
    %c0_i32_1 = arith.constant 0 : i32
    return %c0_i32, %c0_i32_0 : i32, i32
  }
  func.func @transform_5(%arg0: i32) -> (i32, i32) {
    %c0_i32 = arith.constant 0 : i32
    %c0_i32_0 = arith.constant 0 : i32
    %c0_i32_1 = arith.constant 0 : i32
    return %c0_i32, %c0_i32_0 : i32, i32
  }
  func.func @transform_6(%arg0: i32) -> (i32, i32) {
    %c0_i32 = arith.constant 0 : i32
    %c0_i32_0 = arith.constant 0 : i32
    %c0_i32_1 = arith.constant 0 : i32
    return %c0_i32, %c0_i32_0 : i32, i32
  }
  func.func @transform_7(%arg0: i32) -> (i32, i32) {
    %c0_i32 = arith.constant 0 : i32
    %c0_i32_0 = arith.constant 0 : i32
    %c0_i32_1 = arith.constant 0 : i32
    return %c0_i32, %c0_i32_0 : i32, i32
  }
  func.func @transform_8(%arg0: i32) -> (i32, i32, i32) {
    %c0_i32 = arith.constant 0 : i32
    %c0_i32_0 = arith.constant 0 : i32
    %c0_i32_1 = arith.constant 0 : i32
    return %arg0, %c0_i32, %c0_i32_0 : i32, i32, i32
  }
}

module attributes {stable_mosaic.version = 11 : i64} {
  func.func @_affine_concat_kernel(%arg0: i32, %arg1: memref<1x7x64xf32, #tpu.memory_space<vmem>>, %arg2: memref<1x7x32xf32, #tpu.memory_space<vmem>>, %arg3: memref<1x7x32xf32, #tpu.memory_space<vmem>>, %arg4: memref<1x128xf32, #tpu.memory_space<vmem>>, %arg5: memref<1x128xf32, #tpu.memory_space<vmem>>, %arg6: memref<1x7x128xf32, #tpu.memory_space<vmem>>) attributes {dimension_semantics = [#tpu.dimension_semantics<parallel>], iteration_bounds = array<i64: 2>, scalar_prefetch = 0 : i64, scratch_operands = 0 : i64, tpu.core_type = #tpu.core_type<tc>, window_params = [{transform_indices = @transform_0, window_bounds = array<i64: 1, 7, 64>}, {transform_indices = @transform_1, window_bounds = array<i64: 1, 7, 32>}, {transform_indices = @transform_2, window_bounds = array<i64: 1, 7, 32>}, {pipeline_mode = #tpu.pipeline_mode<synchronous>, transform_indices = @transform_3, window_bounds = array<i64: 1, 128>}, {pipeline_mode = #tpu.pipeline_mode<synchronous>, transform_indices = @transform_4, window_bounds = array<i64: 1, 128>}, {transform_indices = @transform_5, window_bounds = array<i64: 1, 7, 128>}]} {
    %c0 = arith.constant 0 : index
    %c0_0 = arith.constant 0 : index
    %c0_1 = arith.constant 0 : index
    %0 = vector.load %arg1[%c0, %c0_0, %c0_1] : memref<1x7x64xf32, #tpu.memory_space<vmem>>, vector<1x7x64xf32>
    %1 = vector.shape_cast %0 : vector<1x7x64xf32> to vector<7x64xf32>
    %c0_2 = arith.constant 0 : index
    %c0_3 = arith.constant 0 : index
    %2 = vector.load %arg4[%c0_2, %c0_3] : memref<1x128xf32, #tpu.memory_space<vmem>>, vector<1x64xf32>
    %3 = vector.broadcast %2 : vector<1x64xf32> to vector<7x64xf32>
    %4 = arith.mulf %1, %3 : vector<7x64xf32>
    %c0_4 = arith.constant 0 : index
    %c0_5 = arith.constant 0 : index
    %5 = vector.load %arg5[%c0_4, %c0_5] : memref<1x128xf32, #tpu.memory_space<vmem>>, vector<1x64xf32>
    %6 = vector.broadcast %5 : vector<1x64xf32> to vector<7x64xf32>
    %7 = arith.addf %4, %6 : vector<7x64xf32>
    %c0_6 = arith.constant 0 : index
    %c0_7 = arith.constant 0 : index
    %c0_8 = arith.constant 0 : index
    %8 = vector.load %arg2[%c0_6, %c0_7, %c0_8] : memref<1x7x32xf32, #tpu.memory_space<vmem>>, vector<1x7x32xf32>
    %9 = vector.shape_cast %8 : vector<1x7x32xf32> to vector<7x32xf32>
    %c0_9 = arith.constant 0 : index
    %c64 = arith.constant 64 : index
    %10 = vector.load %arg4[%c0_9, %c64] : memref<1x128xf32, #tpu.memory_space<vmem>>, vector<1x32xf32>
    %11 = vector.broadcast %10 : vector<1x32xf32> to vector<7x32xf32>
    %12 = arith.mulf %9, %11 : vector<7x32xf32>
    %c0_10 = arith.constant 0 : index
    %c64_11 = arith.constant 64 : index
    %13 = vector.load %arg5[%c0_10, %c64_11] : memref<1x128xf32, #tpu.memory_space<vmem>>, vector<1x32xf32>
    %14 = vector.broadcast %13 : vector<1x32xf32> to vector<7x32xf32>
    %15 = arith.addf %12, %14 : vector<7x32xf32>
    %c0_12 = arith.constant 0 : index
    %c0_13 = arith.constant 0 : index
    %c0_14 = arith.constant 0 : index
    %16 = vector.load %arg3[%c0_12, %c0_13, %c0_14] : memref<1x7x32xf32, #tpu.memory_space<vmem>>, vector<1x7x32xf32>
    %17 = vector.shape_cast %16 : vector<1x7x32xf32> to vector<7x32xf32>
    %c0_15 = arith.constant 0 : index
    %c96 = arith.constant 96 : index
    %18 = vector.load %arg4[%c0_15, %c96] : memref<1x128xf32, #tpu.memory_space<vmem>>, vector<1x32xf32>
    %19 = vector.broadcast %18 : vector<1x32xf32> to vector<7x32xf32>
    %20 = arith.mulf %17, %19 : vector<7x32xf32>
    %c0_16 = arith.constant 0 : index
    %c96_17 = arith.constant 96 : index
    %21 = vector.load %arg5[%c0_16, %c96_17] : memref<1x128xf32, #tpu.memory_space<vmem>>, vector<1x32xf32>
    %22 = vector.broadcast %21 : vector<1x32xf32> to vector<7x32xf32>
    %23 = arith.addf %20, %22 : vector<7x32xf32>
    %24 = tpu.concatenate %7, %15, %23 in 1 : vector<7x64xf32>, vector<7x32xf32>, vector<7x32xf32> -> vector<7x128xf32>
    %c0_18 = arith.constant 0 : index
    %c0_19 = arith.constant 0 : index
    %c0_20 = arith.constant 0 : index
    %25 = vector.load %arg6[%c0_18, %c0_19, %c0_20] : memref<1x7x128xf32, #tpu.memory_space<vmem>>, vector<1x7x128xf32>
    %26 = vector.shape_cast %25 : vector<1x7x128xf32> to vector<7x128xf32>
    %27 = vector.shape_cast %24 : vector<7x128xf32> to vector<1x7x128xf32>
    tpu.vector_store %arg6[%c0_18, %c0_19, %c0_20], %27 {strides = array<i32>} : memref<1x7x128xf32, #tpu.memory_space<vmem>>, vector<1x7x128xf32>,
    return
  }
  func.func @transform_0(%arg0: i32) -> (i32, i32, i32) {
    %c0_i32 = arith.constant 0 : i32
    %c0_i32_0 = arith.constant 0 : i32
    %c0_i32_1 = arith.constant 0 : i32
    return %arg0, %c0_i32, %c0_i32_0 : i32, i32, i32
  }
  func.func @transform_1(%arg0: i32) -> (i32, i32, i32) {
    %c0_i32 = arith.constant 0 : i32
    %c0_i32_0 = arith.constant 0 : i32
    %c0_i32_1 = arith.constant 0 : i32
    return %arg0, %c0_i32, %c0_i32_0 : i32, i32, i32
  }
  func.func @transform_2(%arg0: i32) -> (i32, i32, i32) {
    %c0_i32 = arith.constant 0 : i32
    %c0_i32_0 = arith.constant 0 : i32
    %c0_i32_1 = arith.constant 0 : i32
    return %arg0, %c0_i32, %c0_i32_0 : i32, i32, i32
  }
  func.func @transform_3(%arg0: i32) -> (i32, i32) {
    %c0_i32 = arith.constant 0 : i32
    %c0_i32_0 = arith.constant 0 : i32
    %c0_i32_1 = arith.constant 0 : i32
    return %c0_i32, %c0_i32_0 : i32, i32
  }
  func.func @transform_4(%arg0: i32) -> (i32, i32) {
    %c0_i32 = arith.constant 0 : i32
    %c0_i32_0 = arith.constant 0 : i32
    %c0_i32_1 = arith.constant 0 : i32
    return %c0_i32, %c0_i32_0 : i32, i32
  }
  func.func @transform_5(%arg0: i32) -> (i32, i32, i32) {
    %c0_i32 = arith.constant 0 : i32
    %c0_i32_0 = arith.constant 0 : i32
    %c0_i32_1 = arith.constant 0 : i32
    return %arg0, %c0_i32, %c0_i32_0 : i32, i32, i32
  }
}

</mosaic_0001>

<llo_original>
// kernel: densenet_pallas.14
$region0: #{densenet_pallas.14}
  #allocation0 [shape = 'u32[]', space=smem, size = 0x4, offset = 0x4, fixed_abs, tag = 'smem constant byte address 0x4 - core index']
  #allocation1 [shape = 'u32[72,128]{1,0:T(1,128)}', space=vmem, size = 0x9000, scoped, tag = 'internal scratch']
  #allocation2 [shape = 'f32[10,10,64]{2,1,0:T(8,128)}', space=vmem, size = 0x14000, scoped, tag = 'scratch operand']
  %s0 = inlined_call_operand.vmem [shape: f32[2,8,8,64], index: 0, kind: input, shape index: {}]
  %s1 = inlined_call_operand.vmem [shape: f32[2,9,9,64], index: 1, kind: output, shape index: {}]
  %s2 = sld [smem:[#allocation0]]
  $region37: #{densenet_pallas.14} parent=0
    _
  %s4 = ssub.s32 1, %s2
  %s5 = scalar_select 0, %s4, %s2
  loop: start=0, step=1, limit=4
  $region2: #{densenet_pallas.14} parent=0 // loop_pre_header
    _
  $region3: #{densenet_pallas.14} parent=0 // loop_header
    %s7 = sphi 0, %s11
    %p8 = scmp.ge.s32.totalorder %s7, 4
    %s17 = sphi 0, %s19
    %s20 = sphi 0, %s17
    %s21 = sphi 0, %s20
    %s37 = sphi 0, %s21
    %s43 = sphi 0, %s45
    %s46 = sphi 0, %s43
    %s47 = sphi 0, %s46
    %s63 = sphi 0, %s47
  $region4: #{densenet_pallas.14} parent=0 // loop_header_branch
    %10 = sbr.rel (%p8) target = $region8
  $region5: #{densenet_pallas.14} parent=0 // loop_body
    %s12 = ssub.s32 %s7, 1
    %s13 = ssub.s32 %s7, 2
    %s14 = sadd.s32 %s7, 1
    %s15 = ssub.s32 %s7, %s14
    %p16 = scmp.eq.s32.totalorder %s15, 0
    %s18 = sadd.s32 %s17, 1
    %s19 = scalar_select %p16, %s17, %s18
    %p22 = pneg %p16
    %p23 = scmp.eq.s32.totalorder %s7, 1
    %p24 = por %p22, %p23
    %p25 = scmp.ne.s32.totalorder %s17, %s20
    %p26 = scmp.eq.s32.totalorder %s7, 0
    %p27 = por %p25, %p26
    %p28 = scmp.ne.s32.totalorder %s17, %s20
    %p29 = scmp.eq.s32.totalorder %s12, 1
    %p30 = por %p28, %p29
    %p31 = scmp.ne.s32.totalorder %s20, %s21
    %p32 = scmp.eq.s32.totalorder %s12, 0
    %p33 = por %p31, %p32
    %p34 = scmp.ne.s32.totalorder %s20, %s21
    %p35 = scmp.eq.s32.totalorder %s13, 1
    %p36 = por %p34, %p35
    %p38 = scmp.ne.s32.totalorder %s21, %s37
    %p39 = scmp.eq.s32.totalorder %s13, 0
    %p40 = por %p38, %p39
    %s41 = ssub.s32 %s7, %s14
    %p42 = scmp.eq.s32.totalorder %s41, 0
    %s44 = sadd.s32 %s43, 1
    %s45 = scalar_select %p42, %s43, %s44
    %p48 = pneg %p42
    %p49 = scmp.eq.s32.totalorder %s7, 1
    %p50 = por %p48, %p49
    %p51 = scmp.ne.s32.totalorder %s43, %s46
    %p52 = scmp.eq.s32.totalorder %s7, 0
    %p53 = por %p51, %p52
    %p54 = scmp.ne.s32.totalorder %s43, %s46
    %p55 = scmp.eq.s32.totalorder %s12, 1
    %p56 = por %p54, %p55
    %p57 = scmp.ne.s32.totalorder %s46, %s47
    %p58 = scmp.eq.s32.totalorder %s12, 0
    %p59 = por %p57, %p58
    %p60 = scmp.ne.s32.totalorder %s46, %s47
    %p61 = scmp.eq.s32.totalorder %s13, 1
    %p62 = por %p60, %p61
    %p64 = scmp.ne.s32.totalorder %s47, %s63
    %p65 = scmp.eq.s32.totalorder %s13, 0
    %p66 = por %p64, %p65
    %p67 = scmp.le.s32.totalorder 1, %s7
    %p68 = scmp.lt.s32.totalorder %s7, 3
    %p69 = pnand %p67, %p68
    %p70 = pneg %p69
    // Predicated region
    $region9: #{densenet_pallas.14} parent=5 // pred_check
      _
    $region10: #{densenet_pallas.14} parent=5 // pred_check_branch
      %72 = sbr.rel (%p69) target = $region12
    $region11: #{densenet_pallas.14} parent=5 // pred_region
      %s73 = ssub.s32 %s7, 1
    $region12: #{densenet_pallas.14} parent=5 // pred_fallthru
      _
    %p74 = scmp.lt.s32.totalorder %s7, 2
    // Predicated region
    $region13: #{densenet_pallas.14} parent=5 // pred_check
      %p75 = pneg %p74
    $region14: #{densenet_pallas.14} parent=5 // pred_check_branch
      %77 = sbr.rel (%p75) target = $region16
    $region15: #{densenet_pallas.14} parent=5 // pred_region
      // Predicated region
      $region17: #{densenet_pallas.14} parent=15 // pred_check
        %p78 = pneg %p27
      $region18: #{densenet_pallas.14} parent=15 // pred_check_branch
        %80 = sbr.rel (%p78) target = $region20
      $region19: #{densenet_pallas.14} parent=15 // pred_region
        %p81 = scmp.lt.s32.totalorder %s7, 1
        %s82 = scalar_select %p81, %s7, 1
        %s83 = smul.addr %s82, 8
        %s84 = smul.addr %s83, 8
        %s85 = scalar_lea.vmem %s0, %s84
      $region20: #{densenet_pallas.14} parent=15 // pred_fallthru
        _
    $region16: #{densenet_pallas.14} parent=5 // pred_fallthru
      _
    %p86 = scmp.le.s32.totalorder 1, %s7
    %p87 = scmp.lt.s32.totalorder %s7, 3
    %p88 = pnand %p86, %p87
    %p89 = pneg %p88
    // Predicated region
    $region21: #{densenet_pallas.14} parent=5 // pred_check
      _
    $region22: #{densenet_pallas.14} parent=5 // pred_check_branch
      %91 = sbr.rel (%p88) target = $region24
    $region23: #{densenet_pallas.14} parent=5 // pred_region
      %s92 = ssub.s32 %s7, 1
      %p93 = scmp.lt.s32.totalorder %s12, 1
      %s94 = scalar_select %p93, %s12, 1
      %s95 = smul.addr %s94, 8
      %s96 = smul.addr %s95, 8
      %s97 = scalar_lea.vmem %s0, %s96
      %p98 = pneg %p33
      %p99 = pneg %p30
      %p100 = pneg %p59
      %p101 = pneg %p56
      %p102 = scmp.lt.s32.totalorder %s12, 1
      %s103 = scalar_select %p102, %s12, 1
      %s104 = smul.addr %s103, 18
      %s105 = smul.addr %s104, 8
      %s106 = scalar_lea.vmem %s1, %s105
      %p107 = scmp.lt.s32.totalorder %s12, 1
      %s108 = scalar_select %p107, %s12, 1
      %s109 = smul.addr %s108, 8
      %s110 = smul.addr %s109, 8
      %s111 = scalar_lea.vmem %s0, %s110
      %p112 = scmp.lt.s32.totalorder %s12, 1
      %s113 = scalar_select %p112, %s12, 1
      %s114 = smul.addr %s113, 18
      %s115 = smul.addr %s114, 8
      %s116 = scalar_lea.vmem %s1, %s115
      %vm117 = vcmask 523264
      %118 = vst.msk [vmem:[#allocation2] sm:$0xff] %vm117, -inf
      %vm119 = vcmask 517120
      %120 = vst.msk [vmem:[#allocation2 + $0x8] sm:$0x3] %vm119, -inf
      %s121 = scalar_lea.vmem [#allocation2], 144
      %122 = vst.msk [vmem:[%s121] sm:$0xff] %vm117, -inf
      %123 = vst.msk [vmem:[%s121 + $0x8] sm:$0x3] %vm119, -inf
      %s124 = scalar_lea.vmem [#allocation2], 16
      %vm125 = vcmask 516096
      %126 = vst.msk [vmem:[%s124] sm:$0x1] %vm125, -inf
      %127 = vst.msk [vmem:[%s124 + $0x10] sm:$0x1] %vm125, -inf
      %128 = vst.msk [vmem:[%s124 + $0x20] sm:$0x1] %vm125, -inf
      %129 = vst.msk [vmem:[%s124 + $0x30] sm:$0x1] %vm125, -inf
      %130 = vst.msk [vmem:[%s124 + $0x40] sm:$0x1] %vm125, -inf
      %131 = vst.msk [vmem:[%s124 + $0x50] sm:$0x1] %vm125, -inf
      %132 = vst.msk [vmem:[%s124 + $0x60] sm:$0x1] %vm125, -inf
      %133 = vst.msk [vmem:[%s124 + $0x70] sm:$0x1] %vm125, -inf
      %134 = vst.msk [vmem:[%s124 + $0x9] sm:$0x1] %vm125, -inf
      %135 = vst.msk [vmem:[%s124 + $0x19] sm:$0x1] %vm125, -inf
      %136 = vst.msk [vmem:[%s124 + $0x29] sm:$0x1] %vm125, -inf
      %137 = vst.msk [vmem:[%s124 + $0x39] sm:$0x1] %vm125, -inf
      %138 = vst.msk [vmem:[%s124 + $0x49] sm:$0x1] %vm125, -inf
      %139 = vst.msk [vmem:[%s124 + $0x59] sm:$0x1] %vm125, -inf
      %140 = vst.msk [vmem:[%s124 + $0x69] sm:$0x1] %vm125, -inf
      %141 = vst.msk [vmem:[%s124 + $0x79] sm:$0x1] %vm125, -inf
      %v142 = vld [vmem:[%s111] sm:$0xff]
      %v143 = vld [vmem:[%s111 + $0x8] sm:$0xff]
      %v144 = vld [vmem:[%s111 + $0x10] sm:$0xff]
      %v145 = vld [vmem:[%s111 + $0x18] sm:$0xff]
      %v146 = vld [vmem:[%s111 + $0x20] sm:$0xff]
      %v147 = vld [vmem:[%s111 + $0x28] sm:$0xff]
      %v148 = vld [vmem:[%s111 + $0x30] sm:$0xff]
      %v149 = vld [vmem:[%s111 + $0x38] sm:$0xff]
      %150 = vst.msk [vmem:[%s124 + $0x1] sm:$0xff] %vm117, %v142
      %151 = vst.msk [vmem:[%s124 + $0x11] sm:$0xff] %vm117, %v143
      %152 = vst.msk [vmem:[%s124 + $0x21] sm:$0xff] %vm117, %v144
      %153 = vst.msk [vmem:[%s124 + $0x31] sm:$0xff] %vm117, %v145
      %154 = vst.msk [vmem:[%s124 + $0x41] sm:$0xff] %vm117, %v146
      %155 = vst.msk [vmem:[%s124 + $0x51] sm:$0xff] %vm117, %v147
      %156 = vst.msk [vmem:[%s124 + $0x61] sm:$0xff] %vm117, %v148
      %157 = vst.msk [vmem:[%s124 + $0x71] sm:$0xff] %vm117, %v149
      %v158 = vld [vmem:[#allocation2] sm:$0xff]
      %v159 = vld [vmem:[#allocation2 + $0x8] sm:$0x3]
      %v160 = vld [vmem:[#allocation2 + $0x10] sm:$0xff]
      %v161 = vld [vmem:[#allocation2 + $0x18] sm:$0x3]
      %v162 = vld [vmem:[#allocation2 + $0x20] sm:$0xff]
      %v163 = vld [vmem:[#allocation2 + $0x28] sm:$0x3]
      %v164 = vld [vmem:[#allocation2 + $0x30] sm:$0xff]
      %v165 = vld [vmem:[#allocation2 + $0x38] sm:$0x3]
      %v166 = vld [vmem:[#allocation2 + $0x40] sm:$0xff]
      %v167 = vld [vmem:[#allocation2 + $0x48] sm:$0x3]
      %v168 = vld [vmem:[#allocation2 + $0x50] sm:$0xff]
      %v169 = vld [vmem:[#allocation2 + $0x58] sm:$0x3]
      %v170 = vld [vmem:[#allocation2 + $0x60] sm:$0xff]
      %v171 = vld [vmem:[#allocation2 + $0x68] sm:$0x3]
      %v172 = vld [vmem:[#allocation2 + $0x70] sm:$0xff]
      %v173 = vld [vmem:[#allocation2 + $0x78] sm:$0x3]
      %v174 = vld [vmem:[#allocation2 + $0x80] sm:$0xff]
      %v175 = vld [vmem:[#allocation2 + $0x88] sm:$0x3]
      %v176 = vld [vmem:[#allocation2 + $0x90] sm:$0xff]
      %v177 = vld [vmem:[#allocation2 + $0x98] sm:$0x3]
      %vm196 = vcmask 1046528
      %v197 = vrot.slane %v158, 1
      %v198 = vrot.slane %v159, 1
      %v199 = vsel %vm196, %v197, %v198
      %v200 = vrot.slane %v160, 1
      %v201 = vrot.slane %v161, 1
      %v202 = vsel %vm196, %v200, %v201
      %v203 = vrot.slane %v162, 1
      %v204 = vrot.slane %v163, 1
      %v205 = vsel %vm196, %v203, %v204
      %v206 = vrot.slane %v164, 1
      %v207 = vrot.slane %v165, 1
      %v208 = vsel %vm196, %v206, %v207
      %v209 = vrot.slane %v166, 1
      %v210 = vrot.slane %v167, 1
      %v211 = vsel %vm196, %v209, %v210
      %v212 = vrot.slane %v168, 1
      %v213 = vrot.slane %v169, 1
      %v214 = vsel %vm196, %v212, %v213
      %v215 = vrot.slane %v170, 1
      %v216 = vrot.slane %v171, 1
      %v217 = vsel %vm196, %v215, %v216
      %v218 = vrot.slane %v172, 1
      %v219 = vrot.slane %v173, 1
      %v220 = vsel %vm196, %v218, %v219
      %v221 = vrot.slane %v174, 1
      %v222 = vrot.slane %v175, 1
      %v223 = vsel %vm196, %v221, %v222
      %v242 = vmax.f32 %v158, %v199
      %v243 = vmax.f32 %v159, %v198
      %v244 = vmax.f32 %v160, %v202
      %v245 = vmax.f32 %v161, %v201
      %v246 = vmax.f32 %v162, %v205
      %v247 = vmax.f32 %v163, %v204
      %v248 = vmax.f32 %v164, %v208
      %v249 = vmax.f32 %v165, %v207
      %v250 = vmax.f32 %v166, %v211
      %v251 = vmax.f32 %v167, %v210
      %v252 = vmax.f32 %v168, %v214
      %v253 = vmax.f32 %v169, %v213
      %v254 = vmax.f32 %v170, %v217
      %v255 = vmax.f32 %v171, %v216
      %v256 = vmax.f32 %v172, %v220
      %v257 = vmax.f32 %v173, %v219
      %v258 = vmax.f32 %v174, %v223
      %v259 = vmax.f32 %v175, %v222
      %v262 = vrot.slane %v176, 1
      %v263 = vrot.slane %v177, 1
      %v264 = vsel %vm196, %v262, %v263
      %v267 = vmax.f32 %v176, %v264
      %v268 = vmax.f32 %v177, %v263
      %v269 = vmax.f32 %v242, %v244
      %v270 = vmax.f32 %v243, %v245
      %v271 = vmax.f32 %v244, %v246
      %v272 = vmax.f32 %v245, %v247
      %v273 = vmax.f32 %v246, %v248
      %v274 = vmax.f32 %v247, %v249
      %v275 = vmax.f32 %v248, %v250
      %v276 = vmax.f32 %v249, %v251
      %v277 = vmax.f32 %v250, %v252
      %v278 = vmax.f32 %v251, %v253
      %v279 = vmax.f32 %v252, %v254
      %v280 = vmax.f32 %v253, %v255
      %v281 = vmax.f32 %v254, %v256
      %v282 = vmax.f32 %v255, %v257
      %v283 = vmax.f32 %v256, %v258
      %v284 = vmax.f32 %v257, %v259
      %v285 = vmax.f32 %v258, %v267
      %v286 = vmax.f32 %v259, %v268
      %287 = vst.msk [vmem:[%s116] sm:$0xff] %vm117, %v269
      %288 = vst.msk [vmem:[%s116 + $0x8] sm:$0x1] %vm125, %v270
      %289 = vst.msk [vmem:[%s116 + $0x10] sm:$0xff] %vm117, %v271
      %290 = vst.msk [vmem:[%s116 + $0x18] sm:$0x1] %vm125, %v272
      %291 = vst.msk [vmem:[%s116 + $0x20] sm:$0xff] %vm117, %v273
      %292 = vst.msk [vmem:[%s116 + $0x28] sm:$0x1] %vm125, %v274
      %293 = vst.msk [vmem:[%s116 + $0x30] sm:$0xff] %vm117, %v275
      %294 = vst.msk [vmem:[%s116 + $0x38] sm:$0x1] %vm125, %v276
      %295 = vst.msk [vmem:[%s116 + $0x40] sm:$0xff] %vm117, %v277
      %296 = vst.msk [vmem:[%s116 + $0x48] sm:$0x1] %vm125, %v278
      %297 = vst.msk [vmem:[%s116 + $0x50] sm:$0xff] %vm117, %v279
      %298 = vst.msk [vmem:[%s116 + $0x58] sm:$0x1] %vm125, %v280
      %299 = vst.msk [vmem:[%s116 + $0x60] sm:$0xff] %vm117, %v281
      %300 = vst.msk [vmem:[%s116 + $0x68] sm:$0x1] %vm125, %v282
      %301 = vst.msk [vmem:[%s116 + $0x70] sm:$0xff] %vm117, %v283
      %302 = vst.msk [vmem:[%s116 + $0x78] sm:$0x1] %vm125, %v284
      %303 = vst.msk [vmem:[%s116 + $0x80] sm:$0xff] %vm117, %v285
      %304 = vst.msk [vmem:[%s116 + $0x88] sm:$0x1] %vm125, %v286
      %p305 = scmp.lt.s32.totalorder %s12, 1
      %s306 = scalar_select %p305, %s12, 1
      %s307 = smul.addr %s306, 18
      %s308 = smul.addr %s307, 8
      %s309 = scalar_lea.vmem %s1, %s308
      // Predicated region
      $region25: #{densenet_pallas.14} parent=23 // pred_check
        %p310 = pneg %p56
      $region26: #{densenet_pallas.14} parent=23 // pred_check_branch
        %312 = sbr.rel (%p310) target = $region28
      $region27: #{densenet_pallas.14} parent=23 // pred_region
        _
      $region28: #{densenet_pallas.14} parent=23 // pred_fallthru
        _
    $region24: #{densenet_pallas.14} parent=5 // pred_fallthru
      _
    %p313 = scmp.le.s32.totalorder 2, %s7
    // Predicated region
    $region29: #{densenet_pallas.14} parent=5 // pred_check
      %p314 = pneg %p313
    $region30: #{densenet_pallas.14} parent=5 // pred_check_branch
      %316 = sbr.rel (%p314) target = $region32
    $region31: #{densenet_pallas.14} parent=5 // pred_region
      %s317 = ssub.s32 %s7, 2
      // Predicated region
      $region33: #{densenet_pallas.14} parent=31 // pred_check
        %p318 = pneg %p62
      $region34: #{densenet_pallas.14} parent=31 // pred_check_branch
        %320 = sbr.rel (%p318) target = $region36
      $region35: #{densenet_pallas.14} parent=31 // pred_region
        %p321 = scmp.lt.s32.totalorder %s13, 1
        %s322 = scalar_select %p321, %s13, 1
        %s323 = smul.addr %s322, 18
        %s324 = smul.addr %s323, 8
        %s325 = scalar_lea.vmem %s1, %s324
      $region36: #{densenet_pallas.14} parent=31 // pred_fallthru
        _
    $region32: #{densenet_pallas.14} parent=5 // pred_fallthru
      _
  $region6: #{densenet_pallas.14} parent=0 // loop_footer
    %s11 = sadd.s32 1, %s7
  $region7: #{densenet_pallas.14} parent=0 // loop_footer_branch
    %6 = sbr.rel target = $region3
  $region8: #{densenet_pallas.14} parent=0 // loop_exit
    _

// kernel: densenet_pallas.13
$region0: #{densenet_pallas.13}
  #allocation0 [shape = 'u32[]', space=smem, size = 0x4, offset = 0x4, fixed_abs, tag = 'smem constant byte address 0x4 - core index']
  #allocation1 [shape = 'u32[72,128]{1,0:T(1,128)}', space=vmem, size = 0x9000, scoped, tag = 'internal scratch']
  %s0 = inlined_call_operand.vmem [shape: f32[2,64,27], index: 0, kind: input, shape index: {}]
  %s1 = inlined_call_operand.vmem [shape: f32[27,64], index: 1, kind: input, shape index: {}]
  %s2 = inlined_call_operand.vmem [shape: f32[1,27], index: 2, kind: input, shape index: {}]
  %s3 = inlined_call_operand.vmem [shape: f32[1,27], index: 3, kind: input, shape index: {}]
  %s4 = inlined_call_operand.vmem [shape: f32[1,64], index: 4, kind: input, shape index: {}]
  %s5 = inlined_call_operand.vmem [shape: f32[1,64], index: 5, kind: input, shape index: {}]
  %s6 = inlined_call_operand.vmem [shape: f32[2,64,64], index: 6, kind: output, shape index: {}]
  %s7 = sld [smem:[#allocation0]]
  $region57: #{densenet_pallas.13} parent=0
    _
  %s9 = ssub.s32 1, %s7
  %s10 = scalar_select 0, %s9, %s7
  loop: start=0, step=1, limit=4
  $region2: #{densenet_pallas.13} parent=0 // loop_pre_header
    _
  $region3: #{densenet_pallas.13} parent=0 // loop_header
    %s12 = sphi 0, %s16
    %p13 = scmp.ge.s32.totalorder %s12, 4
    %s22 = sphi 0, %s24
    %s25 = sphi 0, %s22
    %s26 = sphi 0, %s25
    %s42 = sphi 0, %s26
    %s46 = sphi 0, %s46
    %s48 = sphi 0, %s46
    %s49 = sphi 0, %s48
    %s63 = sphi 0, %s49
    %s67 = sphi 0, %s67
    %s69 = sphi 0, %s67
    %s70 = sphi 0, %s69
    %s84 = sphi 0, %s70
    %s88 = sphi 0, %s88
    %s90 = sphi 0, %s88
    %s91 = sphi 0, %s90
    %s105 = sphi 0, %s91
    %s109 = sphi 0, %s109
    %s111 = sphi 0, %s109
    %s112 = sphi 0, %s111
    %s126 = sphi 0, %s112
    %s130 = sphi 0, %s130
    %s132 = sphi 0, %s130
    %s133 = sphi 0, %s132
    %s147 = sphi 0, %s133
    %s153 = sphi 0, %s155
    %s156 = sphi 0, %s153
    %s157 = sphi 0, %s156
    %s173 = sphi 0, %s157
  $region4: #{densenet_pallas.13} parent=0 // loop_header_branch
    %15 = sbr.rel (%p13) target = $region8
  $region5: #{densenet_pallas.13} parent=0 // loop_body
    %s17 = ssub.s32 %s12, 1
    %s18 = ssub.s32 %s12, 2
    %s19 = sadd.s32 %s12, 1
    %s20 = ssub.s32 %s12, %s19
    %p21 = scmp.eq.s32.totalorder %s20, 0
    %s23 = sadd.s32 %s22, 1
    %s24 = scalar_select %p21, %s22, %s23
    %p27 = pneg %p21
    %p28 = scmp.eq.s32.totalorder %s12, 1
    %p29 = por %p27, %p28
    %p30 = scmp.ne.s32.totalorder %s22, %s25
    %p31 = scmp.eq.s32.totalorder %s12, 0
    %p32 = por %p30, %p31
    %p33 = scmp.ne.s32.totalorder %s22, %s25
    %p34 = scmp.eq.s32.totalorder %s17, 1
    %p35 = por %p33, %p34
    %p36 = scmp.ne.s32.totalorder %s25, %s26
    %p37 = scmp.eq.s32.totalorder %s17, 0
    %p38 = por %p36, %p37
    %p39 = scmp.ne.s32.totalorder %s25, %s26
    %p40 = scmp.eq.s32.totalorder %s18, 1
    %p41 = por %p39, %p40
    %p43 = scmp.ne.s32.totalorder %s26, %s42
    %p44 = scmp.eq.s32.totalorder %s18, 0
    %p45 = por %p43, %p44
    %s47 = sadd.s32 %s46, 1
    %p50 = scmp.eq.s32.totalorder %s12, 1
    %p51 = scmp.ne.s32.totalorder %s46, %s48
    %p52 = scmp.eq.s32.totalorder %s12, 0
    %p53 = por %p51, %p52
    %p54 = scmp.ne.s32.totalorder %s46, %s48
    %p55 = scmp.eq.s32.totalorder %s17, 1
    %p56 = por %p54, %p55
    %p57 = scmp.ne.s32.totalorder %s48, %s49
    %p58 = scmp.eq.s32.totalorder %s17, 0
    %p59 = por %p57, %p58
    %p60 = scmp.ne.s32.totalorder %s48, %s49
    %p61 = scmp.eq.s32.totalorder %s18, 1
    %p62 = por %p60, %p61
    %p64 = scmp.ne.s32.totalorder %s49, %s63
    %p65 = scmp.eq.s32.totalorder %s18, 0
    %p66 = por %p64, %p65
    %s68 = sadd.s32 %s67, 1
    %p71 = scmp.eq.s32.totalorder %s12, 1
    %p72 = scmp.ne.s32.totalorder %s67, %s69
    %p73 = scmp.eq.s32.totalorder %s12, 0
    %p74 = por %p72, %p73
    %p75 = scmp.ne.s32.totalorder %s67, %s69
    %p76 = scmp.eq.s32.totalorder %s17, 1
    %p77 = por %p75, %p76
    %p78 = scmp.ne.s32.totalorder %s69, %s70
    %p79 = scmp.eq.s32.totalorder %s17, 0
    %p80 = por %p78, %p79
    %p81 = scmp.ne.s32.totalorder %s69, %s70
    %p82 = scmp.eq.s32.totalorder %s18, 1
    %p83 = por %p81, %p82
    %p85 = scmp.ne.s32.totalorder %s70, %s84
    %p86 = scmp.eq.s32.totalorder %s18, 0
    %p87 = por %p85, %p86
    %s89 = sadd.s32 %s88, 1
    %p92 = scmp.eq.s32.totalorder %s12, 1
    %p93 = scmp.ne.s32.totalorder %s88, %s90
    %p94 = scmp.eq.s32.totalorder %s12, 0
    %p95 = por %p93, %p94
    %p96 = scmp.ne.s32.totalorder %s88, %s90
    %p97 = scmp.eq.s32.totalorder %s17, 1
    %p98 = por %p96, %p97
    %p99 = scmp.ne.s32.totalorder %s90, %s91
    %p100 = scmp.eq.s32.totalorder %s17, 0
    %p101 = por %p99, %p100
    %p102 = scmp.ne.s32.totalorder %s90, %s91
    %p103 = scmp.eq.s32.totalorder %s18, 1
    %p104 = por %p102, %p103
    %p106 = scmp.ne.s32.totalorder %s91, %s105
    %p107 = scmp.eq.s32.totalorder %s18, 0
    %p108 = por %p106, %p107
    %s110 = sadd.s32 %s109, 1
    %p113 = scmp.eq.s32.totalorder %s12, 1
    %p114 = scmp.ne.s32.totalorder %s109, %s111
    %p115 = scmp.eq.s32.totalorder %s12, 0
    %p116 = por %p114, %p115
    %p117 = scmp.ne.s32.totalorder %s109, %s111
    %p118 = scmp.eq.s32.totalorder %s17, 1
    %p119 = por %p117, %p118
    %p120 = scmp.ne.s32.totalorder %s111, %s112
    %p121 = scmp.eq.s32.totalorder %s17, 0
    %p122 = por %p120, %p121
    %p123 = scmp.ne.s32.totalorder %s111, %s112
    %p124 = scmp.eq.s32.totalorder %s18, 1
    %p125 = por %p123, %p124
    %p127 = scmp.ne.s32.totalorder %s112, %s126
    %p128 = scmp.eq.s32.totalorder %s18, 0
    %p129 = por %p127, %p128
    %s131 = sadd.s32 %s130, 1
    %p134 = scmp.eq.s32.totalorder %s12, 1
    %p135 = scmp.ne.s32.totalorder %s130, %s132
    %p136 = scmp.eq.s32.totalorder %s12, 0
    %p137 = por %p135, %p136
    %p138 = scmp.ne.s32.totalorder %s130, %s132
    %p139 = scmp.eq.s32.totalorder %s17, 1
    %p140 = por %p138, %p139
    %p141 = scmp.ne.s32.totalorder %s132, %s133
    %p142 = scmp.eq.s32.totalorder %s17, 0
    %p143 = por %p141, %p142
    %p144 = scmp.ne.s32.totalorder %s132, %s133
    %p145 = scmp.eq.s32.totalorder %s18, 1
    %p146 = por %p144, %p145
    %p148 = scmp.ne.s32.totalorder %s133, %s147
    %p149 = scmp.eq.s32.totalorder %s18, 0
    %p150 = por %p148, %p149
    %s151 = ssub.s32 %s12, %s19
    %p152 = scmp.eq.s32.totalorder %s151, 0
    %s154 = sadd.s32 %s153, 1
    %s155 = scalar_select %p152, %s153, %s154
    %p158 = pneg %p152
    %p159 = scmp.eq.s32.totalorder %s12, 1
    %p160 = por %p158, %p159
    %p161 = scmp.ne.s32.totalorder %s153, %s156
    %p162 = scmp.eq.s32.totalorder %s12, 0
    %p163 = por %p161, %p162
    %p164 = scmp.ne.s32.totalorder %s153, %s156
    %p165 = scmp.eq.s32.totalorder %s17, 1
    %p166 = por %p164, %p165
    %p167 = scmp.ne.s32.totalorder %s156, %s157
    %p168 = scmp.eq.s32.totalorder %s17, 0
    %p169 = por %p167, %p168
    %p170 = scmp.ne.s32.totalorder %s156, %s157
    %p171 = scmp.eq.s32.totalorder %s18, 1
    %p172 = por %p170, %p171
    %p174 = scmp.ne.s32.totalorder %s157, %s173
    %p175 = scmp.eq.s32.totalorder %s18, 0
    %p176 = por %p174, %p175
    %p177 = scmp.le.s32.totalorder 1, %s12
    %p178 = scmp.lt.s32.totalorder %s12, 3
    %p179 = pnand %p177, %p178
    %p180 = pneg %p179
    // Predicated region
    $region9: #{densenet_pallas.13} parent=5 // pred_check
      _
    $region10: #{densenet_pallas.13} parent=5 // pred_check_branch
      %182 = sbr.rel (%p179) target = $region12
    $region11: #{densenet_pallas.13} parent=5 // pred_region
      %s183 = ssub.s32 %s12, 1
      // Predicated region
      $region13: #{densenet_pallas.13} parent=11 // pred_check
        %p184 = pneg %p59
      $region14: #{densenet_pallas.13} parent=11 // pred_check_branch
        %186 = sbr.rel (%p184) target = $region16
      $region15: #{densenet_pallas.13} parent=11 // pred_region
        _
      $region16: #{densenet_pallas.13} parent=11 // pred_fallthru
        _
      // Predicated region
      $region17: #{densenet_pallas.13} parent=11 // pred_check
        %p187 = pneg %p80
      $region18: #{densenet_pallas.13} parent=11 // pred_check_branch
        %189 = sbr.rel (%p187) target = $region20
      $region19: #{densenet_pallas.13} parent=11 // pred_region
        _
      $region20: #{densenet_pallas.13} parent=11 // pred_fallthru
        _
      // Predicated region
      $region21: #{densenet_pallas.13} parent=11 // pred_check
        %p190 = pneg %p101
      $region22: #{densenet_pallas.13} parent=11 // pred_check_branch
        %192 = sbr.rel (%p190) target = $region24
      $region23: #{densenet_pallas.13} parent=11 // pred_region
        _
      $region24: #{densenet_pallas.13} parent=11 // pred_fallthru
        _
      // Predicated region
      $region25: #{densenet_pallas.13} parent=11 // pred_check
        %p193 = pneg %p122
      $region26: #{densenet_pallas.13} parent=11 // pred_check_branch
        %195 = sbr.rel (%p193) target = $region28
      $region27: #{densenet_pallas.13} parent=11 // pred_region
        _
      $region28: #{densenet_pallas.13} parent=11 // pred_fallthru
        _
      // Predicated region
      $region29: #{densenet_pallas.13} parent=11 // pred_check
        %p196 = pneg %p143
      $region30: #{densenet_pallas.13} parent=11 // pred_check_branch
        %198 = sbr.rel (%p196) target = $region32
      $region31: #{densenet_pallas.13} parent=11 // pred_region
        _
      $region32: #{densenet_pallas.13} parent=11 // pred_fallthru
        _
    $region12: #{densenet_pallas.13} parent=5 // pred_fallthru
      _
    %p199 = scmp.lt.s32.totalorder %s12, 2
    // Predicated region
    $region33: #{densenet_pallas.13} parent=5 // pred_check
      %p200 = pneg %p199
    $region34: #{densenet_pallas.13} parent=5 // pred_check_branch
      %202 = sbr.rel (%p200) target = $region36
    $region35: #{densenet_pallas.13} parent=5 // pred_region
      // Predicated region
      $region37: #{densenet_pallas.13} parent=35 // pred_check
        %p203 = pneg %p32
      $region38: #{densenet_pallas.13} parent=35 // pred_check_branch
        %205 = sbr.rel (%p203) target = $region40
      $region39: #{densenet_pallas.13} parent=35 // pred_region
        %p206 = scmp.lt.s32.totalorder %s12, 1
        %s207 = scalar_select %p206, %s12, 1
        %s208 = smul.addr %s207, 8
        %s209 = smul.addr %s208, 8
        %s210 = scalar_lea.vmem %s0, %s209
      $region40: #{densenet_pallas.13} parent=35 // pred_fallthru
        _
    $region36: #{densenet_pallas.13} parent=5 // pred_fallthru
      _
    %p211 = scmp.le.s32.totalorder 1, %s12
    %p212 = scmp.lt.s32.totalorder %s12, 3
    %p213 = pnand %p211, %p212
    %p214 = pneg %p213
    // Predicated region
    $region41: #{densenet_pallas.13} parent=5 // pred_check
      _
    $region42: #{densenet_pallas.13} parent=5 // pred_check_branch
      %216 = sbr.rel (%p213) target = $region44
    $region43: #{densenet_pallas.13} parent=5 // pred_region
      %s217 = ssub.s32 %s12, 1
      %p218 = scmp.lt.s32.totalorder %s17, 1
      %s219 = scalar_select %p218, %s17, 1
      %s220 = smul.addr %s219, 8
      %s221 = smul.addr %s220, 8
      %s222 = scalar_lea.vmem %s0, %s221
      %p223 = pneg %p38
      %p224 = pneg %p35
      %p225 = pneg %p59
      %p226 = pneg %p56
      %p227 = pneg %p80
      %p228 = pneg %p77
      %p229 = pneg %p101
      %p230 = pneg %p98
      %p231 = pneg %p122
      %p232 = pneg %p119
      %p233 = pneg %p143
      %p234 = pneg %p140
      %p235 = pneg %p169
      %p236 = pneg %p166
      %p237 = scmp.lt.s32.totalorder %s17, 1
      %s238 = scalar_select %p237, %s17, 1
      %s239 = smul.addr %s238, 8
      %s240 = smul.addr %s239, 8
      %s241 = scalar_lea.vmem %s6, %s240
      %p242 = scmp.lt.s32.totalorder %s17, 1
      %s243 = scalar_select %p242, %s17, 1
      %s244 = smul.addr %s243, 8
      %s245 = smul.addr %s244, 8
      %s246 = scalar_lea.vmem %s0, %s245
      %p247 = scmp.lt.s32.totalorder %s17, 1
      %s248 = scalar_select %p247, %s17, 1
      %s249 = smul.addr %s248, 8
      %s250 = smul.addr %s249, 8
      %s251 = scalar_lea.vmem %s6, %s250
      %v252 = vld [vmem:[%s246] sm:$0xff]
      %v253 = vld [vmem:[%s246 + $0x8] sm:$0xff]
      %v254 = vld [vmem:[%s246 + $0x10] sm:$0xff]
      %v255 = vld [vmem:[%s246 + $0x18] sm:$0xff]
      %v256 = vld [vmem:[%s246 + $0x20] sm:$0xff]
      %v257 = vld [vmem:[%s246 + $0x28] sm:$0xff]
      %v258 = vld [vmem:[%s246 + $0x30] sm:$0xff]
      %v259 = vld [vmem:[%s246 + $0x38] sm:$0xff]
      %v260 = vld [vmem:[%s2] sm:$0x1]
      %v262 = vperm.slane %v260, 0
      %v264 = vmul.f32 %v252, %v262
      %v265 = vmul.f32 %v253, %v262
      %v266 = vmul.f32 %v254, %v262
      %v267 = vmul.f32 %v255, %v262
      %v268 = vmul.f32 %v256, %v262
      %v269 = vmul.f32 %v257, %v262
      %v270 = vmul.f32 %v258, %v262
      %v271 = vmul.f32 %v259, %v262
      %v272 = vld [vmem:[%s3] sm:$0x1]
      %v274 = vperm.slane %v272, 0
      %v276 = vadd.f32 %v264, %v274
      %v277 = vadd.f32 %v265, %v274
      %v278 = vadd.f32 %v266, %v274
      %v279 = vadd.f32 %v267, %v274
      %v280 = vadd.f32 %v268, %v274
      %v281 = vadd.f32 %v269, %v274
      %v282 = vadd.f32 %v270, %v274
      %v283 = vadd.f32 %v271, %v274
      %v284 = vld [vmem:[%s1] sm:$0xff]
      %v285 = vld [vmem:[%s1 + $0x8] sm:$0xff]
      %v286 = vld [vmem:[%s1 + $0x10] sm:$0xff]
      %v287 = vld [vmem:[%s1 + $0x18] sm:$0x7]
      %vm288 = vcmask 220160
      %v290 = vsel %vm288, %v276, 0
      %v293 = vsel %vm288, %v277, 0
      %v296 = vsel %vm288, %v278, 0
      %v299 = vsel %vm288, %v279, 0
      %v302 = vsel %vm288, %v280, 0
      %v305 = vsel %vm288, %v281, 0
      %v308 = vsel %vm288, %v282, 0
      %v311 = vsel %vm288, %v283, 0
      %vm313 = vcmask 1042432
      %v315 = vsel %vm313, %v287, 0
      %317 = vmatpush.msra.mxu0 0.0
      %318 = vmatpush.msra.mxu0 0.0
      %319 = vmatpush.msra.mxu0 0.0
      %320 = vmatpush.msra.mxu0 0.0
      %321 = vmatpush.msra.mxu0 0.0
      %322 = vmatpush.msra.mxu0 0.0
      %323 = vmatpush.msra.mxu0 0.0
      %324 = vmatpush.msra.mxu0 0.0
      %325 = vmatpush.msra.mxu0 0.0
      %326 = vmatpush.msra.mxu0 0.0
      %327 = vmatpush.msra.mxu0 0.0
      %328 = vmatpush.msra.mxu0 0.0
      %329 = vmatpush.msra.mxu0 %v315
      %330 = vmatpush.msra.mxu0 %v286
      %331 = vmatpush.msra.mxu0 %v285
      %332 = vmatpush.msra.mxu0 %v284
      %333 = vmatmul.f32.gmra.mxu0 %v290
      %v334 = vpop.f32.mrf.mxu0
      %v335 = vadd.f32 0.0, %v334
      %336 = vmatmul.f32.gmra.mxu0 %v293
      %v337 = vpop.f32.mrf.mxu0
      %v338 = vadd.f32 0.0, %v337
      %339 = vmatmul.f32.gmra.mxu0 %v296
      %v340 = vpop.f32.mrf.mxu0
      %v341 = vadd.f32 0.0, %v340
      %342 = vmatmul.f32.gmra.mxu0 %v299
      %v343 = vpop.f32.mrf.mxu0
      %v344 = vadd.f32 0.0, %v343
      %345 = vmatmul.f32.gmra.mxu0 %v302
      %v346 = vpop.f32.mrf.mxu0
      %v347 = vadd.f32 0.0, %v346
      %348 = vmatmul.f32.gmra.mxu0 %v305
      %v349 = vpop.f32.mrf.mxu0
      %v350 = vadd.f32 0.0, %v349
      %351 = vmatmul.f32.gmra.mxu0 %v308
      %v352 = vpop.f32.mrf.mxu0
      %v353 = vadd.f32 0.0, %v352
      %354 = vmatmul.f32.gmra.mxu0 %v311
      %v355 = vpop.f32.mrf.mxu0
      %v356 = vadd.f32 0.0, %v355
      %357 = vdwg.mxu0
      %v358 = vld [vmem:[%s4] sm:$0x1]
      %v360 = vperm.slane %v358, 0
      %v362 = vmul.f32 %v335, %v360
      %v363 = vmul.f32 %v338, %v360
      %v364 = vmul.f32 %v341, %v360
      %v365 = vmul.f32 %v344, %v360
      %v366 = vmul.f32 %v347, %v360
      %v367 = vmul.f32 %v350, %v360
      %v368 = vmul.f32 %v353, %v360
      %v369 = vmul.f32 %v356, %v360
      %v370 = vld [vmem:[%s5] sm:$0x1]
      %v372 = vperm.slane %v370, 0
      %v374 = vadd.f32 %v362, %v372
      %v375 = vadd.f32 %v363, %v372
      %v376 = vadd.f32 %v364, %v372
      %v377 = vadd.f32 %v365, %v372
      %v378 = vadd.f32 %v366, %v372
      %v379 = vadd.f32 %v367, %v372
      %v380 = vadd.f32 %v368, %v372
      %v381 = vadd.f32 %v369, %v372
      %v382 = vmax.f32 %v374, 0.0
      %v383 = vmax.f32 %v375, 0.0
      %v384 = vmax.f32 %v376, 0.0
      %v385 = vmax.f32 %v377, 0.0
      %v386 = vmax.f32 %v378, 0.0
      %v387 = vmax.f32 %v379, 0.0
      %v388 = vmax.f32 %v380, 0.0
      %v389 = vmax.f32 %v381, 0.0
      %vm390 = vcmask 523264
      %391 = vst.msk [vmem:[%s251] sm:$0xff] %vm390, %v382
      %392 = vst.msk [vmem:[%s251 + $0x8] sm:$0xff] %vm390, %v383
      %393 = vst.msk [vmem:[%s251 + $0x10] sm:$0xff] %vm390, %v384
      %394 = vst.msk [vmem:[%s251 + $0x18] sm:$0xff] %vm390, %v385
      %395 = vst.msk [vmem:[%s251 + $0x20] sm:$0xff] %vm390, %v386
      %396 = vst.msk [vmem:[%s251 + $0x28] sm:$0xff] %vm390, %v387
      %397 = vst.msk [vmem:[%s251 + $0x30] sm:$0xff] %vm390, %v388
      %398 = vst.msk [vmem:[%s251 + $0x38] sm:$0xff] %vm390, %v389
      %p399 = scmp.lt.s32.totalorder %s17, 1
      %s400 = scalar_select %p399, %s17, 1
      %s401 = smul.addr %s400, 8
      %s402 = smul.addr %s401, 8
      %s403 = scalar_lea.vmem %s6, %s402
      // Predicated region
      $region45: #{densenet_pallas.13} parent=43 // pred_check
        %p404 = pneg %p166
      $region46: #{densenet_pallas.13} parent=43 // pred_check_branch
        %406 = sbr.rel (%p404) target = $region48
      $region47: #{densenet_pallas.13} parent=43 // pred_region
        _
      $region48: #{densenet_pallas.13} parent=43 // pred_fallthru
        _
    $region44: #{densenet_pallas.13} parent=5 // pred_fallthru
      _
    %p407 = scmp.le.s32.totalorder 2, %s12
    // Predicated region
    $region49: #{densenet_pallas.13} parent=5 // pred_check
      %p408 = pneg %p407
    $region50: #{densenet_pallas.13} parent=5 // pred_check_branch
      %410 = sbr.rel (%p408) target = $region52
    $region51: #{densenet_pallas.13} parent=5 // pred_region
      %s411 = ssub.s32 %s12, 2
      // Predicated region
      $region53: #{densenet_pallas.13} parent=51 // pred_check
        %p412 = pneg %p172
      $region54: #{densenet_pallas.13} parent=51 // pred_check_branch
        %414 = sbr.rel (%p412) target = $region56
      $region55: #{densenet_pallas.13} parent=51 // pred_region
        %p415 = scmp.lt.s32.totalorder %s18, 1
        %s416 = scalar_select %p415, %s18, 1
        %s417 = smul.addr %s416, 8
        %s418 = smul.addr %s417, 8
        %s419 = scalar_lea.vmem %s6, %s418
      $region56: #{densenet_pallas.13} parent=51 // pred_fallthru
        _
    $region52: #{densenet_pallas.13} parent=5 // pred_fallthru
      _
  $region6: #{densenet_pallas.13} parent=0 // loop_footer
    %s16 = sadd.s32 1, %s12
  $region7: #{densenet_pallas.13} parent=0 // loop_footer_branch
    %11 = sbr.rel target = $region3
  $region8: #{densenet_pallas.13} parent=0 // loop_exit
    _

// kernel: densenet_pallas.15
$region0: #{densenet_pallas.15}
  #allocation0 [shape = 'u32[]', space=smem, size = 0x4, offset = 0x4, fixed_abs, tag = 'smem constant byte address 0x4 - core index']
  #allocation1 [shape = 'u32[72,128]{1,0:T(1,128)}', space=vmem, size = 0x9000, scoped, tag = 'internal scratch']
  #allocation2 [shape = 'f32[49,128]{1,0:T(8,128)}', space=vmem, size = 0x7000, scoped, tag = 'scratch operand']
  %s0 = inlined_call_operand.vmem [shape: f32[2,25,64], index: 0, kind: input, shape index: {}]
  %s1 = inlined_call_operand.vmem [shape: f32[64,128], index: 1, kind: input, shape index: {}]
  %s2 = inlined_call_operand.vmem [shape: f32[1,64], index: 2, kind: input, shape index: {}]
  %s3 = inlined_call_operand.vmem [shape: f32[1,64], index: 3, kind: input, shape index: {}]
  %s4 = inlined_call_operand.vmem [shape: f32[1,128], index: 4, kind: input, shape index: {}]
  %s5 = inlined_call_operand.vmem [shape: f32[1,128], index: 5, kind: input, shape index: {}]
  %s6 = inlined_call_operand.vmem [shape: f32[128,288], index: 6, kind: input, shape index: {}]
  %s7 = inlined_call_operand.vmem [shape: f32[2,25,32], index: 7, kind: output, shape index: {}]
  %s8 = sld [smem:[#allocation0]]
  $region61: #{densenet_pallas.15} parent=0
    _
  %s10 = ssub.s32 1, %s8
  %s11 = scalar_select 0, %s10, %s8
  loop: start=0, step=1, limit=4
  $region2: #{densenet_pallas.15} parent=0 // loop_pre_header
    _
  $region3: #{densenet_pallas.15} parent=0 // loop_header
    %s13 = sphi 0, %s17
    %p14 = scmp.ge.s32.totalorder %s13, 4
    %s23 = sphi 0, %s25
    %s26 = sphi 0, %s23
    %s27 = sphi 0, %s26
    %s43 = sphi 0, %s27
    %s47 = sphi 0, %s47
    %s49 = sphi 0, %s47
    %s50 = sphi 0, %s49
    %s64 = sphi 0, %s50
    %s68 = sphi 0, %s68
    %s70 = sphi 0, %s68
    %s71 = sphi 0, %s70
    %s85 = sphi 0, %s71
    %s89 = sphi 0, %s89
    %s91 = sphi 0, %s89
    %s92 = sphi 0, %s91
    %s106 = sphi 0, %s92
    %s110 = sphi 0, %s110
    %s112 = sphi 0, %s110
    %s113 = sphi 0, %s112
    %s127 = sphi 0, %s113
    %s131 = sphi 0, %s131
    %s133 = sphi 0, %s131
    %s134 = sphi 0, %s133
    %s148 = sphi 0, %s134
    %s152 = sphi 0, %s152
    %s154 = sphi 0, %s152
    %s155 = sphi 0, %s154
    %s169 = sphi 0, %s155
    %s175 = sphi 0, %s177
    %s178 = sphi 0, %s175
    %s179 = sphi 0, %s178
    %s195 = sphi 0, %s179
  $region4: #{densenet_pallas.15} parent=0 // loop_header_branch
    %16 = sbr.rel (%p14) target = $region8
  $region5: #{densenet_pallas.15} parent=0 // loop_body
    %s18 = ssub.s32 %s13, 1
    %s19 = ssub.s32 %s13, 2
    %s20 = sadd.s32 %s13, 1
    %s21 = ssub.s32 %s13, %s20
    %p22 = scmp.eq.s32.totalorder %s21, 0
    %s24 = sadd.s32 %s23, 1
    %s25 = scalar_select %p22, %s23, %s24
    %p28 = pneg %p22
    %p29 = scmp.eq.s32.totalorder %s13, 1
    %p30 = por %p28, %p29
    %p31 = scmp.ne.s32.totalorder %s23, %s26
    %p32 = scmp.eq.s32.totalorder %s13, 0
    %p33 = por %p31, %p32
    %p34 = scmp.ne.s32.totalorder %s23, %s26
    %p35 = scmp.eq.s32.totalorder %s18, 1
    %p36 = por %p34, %p35
    %p37 = scmp.ne.s32.totalorder %s26, %s27
    %p38 = scmp.eq.s32.totalorder %s18, 0
    %p39 = por %p37, %p38
    %p40 = scmp.ne.s32.totalorder %s26, %s27
    %p41 = scmp.eq.s32.totalorder %s19, 1
    %p42 = por %p40, %p41
    %p44 = scmp.ne.s32.totalorder %s27, %s43
    %p45 = scmp.eq.s32.totalorder %s19, 0
    %p46 = por %p44, %p45
    %s48 = sadd.s32 %s47, 1
    %p51 = scmp.eq.s32.totalorder %s13, 1
    %p52 = scmp.ne.s32.totalorder %s47, %s49
    %p53 = scmp.eq.s32.totalorder %s13, 0
    %p54 = por %p52, %p53
    %p55 = scmp.ne.s32.totalorder %s47, %s49
    %p56 = scmp.eq.s32.totalorder %s18, 1
    %p57 = por %p55, %p56
    %p58 = scmp.ne.s32.totalorder %s49, %s50
    %p59 = scmp.eq.s32.totalorder %s18, 0
    %p60 = por %p58, %p59
    %p61 = scmp.ne.s32.totalorder %s49, %s50
    %p62 = scmp.eq.s32.totalorder %s19, 1
    %p63 = por %p61, %p62
    %p65 = scmp.ne.s32.totalorder %s50, %s64
    %p66 = scmp.eq.s32.totalorder %s19, 0
    %p67 = por %p65, %p66
    %s69 = sadd.s32 %s68, 1
    %p72 = scmp.eq.s32.totalorder %s13, 1
    %p73 = scmp.ne.s32.totalorder %s68, %s70
    %p74 = scmp.eq.s32.totalorder %s13, 0
    %p75 = por %p73, %p74
    %p76 = scmp.ne.s32.totalorder %s68, %s70
    %p77 = scmp.eq.s32.totalorder %s18, 1
    %p78 = por %p76, %p77
    %p79 = scmp.ne.s32.totalorder %s70, %s71
    %p80 = scmp.eq.s32.totalorder %s18, 0
    %p81 = por %p79, %p80
    %p82 = scmp.ne.s32.totalorder %s70, %s71
    %p83 = scmp.eq.s32.totalorder %s19, 1
    %p84 = por %p82, %p83
    %p86 = scmp.ne.s32.totalorder %s71, %s85
    %p87 = scmp.eq.s32.totalorder %s19, 0
    %p88 = por %p86, %p87
    %s90 = sadd.s32 %s89, 1
    %p93 = scmp.eq.s32.totalorder %s13, 1
    %p94 = scmp.ne.s32.totalorder %s89, %s91
    %p95 = scmp.eq.s32.totalorder %s13, 0
    %p96 = por %p94, %p95
    %p97 = scmp.ne.s32.totalorder %s89, %s91
    %p98 = scmp.eq.s32.totalorder %s18, 1
    %p99 = por %p97, %p98
    %p100 = scmp.ne.s32.totalorder %s91, %s92
    %p101 = scmp.eq.s32.totalorder %s18, 0
    %p102 = por %p100, %p101
    %p103 = scmp.ne.s32.totalorder %s91, %s92
    %p104 = scmp.eq.s32.totalorder %s19, 1
    %p105 = por %p103, %p104
    %p107 = scmp.ne.s32.totalorder %s92, %s106
    %p108 = scmp.eq.s32.totalorder %s19, 0
    %p109 = por %p107, %p108
    %s111 = sadd.s32 %s110, 1
    %p114 = scmp.eq.s32.totalorder %s13, 1
    %p115 = scmp.ne.s32.totalorder %s110, %s112
    %p116 = scmp.eq.s32.totalorder %s13, 0
    %p117 = por %p115, %p116
    %p118 = scmp.ne.s32.totalorder %s110, %s112
    %p119 = scmp.eq.s32.totalorder %s18, 1
    %p120 = por %p118, %p119
    %p121 = scmp.ne.s32.totalorder %s112, %s113
    %p122 = scmp.eq.s32.totalorder %s18, 0
    %p123 = por %p121, %p122
    %p124 = scmp.ne.s32.totalorder %s112, %s113
    %p125 = scmp.eq.s32.totalorder %s19, 1
    %p126 = por %p124, %p125
    %p128 = scmp.ne.s32.totalorder %s113, %s127
    %p129 = scmp.eq.s32.totalorder %s19, 0
    %p130 = por %p128, %p129
    %s132 = sadd.s32 %s131, 1
    %p135 = scmp.eq.s32.totalorder %s13, 1
    %p136 = scmp.ne.s32.totalorder %s131, %s133
    %p137 = scmp.eq.s32.totalorder %s13, 0
    %p138 = por %p136, %p137
    %p139 = scmp.ne.s32.totalorder %s131, %s133
    %p140 = scmp.eq.s32.totalorder %s18, 1
    %p141 = por %p139, %p140
    %p142 = scmp.ne.s32.totalorder %s133, %s134
    %p143 = scmp.eq.s32.totalorder %s18, 0
    %p144 = por %p142, %p143
    %p145 = scmp.ne.s32.totalorder %s133, %s134
    %p146 = scmp.eq.s32.totalorder %s19, 1
    %p147 = por %p145, %p146
    %p149 = scmp.ne.s32.totalorder %s134, %s148
    %p150 = scmp.eq.s32.totalorder %s19, 0
    %p151 = por %p149, %p150
    %s153 = sadd.s32 %s152, 1
    %p156 = scmp.eq.s32.totalorder %s13, 1
    %p157 = scmp.ne.s32.totalorder %s152, %s154
    %p158 = scmp.eq.s32.totalorder %s13, 0
    %p159 = por %p157, %p158
    %p160 = scmp.ne.s32.totalorder %s152, %s154
    %p161 = scmp.eq.s32.totalorder %s18, 1
    %p162 = por %p160, %p161
    %p163 = scmp.ne.s32.totalorder %s154, %s155
    %p164 = scmp.eq.s32.totalorder %s18, 0
    %p165 = por %p163, %p164
    %p166 = scmp.ne.s32.totalorder %s154, %s155
    %p167 = scmp.eq.s32.totalorder %s19, 1
    %p168 = por %p166, %p167
    %p170 = scmp.ne.s32.totalorder %s155, %s169
    %p171 = scmp.eq.s32.totalorder %s19, 0
    %p172 = por %p170, %p171
    %s173 = ssub.s32 %s13, %s20
    %p174 = scmp.eq.s32.totalorder %s173, 0
    %s176 = sadd.s32 %s175, 1
    %s177 = scalar_select %p174, %s175, %s176
    %p180 = pneg %p174
    %p181 = scmp.eq.s32.totalorder %s13, 1
    %p182 = por %p180, %p181
    %p183 = scmp.ne.s32.totalorder %s175, %s178
    %p184 = scmp.eq.s32.totalorder %s13, 0
    %p185 = por %p183, %p184
    %p186 = scmp.ne.s32.totalorder %s175, %s178
    %p187 = scmp.eq.s32.totalorder %s18, 1
    %p188 = por %p186, %p187
    %p189 = scmp.ne.s32.totalorder %s178, %s179
    %p190 = scmp.eq.s32.totalorder %s18, 0
    %p191 = por %p189, %p190
    %p192 = scmp.ne.s32.totalorder %s178, %s179
    %p193 = scmp.eq.s32.totalorder %s19, 1
    %p194 = por %p192, %p193
    %p196 = scmp.ne.s32.totalorder %s179, %s195
    %p197 = scmp.eq.s32.totalorder %s19, 0
    %p198 = por %p196, %p197
    %p199 = scmp.le.s32.totalorder 1, %s13
    %p200 = scmp.lt.s32.totalorder %s13, 3
    %p201 = pnand %p199, %p200
    %p202 = pneg %p201
    // Predicated region
    $region9: #{densenet_pallas.15} parent=5 // pred_check
      _
    $region10: #{densenet_pallas.15} parent=5 // pred_check_branch
      %204 = sbr.rel (%p201) target = $region12
    $region11: #{densenet_pallas.15} parent=5 // pred_region
      %s205 = ssub.s32 %s13, 1
      // Predicated region
      $region13: #{densenet_pallas.15} parent=11 // pred_check
        %p206 = pneg %p60
      $region14: #{densenet_pallas.15} parent=11 // pred_check_branch
        %208 = sbr.rel (%p206) target = $region16
      $region15: #{densenet_pallas.15} parent=11 // pred_region
        _
      $region16: #{densenet_pallas.15} parent=11 // pred_fallthru
        _
      // Predicated region
      $region17: #{densenet_pallas.15} parent=11 // pred_check
        %p209 = pneg %p81
      $region18: #{densenet_pallas.15} parent=11 // pred_check_branch
        %211 = sbr.rel (%p209) target = $region20
      $region19: #{densenet_pallas.15} parent=11 // pred_region
        _
      $region20: #{densenet_pallas.15} parent=11 // pred_fallthru
        _
      // Predicated region
      $region21: #{densenet_pallas.15} parent=11 // pred_check
        %p212 = pneg %p102
      $region22: #{densenet_pallas.15} parent=11 // pred_check_branch
        %214 = sbr.rel (%p212) target = $region24
      $region23: #{densenet_pallas.15} parent=11 // pred_region
        _
      $region24: #{densenet_pallas.15} parent=11 // pred_fallthru
        _
      // Predicated region
      $region25: #{densenet_pallas.15} parent=11 // pred_check
        %p215 = pneg %p123
      $region26: #{densenet_pallas.15} parent=11 // pred_check_branch
        %217 = sbr.rel (%p215) target = $region28
      $region27: #{densenet_pallas.15} parent=11 // pred_region
        _
      $region28: #{densenet_pallas.15} parent=11 // pred_fallthru
        _
      // Predicated region
      $region29: #{densenet_pallas.15} parent=11 // pred_check
        %p218 = pneg %p144
      $region30: #{densenet_pallas.15} parent=11 // pred_check_branch
        %220 = sbr.rel (%p218) target = $region32
      $region31: #{densenet_pallas.15} parent=11 // pred_region
        _
      $region32: #{densenet_pallas.15} parent=11 // pred_fallthru
        _
      // Predicated region
      $region33: #{densenet_pallas.15} parent=11 // pred_check
        %p221 = pneg %p165
      $region34: #{densenet_pallas.15} parent=11 // pred_check_branch
        %223 = sbr.rel (%p221) target = $region36
      $region35: #{densenet_pallas.15} parent=11 // pred_region
        _
      $region36: #{densenet_pallas.15} parent=11 // pred_fallthru
        _
    $region12: #{densenet_pallas.15} parent=5 // pred_fallthru
      _
    %p224 = scmp.lt.s32.totalorder %s13, 2
    // Predicated region
    $region37: #{densenet_pallas.15} parent=5 // pred_check
      %p225 = pneg %p224
    $region38: #{densenet_pallas.15} parent=5 // pred_check_branch
      %227 = sbr.rel (%p225) target = $region40
    $region39: #{densenet_pallas.15} parent=5 // pred_region
      // Predicated region
      $region41: #{densenet_pallas.15} parent=39 // pred_check
        %p228 = pneg %p33
      $region42: #{densenet_pallas.15} parent=39 // pred_check_branch
        %230 = sbr.rel (%p228) target = $region44
      $region43: #{densenet_pallas.15} parent=39 // pred_region
        %p231 = scmp.lt.s32.totalorder %s13, 1
        %s232 = scalar_select %p231, %s13, 1
        %s233 = smul.addr %s232, 4
        %s234 = smul.addr %s233, 8
        %s235 = scalar_lea.vmem %s0, %s234
      $region44: #{densenet_pallas.15} parent=39 // pred_fallthru
        _
    $region40: #{densenet_pallas.15} parent=5 // pred_fallthru
      _
    %p236 = scmp.le.s32.totalorder 1, %s13
    %p237 = scmp.lt.s32.totalorder %s13, 3
    %p238 = pnand %p236, %p237
    %p239 = pneg %p238
    // Predicated region
    $region45: #{densenet_pallas.15} parent=5 // pred_check
      _
    $region46: #{densenet_pallas.15} parent=5 // pred_check_branch
      %241 = sbr.rel (%p238) target = $region48
    $region47: #{densenet_pallas.15} parent=5 // pred_region
      %s242 = ssub.s32 %s13, 1
      %p243 = scmp.lt.s32.totalorder %s18, 1
      %s244 = scalar_select %p243, %s18, 1
      %s245 = smul.addr %s244, 4
      %s246 = smul.addr %s245, 8
      %s247 = scalar_lea.vmem %s0, %s246
      %p248 = pneg %p39
      %p249 = pneg %p36
      %p250 = pneg %p60
      %p251 = pneg %p57
      %p252 = pneg %p81
      %p253 = pneg %p78
      %p254 = pneg %p102
      %p255 = pneg %p99
      %p256 = pneg %p123
      %p257 = pneg %p120
      %p258 = pneg %p144
      %p259 = pneg %p141
      %p260 = pneg %p165
      %p261 = pneg %p162
      %p262 = pneg %p191
      %p263 = pneg %p188
      %p264 = scmp.lt.s32.totalorder %s18, 1
      %s265 = scalar_select %p264, %s18, 1
      %s266 = smul.addr %s265, 4
      %s267 = smul.addr %s266, 8
      %s268 = scalar_lea.vmem %s7, %s267
      %p269 = scmp.lt.s32.totalorder %s18, 1
      %s270 = scalar_select %p269, %s18, 1
      %s271 = smul.addr %s270, 4
      %s272 = smul.addr %s271, 8
      %s273 = scalar_lea.vmem %s0, %s272
      %p274 = scmp.lt.s32.totalorder %s18, 1
      %s275 = scalar_select %p274, %s18, 1
      %s276 = smul.addr %s275, 4
      %s277 = smul.addr %s276, 8
      %s278 = scalar_lea.vmem %s7, %s277
      %v279 = vld [vmem:[%s273] sm:$0xff]
      %v280 = vld [vmem:[%s273 + $0x8] sm:$0xff]
      %v281 = vld [vmem:[%s273 + $0x10] sm:$0xff]
      %v282 = vld [vmem:[%s273 + $0x18] sm:$0x1]
      %v283 = vld [vmem:[%s2] sm:$0x1]
      %v285 = vperm.slane %v283, 0
      %v287 = vmul.f32 %v279, %v285
      %v288 = vmul.f32 %v280, %v285
      %v289 = vmul.f32 %v281, %v285
      %v290 = vmul.f32 %v282, %v285
      %v291 = vld [vmem:[%s3] sm:$0x1]
      %v293 = vperm.slane %v291, 0
      %v295 = vadd.f32 %v287, %v293
      %v296 = vadd.f32 %v288, %v293
      %v297 = vadd.f32 %v289, %v293
      %v298 = vadd.f32 %v290, %v293
      %v299 = vmax.f32 %v295, 0.0
      %v300 = vmax.f32 %v296, 0.0
      %v301 = vmax.f32 %v297, 0.0
      %v302 = vmax.f32 %v298, 0.0
      %v303 = vld [vmem:[%s1] sm:$0xff]
      %v304 = vld [vmem:[%s1 + $0x8] sm:$0xff]
      %v305 = vld [vmem:[%s1 + $0x10] sm:$0xff]
      %v306 = vld [vmem:[%s1 + $0x18] sm:$0xff]
      %v307 = vld [vmem:[%s1 + $0x20] sm:$0xff]
      %v308 = vld [vmem:[%s1 + $0x28] sm:$0xff]
      %v309 = vld [vmem:[%s1 + $0x30] sm:$0xff]
      %v310 = vld [vmem:[%s1 + $0x38] sm:$0xff]
      %vm311 = vcmask 523264
      %v313 = vsel %vm311, %v299, 0
      %v316 = vsel %vm311, %v300, 0
      %v319 = vsel %vm311, %v301, 0
      %v322 = vsel %vm311, %v302, 0
      %324 = vmatpush.msra.mxu0 0.0
      %325 = vmatpush.msra.mxu0 0.0
      %326 = vmatpush.msra.mxu0 0.0
      %327 = vmatpush.msra.mxu0 0.0
      %328 = vmatpush.msra.mxu0 0.0
      %329 = vmatpush.msra.mxu0 0.0
      %330 = vmatpush.msra.mxu0 0.0
      %331 = vmatpush.msra.mxu0 0.0
      %332 = vmatpush.msra.mxu0 %v310
      %333 = vmatpush.msra.mxu0 %v309
      %334 = vmatpush.msra.mxu0 %v308
      %335 = vmatpush.msra.mxu0 %v307
      %336 = vmatpush.msra.mxu0 %v306
      %337 = vmatpush.msra.mxu0 %v305
      %338 = vmatpush.msra.mxu0 %v304
      %339 = vmatpush.msra.mxu0 %v303
      %340 = vmatmul.f32.gmra.mxu0 %v313
      %v341 = vpop.f32.mrf.mxu0
      %v342 = vadd.f32 0.0, %v341
      %343 = vmatmul.f32.gmra.mxu0 %v316
      %v344 = vpop.f32.mrf.mxu0
      %v345 = vadd.f32 0.0, %v344
      %346 = vmatmul.f32.gmra.mxu0 %v319
      %v347 = vpop.f32.mrf.mxu0
      %v348 = vadd.f32 0.0, %v347
      %349 = vmatmul.f32.gmra.mxu0 %v322
      %v350 = vpop.f32.mrf.mxu0
      %v351 = vadd.f32 0.0, %v350
      %352 = vdwg.mxu0
      %v353 = vld [vmem:[%s4] sm:$0x1]
      %v355 = vperm.slane %v353, 0
      %v357 = vmul.f32 %v342, %v355
      %v358 = vmul.f32 %v345, %v355
      %v359 = vmul.f32 %v348, %v355
      %v360 = vmul.f32 %v351, %v355
      %v361 = vld [vmem:[%s5] sm:$0x1]
      %v363 = vperm.slane %v361, 0
      %v365 = vadd.f32 %v357, %v363
      %v366 = vadd.f32 %v358, %v363
      %v367 = vadd.f32 %v359, %v363
      %v368 = vadd.f32 %v360, %v363
      %v369 = vmax.f32 %v365, 0.0
      %v370 = vmax.f32 %v366, 0.0
      %v371 = vmax.f32 %v367, 0.0
      %v372 = vmax.f32 %v368, 0.0
      %373 = vst [vmem:[#allocation2] sm:$0xff] 0.0
      %374 = vst [vmem:[#allocation2 + $0xd] sm:$0x3] 0.0
      %375 = vst [vmem:[#allocation2 + $0x14] sm:$0x3] 0.0
      %376 = vst [vmem:[#allocation2 + $0x1b] sm:$0x3] 0.0
      %377 = vst [vmem:[#allocation2 + $0x22] sm:$0x3] 0.0
      %378 = vst [vmem:[#allocation2 + $0x29] sm:$0xff] 0.0
      %379 = vst [vmem:[#allocation2 + $0x8] sm:$0x1f] %v369
      %380 = vst [vmem:[#allocation2 + $0xa] sm:$0xe0] %v369
      %381 = vst [vmem:[#allocation2 + $0x12] sm:$0x3] %v370
      %382 = vst [vmem:[#allocation2 + $0x14] sm:$0x7c] %v370
      %383 = vst [vmem:[#allocation2 + $0x16] sm:$0x80] %v370
      %384 = vst [vmem:[#allocation2 + $0x1e] sm:$0xf] %v371
      %385 = vst [vmem:[#allocation2 + $0x20] sm:$0xf0] %v371
      %386 = vst [vmem:[#allocation2 + $0x28] sm:$0x1] %v372
      %v387 = vld [vmem:[#allocation2] sm:$0xff]
      %v388 = vld [vmem:[#allocation2 + $0x8] sm:$0xff]
      %v389 = vld [vmem:[#allocation2 + $0x10] sm:$0xff]
      %v390 = vld [vmem:[#allocation2 + $0x18] sm:$0xff]
      %v391 = vld [vmem:[#allocation2 + $0x20] sm:$0xff]
      %v392 = vld [vmem:[#allocation2 + $0x28] sm:$0xff]
      %v393 = vld [vmem:[#allocation2 + $0x30] sm:$0x1]
      %v394 = vld [vmem:[%s6] sm:$0xff]
      %v395 = vld [vmem:[%s6 + $0x8] sm:$0xff]
      %v396 = vld [vmem:[%s6 + $0x10] sm:$0xff]
      %v397 = vld [vmem:[%s6 + $0x18] sm:$0xff]
      %v398 = vld [vmem:[%s6 + $0x20] sm:$0xff]
      %v399 = vld [vmem:[%s6 + $0x28] sm:$0xff]
      %v400 = vld [vmem:[%s6 + $0x30] sm:$0xff]
      %v401 = vld [vmem:[%s6 + $0x38] sm:$0xff]
      %v402 = vld [vmem:[%s6 + $0x40] sm:$0xff]
      %v403 = vld [vmem:[%s6 + $0x48] sm:$0xff]
      %v404 = vld [vmem:[%s6 + $0x50] sm:$0xff]
      %v405 = vld [vmem:[%s6 + $0x58] sm:$0xff]
      %v406 = vld [vmem:[%s6 + $0x60] sm:$0xff]
      %v407 = vld [vmem:[%s6 + $0x68] sm:$0xff]
      %v408 = vld [vmem:[%s6 + $0x70] sm:$0xff]
      %v409 = vld [vmem:[%s6 + $0x78] sm:$0xff]
      %v410 = vld [vmem:[%s6 + $0x80] sm:$0xff]
      %v411 = vld [vmem:[%s6 + $0x88] sm:$0xff]
      %v412 = vld [vmem:[%s6 + $0x90] sm:$0xff]
      %v413 = vld [vmem:[%s6 + $0x98] sm:$0xff]
      %v414 = vld [vmem:[%s6 + $0xa0] sm:$0xff]
      %v415 = vld [vmem:[%s6 + $0xa8] sm:$0xff]
      %v416 = vld [vmem:[%s6 + $0xb0] sm:$0xff]
      %v417 = vld [vmem:[%s6 + $0xb8] sm:$0xff]
      %v418 = vld [vmem:[%s6 + $0xc0] sm:$0xff]
      %v419 = vld [vmem:[%s6 + $0xc8] sm:$0xff]
      %v420 = vld [vmem:[%s6 + $0xd0] sm:$0xff]
      %v421 = vld [vmem:[%s6 + $0xd8] sm:$0xff]
      %v422 = vld [vmem:[%s6 + $0xe0] sm:$0xff]
      %v423 = vld [vmem:[%s6 + $0xe8] sm:$0xff]
      %v424 = vld [vmem:[%s6 + $0xf0] sm:$0xff]
      %v425 = vld [vmem:[%s6 + $0xf8] sm:$0xff]
      %v426 = vld [vmem:[%s6 + $0x100] sm:$0xff]
      %v427 = vld [vmem:[%s6 + $0x108] sm:$0xff]
      %v428 = vld [vmem:[%s6 + $0x110] sm:$0xff]
      %v429 = vld [vmem:[%s6 + $0x118] sm:$0xff]
      %v430 = vld [vmem:[%s6 + $0x120] sm:$0xff]
      %v431 = vld [vmem:[%s6 + $0x128] sm:$0xff]
      %v432 = vld [vmem:[%s6 + $0x130] sm:$0xff]
      %v433 = vld [vmem:[%s6 + $0x138] sm:$0xff]
      %v434 = vld [vmem:[%s6 + $0x140] sm:$0xff]
      %v435 = vld [vmem:[%s6 + $0x148] sm:$0xff]
      %v436 = vld [vmem:[%s6 + $0x150] sm:$0xff]
      %v437 = vld [vmem:[%s6 + $0x158] sm:$0xff]
      %v438 = vld [vmem:[%s6 + $0x160] sm:$0xff]
      %v439 = vld [vmem:[%s6 + $0x168] sm:$0xff]
      %v440 = vld [vmem:[%s6 + $0x170] sm:$0xff]
      %v441 = vld [vmem:[%s6 + $0x178] sm:$0xff]
      %442 = vmatpush.msra.mxu0 %v439
      %443 = vmatpush.msra.mxu0 %v436
      %444 = vmatpush.msra.mxu0 %v433
      %445 = vmatpush.msra.mxu0 %v430
      %446 = vmatpush.msra.mxu0 %v427
      %447 = vmatpush.msra.mxu0 %v424
      %448 = vmatpush.msra.mxu0 %v421
      %449 = vmatpush.msra.mxu0 %v418
      %450 = vmatpush.msra.mxu0 %v415
      %451 = vmatpush.msra.mxu0 %v412
      %452 = vmatpush.msra.mxu0 %v409
      %453 = vmatpush.msra.mxu0 %v406
      %454 = vmatpush.msra.mxu0 %v403
      %455 = vmatpush.msra.mxu0 %v400
      %456 = vmatpush.msra.mxu0 %v397
      %457 = vmatpush.msra.mxu0 %v394
      %458 = vmatmul.f32.gmra.mxu0 %v387
      %v459 = vpop.f32.mrf.mxu0
      %v460 = vadd.f32 0.0, %v459
      %461 = vmatmul.f32.gmra.mxu0 %v388
      %v462 = vpop.f32.mrf.mxu0
      %v463 = vadd.f32 0.0, %v462
      %464 = vmatmul.f32.gmra.mxu0 %v389
      %v465 = vpop.f32.mrf.mxu0
      %v466 = vadd.f32 0.0, %v465
      %467 = vmatmul.f32.gmra.mxu0 %v390
      %v468 = vpop.f32.mrf.mxu0
      %v469 = vadd.f32 0.0, %v468
      %470 = vmatmul.f32.gmra.mxu0 %v391
      %v471 = vpop.f32.mrf.mxu0
      %v472 = vadd.f32 0.0, %v471
      %473 = vmatmul.f32.gmra.mxu0 %v392
      %v474 = vpop.f32.mrf.mxu0
      %475 = vmatmul.f32.gmra.mxu0 %v393
      %v476 = vpop.f32.mrf.mxu0
      %477 = vdwg.mxu0
      %478 = vmatpush.msra.mxu0 %v440
      %479 = vmatpush.msra.mxu0 %v437
      %480 = vmatpush.msra.mxu0 %v434
      %481 = vmatpush.msra.mxu0 %v431
      %482 = vmatpush.msra.mxu0 %v428
      %483 = vmatpush.msra.mxu0 %v425
      %484 = vmatpush.msra.mxu0 %v422
      %485 = vmatpush.msra.mxu0 %v419
      %486 = vmatpush.msra.mxu0 %v416
      %487 = vmatpush.msra.mxu0 %v413
      %488 = vmatpush.msra.mxu0 %v410
      %489 = vmatpush.msra.mxu0 %v407
      %490 = vmatpush.msra.mxu0 %v404
      %491 = vmatpush.msra.mxu0 %v401
      %492 = vmatpush.msra.mxu0 %v398
      %493 = vmatpush.msra.mxu0 %v395
      %494 = vmatmul.f32.gmra.mxu0 %v387
      %v495 = vpop.f32.mrf.mxu0
      %496 = vmatmul.f32.gmra.mxu0 %v388
      %v497 = vpop.f32.mrf.mxu0
      %v498 = vadd.f32 0.0, %v497
      %499 = vmatmul.f32.gmra.mxu0 %v389
      %v500 = vpop.f32.mrf.mxu0
      %v501 = vadd.f32 0.0, %v500
      %502 = vmatmul.f32.gmra.mxu0 %v390
      %v503 = vpop.f32.mrf.mxu0
      %v504 = vadd.f32 0.0, %v503
      %505 = vmatmul.f32.gmra.mxu0 %v391
      %v506 = vpop.f32.mrf.mxu0
      %v507 = vadd.f32 0.0, %v506
      %508 = vmatmul.f32.gmra.mxu0 %v392
      %v509 = vpop.f32.mrf.mxu0
      %v510 = vadd.f32 0.0, %v509
      %511 = vmatmul.f32.gmra.mxu0 %v393
      %v512 = vpop.f32.mrf.mxu0
      %513 = vdwg.mxu0
      %514 = vmatpush.msra.mxu0 %v441
      %515 = vmatpush.msra.mxu0 %v438
      %516 = vmatpush.msra.mxu0 %v435
      %517 = vmatpush.msra.mxu0 %v432
      %518 = vmatpush.msra.mxu0 %v429
      %519 = vmatpush.msra.mxu0 %v426
      %520 = vmatpush.msra.mxu0 %v423
      %521 = vmatpush.msra.mxu0 %v420
      %522 = vmatpush.msra.mxu0 %v417
      %523 = vmatpush.msra.mxu0 %v414
      %524 = vmatpush.msra.mxu0 %v411
      %525 = vmatpush.msra.mxu0 %v408
      %526 = vmatpush.msra.mxu0 %v405
      %527 = vmatpush.msra.mxu0 %v402
      %528 = vmatpush.msra.mxu0 %v399
      %529 = vmatpush.msra.mxu0 %v396
      %530 = vmatmul.f32.gmra.mxu0 %v387
      %v531 = vpop.f32.mrf.mxu0
      %532 = vmatmul.f32.gmra.mxu0 %v388
      %v533 = vpop.f32.mrf.mxu0
      %534 = vmatmul.f32.gmra.mxu0 %v389
      %v535 = vpop.f32.mrf.mxu0
      %v536 = vadd.f32 0.0, %v535
      %537 = vmatmul.f32.gmra.mxu0 %v390
      %v538 = vpop.f32.mrf.mxu0
      %v539 = vadd.f32 0.0, %v538
      %540 = vmatmul.f32.gmra.mxu0 %v391
      %v541 = vpop.f32.mrf.mxu0
      %v542 = vadd.f32 0.0, %v541
      %543 = vmatmul.f32.gmra.mxu0 %v392
      %v544 = vpop.f32.mrf.mxu0
      %v545 = vadd.f32 0.0, %v544
      %546 = vmatmul.f32.gmra.mxu0 %v393
      %v547 = vpop.f32.mrf.mxu0
      %v548 = vadd.f32 0.0, %v547
      %549 = vdwg.mxu0
      %v551 = vrot.slane %v460, 1
      %552 = vrot.lane.b32.xlu0 %v551, 96
      %v553 = vpop.permute.xlu0 %552
      %v555 = vadd.f32 %v460, %v553
      %v556 = vrot.slane %v460, 2
      %557 = vrot.lane.b32.xlu0 %v556, 64
      %v558 = vpop.permute.xlu0 %557
      %v560 = vadd.f32 %v555, %v558
      %vm562 = vcmask 1040384
      %v563 = vrot.slane %v460, 7
      %v564 = vrot.slane %v463, 7
      %v565 = vsel %vm562, %v563, %v564
      %566 = vrot.lane.b32.xlu0 %v565, 32
      %v567 = vpop.permute.xlu0 %566
      %v569 = vadd.f32 %v560, %v567
      %v570 = vadd.f32 %v569, %v498
      %v572 = vrot.slane %v498, 1
      %573 = vrot.lane.b32.xlu0 %v572, 96
      %v574 = vpop.permute.xlu0 %573
      %v576 = vadd.f32 %v570, %v574
      %vm578 = vcmask 1041408
      %v579 = vrot.slane %v498, 6
      %v580 = vrot.slane %v501, 6
      %v581 = vsel %vm578, %v579, %v580
      %582 = vrot.lane.b32.xlu0 %v581, 64
      %v583 = vpop.permute.xlu0 %582
      %v585 = vadd.f32 %v576, %v583
      %v586 = vrot.slane %v498, 7
      %v587 = vrot.slane %v501, 7
      %v588 = vsel %vm562, %v586, %v587
      %589 = vrot.lane.b32.xlu0 %v588, 32
      %v590 = vpop.permute.xlu0 %589
      %v592 = vadd.f32 %v585, %v590
      %v593 = vadd.f32 %v592, %v536
      %vm594 = vcmask 258048
      %595 = vst.msk [vmem:[%s278] sm:$0x1f] %vm594, %v593
      %v596 = vrot.slane %v463, 1
      %597 = vrot.lane.b32.xlu0 %v596, 96
      %v598 = vpop.permute.xlu0 %597
      %v600 = vadd.f32 %v460, %v598
      %v601 = vadd.f32 %v463, %v598
      %v602 = vrot.slane %v463, 2
      %603 = vrot.lane.b32.xlu0 %v602, 64
      %v604 = vpop.permute.xlu0 %603
      %v606 = vadd.f32 %v600, %v604
      %v607 = vadd.f32 %v601, %v604
      %v609 = vrot.slane %v466, 7
      %v610 = vsel %vm562, %v564, %v609
      %611 = vrot.lane.b32.xlu0 %v564, 32
      %v612 = vpop.permute.xlu0 %611
      %613 = vrot.lane.b32.xlu0 %v610, 32
      %v614 = vpop.permute.xlu0 %613
      %v617 = vadd.f32 %v606, %v612
      %v618 = vadd.f32 %v607, %v614
      %v619 = vadd.f32 %v617, %v498
      %v620 = vadd.f32 %v618, %v501
      %v621 = vrot.slane %v501, 1
      %622 = vrot.lane.b32.xlu0 %v621, 96
      %v623 = vpop.permute.xlu0 %622
      %v625 = vadd.f32 %v619, %v623
      %v626 = vadd.f32 %v620, %v623
      %v628 = vrot.slane %v504, 6
      %v629 = vsel %vm578, %v580, %v628
      %630 = vrot.lane.b32.xlu0 %v580, 64
      %v631 = vpop.permute.xlu0 %630
      %632 = vrot.lane.b32.xlu0 %v629, 64
      %v633 = vpop.permute.xlu0 %632
      %v636 = vadd.f32 %v625, %v631
      %v637 = vadd.f32 %v626, %v633
      %v638 = vrot.slane %v504, 7
      %v639 = vsel %vm562, %v587, %v638
      %640 = vrot.lane.b32.xlu0 %v587, 32
      %v641 = vpop.permute.xlu0 %640
      %642 = vrot.lane.b32.xlu0 %v639, 32
      %v643 = vpop.permute.xlu0 %642
      %v646 = vadd.f32 %v636, %v641
      %v647 = vadd.f32 %v637, %v643
      %v648 = vadd.f32 %v646, %v536
      %v649 = vadd.f32 %v647, %v539
      %vm650 = vcmask 261127
      %651 = vst.msk [vmem:[%s278 - $0x2] sm:$0x80] %vm650, %v648
      %vm652 = vcmask 257024
      %653 = vst.msk [vmem:[%s278 + $0x6] sm:$0xf] %vm652, %v649
      %vm654 = vcmask 1046528
      %v655 = vrot.slane %v466, 1
      %v656 = vsel %vm654, %v596, %v655
      %657 = vrot.lane.b32.xlu0 %v656, 96
      %v658 = vpop.permute.xlu0 %657
      %659 = vrot.lane.b32.xlu0 %v655, 96
      %v660 = vpop.permute.xlu0 %659
      %v663 = vadd.f32 %v463, %v658
      %v664 = vadd.f32 %v466, %v660
      %v665 = vrot.slane %v466, 2
      %666 = vrot.lane.b32.xlu0 %v665, 64
      %v667 = vpop.permute.xlu0 %666
      %v669 = vadd.f32 %v663, %v667
      %v670 = vadd.f32 %v664, %v667
      %v672 = vrot.slane %v469, 7
      %v673 = vsel %vm562, %v609, %v672
      %674 = vrot.lane.b32.xlu0 %v609, 32
      %v675 = vpop.permute.xlu0 %674
      %676 = vrot.lane.b32.xlu0 %v673, 32
      %v677 = vpop.permute.xlu0 %676
      %v680 = vadd.f32 %v669, %v675
      %v681 = vadd.f32 %v670, %v677
      %v682 = vadd.f32 %v680, %v501
      %v683 = vadd.f32 %v681, %v504
      %v684 = vrot.slane %v504, 1
      %v685 = vsel %vm654, %v621, %v684
      %686 = vrot.lane.b32.xlu0 %v685, 96
      %v687 = vpop.permute.xlu0 %686
      %688 = vrot.lane.b32.xlu0 %v684, 96
      %v689 = vpop.permute.xlu0 %688
      %v692 = vadd.f32 %v682, %v687
      %v693 = vadd.f32 %v683, %v689
      %v695 = vrot.slane %v507, 6
      %v696 = vsel %vm578, %v628, %v695
      %697 = vrot.lane.b32.xlu0 %v628, 64
      %v698 = vpop.permute.xlu0 %697
      %699 = vrot.lane.b32.xlu0 %v696, 64
      %v700 = vpop.permute.xlu0 %699
      %v703 = vadd.f32 %v692, %v698
      %v704 = vadd.f32 %v693, %v700
      %v705 = vrot.slane %v507, 7
      %v706 = vsel %vm562, %v638, %v705
      %707 = vrot.lane.b32.xlu0 %v638, 32
      %v708 = vpop.permute.xlu0 %707
      %709 = vrot.lane.b32.xlu0 %v706, 32
      %v710 = vpop.permute.xlu0 %709
      %v713 = vadd.f32 %v703, %v708
      %v714 = vadd.f32 %v704, %v710
      %v715 = vadd.f32 %v713, %v539
      %v716 = vadd.f32 %v714, %v542
      %vm717 = vcmask 261126
      %718 = vst.msk [vmem:[%s278 + $0x4] sm:$0xc0] %vm717, %v715
      %vm719 = vcmask 256000
      %720 = vst.msk [vmem:[%s278 + $0xc] sm:$0x7] %vm719, %v716
      %v721 = vrot.slane %v469, 1
      %v722 = vsel %vm654, %v655, %v721
      %723 = vrot.lane.b32.xlu0 %v722, 96
      %v724 = vpop.permute.xlu0 %723
      %725 = vrot.lane.b32.xlu0 %v721, 96
      %v726 = vpop.permute.xlu0 %725
      %v729 = vadd.f32 %v466, %v724
      %v730 = vadd.f32 %v469, %v726
      %vm731 = vcmask 1045504
      %v732 = vrot.slane %v469, 2
      %v733 = vsel %vm731, %v665, %v732
      %734 = vrot.lane.b32.xlu0 %v733, 64
      %v735 = vpop.permute.xlu0 %734
      %736 = vrot.lane.b32.xlu0 %v732, 64
      %v737 = vpop.permute.xlu0 %736
      %v740 = vadd.f32 %v729, %v735
      %v741 = vadd.f32 %v730, %v737
      %v743 = vrot.slane %v472, 7
      %v744 = vsel %vm562, %v672, %v743
      %745 = vrot.lane.b32.xlu0 %v672, 32
      %v746 = vpop.permute.xlu0 %745
      %747 = vrot.lane.b32.xlu0 %v744, 32
      %v748 = vpop.permute.xlu0 %747
      %v751 = vadd.f32 %v740, %v746
      %v752 = vadd.f32 %v741, %v748
      %v753 = vadd.f32 %v751, %v504
      %v754 = vadd.f32 %v752, %v507
      %v755 = vrot.slane %v507, 1
      %v756 = vsel %vm654, %v684, %v755
      %757 = vrot.lane.b32.xlu0 %v756, 96
      %v758 = vpop.permute.xlu0 %757
      %759 = vrot.lane.b32.xlu0 %v755, 96
      %v760 = vpop.permute.xlu0 %759
      %v763 = vadd.f32 %v753, %v758
      %v764 = vadd.f32 %v754, %v760
      %765 = vrot.lane.b32.xlu0 %v695, 64
      %v766 = vpop.permute.xlu0 %765
      %v768 = vadd.f32 %v763, %v766
      %v769 = vadd.f32 %v764, %v766
      %v771 = vrot.slane %v510, 7
      %v772 = vsel %vm562, %v705, %v771
      %773 = vrot.lane.b32.xlu0 %v705, 32
      %v774 = vpop.permute.xlu0 %773
      %775 = vrot.lane.b32.xlu0 %v772, 32
      %v776 = vpop.permute.xlu0 %775
      %v779 = vadd.f32 %v768, %v774
      %v780 = vadd.f32 %v769, %v776
      %v781 = vadd.f32 %v779, %v542
      %v782 = vadd.f32 %v780, %v545
      %vm783 = vcmask 261125
      %784 = vst.msk [vmem:[%s278 + $0xa] sm:$0xe0] %vm783, %v781
      %vm785 = vcmask 254976
      %786 = vst.msk [vmem:[%s278 + $0x12] sm:$0x3] %vm785, %v782
      %v787 = vrot.slane %v472, 1
      %v788 = vsel %vm654, %v721, %v787
      %789 = vrot.lane.b32.xlu0 %v788, 96
      %v790 = vpop.permute.xlu0 %789
      %791 = vrot.lane.b32.xlu0 %v787, 96
      %v792 = vpop.permute.xlu0 %791
      %v795 = vadd.f32 %v469, %v790
      %v796 = vadd.f32 %v472, %v792
      %v797 = vrot.slane %v472, 2
      %v798 = vsel %vm731, %v732, %v797
      %799 = vrot.lane.b32.xlu0 %v798, 64
      %v800 = vpop.permute.xlu0 %799
      %801 = vrot.lane.b32.xlu0 %v797, 64
      %v802 = vpop.permute.xlu0 %801
      %v805 = vadd.f32 %v795, %v800
      %v806 = vadd.f32 %v796, %v802
      %807 = vrot.lane.b32.xlu0 %v743, 32
      %v808 = vpop.permute.xlu0 %807
      %v810 = vadd.f32 %v805, %v808
      %v811 = vadd.f32 %v806, %v808
      %v812 = vadd.f32 %v810, %v507
      %v813 = vadd.f32 %v811, %v510
      %v814 = vrot.slane %v510, 1
      %v815 = vsel %vm654, %v755, %v814
      %816 = vrot.lane.b32.xlu0 %v815, 96
      %v817 = vpop.permute.xlu0 %816
      %818 = vrot.lane.b32.xlu0 %v814, 96
      %v819 = vpop.permute.xlu0 %818
      %v822 = vadd.f32 %v812, %v817
      %v823 = vadd.f32 %v813, %v819
      %v824 = vrot.slane %v510, 6
      %825 = vrot.lane.b32.xlu0 %v824, 64
      %v826 = vpop.permute.xlu0 %825
      %v828 = vadd.f32 %v822, %v826
      %v829 = vadd.f32 %v823, %v826
      %830 = vrot.lane.b32.xlu0 %v771, 32
      %v831 = vpop.permute.xlu0 %830
      %v833 = vadd.f32 %v828, %v831
      %v834 = vadd.f32 %v829, %v831
      %v835 = vadd.f32 %v833, %v545
      %v836 = vadd.f32 %v834, %v548
      %vm837 = vcmask 261124
      %838 = vst.msk [vmem:[%s278 + $0x10] sm:$0xf0] %vm837, %v835
      %vm839 = vcmask 253952
      %840 = vst.msk [vmem:[%s278 + $0x18] sm:$0x1] %vm839, %v836
      %p841 = scmp.lt.s32.totalorder %s18, 1
      %s842 = scalar_select %p841, %s18, 1
      %s843 = smul.addr %s842, 4
      %s844 = smul.addr %s843, 8
      %s845 = scalar_lea.vmem %s7, %s844
      // Predicated region
      $region49: #{densenet_pallas.15} parent=47 // pred_check
        %p846 = pneg %p188
      $region50: #{densenet_pallas.15} parent=47 // pred_check_branch
        %848 = sbr.rel (%p846) target = $region52
      $region51: #{densenet_pallas.15} parent=47 // pred_region
        _
      $region52: #{densenet_pallas.15} parent=47 // pred_fallthru
        _
    $region48: #{densenet_pallas.15} parent=5 // pred_fallthru
      _
    %p849 = scmp.le.s32.totalorder 2, %s13
    // Predicated region
    $region53: #{densenet_pallas.15} parent=5 // pred_check
      %p850 = pneg %p849
    $region54: #{densenet_pallas.15} parent=5 // pred_check_branch
      %852 = sbr.rel (%p850) target = $region56
    $region55: #{densenet_pallas.15} parent=5 // pred_region
      %s853 = ssub.s32 %s13, 2
      // Predicated region
      $region57: #{densenet_pallas.15} parent=55 // pred_check
        %p854 = pneg %p194
      $region58: #{densenet_pallas.15} parent=55 // pred_check_branch
        %856 = sbr.rel (%p854) target = $region60
      $region59: #{densenet_pallas.15} parent=55 // pred_region
        %p857 = scmp.lt.s32.totalorder %s19, 1
        %s858 = scalar_select %p857, %s19, 1
        %s859 = smul.addr %s858, 4
        %s860 = smul.addr %s859, 8
        %s861 = scalar_lea.vmem %s7, %s860
      $region60: #{densenet_pallas.15} parent=55 // pred_fallthru
        _
    $region56: #{densenet_pallas.15} parent=5 // pred_fallthru
      _
  $region6: #{densenet_pallas.15} parent=0 // loop_footer
    %s17 = sadd.s32 1, %s13
  $region7: #{densenet_pallas.15} parent=0 // loop_footer_branch
    %12 = sbr.rel target = $region3
  $region8: #{densenet_pallas.15} parent=0 // loop_exit
    _

// kernel: densenet_pallas.16
$region0: #{densenet_pallas.16}
  #allocation0 [shape = 'u32[]', space=smem, size = 0x4, offset = 0x4, fixed_abs, tag = 'smem constant byte address 0x4 - core index']
  #allocation1 [shape = 'u32[72,128]{1,0:T(1,128)}', space=vmem, size = 0x9000, scoped, tag = 'internal scratch']
  #allocation2 [shape = 'f32[49,128]{1,0:T(8,128)}', space=vmem, size = 0x7000, scoped, tag = 'scratch operand']
  %s0 = inlined_call_operand.vmem [shape: f32[2,25,64], index: 0, kind: input, shape index: {}]
  %s1 = inlined_call_operand.vmem [shape: f32[2,25,32], index: 1, kind: input, shape index: {}]
  %s2 = inlined_call_operand.vmem [shape: f32[96,128], index: 2, kind: input, shape index: {}]
  %s3 = inlined_call_operand.vmem [shape: f32[1,96], index: 3, kind: input, shape index: {}]
  %s4 = inlined_call_operand.vmem [shape: f32[1,96], index: 4, kind: input, shape index: {}]
  %s5 = inlined_call_operand.vmem [shape: f32[1,128], index: 5, kind: input, shape index: {}]
  %s6 = inlined_call_operand.vmem [shape: f32[1,128], index: 6, kind: input, shape index: {}]
  %s7 = inlined_call_operand.vmem [shape: f32[128,288], index: 7, kind: input, shape index: {}]
  %s8 = inlined_call_operand.vmem [shape: f32[2,25,32], index: 8, kind: output, shape index: {}]
  %s9 = sld [smem:[#allocation0]]
  $region65: #{densenet_pallas.16} parent=0
    _
  %s11 = ssub.s32 1, %s9
  %s12 = scalar_select 0, %s11, %s9
  loop: start=0, step=1, limit=4
  $region2: #{densenet_pallas.16} parent=0 // loop_pre_header
    _
  $region3: #{densenet_pallas.16} parent=0 // loop_header
    %s14 = sphi 0, %s18
    %p15 = scmp.ge.s32.totalorder %s14, 4
    %s24 = sphi 0, %s26
    %s27 = sphi 0, %s24
    %s28 = sphi 0, %s27
    %s44 = sphi 0, %s28
    %s50 = sphi 0, %s52
    %s53 = sphi 0, %s50
    %s54 = sphi 0, %s53
    %s70 = sphi 0, %s54
    %s74 = sphi 0, %s74
    %s76 = sphi 0, %s74
    %s77 = sphi 0, %s76
    %s91 = sphi 0, %s77
    %s95 = sphi 0, %s95
    %s97 = sphi 0, %s95
    %s98 = sphi 0, %s97
    %s112 = sphi 0, %s98
    %s116 = sphi 0, %s116
    %s118 = sphi 0, %s116
    %s119 = sphi 0, %s118
    %s133 = sphi 0, %s119
    %s137 = sphi 0, %s137
    %s139 = sphi 0, %s137
    %s140 = sphi 0, %s139
    %s154 = sphi 0, %s140
    %s158 = sphi 0, %s158
    %s160 = sphi 0, %s158
    %s161 = sphi 0, %s160
    %s175 = sphi 0, %s161
    %s179 = sphi 0, %s179
    %s181 = sphi 0, %s179
    %s182 = sphi 0, %s181
    %s196 = sphi 0, %s182
    %s202 = sphi 0, %s204
    %s205 = sphi 0, %s202
    %s206 = sphi 0, %s205
    %s222 = sphi 0, %s206
  $region4: #{densenet_pallas.16} parent=0 // loop_header_branch
    %17 = sbr.rel (%p15) target = $region8
  $region5: #{densenet_pallas.16} parent=0 // loop_body
    %s19 = ssub.s32 %s14, 1
    %s20 = ssub.s32 %s14, 2
    %s21 = sadd.s32 %s14, 1
    %s22 = ssub.s32 %s14, %s21
    %p23 = scmp.eq.s32.totalorder %s22, 0
    %s25 = sadd.s32 %s24, 1
    %s26 = scalar_select %p23, %s24, %s25
    %p29 = pneg %p23
    %p30 = scmp.eq.s32.totalorder %s14, 1
    %p31 = por %p29, %p30
    %p32 = scmp.ne.s32.totalorder %s24, %s27
    %p33 = scmp.eq.s32.totalorder %s14, 0
    %p34 = por %p32, %p33
    %p35 = scmp.ne.s32.totalorder %s24, %s27
    %p36 = scmp.eq.s32.totalorder %s19, 1
    %p37 = por %p35, %p36
    %p38 = scmp.ne.s32.totalorder %s27, %s28
    %p39 = scmp.eq.s32.totalorder %s19, 0
    %p40 = por %p38, %p39
    %p41 = scmp.ne.s32.totalorder %s27, %s28
    %p42 = scmp.eq.s32.totalorder %s20, 1
    %p43 = por %p41, %p42
    %p45 = scmp.ne.s32.totalorder %s28, %s44
    %p46 = scmp.eq.s32.totalorder %s20, 0
    %p47 = por %p45, %p46
    %s48 = ssub.s32 %s14, %s21
    %p49 = scmp.eq.s32.totalorder %s48, 0
    %s51 = sadd.s32 %s50, 1
    %s52 = scalar_select %p49, %s50, %s51
    %p55 = pneg %p49
    %p56 = scmp.eq.s32.totalorder %s14, 1
    %p57 = por %p55, %p56
    %p58 = scmp.ne.s32.totalorder %s50, %s53
    %p59 = scmp.eq.s32.totalorder %s14, 0
    %p60 = por %p58, %p59
    %p61 = scmp.ne.s32.totalorder %s50, %s53
    %p62 = scmp.eq.s32.totalorder %s19, 1
    %p63 = por %p61, %p62
    %p64 = scmp.ne.s32.totalorder %s53, %s54
    %p65 = scmp.eq.s32.totalorder %s19, 0
    %p66 = por %p64, %p65
    %p67 = scmp.ne.s32.totalorder %s53, %s54
    %p68 = scmp.eq.s32.totalorder %s20, 1
    %p69 = por %p67, %p68
    %p71 = scmp.ne.s32.totalorder %s54, %s70
    %p72 = scmp.eq.s32.totalorder %s20, 0
    %p73 = por %p71, %p72
    %s75 = sadd.s32 %s74, 1
    %p78 = scmp.eq.s32.totalorder %s14, 1
    %p79 = scmp.ne.s32.totalorder %s74, %s76
    %p80 = scmp.eq.s32.totalorder %s14, 0
    %p81 = por %p79, %p80
    %p82 = scmp.ne.s32.totalorder %s74, %s76
    %p83 = scmp.eq.s32.totalorder %s19, 1
    %p84 = por %p82, %p83
    %p85 = scmp.ne.s32.totalorder %s76, %s77
    %p86 = scmp.eq.s32.totalorder %s19, 0
    %p87 = por %p85, %p86
    %p88 = scmp.ne.s32.totalorder %s76, %s77
    %p89 = scmp.eq.s32.totalorder %s20, 1
    %p90 = por %p88, %p89
    %p92 = scmp.ne.s32.totalorder %s77, %s91
    %p93 = scmp.eq.s32.totalorder %s20, 0
    %p94 = por %p92, %p93
    %s96 = sadd.s32 %s95, 1
    %p99 = scmp.eq.s32.totalorder %s14, 1
    %p100 = scmp.ne.s32.totalorder %s95, %s97
    %p101 = scmp.eq.s32.totalorder %s14, 0
    %p102 = por %p100, %p101
    %p103 = scmp.ne.s32.totalorder %s95, %s97
    %p104 = scmp.eq.s32.totalorder %s19, 1
    %p105 = por %p103, %p104
    %p106 = scmp.ne.s32.totalorder %s97, %s98
    %p107 = scmp.eq.s32.totalorder %s19, 0
    %p108 = por %p106, %p107
    %p109 = scmp.ne.s32.totalorder %s97, %s98
    %p110 = scmp.eq.s32.totalorder %s20, 1
    %p111 = por %p109, %p110
    %p113 = scmp.ne.s32.totalorder %s98, %s112
    %p114 = scmp.eq.s32.totalorder %s20, 0
    %p115 = por %p113, %p114
    %s117 = sadd.s32 %s116, 1
    %p120 = scmp.eq.s32.totalorder %s14, 1
    %p121 = scmp.ne.s32.totalorder %s116, %s118
    %p122 = scmp.eq.s32.totalorder %s14, 0
    %p123 = por %p121, %p122
    %p124 = scmp.ne.s32.totalorder %s116, %s118
    %p125 = scmp.eq.s32.totalorder %s19, 1
    %p126 = por %p124, %p125
    %p127 = scmp.ne.s32.totalorder %s118, %s119
    %p128 = scmp.eq.s32.totalorder %s19, 0
    %p129 = por %p127, %p128
    %p130 = scmp.ne.s32.totalorder %s118, %s119
    %p131 = scmp.eq.s32.totalorder %s20, 1
    %p132 = por %p130, %p131
    %p134 = scmp.ne.s32.totalorder %s119, %s133
    %p135 = scmp.eq.s32.totalorder %s20, 0
    %p136 = por %p134, %p135
    %s138 = sadd.s32 %s137, 1
    %p141 = scmp.eq.s32.totalorder %s14, 1
    %p142 = scmp.ne.s32.totalorder %s137, %s139
    %p143 = scmp.eq.s32.totalorder %s14, 0
    %p144 = por %p142, %p143
    %p145 = scmp.ne.s32.totalorder %s137, %s139
    %p146 = scmp.eq.s32.totalorder %s19, 1
    %p147 = por %p145, %p146
    %p148 = scmp.ne.s32.totalorder %s139, %s140
    %p149 = scmp.eq.s32.totalorder %s19, 0
    %p150 = por %p148, %p149
    %p151 = scmp.ne.s32.totalorder %s139, %s140
    %p152 = scmp.eq.s32.totalorder %s20, 1
    %p153 = por %p151, %p152
    %p155 = scmp.ne.s32.totalorder %s140, %s154
    %p156 = scmp.eq.s32.totalorder %s20, 0
    %p157 = por %p155, %p156
    %s159 = sadd.s32 %s158, 1
    %p162 = scmp.eq.s32.totalorder %s14, 1
    %p163 = scmp.ne.s32.totalorder %s158, %s160
    %p164 = scmp.eq.s32.totalorder %s14, 0
    %p165 = por %p163, %p164
    %p166 = scmp.ne.s32.totalorder %s158, %s160
    %p167 = scmp.eq.s32.totalorder %s19, 1
    %p168 = por %p166, %p167
    %p169 = scmp.ne.s32.totalorder %s160, %s161
    %p170 = scmp.eq.s32.totalorder %s19, 0
    %p171 = por %p169, %p170
    %p172 = scmp.ne.s32.totalorder %s160, %s161
    %p173 = scmp.eq.s32.totalorder %s20, 1
    %p174 = por %p172, %p173
    %p176 = scmp.ne.s32.totalorder %s161, %s175
    %p177 = scmp.eq.s32.totalorder %s20, 0
    %p178 = por %p176, %p177
    %s180 = sadd.s32 %s179, 1
    %p183 = scmp.eq.s32.totalorder %s14, 1
    %p184 = scmp.ne.s32.totalorder %s179, %s181
    %p185 = scmp.eq.s32.totalorder %s14, 0
    %p186 = por %p184, %p185
    %p187 = scmp.ne.s32.totalorder %s179, %s181
    %p188 = scmp.eq.s32.totalorder %s19, 1
    %p189 = por %p187, %p188
    %p190 = scmp.ne.s32.totalorder %s181, %s182
    %p191 = scmp.eq.s32.totalorder %s19, 0
    %p192 = por %p190, %p191
    %p193 = scmp.ne.s32.totalorder %s181, %s182
    %p194 = scmp.eq.s32.totalorder %s20, 1
    %p195 = por %p193, %p194
    %p197 = scmp.ne.s32.totalorder %s182, %s196
    %p198 = scmp.eq.s32.totalorder %s20, 0
    %p199 = por %p197, %p198
    %s200 = ssub.s32 %s14, %s21
    %p201 = scmp.eq.s32.totalorder %s200, 0
    %s203 = sadd.s32 %s202, 1
    %s204 = scalar_select %p201, %s202, %s203
    %p207 = pneg %p201
    %p208 = scmp.eq.s32.totalorder %s14, 1
    %p209 = por %p207, %p208
    %p210 = scmp.ne.s32.totalorder %s202, %s205
    %p211 = scmp.eq.s32.totalorder %s14, 0
    %p212 = por %p210, %p211
    %p213 = scmp.ne.s32.totalorder %s202, %s205
    %p214 = scmp.eq.s32.totalorder %s19, 1
    %p215 = por %p213, %p214
    %p216 = scmp.ne.s32.totalorder %s205, %s206
    %p217 = scmp.eq.s32.totalorder %s19, 0
    %p218 = por %p216, %p217
    %p219 = scmp.ne.s32.totalorder %s205, %s206
    %p220 = scmp.eq.s32.totalorder %s20, 1
    %p221 = por %p219, %p220
    %p223 = scmp.ne.s32.totalorder %s206, %s222
    %p224 = scmp.eq.s32.totalorder %s20, 0
    %p225 = por %p223, %p224
    %p226 = scmp.le.s32.totalorder 1, %s14
    %p227 = scmp.lt.s32.totalorder %s14, 3
    %p228 = pnand %p226, %p227
    %p229 = pneg %p228
    // Predicated region
    $region9: #{densenet_pallas.16} parent=5 // pred_check
      _
    $region10: #{densenet_pallas.16} parent=5 // pred_check_branch
      %231 = sbr.rel (%p228) target = $region12
    $region11: #{densenet_pallas.16} parent=5 // pred_region
      %s232 = ssub.s32 %s14, 1
      // Predicated region
      $region13: #{densenet_pallas.16} parent=11 // pred_check
        %p233 = pneg %p87
      $region14: #{densenet_pallas.16} parent=11 // pred_check_branch
        %235 = sbr.rel (%p233) target = $region16
      $region15: #{densenet_pallas.16} parent=11 // pred_region
        _
      $region16: #{densenet_pallas.16} parent=11 // pred_fallthru
        _
      // Predicated region
      $region17: #{densenet_pallas.16} parent=11 // pred_check
        %p236 = pneg %p108
      $region18: #{densenet_pallas.16} parent=11 // pred_check_branch
        %238 = sbr.rel (%p236) target = $region20
      $region19: #{densenet_pallas.16} parent=11 // pred_region
        _
      $region20: #{densenet_pallas.16} parent=11 // pred_fallthru
        _
      // Predicated region
      $region21: #{densenet_pallas.16} parent=11 // pred_check
        %p239 = pneg %p129
      $region22: #{densenet_pallas.16} parent=11 // pred_check_branch
        %241 = sbr.rel (%p239) target = $region24
      $region23: #{densenet_pallas.16} parent=11 // pred_region
        _
      $region24: #{densenet_pallas.16} parent=11 // pred_fallthru
        _
      // Predicated region
      $region25: #{densenet_pallas.16} parent=11 // pred_check
        %p242 = pneg %p150
      $region26: #{densenet_pallas.16} parent=11 // pred_check_branch
        %244 = sbr.rel (%p242) target = $region28
      $region27: #{densenet_pallas.16} parent=11 // pred_region
        _
      $region28: #{densenet_pallas.16} parent=11 // pred_fallthru
        _
      // Predicated region
      $region29: #{densenet_pallas.16} parent=11 // pred_check
        %p245 = pneg %p171
      $region30: #{densenet_pallas.16} parent=11 // pred_check_branch
        %247 = sbr.rel (%p245) target = $region32
      $region31: #{densenet_pallas.16} parent=11 // pred_region
        _
      $region32: #{densenet_pallas.16} parent=11 // pred_fallthru
        _
      // Predicated region
      $region33: #{densenet_pallas.16} parent=11 // pred_check
        %p248 = pneg %p192
      $region34: #{densenet_pallas.16} parent=11 // pred_check_branch
        %250 = sbr.rel (%p248) target = $region36
      $region35: #{densenet_pallas.16} parent=11 // pred_region
        _
      $region36: #{densenet_pallas.16} parent=11 // pred_fallthru
        _
    $region12: #{densenet_pallas.16} parent=5 // pred_fallthru
      _
    %p251 = scmp.lt.s32.totalorder %s14, 2
    // Predicated region
    $region37: #{densenet_pallas.16} parent=5 // pred_check
      %p252 = pneg %p251
    $region38: #{densenet_pallas.16} parent=5 // pred_check_branch
      %254 = sbr.rel (%p252) target = $region40
    $region39: #{densenet_pallas.16} parent=5 // pred_region
      // Predicated region
      $region41: #{densenet_pallas.16} parent=39 // pred_check
        %p255 = pneg %p34
      $region42: #{densenet_pallas.16} parent=39 // pred_check_branch
        %257 = sbr.rel (%p255) target = $region44
      $region43: #{densenet_pallas.16} parent=39 // pred_region
        %p258 = scmp.lt.s32.totalorder %s14, 1
        %s259 = scalar_select %p258, %s14, 1
        %s260 = smul.addr %s259, 4
        %s261 = smul.addr %s260, 8
        %s262 = scalar_lea.vmem %s0, %s261
      $region44: #{densenet_pallas.16} parent=39 // pred_fallthru
        _
      // Predicated region
      $region45: #{densenet_pallas.16} parent=39 // pred_check
        %p263 = pneg %p60
      $region46: #{densenet_pallas.16} parent=39 // pred_check_branch
        %265 = sbr.rel (%p263) target = $region48
      $region47: #{densenet_pallas.16} parent=39 // pred_region
        %p266 = scmp.lt.s32.totalorder %s14, 1
        %s267 = scalar_select %p266, %s14, 1
        %s268 = smul.addr %s267, 4
        %s269 = smul.addr %s268, 8
        %s270 = scalar_lea.vmem %s1, %s269
      $region48: #{densenet_pallas.16} parent=39 // pred_fallthru
        _
    $region40: #{densenet_pallas.16} parent=5 // pred_fallthru
      _
    %p271 = scmp.le.s32.totalorder 1, %s14
    %p272 = scmp.lt.s32.totalorder %s14, 3
    %p273 = pnand %p271, %p272
    %p274 = pneg %p273
    // Predicated region
    $region49: #{densenet_pallas.16} parent=5 // pred_check
      _
    $region50: #{densenet_pallas.16} parent=5 // pred_check_branch
      %276 = sbr.rel (%p273) target = $region52
    $region51: #{densenet_pallas.16} parent=5 // pred_region
      %s277 = ssub.s32 %s14, 1
      %p278 = scmp.lt.s32.totalorder %s19, 1
      %s279 = scalar_select %p278, %s19, 1
      %s280 = smul.addr %s279, 4
      %s281 = smul.addr %s280, 8
      %s282 = scalar_lea.vmem %s0, %s281
      %p283 = pneg %p40
      %p284 = pneg %p37
      %p285 = scmp.lt.s32.totalorder %s19, 1
      %s286 = scalar_select %p285, %s19, 1
      %s287 = smul.addr %s286, 4
      %s288 = smul.addr %s287, 8
      %s289 = scalar_lea.vmem %s1, %s288
      %p290 = pneg %p66
      %p291 = pneg %p63
      %p292 = pneg %p87
      %p293 = pneg %p84
      %p294 = pneg %p108
      %p295 = pneg %p105
      %p296 = pneg %p129
      %p297 = pneg %p126
      %p298 = pneg %p150
      %p299 = pneg %p147
      %p300 = pneg %p171
      %p301 = pneg %p168
      %p302 = pneg %p192
      %p303 = pneg %p189
      %p304 = pneg %p218
      %p305 = pneg %p215
      %p306 = scmp.lt.s32.totalorder %s19, 1
      %s307 = scalar_select %p306, %s19, 1
      %s308 = smul.addr %s307, 4
      %s309 = smul.addr %s308, 8
      %s310 = scalar_lea.vmem %s8, %s309
      %p311 = scmp.lt.s32.totalorder %s19, 1
      %s312 = scalar_select %p311, %s19, 1
      %s313 = smul.addr %s312, 4
      %s314 = smul.addr %s313, 8
      %s315 = scalar_lea.vmem %s0, %s314
      %p316 = scmp.lt.s32.totalorder %s19, 1
      %s317 = scalar_select %p316, %s19, 1
      %s318 = smul.addr %s317, 4
      %s319 = smul.addr %s318, 8
      %s320 = scalar_lea.vmem %s1, %s319
      %p321 = scmp.lt.s32.totalorder %s19, 1
      %s322 = scalar_select %p321, %s19, 1
      %s323 = smul.addr %s322, 4
      %s324 = smul.addr %s323, 8
      %s325 = scalar_lea.vmem %s8, %s324
      %v326 = vld [vmem:[%s315] sm:$0xff]
      %v327 = vld [vmem:[%s315 + $0x8] sm:$0xff]
      %v328 = vld [vmem:[%s315 + $0x10] sm:$0xff]
      %v329 = vld [vmem:[%s315 + $0x18] sm:$0x1]
      %v330 = vld [vmem:[%s3] sm:$0x1]
      %v332 = vperm.slane %v330, 0
      %v334 = vmul.f32 %v326, %v332
      %v335 = vmul.f32 %v327, %v332
      %v336 = vmul.f32 %v328, %v332
      %v337 = vmul.f32 %v329, %v332
      %v338 = vld [vmem:[%s4] sm:$0x1]
      %v340 = vperm.slane %v338, 0
      %v342 = vadd.f32 %v334, %v340
      %v343 = vadd.f32 %v335, %v340
      %v344 = vadd.f32 %v336, %v340
      %v345 = vadd.f32 %v337, %v340
      %v346 = vmax.f32 %v342, 0.0
      %v347 = vmax.f32 %v343, 0.0
      %v348 = vmax.f32 %v344, 0.0
      %v349 = vmax.f32 %v345, 0.0
      %v350 = vld [vmem:[%s2] sm:$0xff]
      %v351 = vld [vmem:[%s2 + $0x8] sm:$0xff]
      %v352 = vld [vmem:[%s2 + $0x10] sm:$0xff]
      %v353 = vld [vmem:[%s2 + $0x18] sm:$0xff]
      %v354 = vld [vmem:[%s2 + $0x20] sm:$0xff]
      %v355 = vld [vmem:[%s2 + $0x28] sm:$0xff]
      %v356 = vld [vmem:[%s2 + $0x30] sm:$0xff]
      %v357 = vld [vmem:[%s2 + $0x38] sm:$0xff]
      %v358 = vld [vmem:[%s320] sm:$0xff]
      %v359 = vld [vmem:[%s320 + $0x8] sm:$0xff]
      %v360 = vld [vmem:[%s320 + $0x10] sm:$0xff]
      %v361 = vld [vmem:[%s320 + $0x18] sm:$0x1]
      %362 = vrot.lane.b32.xlu0 %v332, 64
      %v363 = vpop.permute.xlu0 %362
      %v365 = vmul.f32 %v358, %v363
      %v366 = vmul.f32 %v359, %v363
      %v367 = vmul.f32 %v360, %v363
      %v368 = vmul.f32 %v361, %v363
      %369 = vrot.lane.b32.xlu0 %v340, 64
      %v370 = vpop.permute.xlu0 %369
      %v372 = vadd.f32 %v365, %v370
      %v373 = vadd.f32 %v366, %v370
      %v374 = vadd.f32 %v367, %v370
      %v375 = vadd.f32 %v368, %v370
      %v376 = vmax.f32 %v372, 0.0
      %v377 = vmax.f32 %v373, 0.0
      %v378 = vmax.f32 %v374, 0.0
      %v379 = vmax.f32 %v375, 0.0
      %v380 = vld [vmem:[%s2 + $0x40] sm:$0xff]
      %v381 = vld [vmem:[%s2 + $0x48] sm:$0xff]
      %v382 = vld [vmem:[%s2 + $0x50] sm:$0xff]
      %v383 = vld [vmem:[%s2 + $0x58] sm:$0xff]
      %vm384 = vcmask 261120
      %v386 = vsel %vm384, %v376, 0
      %v389 = vsel %vm384, %v377, 0
      %v392 = vsel %vm384, %v378, 0
      %v395 = vsel %vm384, %v379, 0
      %397 = vmatpush.msra.mxu0 0.0
      %398 = vmatpush.msra.mxu0 0.0
      %399 = vmatpush.msra.mxu0 0.0
      %400 = vmatpush.msra.mxu0 0.0
      %401 = vmatpush.msra.mxu0 0.0
      %402 = vmatpush.msra.mxu0 0.0
      %403 = vmatpush.msra.mxu0 0.0
      %404 = vmatpush.msra.mxu0 0.0
      %405 = vmatpush.msra.mxu0 0.0
      %406 = vmatpush.msra.mxu0 0.0
      %407 = vmatpush.msra.mxu0 0.0
      %408 = vmatpush.msra.mxu0 0.0
      %409 = vmatpush.msra.mxu0 %v383
      %410 = vmatpush.msra.mxu0 %v382
      %411 = vmatpush.msra.mxu0 %v381
      %412 = vmatpush.msra.mxu0 %v380
      %413 = vmatmul.f32.gmra.mxu0 %v386
      %v414 = vpop.f32.mrf.mxu0
      %v415 = vadd.f32 0.0, %v414
      %416 = vmatmul.f32.gmra.mxu0 %v389
      %v417 = vpop.f32.mrf.mxu0
      %v418 = vadd.f32 0.0, %v417
      %419 = vmatmul.f32.gmra.mxu0 %v392
      %v420 = vpop.f32.mrf.mxu0
      %v421 = vadd.f32 0.0, %v420
      %422 = vmatmul.f32.gmra.mxu0 %v395
      %v423 = vpop.f32.mrf.mxu0
      %v424 = vadd.f32 0.0, %v423
      %425 = vdwg.mxu0
      %vm426 = vcmask 523264
      %v428 = vsel %vm426, %v346, 0
      %v431 = vsel %vm426, %v347, 0
      %v434 = vsel %vm426, %v348, 0
      %v437 = vsel %vm426, %v349, 0
      %439 = vmatpush.msra.mxu0 0.0
      %440 = vmatpush.msra.mxu0 0.0
      %441 = vmatpush.msra.mxu0 0.0
      %442 = vmatpush.msra.mxu0 0.0
      %443 = vmatpush.msra.mxu0 0.0
      %444 = vmatpush.msra.mxu0 0.0
      %445 = vmatpush.msra.mxu0 0.0
      %446 = vmatpush.msra.mxu0 0.0
      %447 = vmatpush.msra.mxu0 %v357
      %448 = vmatpush.msra.mxu0 %v356
      %449 = vmatpush.msra.mxu0 %v355
      %450 = vmatpush.msra.mxu0 %v354
      %451 = vmatpush.msra.mxu0 %v353
      %452 = vmatpush.msra.mxu0 %v352
      %453 = vmatpush.msra.mxu0 %v351
      %454 = vmatpush.msra.mxu0 %v350
      %455 = vmatmul.f32.gmra.mxu0 %v428
      %v456 = vpop.f32.mrf.mxu0
      %v457 = vadd.f32 %v415, %v456
      %458 = vmatmul.f32.gmra.mxu0 %v431
      %v459 = vpop.f32.mrf.mxu0
      %v460 = vadd.f32 %v418, %v459
      %461 = vmatmul.f32.gmra.mxu0 %v434
      %v462 = vpop.f32.mrf.mxu0
      %v463 = vadd.f32 %v421, %v462
      %464 = vmatmul.f32.gmra.mxu0 %v437
      %v465 = vpop.f32.mrf.mxu0
      %v466 = vadd.f32 %v424, %v465
      %467 = vdwg.mxu0
      %v468 = vld [vmem:[%s5] sm:$0x1]
      %v470 = vperm.slane %v468, 0
      %v472 = vmul.f32 %v457, %v470
      %v473 = vmul.f32 %v460, %v470
      %v474 = vmul.f32 %v463, %v470
      %v475 = vmul.f32 %v466, %v470
      %v476 = vld [vmem:[%s6] sm:$0x1]
      %v478 = vperm.slane %v476, 0
      %v480 = vadd.f32 %v472, %v478
      %v481 = vadd.f32 %v473, %v478
      %v482 = vadd.f32 %v474, %v478
      %v483 = vadd.f32 %v475, %v478
      %v484 = vmax.f32 %v480, 0.0
      %v485 = vmax.f32 %v481, 0.0
      %v486 = vmax.f32 %v482, 0.0
      %v487 = vmax.f32 %v483, 0.0
      %488 = vst [vmem:[#allocation2] sm:$0xff] 0.0
      %489 = vst [vmem:[#allocation2 + $0xd] sm:$0x3] 0.0
      %490 = vst [vmem:[#allocation2 + $0x14] sm:$0x3] 0.0
      %491 = vst [vmem:[#allocation2 + $0x1b] sm:$0x3] 0.0
      %492 = vst [vmem:[#allocation2 + $0x22] sm:$0x3] 0.0
      %493 = vst [vmem:[#allocation2 + $0x29] sm:$0xff] 0.0
      %494 = vst [vmem:[#allocation2 + $0x8] sm:$0x1f] %v484
      %495 = vst [vmem:[#allocation2 + $0xa] sm:$0xe0] %v484
      %496 = vst [vmem:[#allocation2 + $0x12] sm:$0x3] %v485
      %497 = vst [vmem:[#allocation2 + $0x14] sm:$0x7c] %v485
      %498 = vst [vmem:[#allocation2 + $0x16] sm:$0x80] %v485
      %499 = vst [vmem:[#allocation2 + $0x1e] sm:$0xf] %v486
      %500 = vst [vmem:[#allocation2 + $0x20] sm:$0xf0] %v486
      %501 = vst [vmem:[#allocation2 + $0x28] sm:$0x1] %v487
      %v502 = vld [vmem:[#allocation2] sm:$0xff]
      %v503 = vld [vmem:[#allocation2 + $0x8] sm:$0xff]
      %v504 = vld [vmem:[#allocation2 + $0x10] sm:$0xff]
      %v505 = vld [vmem:[#allocation2 + $0x18] sm:$0xff]
      %v506 = vld [vmem:[#allocation2 + $0x20] sm:$0xff]
      %v507 = vld [vmem:[#allocation2 + $0x28] sm:$0xff]
      %v508 = vld [vmem:[#allocation2 + $0x30] sm:$0x1]
      %v509 = vld [vmem:[%s7] sm:$0xff]
      %v510 = vld [vmem:[%s7 + $0x8] sm:$0xff]
      %v511 = vld [vmem:[%s7 + $0x10] sm:$0xff]
      %v512 = vld [vmem:[%s7 + $0x18] sm:$0xff]
      %v513 = vld [vmem:[%s7 + $0x20] sm:$0xff]
      %v514 = vld [vmem:[%s7 + $0x28] sm:$0xff]
      %v515 = vld [vmem:[%s7 + $0x30] sm:$0xff]
      %v516 = vld [vmem:[%s7 + $0x38] sm:$0xff]
      %v517 = vld [vmem:[%s7 + $0x40] sm:$0xff]
      %v518 = vld [vmem:[%s7 + $0x48] sm:$0xff]
      %v519 = vld [vmem:[%s7 + $0x50] sm:$0xff]
      %v520 = vld [vmem:[%s7 + $0x58] sm:$0xff]
      %v521 = vld [vmem:[%s7 + $0x60] sm:$0xff]
      %v522 = vld [vmem:[%s7 + $0x68] sm:$0xff]
      %v523 = vld [vmem:[%s7 + $0x70] sm:$0xff]
      %v524 = vld [vmem:[%s7 + $0x78] sm:$0xff]
      %v525 = vld [vmem:[%s7 + $0x80] sm:$0xff]
      %v526 = vld [vmem:[%s7 + $0x88] sm:$0xff]
      %v527 = vld [vmem:[%s7 + $0x90] sm:$0xff]
      %v528 = vld [vmem:[%s7 + $0x98] sm:$0xff]
      %v529 = vld [vmem:[%s7 + $0xa0] sm:$0xff]
      %v530 = vld [vmem:[%s7 + $0xa8] sm:$0xff]
      %v531 = vld [vmem:[%s7 + $0xb0] sm:$0xff]
      %v532 = vld [vmem:[%s7 + $0xb8] sm:$0xff]
      %v533 = vld [vmem:[%s7 + $0xc0] sm:$0xff]
      %v534 = vld [vmem:[%s7 + $0xc8] sm:$0xff]
      %v535 = vld [vmem:[%s7 + $0xd0] sm:$0xff]
      %v536 = vld [vmem:[%s7 + $0xd8] sm:$0xff]
      %v537 = vld [vmem:[%s7 + $0xe0] sm:$0xff]
      %v538 = vld [vmem:[%s7 + $0xe8] sm:$0xff]
      %v539 = vld [vmem:[%s7 + $0xf0] sm:$0xff]
      %v540 = vld [vmem:[%s7 + $0xf8] sm:$0xff]
      %v541 = vld [vmem:[%s7 + $0x100] sm:$0xff]
      %v542 = vld [vmem:[%s7 + $0x108] sm:$0xff]
      %v543 = vld [vmem:[%s7 + $0x110] sm:$0xff]
      %v544 = vld [vmem:[%s7 + $0x118] sm:$0xff]
      %v545 = vld [vmem:[%s7 + $0x120] sm:$0xff]
      %v546 = vld [vmem:[%s7 + $0x128] sm:$0xff]
      %v547 = vld [vmem:[%s7 + $0x130] sm:$0xff]
      %v548 = vld [vmem:[%s7 + $0x138] sm:$0xff]
      %v549 = vld [vmem:[%s7 + $0x140] sm:$0xff]
      %v550 = vld [vmem:[%s7 + $0x148] sm:$0xff]
      %v551 = vld [vmem:[%s7 + $0x150] sm:$0xff]
      %v552 = vld [vmem:[%s7 + $0x158] sm:$0xff]
      %v553 = vld [vmem:[%s7 + $0x160] sm:$0xff]
      %v554 = vld [vmem:[%s7 + $0x168] sm:$0xff]
      %v555 = vld [vmem:[%s7 + $0x170] sm:$0xff]
      %v556 = vld [vmem:[%s7 + $0x178] sm:$0xff]
      %557 = vmatpush.msra.mxu0 %v554
      %558 = vmatpush.msra.mxu0 %v551
      %559 = vmatpush.msra.mxu0 %v548
      %560 = vmatpush.msra.mxu0 %v545
      %561 = vmatpush.msra.mxu0 %v542
      %562 = vmatpush.msra.mxu0 %v539
      %563 = vmatpush.msra.mxu0 %v536
      %564 = vmatpush.msra.mxu0 %v533
      %565 = vmatpush.msra.mxu0 %v530
      %566 = vmatpush.msra.mxu0 %v527
      %567 = vmatpush.msra.mxu0 %v524
      %568 = vmatpush.msra.mxu0 %v521
      %569 = vmatpush.msra.mxu0 %v518
      %570 = vmatpush.msra.mxu0 %v515
      %571 = vmatpush.msra.mxu0 %v512
      %572 = vmatpush.msra.mxu0 %v509
      %573 = vmatmul.f32.gmra.mxu0 %v502
      %v574 = vpop.f32.mrf.mxu0
      %v575 = vadd.f32 0.0, %v574
      %576 = vmatmul.f32.gmra.mxu0 %v503
      %v577 = vpop.f32.mrf.mxu0
      %v578 = vadd.f32 0.0, %v577
      %579 = vmatmul.f32.gmra.mxu0 %v504
      %v580 = vpop.f32.mrf.mxu0
      %v581 = vadd.f32 0.0, %v580
      %582 = vmatmul.f32.gmra.mxu0 %v505
      %v583 = vpop.f32.mrf.mxu0
      %v584 = vadd.f32 0.0, %v583
      %585 = vmatmul.f32.gmra.mxu0 %v506
      %v586 = vpop.f32.mrf.mxu0
      %v587 = vadd.f32 0.0, %v586
      %588 = vmatmul.f32.gmra.mxu0 %v507
      %v589 = vpop.f32.mrf.mxu0
      %590 = vmatmul.f32.gmra.mxu0 %v508
      %v591 = vpop.f32.mrf.mxu0
      %592 = vdwg.mxu0
      %593 = vmatpush.msra.mxu0 %v555
      %594 = vmatpush.msra.mxu0 %v552
      %595 = vmatpush.msra.mxu0 %v549
      %596 = vmatpush.msra.mxu0 %v546
      %597 = vmatpush.msra.mxu0 %v543
      %598 = vmatpush.msra.mxu0 %v540
      %599 = vmatpush.msra.mxu0 %v537
      %600 = vmatpush.msra.mxu0 %v534
      %601 = vmatpush.msra.mxu0 %v531
      %602 = vmatpush.msra.mxu0 %v528
      %603 = vmatpush.msra.mxu0 %v525
      %604 = vmatpush.msra.mxu0 %v522
      %605 = vmatpush.msra.mxu0 %v519
      %606 = vmatpush.msra.mxu0 %v516
      %607 = vmatpush.msra.mxu0 %v513
      %608 = vmatpush.msra.mxu0 %v510
      %609 = vmatmul.f32.gmra.mxu0 %v502
      %v610 = vpop.f32.mrf.mxu0
      %611 = vmatmul.f32.gmra.mxu0 %v503
      %v612 = vpop.f32.mrf.mxu0
      %v613 = vadd.f32 0.0, %v612
      %614 = vmatmul.f32.gmra.mxu0 %v504
      %v615 = vpop.f32.mrf.mxu0
      %v616 = vadd.f32 0.0, %v615
      %617 = vmatmul.f32.gmra.mxu0 %v505
      %v618 = vpop.f32.mrf.mxu0
      %v619 = vadd.f32 0.0, %v618
      %620 = vmatmul.f32.gmra.mxu0 %v506
      %v621 = vpop.f32.mrf.mxu0
      %v622 = vadd.f32 0.0, %v621
      %623 = vmatmul.f32.gmra.mxu0 %v507
      %v624 = vpop.f32.mrf.mxu0
      %v625 = vadd.f32 0.0, %v624
      %626 = vmatmul.f32.gmra.mxu0 %v508
      %v627 = vpop.f32.mrf.mxu0
      %628 = vdwg.mxu0
      %629 = vmatpush.msra.mxu0 %v556
      %630 = vmatpush.msra.mxu0 %v553
      %631 = vmatpush.msra.mxu0 %v550
      %632 = vmatpush.msra.mxu0 %v547
      %633 = vmatpush.msra.mxu0 %v544
      %634 = vmatpush.msra.mxu0 %v541
      %635 = vmatpush.msra.mxu0 %v538
      %636 = vmatpush.msra.mxu0 %v535
      %637 = vmatpush.msra.mxu0 %v532
      %638 = vmatpush.msra.mxu0 %v529
      %639 = vmatpush.msra.mxu0 %v526
      %640 = vmatpush.msra.mxu0 %v523
      %641 = vmatpush.msra.mxu0 %v520
      %642 = vmatpush.msra.mxu0 %v517
      %643 = vmatpush.msra.mxu0 %v514
      %644 = vmatpush.msra.mxu0 %v511
      %645 = vmatmul.f32.gmra.mxu0 %v502
      %v646 = vpop.f32.mrf.mxu0
      %647 = vmatmul.f32.gmra.mxu0 %v503
      %v648 = vpop.f32.mrf.mxu0
      %649 = vmatmul.f32.gmra.mxu0 %v504
      %v650 = vpop.f32.mrf.mxu0
      %v651 = vadd.f32 0.0, %v650
      %652 = vmatmul.f32.gmra.mxu0 %v505
      %v653 = vpop.f32.mrf.mxu0
      %v654 = vadd.f32 0.0, %v653
      %655 = vmatmul.f32.gmra.mxu0 %v506
      %v656 = vpop.f32.mrf.mxu0
      %v657 = vadd.f32 0.0, %v656
      %658 = vmatmul.f32.gmra.mxu0 %v507
      %v659 = vpop.f32.mrf.mxu0
      %v660 = vadd.f32 0.0, %v659
      %661 = vmatmul.f32.gmra.mxu0 %v508
      %v662 = vpop.f32.mrf.mxu0
      %v663 = vadd.f32 0.0, %v662
      %664 = vdwg.mxu0
      %v666 = vrot.slane %v575, 1
      %667 = vrot.lane.b32.xlu0 %v666, 96
      %v668 = vpop.permute.xlu0 %667
      %v670 = vadd.f32 %v575, %v668
      %v671 = vrot.slane %v575, 2
      %672 = vrot.lane.b32.xlu0 %v671, 64
      %v673 = vpop.permute.xlu0 %672
      %v675 = vadd.f32 %v670, %v673
      %vm677 = vcmask 1040384
      %v678 = vrot.slane %v575, 7
      %v679 = vrot.slane %v578, 7
      %v680 = vsel %vm677, %v678, %v679
      %681 = vrot.lane.b32.xlu0 %v680, 32
      %v682 = vpop.permute.xlu0 %681
      %v684 = vadd.f32 %v675, %v682
      %v685 = vadd.f32 %v684, %v613
      %v687 = vrot.slane %v613, 1
      %688 = vrot.lane.b32.xlu0 %v687, 96
      %v689 = vpop.permute.xlu0 %688
      %v691 = vadd.f32 %v685, %v689
      %vm693 = vcmask 1041408
      %v694 = vrot.slane %v613, 6
      %v695 = vrot.slane %v616, 6
      %v696 = vsel %vm693, %v694, %v695
      %697 = vrot.lane.b32.xlu0 %v696, 64
      %v698 = vpop.permute.xlu0 %697
      %v700 = vadd.f32 %v691, %v698
      %v701 = vrot.slane %v613, 7
      %v702 = vrot.slane %v616, 7
      %v703 = vsel %vm677, %v701, %v702
      %704 = vrot.lane.b32.xlu0 %v703, 32
      %v705 = vpop.permute.xlu0 %704
      %v707 = vadd.f32 %v700, %v705
      %v708 = vadd.f32 %v707, %v651
      %vm709 = vcmask 258048
      %710 = vst.msk [vmem:[%s325] sm:$0x1f] %vm709, %v708
      %v711 = vrot.slane %v578, 1
      %712 = vrot.lane.b32.xlu0 %v711, 96
      %v713 = vpop.permute.xlu0 %712
      %v715 = vadd.f32 %v575, %v713
      %v716 = vadd.f32 %v578, %v713
      %v717 = vrot.slane %v578, 2
      %718 = vrot.lane.b32.xlu0 %v717, 64
      %v719 = vpop.permute.xlu0 %718
      %v721 = vadd.f32 %v715, %v719
      %v722 = vadd.f32 %v716, %v719
      %v724 = vrot.slane %v581, 7
      %v725 = vsel %vm677, %v679, %v724
      %726 = vrot.lane.b32.xlu0 %v679, 32
      %v727 = vpop.permute.xlu0 %726
      %728 = vrot.lane.b32.xlu0 %v725, 32
      %v729 = vpop.permute.xlu0 %728
      %v732 = vadd.f32 %v721, %v727
      %v733 = vadd.f32 %v722, %v729
      %v734 = vadd.f32 %v732, %v613
      %v735 = vadd.f32 %v733, %v616
      %v736 = vrot.slane %v616, 1
      %737 = vrot.lane.b32.xlu0 %v736, 96
      %v738 = vpop.permute.xlu0 %737
      %v740 = vadd.f32 %v734, %v738
      %v741 = vadd.f32 %v735, %v738
      %v743 = vrot.slane %v619, 6
      %v744 = vsel %vm693, %v695, %v743
      %745 = vrot.lane.b32.xlu0 %v695, 64
      %v746 = vpop.permute.xlu0 %745
      %747 = vrot.lane.b32.xlu0 %v744, 64
      %v748 = vpop.permute.xlu0 %747
      %v751 = vadd.f32 %v740, %v746
      %v752 = vadd.f32 %v741, %v748
      %v753 = vrot.slane %v619, 7
      %v754 = vsel %vm677, %v702, %v753
      %755 = vrot.lane.b32.xlu0 %v702, 32
      %v756 = vpop.permute.xlu0 %755
      %757 = vrot.lane.b32.xlu0 %v754, 32
      %v758 = vpop.permute.xlu0 %757
      %v761 = vadd.f32 %v751, %v756
      %v762 = vadd.f32 %v752, %v758
      %v763 = vadd.f32 %v761, %v651
      %v764 = vadd.f32 %v762, %v654
      %vm765 = vcmask 261127
      %766 = vst.msk [vmem:[%s325 - $0x2] sm:$0x80] %vm765, %v763
      %vm767 = vcmask 257024
      %768 = vst.msk [vmem:[%s325 + $0x6] sm:$0xf] %vm767, %v764
      %vm769 = vcmask 1046528
      %v770 = vrot.slane %v581, 1
      %v771 = vsel %vm769, %v711, %v770
      %772 = vrot.lane.b32.xlu0 %v771, 96
      %v773 = vpop.permute.xlu0 %772
      %774 = vrot.lane.b32.xlu0 %v770, 96
      %v775 = vpop.permute.xlu0 %774
      %v778 = vadd.f32 %v578, %v773
      %v779 = vadd.f32 %v581, %v775
      %v780 = vrot.slane %v581, 2
      %781 = vrot.lane.b32.xlu0 %v780, 64
      %v782 = vpop.permute.xlu0 %781
      %v784 = vadd.f32 %v778, %v782
      %v785 = vadd.f32 %v779, %v782
      %v787 = vrot.slane %v584, 7
      %v788 = vsel %vm677, %v724, %v787
      %789 = vrot.lane.b32.xlu0 %v724, 32
      %v790 = vpop.permute.xlu0 %789
      %791 = vrot.lane.b32.xlu0 %v788, 32
      %v792 = vpop.permute.xlu0 %791
      %v795 = vadd.f32 %v784, %v790
      %v796 = vadd.f32 %v785, %v792
      %v797 = vadd.f32 %v795, %v616
      %v798 = vadd.f32 %v796, %v619
      %v799 = vrot.slane %v619, 1
      %v800 = vsel %vm769, %v736, %v799
      %801 = vrot.lane.b32.xlu0 %v800, 96
      %v802 = vpop.permute.xlu0 %801
      %803 = vrot.lane.b32.xlu0 %v799, 96
      %v804 = vpop.permute.xlu0 %803
      %v807 = vadd.f32 %v797, %v802
      %v808 = vadd.f32 %v798, %v804
      %v810 = vrot.slane %v622, 6
      %v811 = vsel %vm693, %v743, %v810
      %812 = vrot.lane.b32.xlu0 %v743, 64
      %v813 = vpop.permute.xlu0 %812
      %814 = vrot.lane.b32.xlu0 %v811, 64
      %v815 = vpop.permute.xlu0 %814
      %v818 = vadd.f32 %v807, %v813
      %v819 = vadd.f32 %v808, %v815
      %v820 = vrot.slane %v622, 7
      %v821 = vsel %vm677, %v753, %v820
      %822 = vrot.lane.b32.xlu0 %v753, 32
      %v823 = vpop.permute.xlu0 %822
      %824 = vrot.lane.b32.xlu0 %v821, 32
      %v825 = vpop.permute.xlu0 %824
      %v828 = vadd.f32 %v818, %v823
      %v829 = vadd.f32 %v819, %v825
      %v830 = vadd.f32 %v828, %v654
      %v831 = vadd.f32 %v829, %v657
      %vm832 = vcmask 261126
      %833 = vst.msk [vmem:[%s325 + $0x4] sm:$0xc0] %vm832, %v830
      %vm834 = vcmask 256000
      %835 = vst.msk [vmem:[%s325 + $0xc] sm:$0x7] %vm834, %v831
      %v836 = vrot.slane %v584, 1
      %v837 = vsel %vm769, %v770, %v836
      %838 = vrot.lane.b32.xlu0 %v837, 96
      %v839 = vpop.permute.xlu0 %838
      %840 = vrot.lane.b32.xlu0 %v836, 96
      %v841 = vpop.permute.xlu0 %840
      %v844 = vadd.f32 %v581, %v839
      %v845 = vadd.f32 %v584, %v841
      %vm846 = vcmask 1045504
      %v847 = vrot.slane %v584, 2
      %v848 = vsel %vm846, %v780, %v847
      %849 = vrot.lane.b32.xlu0 %v848, 64
      %v850 = vpop.permute.xlu0 %849
      %851 = vrot.lane.b32.xlu0 %v847, 64
      %v852 = vpop.permute.xlu0 %851
      %v855 = vadd.f32 %v844, %v850
      %v856 = vadd.f32 %v845, %v852
      %v858 = vrot.slane %v587, 7
      %v859 = vsel %vm677, %v787, %v858
      %860 = vrot.lane.b32.xlu0 %v787, 32
      %v861 = vpop.permute.xlu0 %860
      %862 = vrot.lane.b32.xlu0 %v859, 32
      %v863 = vpop.permute.xlu0 %862
      %v866 = vadd.f32 %v855, %v861
      %v867 = vadd.f32 %v856, %v863
      %v868 = vadd.f32 %v866, %v619
      %v869 = vadd.f32 %v867, %v622
      %v870 = vrot.slane %v622, 1
      %v871 = vsel %vm769, %v799, %v870
      %872 = vrot.lane.b32.xlu0 %v871, 96
      %v873 = vpop.permute.xlu0 %872
      %874 = vrot.lane.b32.xlu0 %v870, 96
      %v875 = vpop.permute.xlu0 %874
      %v878 = vadd.f32 %v868, %v873
      %v879 = vadd.f32 %v869, %v875
      %880 = vrot.lane.b32.xlu0 %v810, 64
      %v881 = vpop.permute.xlu0 %880
      %v883 = vadd.f32 %v878, %v881
      %v884 = vadd.f32 %v879, %v881
      %v886 = vrot.slane %v625, 7
      %v887 = vsel %vm677, %v820, %v886
      %888 = vrot.lane.b32.xlu0 %v820, 32
      %v889 = vpop.permute.xlu0 %888
      %890 = vrot.lane.b32.xlu0 %v887, 32
      %v891 = vpop.permute.xlu0 %890
      %v894 = vadd.f32 %v883, %v889
      %v895 = vadd.f32 %v884, %v891
      %v896 = vadd.f32 %v894, %v657
      %v897 = vadd.f32 %v895, %v660
      %vm898 = vcmask 261125
      %899 = vst.msk [vmem:[%s325 + $0xa] sm:$0xe0] %vm898, %v896
      %vm900 = vcmask 254976
      %901 = vst.msk [vmem:[%s325 + $0x12] sm:$0x3] %vm900, %v897
      %v902 = vrot.slane %v587, 1
      %v903 = vsel %vm769, %v836, %v902
      %904 = vrot.lane.b32.xlu0 %v903, 96
      %v905 = vpop.permute.xlu0 %904
      %906 = vrot.lane.b32.xlu0 %v902, 96
      %v907 = vpop.permute.xlu0 %906
      %v910 = vadd.f32 %v584, %v905
      %v911 = vadd.f32 %v587, %v907
      %v912 = vrot.slane %v587, 2
      %v913 = vsel %vm846, %v847, %v912
      %914 = vrot.lane.b32.xlu0 %v913, 64
      %v915 = vpop.permute.xlu0 %914
      %916 = vrot.lane.b32.xlu0 %v912, 64
      %v917 = vpop.permute.xlu0 %916
      %v920 = vadd.f32 %v910, %v915
      %v921 = vadd.f32 %v911, %v917
      %922 = vrot.lane.b32.xlu0 %v858, 32
      %v923 = vpop.permute.xlu0 %922
      %v925 = vadd.f32 %v920, %v923
      %v926 = vadd.f32 %v921, %v923
      %v927 = vadd.f32 %v925, %v622
      %v928 = vadd.f32 %v926, %v625
      %v929 = vrot.slane %v625, 1
      %v930 = vsel %vm769, %v870, %v929
      %931 = vrot.lane.b32.xlu0 %v930, 96
      %v932 = vpop.permute.xlu0 %931
      %933 = vrot.lane.b32.xlu0 %v929, 96
      %v934 = vpop.permute.xlu0 %933
      %v937 = vadd.f32 %v927, %v932
      %v938 = vadd.f32 %v928, %v934
      %v939 = vrot.slane %v625, 6
      %940 = vrot.lane.b32.xlu0 %v939, 64
      %v941 = vpop.permute.xlu0 %940
      %v943 = vadd.f32 %v937, %v941
      %v944 = vadd.f32 %v938, %v941
      %945 = vrot.lane.b32.xlu0 %v886, 32
      %v946 = vpop.permute.xlu0 %945
      %v948 = vadd.f32 %v943, %v946
      %v949 = vadd.f32 %v944, %v946
      %v950 = vadd.f32 %v948, %v660
      %v951 = vadd.f32 %v949, %v663
      %vm952 = vcmask 261124
      %953 = vst.msk [vmem:[%s325 + $0x10] sm:$0xf0] %vm952, %v950
      %vm954 = vcmask 253952
      %955 = vst.msk [vmem:[%s325 + $0x18] sm:$0x1] %vm954, %v951
      %p956 = scmp.lt.s32.totalorder %s19, 1
      %s957 = scalar_select %p956, %s19, 1
      %s958 = smul.addr %s957, 4
      %s959 = smul.addr %s958, 8
      %s960 = scalar_lea.vmem %s8, %s959
      // Predicated region
      $region53: #{densenet_pallas.16} parent=51 // pred_check
        %p961 = pneg %p215
      $region54: #{densenet_pallas.16} parent=51 // pred_check_branch
        %963 = sbr.rel (%p961) target = $region56
      $region55: #{densenet_pallas.16} parent=51 // pred_region
        _
      $region56: #{densenet_pallas.16} parent=51 // pred_fallthru
        _
    $region52: #{densenet_pallas.16} parent=5 // pred_fallthru
      _
    %p964 = scmp.le.s32.totalorder 2, %s14
    // Predicated region
    $region57: #{densenet_pallas.16} parent=5 // pred_check
      %p965 = pneg %p964
    $region58: #{densenet_pallas.16} parent=5 // pred_check_branch
      %967 = sbr.rel (%p965) target = $region60
    $region59: #{densenet_pallas.16} parent=5 // pred_region
      %s968 = ssub.s32 %s14, 2
      // Predicated region
      $region61: #{densenet_pallas.16} parent=59 // pred_check
        %p969 = pneg %p221
      $region62: #{densenet_pallas.16} parent=59 // pred_check_branch
        %971 = sbr.rel (%p969) target = $region64
      $region63: #{densenet_pallas.16} parent=59 // pred_region
        %p972 = scmp.lt.s32.totalorder %s20, 1
        %s973 = scalar_select %p972, %s20, 1
        %s974 = smul.addr %s973, 4
        %s975 = smul.addr %s974, 8
        %s976 = scalar_lea.vmem %s8, %s975
      $region64: #{densenet_pallas.16} parent=59 // pred_fallthru
        _
    $region60: #{densenet_pallas.16} parent=5 // pred_fallthru
      _
  $region6: #{densenet_pallas.16} parent=0 // loop_footer
    %s18 = sadd.s32 1, %s14
  $region7: #{densenet_pallas.16} parent=0 // loop_footer_branch
    %13 = sbr.rel target = $region3
  $region8: #{densenet_pallas.16} parent=0 // loop_exit
    _

// kernel: densenet_pallas.17
$region0: #{densenet_pallas.17}
  #allocation0 [shape = 'u32[]', space=smem, size = 0x4, offset = 0x4, fixed_abs, tag = 'smem constant byte address 0x4 - core index']
  #allocation1 [shape = 'u32[72,128]{1,0:T(1,128)}', space=vmem, size = 0x9000, scoped, tag = 'internal scratch']
  %s0 = inlined_call_operand.vmem [shape: f32[2,25,64], index: 0, kind: input, shape index: {}]
  %s1 = inlined_call_operand.vmem [shape: f32[2,25,32], index: 1, kind: input, shape index: {}]
  %s2 = inlined_call_operand.vmem [shape: f32[2,25,32], index: 2, kind: input, shape index: {}]
  %s3 = inlined_call_operand.vmem [shape: f32[128,64], index: 3, kind: input, shape index: {}]
  %s4 = inlined_call_operand.vmem [shape: f32[1,128], index: 4, kind: input, shape index: {}]
  %s5 = inlined_call_operand.vmem [shape: f32[1,128], index: 5, kind: input, shape index: {}]
  %s6 = inlined_call_operand.vmem [shape: f32[1,64], index: 6, kind: input, shape index: {}]
  %s7 = inlined_call_operand.vmem [shape: f32[1,64], index: 7, kind: input, shape index: {}]
  %s8 = inlined_call_operand.vmem [shape: f32[2,25,64], index: 8, kind: output, shape index: {}]
  %s9 = sld [smem:[#allocation0]]
  $region65: #{densenet_pallas.17} parent=0
    _
  %s11 = ssub.s32 1, %s9
  %s12 = scalar_select 0, %s11, %s9
  loop: start=0, step=1, limit=4
  $region2: #{densenet_pallas.17} parent=0 // loop_pre_header
    _
  $region3: #{densenet_pallas.17} parent=0 // loop_header
    %s14 = sphi 0, %s18
    %p15 = scmp.ge.s32.totalorder %s14, 4
    %s24 = sphi 0, %s26
    %s27 = sphi 0, %s24
    %s28 = sphi 0, %s27
    %s44 = sphi 0, %s28
    %s50 = sphi 0, %s52
    %s53 = sphi 0, %s50
    %s54 = sphi 0, %s53
    %s70 = sphi 0, %s54
    %s76 = sphi 0, %s78
    %s79 = sphi 0, %s76
    %s80 = sphi 0, %s79
    %s96 = sphi 0, %s80
    %s100 = sphi 0, %s100
    %s102 = sphi 0, %s100
    %s103 = sphi 0, %s102
    %s117 = sphi 0, %s103
    %s121 = sphi 0, %s121
    %s123 = sphi 0, %s121
    %s124 = sphi 0, %s123
    %s138 = sphi 0, %s124
    %s142 = sphi 0, %s142
    %s144 = sphi 0, %s142
    %s145 = sphi 0, %s144
    %s159 = sphi 0, %s145
    %s163 = sphi 0, %s163
    %s165 = sphi 0, %s163
    %s166 = sphi 0, %s165
    %s180 = sphi 0, %s166
    %s184 = sphi 0, %s184
    %s186 = sphi 0, %s184
    %s187 = sphi 0, %s186
    %s201 = sphi 0, %s187
    %s207 = sphi 0, %s209
    %s210 = sphi 0, %s207
    %s211 = sphi 0, %s210
    %s227 = sphi 0, %s211
  $region4: #{densenet_pallas.17} parent=0 // loop_header_branch
    %17 = sbr.rel (%p15) target = $region8
  $region5: #{densenet_pallas.17} parent=0 // loop_body
    %s19 = ssub.s32 %s14, 1
    %s20 = ssub.s32 %s14, 2
    %s21 = sadd.s32 %s14, 1
    %s22 = ssub.s32 %s14, %s21
    %p23 = scmp.eq.s32.totalorder %s22, 0
    %s25 = sadd.s32 %s24, 1
    %s26 = scalar_select %p23, %s24, %s25
    %p29 = pneg %p23
    %p30 = scmp.eq.s32.totalorder %s14, 1
    %p31 = por %p29, %p30
    %p32 = scmp.ne.s32.totalorder %s24, %s27
    %p33 = scmp.eq.s32.totalorder %s14, 0
    %p34 = por %p32, %p33
    %p35 = scmp.ne.s32.totalorder %s24, %s27
    %p36 = scmp.eq.s32.totalorder %s19, 1
    %p37 = por %p35, %p36
    %p38 = scmp.ne.s32.totalorder %s27, %s28
    %p39 = scmp.eq.s32.totalorder %s19, 0
    %p40 = por %p38, %p39
    %p41 = scmp.ne.s32.totalorder %s27, %s28
    %p42 = scmp.eq.s32.totalorder %s20, 1
    %p43 = por %p41, %p42
    %p45 = scmp.ne.s32.totalorder %s28, %s44
    %p46 = scmp.eq.s32.totalorder %s20, 0
    %p47 = por %p45, %p46
    %s48 = ssub.s32 %s14, %s21
    %p49 = scmp.eq.s32.totalorder %s48, 0
    %s51 = sadd.s32 %s50, 1
    %s52 = scalar_select %p49, %s50, %s51
    %p55 = pneg %p49
    %p56 = scmp.eq.s32.totalorder %s14, 1
    %p57 = por %p55, %p56
    %p58 = scmp.ne.s32.totalorder %s50, %s53
    %p59 = scmp.eq.s32.totalorder %s14, 0
    %p60 = por %p58, %p59
    %p61 = scmp.ne.s32.totalorder %s50, %s53
    %p62 = scmp.eq.s32.totalorder %s19, 1
    %p63 = por %p61, %p62
    %p64 = scmp.ne.s32.totalorder %s53, %s54
    %p65 = scmp.eq.s32.totalorder %s19, 0
    %p66 = por %p64, %p65
    %p67 = scmp.ne.s32.totalorder %s53, %s54
    %p68 = scmp.eq.s32.totalorder %s20, 1
    %p69 = por %p67, %p68
    %p71 = scmp.ne.s32.totalorder %s54, %s70
    %p72 = scmp.eq.s32.totalorder %s20, 0
    %p73 = por %p71, %p72
    %s74 = ssub.s32 %s14, %s21
    %p75 = scmp.eq.s32.totalorder %s74, 0
    %s77 = sadd.s32 %s76, 1
    %s78 = scalar_select %p75, %s76, %s77
    %p81 = pneg %p75
    %p82 = scmp.eq.s32.totalorder %s14, 1
    %p83 = por %p81, %p82
    %p84 = scmp.ne.s32.totalorder %s76, %s79
    %p85 = scmp.eq.s32.totalorder %s14, 0
    %p86 = por %p84, %p85
    %p87 = scmp.ne.s32.totalorder %s76, %s79
    %p88 = scmp.eq.s32.totalorder %s19, 1
    %p89 = por %p87, %p88
    %p90 = scmp.ne.s32.totalorder %s79, %s80
    %p91 = scmp.eq.s32.totalorder %s19, 0
    %p92 = por %p90, %p91
    %p93 = scmp.ne.s32.totalorder %s79, %s80
    %p94 = scmp.eq.s32.totalorder %s20, 1
    %p95 = por %p93, %p94
    %p97 = scmp.ne.s32.totalorder %s80, %s96
    %p98 = scmp.eq.s32.totalorder %s20, 0
    %p99 = por %p97, %p98
    %s101 = sadd.s32 %s100, 1
    %p104 = scmp.eq.s32.totalorder %s14, 1
    %p105 = scmp.ne.s32.totalorder %s100, %s102
    %p106 = scmp.eq.s32.totalorder %s14, 0
    %p107 = por %p105, %p106
    %p108 = scmp.ne.s32.totalorder %s100, %s102
    %p109 = scmp.eq.s32.totalorder %s19, 1
    %p110 = por %p108, %p109
    %p111 = scmp.ne.s32.totalorder %s102, %s103
    %p112 = scmp.eq.s32.totalorder %s19, 0
    %p113 = por %p111, %p112
    %p114 = scmp.ne.s32.totalorder %s102, %s103
    %p115 = scmp.eq.s32.totalorder %s20, 1
    %p116 = por %p114, %p115
    %p118 = scmp.ne.s32.totalorder %s103, %s117
    %p119 = scmp.eq.s32.totalorder %s20, 0
    %p120 = por %p118, %p119
    %s122 = sadd.s32 %s121, 1
    %p125 = scmp.eq.s32.totalorder %s14, 1
    %p126 = scmp.ne.s32.totalorder %s121, %s123
    %p127 = scmp.eq.s32.totalorder %s14, 0
    %p128 = por %p126, %p127
    %p129 = scmp.ne.s32.totalorder %s121, %s123
    %p130 = scmp.eq.s32.totalorder %s19, 1
    %p131 = por %p129, %p130
    %p132 = scmp.ne.s32.totalorder %s123, %s124
    %p133 = scmp.eq.s32.totalorder %s19, 0
    %p134 = por %p132, %p133
    %p135 = scmp.ne.s32.totalorder %s123, %s124
    %p136 = scmp.eq.s32.totalorder %s20, 1
    %p137 = por %p135, %p136
    %p139 = scmp.ne.s32.totalorder %s124, %s138
    %p140 = scmp.eq.s32.totalorder %s20, 0
    %p141 = por %p139, %p140
    %s143 = sadd.s32 %s142, 1
    %p146 = scmp.eq.s32.totalorder %s14, 1
    %p147 = scmp.ne.s32.totalorder %s142, %s144
    %p148 = scmp.eq.s32.totalorder %s14, 0
    %p149 = por %p147, %p148
    %p150 = scmp.ne.s32.totalorder %s142, %s144
    %p151 = scmp.eq.s32.totalorder %s19, 1
    %p152 = por %p150, %p151
    %p153 = scmp.ne.s32.totalorder %s144, %s145
    %p154 = scmp.eq.s32.totalorder %s19, 0
    %p155 = por %p153, %p154
    %p156 = scmp.ne.s32.totalorder %s144, %s145
    %p157 = scmp.eq.s32.totalorder %s20, 1
    %p158 = por %p156, %p157
    %p160 = scmp.ne.s32.totalorder %s145, %s159
    %p161 = scmp.eq.s32.totalorder %s20, 0
    %p162 = por %p160, %p161
    %s164 = sadd.s32 %s163, 1
    %p167 = scmp.eq.s32.totalorder %s14, 1
    %p168 = scmp.ne.s32.totalorder %s163, %s165
    %p169 = scmp.eq.s32.totalorder %s14, 0
    %p170 = por %p168, %p169
    %p171 = scmp.ne.s32.totalorder %s163, %s165
    %p172 = scmp.eq.s32.totalorder %s19, 1
    %p173 = por %p171, %p172
    %p174 = scmp.ne.s32.totalorder %s165, %s166
    %p175 = scmp.eq.s32.totalorder %s19, 0
    %p176 = por %p174, %p175
    %p177 = scmp.ne.s32.totalorder %s165, %s166
    %p178 = scmp.eq.s32.totalorder %s20, 1
    %p179 = por %p177, %p178
    %p181 = scmp.ne.s32.totalorder %s166, %s180
    %p182 = scmp.eq.s32.totalorder %s20, 0
    %p183 = por %p181, %p182
    %s185 = sadd.s32 %s184, 1
    %p188 = scmp.eq.s32.totalorder %s14, 1
    %p189 = scmp.ne.s32.totalorder %s184, %s186
    %p190 = scmp.eq.s32.totalorder %s14, 0
    %p191 = por %p189, %p190
    %p192 = scmp.ne.s32.totalorder %s184, %s186
    %p193 = scmp.eq.s32.totalorder %s19, 1
    %p194 = por %p192, %p193
    %p195 = scmp.ne.s32.totalorder %s186, %s187
    %p196 = scmp.eq.s32.totalorder %s19, 0
    %p197 = por %p195, %p196
    %p198 = scmp.ne.s32.totalorder %s186, %s187
    %p199 = scmp.eq.s32.totalorder %s20, 1
    %p200 = por %p198, %p199
    %p202 = scmp.ne.s32.totalorder %s187, %s201
    %p203 = scmp.eq.s32.totalorder %s20, 0
    %p204 = por %p202, %p203
    %s205 = ssub.s32 %s14, %s21
    %p206 = scmp.eq.s32.totalorder %s205, 0
    %s208 = sadd.s32 %s207, 1
    %s209 = scalar_select %p206, %s207, %s208
    %p212 = pneg %p206
    %p213 = scmp.eq.s32.totalorder %s14, 1
    %p214 = por %p212, %p213
    %p215 = scmp.ne.s32.totalorder %s207, %s210
    %p216 = scmp.eq.s32.totalorder %s14, 0
    %p217 = por %p215, %p216
    %p218 = scmp.ne.s32.totalorder %s207, %s210
    %p219 = scmp.eq.s32.totalorder %s19, 1
    %p220 = por %p218, %p219
    %p221 = scmp.ne.s32.totalorder %s210, %s211
    %p222 = scmp.eq.s32.totalorder %s19, 0
    %p223 = por %p221, %p222
    %p224 = scmp.ne.s32.totalorder %s210, %s211
    %p225 = scmp.eq.s32.totalorder %s20, 1
    %p226 = por %p224, %p225
    %p228 = scmp.ne.s32.totalorder %s211, %s227
    %p229 = scmp.eq.s32.totalorder %s20, 0
    %p230 = por %p228, %p229
    %p231 = scmp.le.s32.totalorder 1, %s14
    %p232 = scmp.lt.s32.totalorder %s14, 3
    %p233 = pnand %p231, %p232
    %p234 = pneg %p233
    // Predicated region
    $region9: #{densenet_pallas.17} parent=5 // pred_check
      _
    $region10: #{densenet_pallas.17} parent=5 // pred_check_branch
      %236 = sbr.rel (%p233) target = $region12
    $region11: #{densenet_pallas.17} parent=5 // pred_region
      %s237 = ssub.s32 %s14, 1
      // Predicated region
      $region13: #{densenet_pallas.17} parent=11 // pred_check
        %p238 = pneg %p113
      $region14: #{densenet_pallas.17} parent=11 // pred_check_branch
        %240 = sbr.rel (%p238) target = $region16
      $region15: #{densenet_pallas.17} parent=11 // pred_region
        _
      $region16: #{densenet_pallas.17} parent=11 // pred_fallthru
        _
      // Predicated region
      $region17: #{densenet_pallas.17} parent=11 // pred_check
        %p241 = pneg %p134
      $region18: #{densenet_pallas.17} parent=11 // pred_check_branch
        %243 = sbr.rel (%p241) target = $region20
      $region19: #{densenet_pallas.17} parent=11 // pred_region
        _
      $region20: #{densenet_pallas.17} parent=11 // pred_fallthru
        _
      // Predicated region
      $region21: #{densenet_pallas.17} parent=11 // pred_check
        %p244 = pneg %p155
      $region22: #{densenet_pallas.17} parent=11 // pred_check_branch
        %246 = sbr.rel (%p244) target = $region24
      $region23: #{densenet_pallas.17} parent=11 // pred_region
        _
      $region24: #{densenet_pallas.17} parent=11 // pred_fallthru
        _
      // Predicated region
      $region25: #{densenet_pallas.17} parent=11 // pred_check
        %p247 = pneg %p176
      $region26: #{densenet_pallas.17} parent=11 // pred_check_branch
        %249 = sbr.rel (%p247) target = $region28
      $region27: #{densenet_pallas.17} parent=11 // pred_region
        _
      $region28: #{densenet_pallas.17} parent=11 // pred_fallthru
        _
      // Predicated region
      $region29: #{densenet_pallas.17} parent=11 // pred_check
        %p250 = pneg %p197
      $region30: #{densenet_pallas.17} parent=11 // pred_check_branch
        %252 = sbr.rel (%p250) target = $region32
      $region31: #{densenet_pallas.17} parent=11 // pred_region
        _
      $region32: #{densenet_pallas.17} parent=11 // pred_fallthru
        _
    $region12: #{densenet_pallas.17} parent=5 // pred_fallthru
      _
    %p253 = scmp.lt.s32.totalorder %s14, 2
    // Predicated region
    $region33: #{densenet_pallas.17} parent=5 // pred_check
      %p254 = pneg %p253
    $region34: #{densenet_pallas.17} parent=5 // pred_check_branch
      %256 = sbr.rel (%p254) target = $region36
    $region35: #{densenet_pallas.17} parent=5 // pred_region
      // Predicated region
      $region37: #{densenet_pallas.17} parent=35 // pred_check
        %p257 = pneg %p34
      $region38: #{densenet_pallas.17} parent=35 // pred_check_branch
        %259 = sbr.rel (%p257) target = $region40
      $region39: #{densenet_pallas.17} parent=35 // pred_region
        %p260 = scmp.lt.s32.totalorder %s14, 1
        %s261 = scalar_select %p260, %s14, 1
        %s262 = smul.addr %s261, 4
        %s263 = smul.addr %s262, 8
        %s264 = scalar_lea.vmem %s0, %s263
      $region40: #{densenet_pallas.17} parent=35 // pred_fallthru
        _
      // Predicated region
      $region41: #{densenet_pallas.17} parent=35 // pred_check
        %p265 = pneg %p60
      $region42: #{densenet_pallas.17} parent=35 // pred_check_branch
        %267 = sbr.rel (%p265) target = $region44
      $region43: #{densenet_pallas.17} parent=35 // pred_region
        %p268 = scmp.lt.s32.totalorder %s14, 1
        %s269 = scalar_select %p268, %s14, 1
        %s270 = smul.addr %s269, 4
        %s271 = smul.addr %s270, 8
        %s272 = scalar_lea.vmem %s1, %s271
      $region44: #{densenet_pallas.17} parent=35 // pred_fallthru
        _
      // Predicated region
      $region45: #{densenet_pallas.17} parent=35 // pred_check
        %p273 = pneg %p86
      $region46: #{densenet_pallas.17} parent=35 // pred_check_branch
        %275 = sbr.rel (%p273) target = $region48
      $region47: #{densenet_pallas.17} parent=35 // pred_region
        %p276 = scmp.lt.s32.totalorder %s14, 1
        %s277 = scalar_select %p276, %s14, 1
        %s278 = smul.addr %s277, 4
        %s279 = smul.addr %s278, 8
        %s280 = scalar_lea.vmem %s2, %s279
      $region48: #{densenet_pallas.17} parent=35 // pred_fallthru
        _
    $region36: #{densenet_pallas.17} parent=5 // pred_fallthru
      _
    %p281 = scmp.le.s32.totalorder 1, %s14
    %p282 = scmp.lt.s32.totalorder %s14, 3
    %p283 = pnand %p281, %p282
    %p284 = pneg %p283
    // Predicated region
    $region49: #{densenet_pallas.17} parent=5 // pred_check
      _
    $region50: #{densenet_pallas.17} parent=5 // pred_check_branch
      %286 = sbr.rel (%p283) target = $region52
    $region51: #{densenet_pallas.17} parent=5 // pred_region
      %s287 = ssub.s32 %s14, 1
      %p288 = scmp.lt.s32.totalorder %s19, 1
      %s289 = scalar_select %p288, %s19, 1
      %s290 = smul.addr %s289, 4
      %s291 = smul.addr %s290, 8
      %s292 = scalar_lea.vmem %s0, %s291
      %p293 = pneg %p40
      %p294 = pneg %p37
      %p295 = scmp.lt.s32.totalorder %s19, 1
      %s296 = scalar_select %p295, %s19, 1
      %s297 = smul.addr %s296, 4
      %s298 = smul.addr %s297, 8
      %s299 = scalar_lea.vmem %s1, %s298
      %p300 = pneg %p66
      %p301 = pneg %p63
      %p302 = scmp.lt.s32.totalorder %s19, 1
      %s303 = scalar_select %p302, %s19, 1
      %s304 = smul.addr %s303, 4
      %s305 = smul.addr %s304, 8
      %s306 = scalar_lea.vmem %s2, %s305
      %p307 = pneg %p92
      %p308 = pneg %p89
      %p309 = pneg %p113
      %p310 = pneg %p110
      %p311 = pneg %p134
      %p312 = pneg %p131
      %p313 = pneg %p155
      %p314 = pneg %p152
      %p315 = pneg %p176
      %p316 = pneg %p173
      %p317 = pneg %p197
      %p318 = pneg %p194
      %p319 = pneg %p223
      %p320 = pneg %p220
      %p321 = scmp.lt.s32.totalorder %s19, 1
      %s322 = scalar_select %p321, %s19, 1
      %s323 = smul.addr %s322, 4
      %s324 = smul.addr %s323, 8
      %s325 = scalar_lea.vmem %s8, %s324
      %p326 = scmp.lt.s32.totalorder %s19, 1
      %s327 = scalar_select %p326, %s19, 1
      %s328 = smul.addr %s327, 4
      %s329 = smul.addr %s328, 8
      %s330 = scalar_lea.vmem %s0, %s329
      %p331 = scmp.lt.s32.totalorder %s19, 1
      %s332 = scalar_select %p331, %s19, 1
      %s333 = smul.addr %s332, 4
      %s334 = smul.addr %s333, 8
      %s335 = scalar_lea.vmem %s1, %s334
      %p336 = scmp.lt.s32.totalorder %s19, 1
      %s337 = scalar_select %p336, %s19, 1
      %s338 = smul.addr %s337, 4
      %s339 = smul.addr %s338, 8
      %s340 = scalar_lea.vmem %s2, %s339
      %p341 = scmp.lt.s32.totalorder %s19, 1
      %s342 = scalar_select %p341, %s19, 1
      %s343 = smul.addr %s342, 4
      %s344 = smul.addr %s343, 8
      %s345 = scalar_lea.vmem %s8, %s344
      %v346 = vld [vmem:[%s330] sm:$0xff]
      %v347 = vld [vmem:[%s330 + $0x8] sm:$0xff]
      %v348 = vld [vmem:[%s330 + $0x10] sm:$0xff]
      %v349 = vld [vmem:[%s330 + $0x18] sm:$0x1]
      %v350 = vld [vmem:[%s4] sm:$0x1]
      %v352 = vperm.slane %v350, 0
      %v354 = vmul.f32 %v346, %v352
      %v355 = vmul.f32 %v347, %v352
      %v356 = vmul.f32 %v348, %v352
      %v357 = vmul.f32 %v349, %v352
      %v358 = vld [vmem:[%s5] sm:$0x1]
      %v360 = vperm.slane %v358, 0
      %v362 = vadd.f32 %v354, %v360
      %v363 = vadd.f32 %v355, %v360
      %v364 = vadd.f32 %v356, %v360
      %v365 = vadd.f32 %v357, %v360
      %v366 = vmax.f32 %v362, 0.0
      %v367 = vmax.f32 %v363, 0.0
      %v368 = vmax.f32 %v364, 0.0
      %v369 = vmax.f32 %v365, 0.0
      %v370 = vld [vmem:[%s3] sm:$0xff]
      %v371 = vld [vmem:[%s3 + $0x8] sm:$0xff]
      %v372 = vld [vmem:[%s3 + $0x10] sm:$0xff]
      %v373 = vld [vmem:[%s3 + $0x18] sm:$0xff]
      %v374 = vld [vmem:[%s3 + $0x20] sm:$0xff]
      %v375 = vld [vmem:[%s3 + $0x28] sm:$0xff]
      %v376 = vld [vmem:[%s3 + $0x30] sm:$0xff]
      %v377 = vld [vmem:[%s3 + $0x38] sm:$0xff]
      %v378 = vld [vmem:[%s335] sm:$0xff]
      %v379 = vld [vmem:[%s335 + $0x8] sm:$0xff]
      %v380 = vld [vmem:[%s335 + $0x10] sm:$0xff]
      %v381 = vld [vmem:[%s335 + $0x18] sm:$0x1]
      %382 = vrot.lane.b32.xlu0 %v352, 64
      %v383 = vpop.permute.xlu0 %382
      %v385 = vmul.f32 %v378, %v383
      %v386 = vmul.f32 %v379, %v383
      %v387 = vmul.f32 %v380, %v383
      %v388 = vmul.f32 %v381, %v383
      %389 = vrot.lane.b32.xlu0 %v360, 64
      %v390 = vpop.permute.xlu0 %389
      %v392 = vadd.f32 %v385, %v390
      %v393 = vadd.f32 %v386, %v390
      %v394 = vadd.f32 %v387, %v390
      %v395 = vadd.f32 %v388, %v390
      %v396 = vmax.f32 %v392, 0.0
      %v397 = vmax.f32 %v393, 0.0
      %v398 = vmax.f32 %v394, 0.0
      %v399 = vmax.f32 %v395, 0.0
      %v400 = vld [vmem:[%s3 + $0x40] sm:$0xff]
      %v401 = vld [vmem:[%s3 + $0x48] sm:$0xff]
      %v402 = vld [vmem:[%s3 + $0x50] sm:$0xff]
      %v403 = vld [vmem:[%s3 + $0x58] sm:$0xff]
      %vm404 = vcmask 261120
      %v406 = vsel %vm404, %v396, 0
      %v409 = vsel %vm404, %v397, 0
      %v412 = vsel %vm404, %v398, 0
      %v415 = vsel %vm404, %v399, 0
      %417 = vmatpush.msra.mxu0 0.0
      %418 = vmatpush.msra.mxu0 0.0
      %419 = vmatpush.msra.mxu0 0.0
      %420 = vmatpush.msra.mxu0 0.0
      %421 = vmatpush.msra.mxu0 0.0
      %422 = vmatpush.msra.mxu0 0.0
      %423 = vmatpush.msra.mxu0 0.0
      %424 = vmatpush.msra.mxu0 0.0
      %425 = vmatpush.msra.mxu0 0.0
      %426 = vmatpush.msra.mxu0 0.0
      %427 = vmatpush.msra.mxu0 0.0
      %428 = vmatpush.msra.mxu0 0.0
      %429 = vmatpush.msra.mxu0 %v403
      %430 = vmatpush.msra.mxu0 %v402
      %431 = vmatpush.msra.mxu0 %v401
      %432 = vmatpush.msra.mxu0 %v400
      %433 = vmatmul.f32.gmra.mxu0 %v406
      %v434 = vpop.f32.mrf.mxu0
      %v435 = vadd.f32 0.0, %v434
      %436 = vmatmul.f32.gmra.mxu0 %v409
      %v437 = vpop.f32.mrf.mxu0
      %v438 = vadd.f32 0.0, %v437
      %439 = vmatmul.f32.gmra.mxu0 %v412
      %v440 = vpop.f32.mrf.mxu0
      %v441 = vadd.f32 0.0, %v440
      %442 = vmatmul.f32.gmra.mxu0 %v415
      %v443 = vpop.f32.mrf.mxu0
      %v444 = vadd.f32 0.0, %v443
      %445 = vdwg.mxu0
      %vm446 = vcmask 523264
      %v448 = vsel %vm446, %v366, 0
      %v451 = vsel %vm446, %v367, 0
      %v454 = vsel %vm446, %v368, 0
      %v457 = vsel %vm446, %v369, 0
      %459 = vmatpush.msra.mxu0 0.0
      %460 = vmatpush.msra.mxu0 0.0
      %461 = vmatpush.msra.mxu0 0.0
      %462 = vmatpush.msra.mxu0 0.0
      %463 = vmatpush.msra.mxu0 0.0
      %464 = vmatpush.msra.mxu0 0.0
      %465 = vmatpush.msra.mxu0 0.0
      %466 = vmatpush.msra.mxu0 0.0
      %467 = vmatpush.msra.mxu0 %v377
      %468 = vmatpush.msra.mxu0 %v376
      %469 = vmatpush.msra.mxu0 %v375
      %470 = vmatpush.msra.mxu0 %v374
      %471 = vmatpush.msra.mxu0 %v373
      %472 = vmatpush.msra.mxu0 %v372
      %473 = vmatpush.msra.mxu0 %v371
      %474 = vmatpush.msra.mxu0 %v370
      %475 = vmatmul.f32.gmra.mxu0 %v448
      %v476 = vpop.f32.mrf.mxu0
      %v477 = vadd.f32 %v435, %v476
      %478 = vmatmul.f32.gmra.mxu0 %v451
      %v479 = vpop.f32.mrf.mxu0
      %v480 = vadd.f32 %v438, %v479
      %481 = vmatmul.f32.gmra.mxu0 %v454
      %v482 = vpop.f32.mrf.mxu0
      %v483 = vadd.f32 %v441, %v482
      %484 = vmatmul.f32.gmra.mxu0 %v457
      %v485 = vpop.f32.mrf.mxu0
      %v486 = vadd.f32 %v444, %v485
      %487 = vdwg.mxu0
      %v488 = vld [vmem:[%s340] sm:$0xff]
      %v489 = vld [vmem:[%s340 + $0x8] sm:$0xff]
      %v490 = vld [vmem:[%s340 + $0x10] sm:$0xff]
      %v491 = vld [vmem:[%s340 + $0x18] sm:$0x1]
      %492 = vrot.lane.b32.xlu0 %v352, 32
      %v493 = vpop.permute.xlu0 %492
      %v495 = vmul.f32 %v488, %v493
      %v496 = vmul.f32 %v489, %v493
      %v497 = vmul.f32 %v490, %v493
      %v498 = vmul.f32 %v491, %v493
      %499 = vrot.lane.b32.xlu0 %v360, 32
      %v500 = vpop.permute.xlu0 %499
      %v502 = vadd.f32 %v495, %v500
      %v503 = vadd.f32 %v496, %v500
      %v504 = vadd.f32 %v497, %v500
      %v505 = vadd.f32 %v498, %v500
      %v506 = vmax.f32 %v502, 0.0
      %v507 = vmax.f32 %v503, 0.0
      %v508 = vmax.f32 %v504, 0.0
      %v509 = vmax.f32 %v505, 0.0
      %v510 = vld [vmem:[%s3 + $0x60] sm:$0xff]
      %v511 = vld [vmem:[%s3 + $0x68] sm:$0xff]
      %v512 = vld [vmem:[%s3 + $0x70] sm:$0xff]
      %v513 = vld [vmem:[%s3 + $0x78] sm:$0xff]
      %v515 = vsel %vm404, %v506, 0
      %v518 = vsel %vm404, %v507, 0
      %v521 = vsel %vm404, %v508, 0
      %v524 = vsel %vm404, %v509, 0
      %526 = vmatpush.msra.mxu0 0.0
      %527 = vmatpush.msra.mxu0 0.0
      %528 = vmatpush.msra.mxu0 0.0
      %529 = vmatpush.msra.mxu0 0.0
      %530 = vmatpush.msra.mxu0 0.0
      %531 = vmatpush.msra.mxu0 0.0
      %532 = vmatpush.msra.mxu0 0.0
      %533 = vmatpush.msra.mxu0 0.0
      %534 = vmatpush.msra.mxu0 0.0
      %535 = vmatpush.msra.mxu0 0.0
      %536 = vmatpush.msra.mxu0 0.0
      %537 = vmatpush.msra.mxu0 0.0
      %538 = vmatpush.msra.mxu0 %v513
      %539 = vmatpush.msra.mxu0 %v512
      %540 = vmatpush.msra.mxu0 %v511
      %541 = vmatpush.msra.mxu0 %v510
      %542 = vmatmul.f32.gmra.mxu0 %v515
      %v543 = vpop.f32.mrf.mxu0
      %v544 = vadd.f32 0.0, %v543
      %545 = vmatmul.f32.gmra.mxu0 %v518
      %v546 = vpop.f32.mrf.mxu0
      %v547 = vadd.f32 0.0, %v546
      %548 = vmatmul.f32.gmra.mxu0 %v521
      %v549 = vpop.f32.mrf.mxu0
      %v550 = vadd.f32 0.0, %v549
      %551 = vmatmul.f32.gmra.mxu0 %v524
      %v552 = vpop.f32.mrf.mxu0
      %v553 = vadd.f32 0.0, %v552
      %554 = vdwg.mxu0
      %v555 = vadd.f32 %v477, %v544
      %v556 = vadd.f32 %v480, %v547
      %v557 = vadd.f32 %v483, %v550
      %v558 = vadd.f32 %v486, %v553
      %v559 = vld [vmem:[%s6] sm:$0x1]
      %v561 = vperm.slane %v559, 0
      %v563 = vmul.f32 %v555, %v561
      %v564 = vmul.f32 %v556, %v561
      %v565 = vmul.f32 %v557, %v561
      %v566 = vmul.f32 %v558, %v561
      %v567 = vld [vmem:[%s7] sm:$0x1]
      %v569 = vperm.slane %v567, 0
      %v571 = vadd.f32 %v563, %v569
      %v572 = vadd.f32 %v564, %v569
      %v573 = vadd.f32 %v565, %v569
      %v574 = vadd.f32 %v566, %v569
      %575 = vst.msk [vmem:[%s345] sm:$0xff] %vm446, %v571
      %576 = vst.msk [vmem:[%s345 + $0x8] sm:$0xff] %vm446, %v572
      %577 = vst.msk [vmem:[%s345 + $0x10] sm:$0xff] %vm446, %v573
      %vm578 = vcmask 516096
      %579 = vst.msk [vmem:[%s345 + $0x18] sm:$0x1] %vm578, %v574
      %p580 = scmp.lt.s32.totalorder %s19, 1
      %s581 = scalar_select %p580, %s19, 1
      %s582 = smul.addr %s581, 4
      %s583 = smul.addr %s582, 8
      %s584 = scalar_lea.vmem %s8, %s583
      // Predicated region
      $region53: #{densenet_pallas.17} parent=51 // pred_check
        %p585 = pneg %p220
      $region54: #{densenet_pallas.17} parent=51 // pred_check_branch
        %587 = sbr.rel (%p585) target = $region56
      $region55: #{densenet_pallas.17} parent=51 // pred_region
        _
      $region56: #{densenet_pallas.17} parent=51 // pred_fallthru
        _
    $region52: #{densenet_pallas.17} parent=5 // pred_fallthru
      _
    %p588 = scmp.le.s32.totalorder 2, %s14
    // Predicated region
    $region57: #{densenet_pallas.17} parent=5 // pred_check
      %p589 = pneg %p588
    $region58: #{densenet_pallas.17} parent=5 // pred_check_branch
      %591 = sbr.rel (%p589) target = $region60
    $region59: #{densenet_pallas.17} parent=5 // pred_region
      %s592 = ssub.s32 %s14, 2
      // Predicated region
      $region61: #{densenet_pallas.17} parent=59 // pred_check
        %p593 = pneg %p226
      $region62: #{densenet_pallas.17} parent=59 // pred_check_branch
        %595 = sbr.rel (%p593) target = $region64
      $region63: #{densenet_pallas.17} parent=59 // pred_region
        %p596 = scmp.lt.s32.totalorder %s20, 1
        %s597 = scalar_select %p596, %s20, 1
        %s598 = smul.addr %s597, 4
        %s599 = smul.addr %s598, 8
        %s600 = scalar_lea.vmem %s8, %s599
      $region64: #{densenet_pallas.17} parent=59 // pred_fallthru
        _
    $region60: #{densenet_pallas.17} parent=5 // pred_fallthru
      _
  $region6: #{densenet_pallas.17} parent=0 // loop_footer
    %s18 = sadd.s32 1, %s14
  $region7: #{densenet_pallas.17} parent=0 // loop_footer_branch
    %13 = sbr.rel target = $region3
  $region8: #{densenet_pallas.17} parent=0 // loop_exit
    _

// kernel: densenet_pallas.18
$region0: #{densenet_pallas.18}
  #allocation0 [shape = 'u32[]', space=smem, size = 0x4, offset = 0x4, fixed_abs, tag = 'smem constant byte address 0x4 - core index']
  #allocation1 [shape = 'u32[72,128]{1,0:T(1,128)}', space=vmem, size = 0x9000, scoped, tag = 'internal scratch']
  #allocation2 [shape = 'f32[5,7,64]{2,1,0:T(8,128)}', space=vmem, size = 0x5000, scoped, tag = 'scratch operand']
  %s0 = inlined_call_operand.vmem [shape: f32[2,5,5,64], index: 0, kind: input, shape index: {}]
  %s1 = inlined_call_operand.vmem [shape: f32[2,4,6,64], index: 1, kind: output, shape index: {}]
  %s2 = sld [smem:[#allocation0]]
  $region37: #{densenet_pallas.18} parent=0
    _
  %s4 = ssub.s32 1, %s2
  %s5 = scalar_select 0, %s4, %s2
  loop: start=0, step=1, limit=4
  $region2: #{densenet_pallas.18} parent=0 // loop_pre_header
    _
  $region3: #{densenet_pallas.18} parent=0 // loop_header
    %s7 = sphi 0, %s11
    %p8 = scmp.ge.s32.totalorder %s7, 4
    %s17 = sphi 0, %s19
    %s20 = sphi 0, %s17
    %s21 = sphi 0, %s20
    %s37 = sphi 0, %s21
    %s43 = sphi 0, %s45
    %s46 = sphi 0, %s43
    %s47 = sphi 0, %s46
    %s63 = sphi 0, %s47
  $region4: #{densenet_pallas.18} parent=0 // loop_header_branch
    %10 = sbr.rel (%p8) target = $region8
  $region5: #{densenet_pallas.18} parent=0 // loop_body
    %s12 = ssub.s32 %s7, 1
    %s13 = ssub.s32 %s7, 2
    %s14 = sadd.s32 %s7, 1
    %s15 = ssub.s32 %s7, %s14
    %p16 = scmp.eq.s32.totalorder %s15, 0
    %s18 = sadd.s32 %s17, 1
    %s19 = scalar_select %p16, %s17, %s18
    %p22 = pneg %p16
    %p23 = scmp.eq.s32.totalorder %s7, 1
    %p24 = por %p22, %p23
    %p25 = scmp.ne.s32.totalorder %s17, %s20
    %p26 = scmp.eq.s32.totalorder %s7, 0
    %p27 = por %p25, %p26
    %p28 = scmp.ne.s32.totalorder %s17, %s20
    %p29 = scmp.eq.s32.totalorder %s12, 1
    %p30 = por %p28, %p29
    %p31 = scmp.ne.s32.totalorder %s20, %s21
    %p32 = scmp.eq.s32.totalorder %s12, 0
    %p33 = por %p31, %p32
    %p34 = scmp.ne.s32.totalorder %s20, %s21
    %p35 = scmp.eq.s32.totalorder %s13, 1
    %p36 = por %p34, %p35
    %p38 = scmp.ne.s32.totalorder %s21, %s37
    %p39 = scmp.eq.s32.totalorder %s13, 0
    %p40 = por %p38, %p39
    %s41 = ssub.s32 %s7, %s14
    %p42 = scmp.eq.s32.totalorder %s41, 0
    %s44 = sadd.s32 %s43, 1
    %s45 = scalar_select %p42, %s43, %s44
    %p48 = pneg %p42
    %p49 = scmp.eq.s32.totalorder %s7, 1
    %p50 = por %p48, %p49
    %p51 = scmp.ne.s32.totalorder %s43, %s46
    %p52 = scmp.eq.s32.totalorder %s7, 0
    %p53 = por %p51, %p52
    %p54 = scmp.ne.s32.totalorder %s43, %s46
    %p55 = scmp.eq.s32.totalorder %s12, 1
    %p56 = por %p54, %p55
    %p57 = scmp.ne.s32.totalorder %s46, %s47
    %p58 = scmp.eq.s32.totalorder %s12, 0
    %p59 = por %p57, %p58
    %p60 = scmp.ne.s32.totalorder %s46, %s47
    %p61 = scmp.eq.s32.totalorder %s13, 1
    %p62 = por %p60, %p61
    %p64 = scmp.ne.s32.totalorder %s47, %s63
    %p65 = scmp.eq.s32.totalorder %s13, 0
    %p66 = por %p64, %p65
    %p67 = scmp.le.s32.totalorder 1, %s7
    %p68 = scmp.lt.s32.totalorder %s7, 3
    %p69 = pnand %p67, %p68
    %p70 = pneg %p69
    // Predicated region
    $region9: #{densenet_pallas.18} parent=5 // pred_check
      _
    $region10: #{densenet_pallas.18} parent=5 // pred_check_branch
      %72 = sbr.rel (%p69) target = $region12
    $region11: #{densenet_pallas.18} parent=5 // pred_region
      %s73 = ssub.s32 %s7, 1
    $region12: #{densenet_pallas.18} parent=5 // pred_fallthru
      _
    %p74 = scmp.lt.s32.totalorder %s7, 2
    // Predicated region
    $region13: #{densenet_pallas.18} parent=5 // pred_check
      %p75 = pneg %p74
    $region14: #{densenet_pallas.18} parent=5 // pred_check_branch
      %77 = sbr.rel (%p75) target = $region16
    $region15: #{densenet_pallas.18} parent=5 // pred_region
      // Predicated region
      $region17: #{densenet_pallas.18} parent=15 // pred_check
        %p78 = pneg %p27
      $region18: #{densenet_pallas.18} parent=15 // pred_check_branch
        %80 = sbr.rel (%p78) target = $region20
      $region19: #{densenet_pallas.18} parent=15 // pred_region
        %p81 = scmp.lt.s32.totalorder %s7, 1
        %s82 = scalar_select %p81, %s7, 1
        %s83 = smul.addr %s82, 5
        %s84 = smul.addr %s83, 8
        %s85 = scalar_lea.vmem %s0, %s84
      $region20: #{densenet_pallas.18} parent=15 // pred_fallthru
        _
    $region16: #{densenet_pallas.18} parent=5 // pred_fallthru
      _
    %p86 = scmp.le.s32.totalorder 1, %s7
    %p87 = scmp.lt.s32.totalorder %s7, 3
    %p88 = pnand %p86, %p87
    %p89 = pneg %p88
    // Predicated region
    $region21: #{densenet_pallas.18} parent=5 // pred_check
      _
    $region22: #{densenet_pallas.18} parent=5 // pred_check_branch
      %91 = sbr.rel (%p88) target = $region24
    $region23: #{densenet_pallas.18} parent=5 // pred_region
      %s92 = ssub.s32 %s7, 1
      %p93 = scmp.lt.s32.totalorder %s12, 1
      %s94 = scalar_select %p93, %s12, 1
      %s95 = smul.addr %s94, 5
      %s96 = smul.addr %s95, 8
      %s97 = scalar_lea.vmem %s0, %s96
      %p98 = pneg %p33
      %p99 = pneg %p30
      %p100 = pneg %p59
      %p101 = pneg %p56
      %p102 = scmp.lt.s32.totalorder %s12, 1
      %s103 = scalar_select %p102, %s12, 1
      %s104 = smul.addr %s103, 4
      %s105 = smul.addr %s104, 8
      %s106 = scalar_lea.vmem %s1, %s105
      %p107 = scmp.lt.s32.totalorder %s12, 1
      %s108 = scalar_select %p107, %s12, 1
      %s109 = smul.addr %s108, 5
      %s110 = smul.addr %s109, 8
      %s111 = scalar_lea.vmem %s0, %s110
      %p112 = scmp.lt.s32.totalorder %s12, 1
      %s113 = scalar_select %p112, %s12, 1
      %s114 = smul.addr %s113, 4
      %s115 = smul.addr %s114, 8
      %s116 = scalar_lea.vmem %s1, %s115
      %vm117 = vcmask 516096
      %118 = vst.msk [vmem:[#allocation2] sm:$0x1] %vm117, -inf
      %119 = vst.msk [vmem:[#allocation2 + $0x8] sm:$0x1] %vm117, -inf
      %120 = vst.msk [vmem:[#allocation2 + $0x10] sm:$0x1] %vm117, -inf
      %121 = vst.msk [vmem:[#allocation2 + $0x18] sm:$0x1] %vm117, -inf
      %122 = vst.msk [vmem:[#allocation2 + $0x20] sm:$0x1] %vm117, -inf
      %123 = vst.msk [vmem:[#allocation2 + $0x6] sm:$0x1] %vm117, -inf
      %124 = vst.msk [vmem:[#allocation2 + $0xe] sm:$0x1] %vm117, -inf
      %125 = vst.msk [vmem:[#allocation2 + $0x16] sm:$0x1] %vm117, -inf
      %126 = vst.msk [vmem:[#allocation2 + $0x1e] sm:$0x1] %vm117, -inf
      %127 = vst.msk [vmem:[#allocation2 + $0x26] sm:$0x1] %vm117, -inf
      %v128 = vld [vmem:[%s111] sm:$0x1f]
      %v129 = vld [vmem:[%s111 + $0x8] sm:$0x1f]
      %v130 = vld [vmem:[%s111 + $0x10] sm:$0x1f]
      %v131 = vld [vmem:[%s111 + $0x18] sm:$0x1f]
      %v132 = vld [vmem:[%s111 + $0x20] sm:$0x1f]
      %vm133 = vcmask 520192
      %134 = vst.msk [vmem:[#allocation2 + $0x1] sm:$0x1f] %vm133, %v128
      %135 = vst.msk [vmem:[#allocation2 + $0x9] sm:$0x1f] %vm133, %v129
      %136 = vst.msk [vmem:[#allocation2 + $0x11] sm:$0x1f] %vm133, %v130
      %137 = vst.msk [vmem:[#allocation2 + $0x19] sm:$0x1f] %vm133, %v131
      %138 = vst.msk [vmem:[#allocation2 + $0x21] sm:$0x1f] %vm133, %v132
      %v139 = vld [vmem:[#allocation2] sm:$0x7f]
      %v140 = vld [vmem:[#allocation2 + $0x8] sm:$0x7f]
      %v141 = vld [vmem:[#allocation2 + $0x10] sm:$0x7f]
      %v142 = vld [vmem:[#allocation2 + $0x18] sm:$0x7f]
      %v143 = vld [vmem:[#allocation2 + $0x20] sm:$0x7f]
      %v148 = vrot.slane %v139, 1
      %v149 = vrot.slane %v140, 1
      %v150 = vrot.slane %v141, 1
      %v151 = vrot.slane %v142, 1
      %v156 = vmax.f32 %v139, %v148
      %v157 = vmax.f32 %v140, %v149
      %v158 = vmax.f32 %v141, %v150
      %v159 = vmax.f32 %v142, %v151
      %v161 = vrot.slane %v143, 1
      %v163 = vmax.f32 %v143, %v161
      %v164 = vmax.f32 %v156, %v157
      %v165 = vmax.f32 %v157, %v158
      %v166 = vmax.f32 %v158, %v159
      %v167 = vmax.f32 %v159, %v163
      %vm168 = vcmask 521216
      %169 = vst.msk [vmem:[%s116] sm:$0x3f] %vm168, %v164
      %170 = vst.msk [vmem:[%s116 + $0x8] sm:$0x3f] %vm168, %v165
      %171 = vst.msk [vmem:[%s116 + $0x10] sm:$0x3f] %vm168, %v166
      %172 = vst.msk [vmem:[%s116 + $0x18] sm:$0x3f] %vm168, %v167
      %p173 = scmp.lt.s32.totalorder %s12, 1
      %s174 = scalar_select %p173, %s12, 1
      %s175 = smul.addr %s174, 4
      %s176 = smul.addr %s175, 8
      %s177 = scalar_lea.vmem %s1, %s176
      // Predicated region
      $region25: #{densenet_pallas.18} parent=23 // pred_check
        %p178 = pneg %p56
      $region26: #{densenet_pallas.18} parent=23 // pred_check_branch
        %180 = sbr.rel (%p178) target = $region28
      $region27: #{densenet_pallas.18} parent=23 // pred_region
        _
      $region28: #{densenet_pallas.18} parent=23 // pred_fallthru
        _
    $region24: #{densenet_pallas.18} parent=5 // pred_fallthru
      _
    %p181 = scmp.le.s32.totalorder 2, %s7
    // Predicated region
    $region29: #{densenet_pallas.18} parent=5 // pred_check
      %p182 = pneg %p181
    $region30: #{densenet_pallas.18} parent=5 // pred_check_branch
      %184 = sbr.rel (%p182) target = $region32
    $region31: #{densenet_pallas.18} parent=5 // pred_region
      %s185 = ssub.s32 %s7, 2
      // Predicated region
      $region33: #{densenet_pallas.18} parent=31 // pred_check
        %p186 = pneg %p62
      $region34: #{densenet_pallas.18} parent=31 // pred_check_branch
        %188 = sbr.rel (%p186) target = $region36
      $region35: #{densenet_pallas.18} parent=31 // pred_region
        %p189 = scmp.lt.s32.totalorder %s13, 1
        %s190 = scalar_select %p189, %s13, 1
        %s191 = smul.addr %s190, 4
        %s192 = smul.addr %s191, 8
        %s193 = scalar_lea.vmem %s1, %s192
      $region36: #{densenet_pallas.18} parent=31 // pred_fallthru
        _
    $region32: #{densenet_pallas.18} parent=5 // pred_fallthru
      _
  $region6: #{densenet_pallas.18} parent=0 // loop_footer
    %s11 = sadd.s32 1, %s7
  $region7: #{densenet_pallas.18} parent=0 // loop_footer_branch
    %6 = sbr.rel target = $region3
  $region8: #{densenet_pallas.18} parent=0 // loop_exit
    _

// kernel: densenet_pallas.19
$region0: #{densenet_pallas.19}
  #allocation0 [shape = 'u32[]', space=smem, size = 0x4, offset = 0x4, fixed_abs, tag = 'smem constant byte address 0x4 - core index']
  #allocation1 [shape = 'u32[72,128]{1,0:T(1,128)}', space=vmem, size = 0x9000, scoped, tag = 'internal scratch']
  #allocation2 [shape = 'f32[32,128]{1,0:T(8,128)}', space=vmem, size = 0x4000, scoped, tag = 'scratch operand']
  %s0 = inlined_call_operand.vmem [shape: f32[2,12,64], index: 0, kind: input, shape index: {}]
  %s1 = inlined_call_operand.vmem [shape: f32[64,128], index: 1, kind: input, shape index: {}]
  %s2 = inlined_call_operand.vmem [shape: f32[1,64], index: 2, kind: input, shape index: {}]
  %s3 = inlined_call_operand.vmem [shape: f32[1,64], index: 3, kind: input, shape index: {}]
  %s4 = inlined_call_operand.vmem [shape: f32[1,128], index: 4, kind: input, shape index: {}]
  %s5 = inlined_call_operand.vmem [shape: f32[1,128], index: 5, kind: input, shape index: {}]
  %s6 = inlined_call_operand.vmem [shape: f32[128,288], index: 6, kind: input, shape index: {}]
  %s7 = inlined_call_operand.vmem [shape: f32[2,12,32], index: 7, kind: output, shape index: {}]
  %s8 = sld [smem:[#allocation0]]
  $region61: #{densenet_pallas.19} parent=0
    _
  %s10 = ssub.s32 1, %s8
  %s11 = scalar_select 0, %s10, %s8
  loop: start=0, step=1, limit=4
  $region2: #{densenet_pallas.19} parent=0 // loop_pre_header
    _
  $region3: #{densenet_pallas.19} parent=0 // loop_header
    %s13 = sphi 0, %s17
    %p14 = scmp.ge.s32.totalorder %s13, 4
    %s23 = sphi 0, %s25
    %s26 = sphi 0, %s23
    %s27 = sphi 0, %s26
    %s43 = sphi 0, %s27
    %s47 = sphi 0, %s47
    %s49 = sphi 0, %s47
    %s50 = sphi 0, %s49
    %s64 = sphi 0, %s50
    %s68 = sphi 0, %s68
    %s70 = sphi 0, %s68
    %s71 = sphi 0, %s70
    %s85 = sphi 0, %s71
    %s89 = sphi 0, %s89
    %s91 = sphi 0, %s89
    %s92 = sphi 0, %s91
    %s106 = sphi 0, %s92
    %s110 = sphi 0, %s110
    %s112 = sphi 0, %s110
    %s113 = sphi 0, %s112
    %s127 = sphi 0, %s113
    %s131 = sphi 0, %s131
    %s133 = sphi 0, %s131
    %s134 = sphi 0, %s133
    %s148 = sphi 0, %s134
    %s152 = sphi 0, %s152
    %s154 = sphi 0, %s152
    %s155 = sphi 0, %s154
    %s169 = sphi 0, %s155
    %s175 = sphi 0, %s177
    %s178 = sphi 0, %s175
    %s179 = sphi 0, %s178
    %s195 = sphi 0, %s179
  $region4: #{densenet_pallas.19} parent=0 // loop_header_branch
    %16 = sbr.rel (%p14) target = $region8
  $region5: #{densenet_pallas.19} parent=0 // loop_body
    %s18 = ssub.s32 %s13, 1
    %s19 = ssub.s32 %s13, 2
    %s20 = sadd.s32 %s13, 1
    %s21 = ssub.s32 %s13, %s20
    %p22 = scmp.eq.s32.totalorder %s21, 0
    %s24 = sadd.s32 %s23, 1
    %s25 = scalar_select %p22, %s23, %s24
    %p28 = pneg %p22
    %p29 = scmp.eq.s32.totalorder %s13, 1
    %p30 = por %p28, %p29
    %p31 = scmp.ne.s32.totalorder %s23, %s26
    %p32 = scmp.eq.s32.totalorder %s13, 0
    %p33 = por %p31, %p32
    %p34 = scmp.ne.s32.totalorder %s23, %s26
    %p35 = scmp.eq.s32.totalorder %s18, 1
    %p36 = por %p34, %p35
    %p37 = scmp.ne.s32.totalorder %s26, %s27
    %p38 = scmp.eq.s32.totalorder %s18, 0
    %p39 = por %p37, %p38
    %p40 = scmp.ne.s32.totalorder %s26, %s27
    %p41 = scmp.eq.s32.totalorder %s19, 1
    %p42 = por %p40, %p41
    %p44 = scmp.ne.s32.totalorder %s27, %s43
    %p45 = scmp.eq.s32.totalorder %s19, 0
    %p46 = por %p44, %p45
    %s48 = sadd.s32 %s47, 1
    %p51 = scmp.eq.s32.totalorder %s13, 1
    %p52 = scmp.ne.s32.totalorder %s47, %s49
    %p53 = scmp.eq.s32.totalorder %s13, 0
    %p54 = por %p52, %p53
    %p55 = scmp.ne.s32.totalorder %s47, %s49
    %p56 = scmp.eq.s32.totalorder %s18, 1
    %p57 = por %p55, %p56
    %p58 = scmp.ne.s32.totalorder %s49, %s50
    %p59 = scmp.eq.s32.totalorder %s18, 0
    %p60 = por %p58, %p59
    %p61 = scmp.ne.s32.totalorder %s49, %s50
    %p62 = scmp.eq.s32.totalorder %s19, 1
    %p63 = por %p61, %p62
    %p65 = scmp.ne.s32.totalorder %s50, %s64
    %p66 = scmp.eq.s32.totalorder %s19, 0
    %p67 = por %p65, %p66
    %s69 = sadd.s32 %s68, 1
    %p72 = scmp.eq.s32.totalorder %s13, 1
    %p73 = scmp.ne.s32.totalorder %s68, %s70
    %p74 = scmp.eq.s32.totalorder %s13, 0
    %p75 = por %p73, %p74
    %p76 = scmp.ne.s32.totalorder %s68, %s70
    %p77 = scmp.eq.s32.totalorder %s18, 1
    %p78 = por %p76, %p77
    %p79 = scmp.ne.s32.totalorder %s70, %s71
    %p80 = scmp.eq.s32.totalorder %s18, 0
    %p81 = por %p79, %p80
    %p82 = scmp.ne.s32.totalorder %s70, %s71
    %p83 = scmp.eq.s32.totalorder %s19, 1
    %p84 = por %p82, %p83
    %p86 = scmp.ne.s32.totalorder %s71, %s85
    %p87 = scmp.eq.s32.totalorder %s19, 0
    %p88 = por %p86, %p87
    %s90 = sadd.s32 %s89, 1
    %p93 = scmp.eq.s32.totalorder %s13, 1
    %p94 = scmp.ne.s32.totalorder %s89, %s91
    %p95 = scmp.eq.s32.totalorder %s13, 0
    %p96 = por %p94, %p95
    %p97 = scmp.ne.s32.totalorder %s89, %s91
    %p98 = scmp.eq.s32.totalorder %s18, 1
    %p99 = por %p97, %p98
    %p100 = scmp.ne.s32.totalorder %s91, %s92
    %p101 = scmp.eq.s32.totalorder %s18, 0
    %p102 = por %p100, %p101
    %p103 = scmp.ne.s32.totalorder %s91, %s92
    %p104 = scmp.eq.s32.totalorder %s19, 1
    %p105 = por %p103, %p104
    %p107 = scmp.ne.s32.totalorder %s92, %s106
    %p108 = scmp.eq.s32.totalorder %s19, 0
    %p109 = por %p107, %p108
    %s111 = sadd.s32 %s110, 1
    %p114 = scmp.eq.s32.totalorder %s13, 1
    %p115 = scmp.ne.s32.totalorder %s110, %s112
    %p116 = scmp.eq.s32.totalorder %s13, 0
    %p117 = por %p115, %p116
    %p118 = scmp.ne.s32.totalorder %s110, %s112
    %p119 = scmp.eq.s32.totalorder %s18, 1
    %p120 = por %p118, %p119
    %p121 = scmp.ne.s32.totalorder %s112, %s113
    %p122 = scmp.eq.s32.totalorder %s18, 0
    %p123 = por %p121, %p122
    %p124 = scmp.ne.s32.totalorder %s112, %s113
    %p125 = scmp.eq.s32.totalorder %s19, 1
    %p126 = por %p124, %p125
    %p128 = scmp.ne.s32.totalorder %s113, %s127
    %p129 = scmp.eq.s32.totalorder %s19, 0
    %p130 = por %p128, %p129
    %s132 = sadd.s32 %s131, 1
    %p135 = scmp.eq.s32.totalorder %s13, 1
    %p136 = scmp.ne.s32.totalorder %s131, %s133
    %p137 = scmp.eq.s32.totalorder %s13, 0
    %p138 = por %p136, %p137
    %p139 = scmp.ne.s32.totalorder %s131, %s133
    %p140 = scmp.eq.s32.totalorder %s18, 1
    %p141 = por %p139, %p140
    %p142 = scmp.ne.s32.totalorder %s133, %s134
    %p143 = scmp.eq.s32.totalorder %s18, 0
    %p144 = por %p142, %p143
    %p145 = scmp.ne.s32.totalorder %s133, %s134
    %p146 = scmp.eq.s32.totalorder %s19, 1
    %p147 = por %p145, %p146
    %p149 = scmp.ne.s32.totalorder %s134, %s148
    %p150 = scmp.eq.s32.totalorder %s19, 0
    %p151 = por %p149, %p150
    %s153 = sadd.s32 %s152, 1
    %p156 = scmp.eq.s32.totalorder %s13, 1
    %p157 = scmp.ne.s32.totalorder %s152, %s154
    %p158 = scmp.eq.s32.totalorder %s13, 0
    %p159 = por %p157, %p158
    %p160 = scmp.ne.s32.totalorder %s152, %s154
    %p161 = scmp.eq.s32.totalorder %s18, 1
    %p162 = por %p160, %p161
    %p163 = scmp.ne.s32.totalorder %s154, %s155
    %p164 = scmp.eq.s32.totalorder %s18, 0
    %p165 = por %p163, %p164
    %p166 = scmp.ne.s32.totalorder %s154, %s155
    %p167 = scmp.eq.s32.totalorder %s19, 1
    %p168 = por %p166, %p167
    %p170 = scmp.ne.s32.totalorder %s155, %s169
    %p171 = scmp.eq.s32.totalorder %s19, 0
    %p172 = por %p170, %p171
    %s173 = ssub.s32 %s13, %s20
    %p174 = scmp.eq.s32.totalorder %s173, 0
    %s176 = sadd.s32 %s175, 1
    %s177 = scalar_select %p174, %s175, %s176
    %p180 = pneg %p174
    %p181 = scmp.eq.s32.totalorder %s13, 1
    %p182 = por %p180, %p181
    %p183 = scmp.ne.s32.totalorder %s175, %s178
    %p184 = scmp.eq.s32.totalorder %s13, 0
    %p185 = por %p183, %p184
    %p186 = scmp.ne.s32.totalorder %s175, %s178
    %p187 = scmp.eq.s32.totalorder %s18, 1
    %p188 = por %p186, %p187
    %p189 = scmp.ne.s32.totalorder %s178, %s179
    %p190 = scmp.eq.s32.totalorder %s18, 0
    %p191 = por %p189, %p190
    %p192 = scmp.ne.s32.totalorder %s178, %s179
    %p193 = scmp.eq.s32.totalorder %s19, 1
    %p194 = por %p192, %p193
    %p196 = scmp.ne.s32.totalorder %s179, %s195
    %p197 = scmp.eq.s32.totalorder %s19, 0
    %p198 = por %p196, %p197
    %p199 = scmp.le.s32.totalorder 1, %s13
    %p200 = scmp.lt.s32.totalorder %s13, 3
    %p201 = pnand %p199, %p200
    %p202 = pneg %p201
    // Predicated region
    $region9: #{densenet_pallas.19} parent=5 // pred_check
      _
    $region10: #{densenet_pallas.19} parent=5 // pred_check_branch
      %204 = sbr.rel (%p201) target = $region12
    $region11: #{densenet_pallas.19} parent=5 // pred_region
      %s205 = ssub.s32 %s13, 1
      // Predicated region
      $region13: #{densenet_pallas.19} parent=11 // pred_check
        %p206 = pneg %p60
      $region14: #{densenet_pallas.19} parent=11 // pred_check_branch
        %208 = sbr.rel (%p206) target = $region16
      $region15: #{densenet_pallas.19} parent=11 // pred_region
        _
      $region16: #{densenet_pallas.19} parent=11 // pred_fallthru
        _
      // Predicated region
      $region17: #{densenet_pallas.19} parent=11 // pred_check
        %p209 = pneg %p81
      $region18: #{densenet_pallas.19} parent=11 // pred_check_branch
        %211 = sbr.rel (%p209) target = $region20
      $region19: #{densenet_pallas.19} parent=11 // pred_region
        _
      $region20: #{densenet_pallas.19} parent=11 // pred_fallthru
        _
      // Predicated region
      $region21: #{densenet_pallas.19} parent=11 // pred_check
        %p212 = pneg %p102
      $region22: #{densenet_pallas.19} parent=11 // pred_check_branch
        %214 = sbr.rel (%p212) target = $region24
      $region23: #{densenet_pallas.19} parent=11 // pred_region
        _
      $region24: #{densenet_pallas.19} parent=11 // pred_fallthru
        _
      // Predicated region
      $region25: #{densenet_pallas.19} parent=11 // pred_check
        %p215 = pneg %p123
      $region26: #{densenet_pallas.19} parent=11 // pred_check_branch
        %217 = sbr.rel (%p215) target = $region28
      $region27: #{densenet_pallas.19} parent=11 // pred_region
        _
      $region28: #{densenet_pallas.19} parent=11 // pred_fallthru
        _
      // Predicated region
      $region29: #{densenet_pallas.19} parent=11 // pred_check
        %p218 = pneg %p144
      $region30: #{densenet_pallas.19} parent=11 // pred_check_branch
        %220 = sbr.rel (%p218) target = $region32
      $region31: #{densenet_pallas.19} parent=11 // pred_region
        _
      $region32: #{densenet_pallas.19} parent=11 // pred_fallthru
        _
      // Predicated region
      $region33: #{densenet_pallas.19} parent=11 // pred_check
        %p221 = pneg %p165
      $region34: #{densenet_pallas.19} parent=11 // pred_check_branch
        %223 = sbr.rel (%p221) target = $region36
      $region35: #{densenet_pallas.19} parent=11 // pred_region
        _
      $region36: #{densenet_pallas.19} parent=11 // pred_fallthru
        _
    $region12: #{densenet_pallas.19} parent=5 // pred_fallthru
      _
    %p224 = scmp.lt.s32.totalorder %s13, 2
    // Predicated region
    $region37: #{densenet_pallas.19} parent=5 // pred_check
      %p225 = pneg %p224
    $region38: #{densenet_pallas.19} parent=5 // pred_check_branch
      %227 = sbr.rel (%p225) target = $region40
    $region39: #{densenet_pallas.19} parent=5 // pred_region
      // Predicated region
      $region41: #{densenet_pallas.19} parent=39 // pred_check
        %p228 = pneg %p33
      $region42: #{densenet_pallas.19} parent=39 // pred_check_branch
        %230 = sbr.rel (%p228) target = $region44
      $region43: #{densenet_pallas.19} parent=39 // pred_region
        %p231 = scmp.lt.s32.totalorder %s13, 1
        %s232 = scalar_select %p231, %s13, 1
        %s233 = smul.addr %s232, 2
        %s234 = smul.addr %s233, 8
        %s235 = scalar_lea.vmem %s0, %s234
      $region44: #{densenet_pallas.19} parent=39 // pred_fallthru
        _
    $region40: #{densenet_pallas.19} parent=5 // pred_fallthru
      _
    %p236 = scmp.le.s32.totalorder 1, %s13
    %p237 = scmp.lt.s32.totalorder %s13, 3
    %p238 = pnand %p236, %p237
    %p239 = pneg %p238
    // Predicated region
    $region45: #{densenet_pallas.19} parent=5 // pred_check
      _
    $region46: #{densenet_pallas.19} parent=5 // pred_check_branch
      %241 = sbr.rel (%p238) target = $region48
    $region47: #{densenet_pallas.19} parent=5 // pred_region
      %s242 = ssub.s32 %s13, 1
      %p243 = scmp.lt.s32.totalorder %s18, 1
      %s244 = scalar_select %p243, %s18, 1
      %s245 = smul.addr %s244, 2
      %s246 = smul.addr %s245, 8
      %s247 = scalar_lea.vmem %s0, %s246
      %p248 = pneg %p39
      %p249 = pneg %p36
      %p250 = pneg %p60
      %p251 = pneg %p57
      %p252 = pneg %p81
      %p253 = pneg %p78
      %p254 = pneg %p102
      %p255 = pneg %p99
      %p256 = pneg %p123
      %p257 = pneg %p120
      %p258 = pneg %p144
      %p259 = pneg %p141
      %p260 = pneg %p165
      %p261 = pneg %p162
      %p262 = pneg %p191
      %p263 = pneg %p188
      %p264 = scmp.lt.s32.totalorder %s18, 1
      %s265 = scalar_select %p264, %s18, 1
      %s266 = smul.addr %s265, 2
      %s267 = smul.addr %s266, 8
      %s268 = scalar_lea.vmem %s7, %s267
      %p269 = scmp.lt.s32.totalorder %s18, 1
      %s270 = scalar_select %p269, %s18, 1
      %s271 = smul.addr %s270, 2
      %s272 = smul.addr %s271, 8
      %s273 = scalar_lea.vmem %s0, %s272
      %p274 = scmp.lt.s32.totalorder %s18, 1
      %s275 = scalar_select %p274, %s18, 1
      %s276 = smul.addr %s275, 2
      %s277 = smul.addr %s276, 8
      %s278 = scalar_lea.vmem %s7, %s277
      %v279 = vld [vmem:[%s273] sm:$0xff]
      %v280 = vld [vmem:[%s273 + $0x8] sm:$0xf]
      %v281 = vld [vmem:[%s2] sm:$0x1]
      %v283 = vperm.slane %v281, 0
      %v285 = vmul.f32 %v279, %v283
      %v286 = vmul.f32 %v280, %v283
      %v287 = vld [vmem:[%s3] sm:$0x1]
      %v289 = vperm.slane %v287, 0
      %v291 = vadd.f32 %v285, %v289
      %v292 = vadd.f32 %v286, %v289
      %v293 = vmax.f32 %v291, 0.0
      %v294 = vmax.f32 %v292, 0.0
      %v295 = vld [vmem:[%s1] sm:$0xff]
      %v296 = vld [vmem:[%s1 + $0x8] sm:$0xff]
      %v297 = vld [vmem:[%s1 + $0x10] sm:$0xff]
      %v298 = vld [vmem:[%s1 + $0x18] sm:$0xff]
      %v299 = vld [vmem:[%s1 + $0x20] sm:$0xff]
      %v300 = vld [vmem:[%s1 + $0x28] sm:$0xff]
      %v301 = vld [vmem:[%s1 + $0x30] sm:$0xff]
      %v302 = vld [vmem:[%s1 + $0x38] sm:$0xff]
      %vm303 = vcmask 523264
      %v305 = vsel %vm303, %v293, 0
      %v308 = vsel %vm303, %v294, 0
      %310 = vmatpush.msra.mxu0 0.0
      %311 = vmatpush.msra.mxu0 0.0
      %312 = vmatpush.msra.mxu0 0.0
      %313 = vmatpush.msra.mxu0 0.0
      %314 = vmatpush.msra.mxu0 0.0
      %315 = vmatpush.msra.mxu0 0.0
      %316 = vmatpush.msra.mxu0 0.0
      %317 = vmatpush.msra.mxu0 0.0
      %318 = vmatpush.msra.mxu0 %v302
      %319 = vmatpush.msra.mxu0 %v301
      %320 = vmatpush.msra.mxu0 %v300
      %321 = vmatpush.msra.mxu0 %v299
      %322 = vmatpush.msra.mxu0 %v298
      %323 = vmatpush.msra.mxu0 %v297
      %324 = vmatpush.msra.mxu0 %v296
      %325 = vmatpush.msra.mxu0 %v295
      %326 = vmatmul.f32.gmra.mxu0 %v305
      %v327 = vpop.f32.mrf.mxu0
      %v328 = vadd.f32 0.0, %v327
      %329 = vmatmul.f32.gmra.mxu0 %v308
      %v330 = vpop.f32.mrf.mxu0
      %v331 = vadd.f32 0.0, %v330
      %332 = vdwg.mxu0
      %v333 = vld [vmem:[%s4] sm:$0x1]
      %v335 = vperm.slane %v333, 0
      %v337 = vmul.f32 %v328, %v335
      %v338 = vmul.f32 %v331, %v335
      %v339 = vld [vmem:[%s5] sm:$0x1]
      %v341 = vperm.slane %v339, 0
      %v343 = vadd.f32 %v337, %v341
      %v344 = vadd.f32 %v338, %v341
      %v345 = vmax.f32 %v343, 0.0
      %v346 = vmax.f32 %v344, 0.0
      %347 = vst [vmem:[#allocation2] sm:$0xff] 0.0
      %348 = vst [vmem:[#allocation2 + $0x8] sm:$0x1] 0.0
      %349 = vst [vmem:[#allocation2 + $0xf] sm:$0x3] 0.0
      %350 = vst [vmem:[#allocation2 + $0x17] sm:$0xff] 0.0
      %351 = vst [vmem:[#allocation2 + $0x1f] sm:$0x1] 0.0
      %352 = vst [vmem:[#allocation2 + $0x9] sm:$0x3f] %v345
      %353 = vst [vmem:[#allocation2 + $0xb] sm:$0xc0] %v345
      %354 = vst [vmem:[#allocation2 + $0x13] sm:$0xf] %v346
      %v355 = vld [vmem:[#allocation2] sm:$0xff]
      %v356 = vld [vmem:[#allocation2 + $0x8] sm:$0xff]
      %v357 = vld [vmem:[#allocation2 + $0x10] sm:$0xff]
      %v358 = vld [vmem:[#allocation2 + $0x18] sm:$0xff]
      %v359 = vld [vmem:[%s6] sm:$0xff]
      %v360 = vld [vmem:[%s6 + $0x8] sm:$0xff]
      %v361 = vld [vmem:[%s6 + $0x10] sm:$0xff]
      %v362 = vld [vmem:[%s6 + $0x18] sm:$0xff]
      %v363 = vld [vmem:[%s6 + $0x20] sm:$0xff]
      %v364 = vld [vmem:[%s6 + $0x28] sm:$0xff]
      %v365 = vld [vmem:[%s6 + $0x30] sm:$0xff]
      %v366 = vld [vmem:[%s6 + $0x38] sm:$0xff]
      %v367 = vld [vmem:[%s6 + $0x40] sm:$0xff]
      %v368 = vld [vmem:[%s6 + $0x48] sm:$0xff]
      %v369 = vld [vmem:[%s6 + $0x50] sm:$0xff]
      %v370 = vld [vmem:[%s6 + $0x58] sm:$0xff]
      %v371 = vld [vmem:[%s6 + $0x60] sm:$0xff]
      %v372 = vld [vmem:[%s6 + $0x68] sm:$0xff]
      %v373 = vld [vmem:[%s6 + $0x70] sm:$0xff]
      %v374 = vld [vmem:[%s6 + $0x78] sm:$0xff]
      %v375 = vld [vmem:[%s6 + $0x80] sm:$0xff]
      %v376 = vld [vmem:[%s6 + $0x88] sm:$0xff]
      %v377 = vld [vmem:[%s6 + $0x90] sm:$0xff]
      %v378 = vld [vmem:[%s6 + $0x98] sm:$0xff]
      %v379 = vld [vmem:[%s6 + $0xa0] sm:$0xff]
      %v380 = vld [vmem:[%s6 + $0xa8] sm:$0xff]
      %v381 = vld [vmem:[%s6 + $0xb0] sm:$0xff]
      %v382 = vld [vmem:[%s6 + $0xb8] sm:$0xff]
      %v383 = vld [vmem:[%s6 + $0xc0] sm:$0xff]
      %v384 = vld [vmem:[%s6 + $0xc8] sm:$0xff]
      %v385 = vld [vmem:[%s6 + $0xd0] sm:$0xff]
      %v386 = vld [vmem:[%s6 + $0xd8] sm:$0xff]
      %v387 = vld [vmem:[%s6 + $0xe0] sm:$0xff]
      %v388 = vld [vmem:[%s6 + $0xe8] sm:$0xff]
      %v389 = vld [vmem:[%s6 + $0xf0] sm:$0xff]
      %v390 = vld [vmem:[%s6 + $0xf8] sm:$0xff]
      %v391 = vld [vmem:[%s6 + $0x100] sm:$0xff]
      %v392 = vld [vmem:[%s6 + $0x108] sm:$0xff]
      %v393 = vld [vmem:[%s6 + $0x110] sm:$0xff]
      %v394 = vld [vmem:[%s6 + $0x118] sm:$0xff]
      %v395 = vld [vmem:[%s6 + $0x120] sm:$0xff]
      %v396 = vld [vmem:[%s6 + $0x128] sm:$0xff]
      %v397 = vld [vmem:[%s6 + $0x130] sm:$0xff]
      %v398 = vld [vmem:[%s6 + $0x138] sm:$0xff]
      %v399 = vld [vmem:[%s6 + $0x140] sm:$0xff]
      %v400 = vld [vmem:[%s6 + $0x148] sm:$0xff]
      %v401 = vld [vmem:[%s6 + $0x150] sm:$0xff]
      %v402 = vld [vmem:[%s6 + $0x158] sm:$0xff]
      %v403 = vld [vmem:[%s6 + $0x160] sm:$0xff]
      %v404 = vld [vmem:[%s6 + $0x168] sm:$0xff]
      %v405 = vld [vmem:[%s6 + $0x170] sm:$0xff]
      %v406 = vld [vmem:[%s6 + $0x178] sm:$0xff]
      %407 = vmatpush.msra.mxu0 %v404
      %408 = vmatpush.msra.mxu0 %v401
      %409 = vmatpush.msra.mxu0 %v398
      %410 = vmatpush.msra.mxu0 %v395
      %411 = vmatpush.msra.mxu0 %v392
      %412 = vmatpush.msra.mxu0 %v389
      %413 = vmatpush.msra.mxu0 %v386
      %414 = vmatpush.msra.mxu0 %v383
      %415 = vmatpush.msra.mxu0 %v380
      %416 = vmatpush.msra.mxu0 %v377
      %417 = vmatpush.msra.mxu0 %v374
      %418 = vmatpush.msra.mxu0 %v371
      %419 = vmatpush.msra.mxu0 %v368
      %420 = vmatpush.msra.mxu0 %v365
      %421 = vmatpush.msra.mxu0 %v362
      %422 = vmatpush.msra.mxu0 %v359
      %423 = vmatmul.f32.gmra.mxu0 %v355
      %v424 = vpop.f32.mrf.mxu0
      %v425 = vadd.f32 0.0, %v424
      %426 = vmatmul.f32.gmra.mxu0 %v356
      %v427 = vpop.f32.mrf.mxu0
      %v428 = vadd.f32 0.0, %v427
      %429 = vmatmul.f32.gmra.mxu0 %v357
      %v430 = vpop.f32.mrf.mxu0
      %v431 = vadd.f32 0.0, %v430
      %432 = vmatmul.f32.gmra.mxu0 %v358
      %v433 = vpop.f32.mrf.mxu0
      %434 = vdwg.mxu0
      %435 = vmatpush.msra.mxu0 %v405
      %436 = vmatpush.msra.mxu0 %v402
      %437 = vmatpush.msra.mxu0 %v399
      %438 = vmatpush.msra.mxu0 %v396
      %439 = vmatpush.msra.mxu0 %v393
      %440 = vmatpush.msra.mxu0 %v390
      %441 = vmatpush.msra.mxu0 %v387
      %442 = vmatpush.msra.mxu0 %v384
      %443 = vmatpush.msra.mxu0 %v381
      %444 = vmatpush.msra.mxu0 %v378
      %445 = vmatpush.msra.mxu0 %v375
      %446 = vmatpush.msra.mxu0 %v372
      %447 = vmatpush.msra.mxu0 %v369
      %448 = vmatpush.msra.mxu0 %v366
      %449 = vmatpush.msra.mxu0 %v363
      %450 = vmatpush.msra.mxu0 %v360
      %451 = vmatmul.f32.gmra.mxu0 %v355
      %v452 = vpop.f32.mrf.mxu0
      %453 = vmatmul.f32.gmra.mxu0 %v356
      %v454 = vpop.f32.mrf.mxu0
      %v455 = vadd.f32 0.0, %v454
      %456 = vmatmul.f32.gmra.mxu0 %v357
      %v457 = vpop.f32.mrf.mxu0
      %v458 = vadd.f32 0.0, %v457
      %459 = vmatmul.f32.gmra.mxu0 %v358
      %v460 = vpop.f32.mrf.mxu0
      %v461 = vadd.f32 0.0, %v460
      %462 = vdwg.mxu0
      %463 = vmatpush.msra.mxu0 %v406
      %464 = vmatpush.msra.mxu0 %v403
      %465 = vmatpush.msra.mxu0 %v400
      %466 = vmatpush.msra.mxu0 %v397
      %467 = vmatpush.msra.mxu0 %v394
      %468 = vmatpush.msra.mxu0 %v391
      %469 = vmatpush.msra.mxu0 %v388
      %470 = vmatpush.msra.mxu0 %v385
      %471 = vmatpush.msra.mxu0 %v382
      %472 = vmatpush.msra.mxu0 %v379
      %473 = vmatpush.msra.mxu0 %v376
      %474 = vmatpush.msra.mxu0 %v373
      %475 = vmatpush.msra.mxu0 %v370
      %476 = vmatpush.msra.mxu0 %v367
      %477 = vmatpush.msra.mxu0 %v364
      %478 = vmatpush.msra.mxu0 %v361
      %479 = vmatmul.f32.gmra.mxu0 %v355
      %v480 = vpop.f32.mrf.mxu0
      %481 = vmatmul.f32.gmra.mxu0 %v356
      %v482 = vpop.f32.mrf.mxu0
      %483 = vmatmul.f32.gmra.mxu0 %v357
      %v484 = vpop.f32.mrf.mxu0
      %v485 = vadd.f32 0.0, %v484
      %486 = vmatmul.f32.gmra.mxu0 %v358
      %v487 = vpop.f32.mrf.mxu0
      %v488 = vadd.f32 0.0, %v487
      %489 = vdwg.mxu0
      %v491 = vrot.slane %v425, 1
      %492 = vrot.lane.b32.xlu0 %v491, 96
      %v493 = vpop.permute.xlu0 %492
      %v495 = vadd.f32 %v425, %v493
      %v496 = vrot.slane %v425, 2
      %497 = vrot.lane.b32.xlu0 %v496, 64
      %v498 = vpop.permute.xlu0 %497
      %v500 = vadd.f32 %v495, %v498
      %502 = vrot.lane.b32.xlu0 %v428, 32
      %v503 = vpop.permute.xlu0 %502
      %v505 = vadd.f32 %v500, %v503
      %v507 = vrot.slane %v455, 1
      %v509 = vadd.f32 %v505, %v507
      %v510 = vrot.slane %v455, 2
      %511 = vrot.lane.b32.xlu0 %v510, 96
      %v512 = vpop.permute.xlu0 %511
      %v514 = vadd.f32 %v509, %v512
      %516 = vrot.lane.b32.xlu0 %v458, 64
      %v517 = vpop.permute.xlu0 %516
      %v519 = vadd.f32 %v514, %v517
      %v520 = vrot.slane %v458, 1
      %521 = vrot.lane.b32.xlu0 %v520, 32
      %v522 = vpop.permute.xlu0 %521
      %v524 = vadd.f32 %v519, %v522
      %v526 = vrot.slane %v485, 2
      %v528 = vadd.f32 %v524, %v526
      %vm529 = vcmask 259072
      %530 = vst.msk [vmem:[%s278] sm:$0x3f] %vm529, %v528
      %v531 = vrot.slane %v428, 1
      %532 = vrot.lane.b32.xlu0 %v531, 96
      %v533 = vpop.permute.xlu0 %532
      %v535 = vadd.f32 %v428, %v533
      %v536 = vrot.slane %v428, 2
      %537 = vrot.lane.b32.xlu0 %v536, 64
      %v538 = vpop.permute.xlu0 %537
      %v540 = vadd.f32 %v535, %v538
      %542 = vrot.lane.b32.xlu0 %v431, 32
      %v543 = vpop.permute.xlu0 %542
      %v545 = vadd.f32 %v540, %v543
      %v547 = vadd.f32 %v545, %v520
      %v548 = vrot.slane %v458, 2
      %549 = vrot.lane.b32.xlu0 %v548, 96
      %v550 = vpop.permute.xlu0 %549
      %v552 = vadd.f32 %v547, %v550
      %554 = vrot.lane.b32.xlu0 %v461, 64
      %v555 = vpop.permute.xlu0 %554
      %v557 = vadd.f32 %v552, %v555
      %v558 = vrot.slane %v461, 1
      %559 = vrot.lane.b32.xlu0 %v558, 32
      %v560 = vpop.permute.xlu0 %559
      %v562 = vadd.f32 %v557, %v560
      %v564 = vrot.slane %v488, 2
      %v566 = vadd.f32 %v562, %v564
      %567 = vst.msk [vmem:[%s278 + $0x6] sm:$0x3f] %vm529, %v566
      %p568 = scmp.lt.s32.totalorder %s18, 1
      %s569 = scalar_select %p568, %s18, 1
      %s570 = smul.addr %s569, 2
      %s571 = smul.addr %s570, 8
      %s572 = scalar_lea.vmem %s7, %s571
      // Predicated region
      $region49: #{densenet_pallas.19} parent=47 // pred_check
        %p573 = pneg %p188
      $region50: #{densenet_pallas.19} parent=47 // pred_check_branch
        %575 = sbr.rel (%p573) target = $region52
      $region51: #{densenet_pallas.19} parent=47 // pred_region
        _
      $region52: #{densenet_pallas.19} parent=47 // pred_fallthru
        _
    $region48: #{densenet_pallas.19} parent=5 // pred_fallthru
      _
    %p576 = scmp.le.s32.totalorder 2, %s13
    // Predicated region
    $region53: #{densenet_pallas.19} parent=5 // pred_check
      %p577 = pneg %p576
    $region54: #{densenet_pallas.19} parent=5 // pred_check_branch
      %579 = sbr.rel (%p577) target = $region56
    $region55: #{densenet_pallas.19} parent=5 // pred_region
      %s580 = ssub.s32 %s13, 2
      // Predicated region
      $region57: #{densenet_pallas.19} parent=55 // pred_check
        %p581 = pneg %p194
      $region58: #{densenet_pallas.19} parent=55 // pred_check_branch
        %583 = sbr.rel (%p581) target = $region60
      $region59: #{densenet_pallas.19} parent=55 // pred_region
        %p584 = scmp.lt.s32.totalorder %s19, 1
        %s585 = scalar_select %p584, %s19, 1
        %s586 = smul.addr %s585, 2
        %s587 = smul.addr %s586, 8
        %s588 = scalar_lea.vmem %s7, %s587
      $region60: #{densenet_pallas.19} parent=55 // pred_fallthru
        _
    $region56: #{densenet_pallas.19} parent=5 // pred_fallthru
      _
  $region6: #{densenet_pallas.19} parent=0 // loop_footer
    %s17 = sadd.s32 1, %s13
  $region7: #{densenet_pallas.19} parent=0 // loop_footer_branch
    %12 = sbr.rel target = $region3
  $region8: #{densenet_pallas.19} parent=0 // loop_exit
    _

// kernel: densenet_pallas.20
$region0: #{densenet_pallas.20}
  #allocation0 [shape = 'u32[]', space=smem, size = 0x4, offset = 0x4, fixed_abs, tag = 'smem constant byte address 0x4 - core index']
  #allocation1 [shape = 'u32[72,128]{1,0:T(1,128)}', space=vmem, size = 0x9000, scoped, tag = 'internal scratch']
  #allocation2 [shape = 'f32[32,128]{1,0:T(8,128)}', space=vmem, size = 0x4000, scoped, tag = 'scratch operand']
  %s0 = inlined_call_operand.vmem [shape: f32[2,12,64], index: 0, kind: input, shape index: {}]
  %s1 = inlined_call_operand.vmem [shape: f32[2,12,32], index: 1, kind: input, shape index: {}]
  %s2 = inlined_call_operand.vmem [shape: f32[96,128], index: 2, kind: input, shape index: {}]
  %s3 = inlined_call_operand.vmem [shape: f32[1,96], index: 3, kind: input, shape index: {}]
  %s4 = inlined_call_operand.vmem [shape: f32[1,96], index: 4, kind: input, shape index: {}]
  %s5 = inlined_call_operand.vmem [shape: f32[1,128], index: 5, kind: input, shape index: {}]
  %s6 = inlined_call_operand.vmem [shape: f32[1,128], index: 6, kind: input, shape index: {}]
  %s7 = inlined_call_operand.vmem [shape: f32[128,288], index: 7, kind: input, shape index: {}]
  %s8 = inlined_call_operand.vmem [shape: f32[2,12,32], index: 8, kind: output, shape index: {}]
  %s9 = sld [smem:[#allocation0]]
  $region65: #{densenet_pallas.20} parent=0
    _
  %s11 = ssub.s32 1, %s9
  %s12 = scalar_select 0, %s11, %s9
  loop: start=0, step=1, limit=4
  $region2: #{densenet_pallas.20} parent=0 // loop_pre_header
    _
  $region3: #{densenet_pallas.20} parent=0 // loop_header
    %s14 = sphi 0, %s18
    %p15 = scmp.ge.s32.totalorder %s14, 4
    %s24 = sphi 0, %s26
    %s27 = sphi 0, %s24
    %s28 = sphi 0, %s27
    %s44 = sphi 0, %s28
    %s50 = sphi 0, %s52
    %s53 = sphi 0, %s50
    %s54 = sphi 0, %s53
    %s70 = sphi 0, %s54
    %s74 = sphi 0, %s74
    %s76 = sphi 0, %s74
    %s77 = sphi 0, %s76
    %s91 = sphi 0, %s77
    %s95 = sphi 0, %s95
    %s97 = sphi 0, %s95
    %s98 = sphi 0, %s97
    %s112 = sphi 0, %s98
    %s116 = sphi 0, %s116
    %s118 = sphi 0, %s116
    %s119 = sphi 0, %s118
    %s133 = sphi 0, %s119
    %s137 = sphi 0, %s137
    %s139 = sphi 0, %s137
    %s140 = sphi 0, %s139
    %s154 = sphi 0, %s140
    %s158 = sphi 0, %s158
    %s160 = sphi 0, %s158
    %s161 = sphi 0, %s160
    %s175 = sphi 0, %s161
    %s179 = sphi 0, %s179
    %s181 = sphi 0, %s179
    %s182 = sphi 0, %s181
    %s196 = sphi 0, %s182
    %s202 = sphi 0, %s204
    %s205 = sphi 0, %s202
    %s206 = sphi 0, %s205
    %s222 = sphi 0, %s206
  $region4: #{densenet_pallas.20} parent=0 // loop_header_branch
    %17 = sbr.rel (%p15) target = $region8
  $region5: #{densenet_pallas.20} parent=0 // loop_body
    %s19 = ssub.s32 %s14, 1
    %s20 = ssub.s32 %s14, 2
    %s21 = sadd.s32 %s14, 1
    %s22 = ssub.s32 %s14, %s21
    %p23 = scmp.eq.s32.totalorder %s22, 0
    %s25 = sadd.s32 %s24, 1
    %s26 = scalar_select %p23, %s24, %s25
    %p29 = pneg %p23
    %p30 = scmp.eq.s32.totalorder %s14, 1
    %p31 = por %p29, %p30
    %p32 = scmp.ne.s32.totalorder %s24, %s27
    %p33 = scmp.eq.s32.totalorder %s14, 0
    %p34 = por %p32, %p33
    %p35 = scmp.ne.s32.totalorder %s24, %s27
    %p36 = scmp.eq.s32.totalorder %s19, 1
    %p37 = por %p35, %p36
    %p38 = scmp.ne.s32.totalorder %s27, %s28
    %p39 = scmp.eq.s32.totalorder %s19, 0
    %p40 = por %p38, %p39
    %p41 = scmp.ne.s32.totalorder %s27, %s28
    %p42 = scmp.eq.s32.totalorder %s20, 1
    %p43 = por %p41, %p42
    %p45 = scmp.ne.s32.totalorder %s28, %s44
    %p46 = scmp.eq.s32.totalorder %s20, 0
    %p47 = por %p45, %p46
    %s48 = ssub.s32 %s14, %s21
    %p49 = scmp.eq.s32.totalorder %s48, 0
    %s51 = sadd.s32 %s50, 1
    %s52 = scalar_select %p49, %s50, %s51
    %p55 = pneg %p49
    %p56 = scmp.eq.s32.totalorder %s14, 1
    %p57 = por %p55, %p56
    %p58 = scmp.ne.s32.totalorder %s50, %s53
    %p59 = scmp.eq.s32.totalorder %s14, 0
    %p60 = por %p58, %p59
    %p61 = scmp.ne.s32.totalorder %s50, %s53
    %p62 = scmp.eq.s32.totalorder %s19, 1
    %p63 = por %p61, %p62
    %p64 = scmp.ne.s32.totalorder %s53, %s54
    %p65 = scmp.eq.s32.totalorder %s19, 0
    %p66 = por %p64, %p65
    %p67 = scmp.ne.s32.totalorder %s53, %s54
    %p68 = scmp.eq.s32.totalorder %s20, 1
    %p69 = por %p67, %p68
    %p71 = scmp.ne.s32.totalorder %s54, %s70
    %p72 = scmp.eq.s32.totalorder %s20, 0
    %p73 = por %p71, %p72
    %s75 = sadd.s32 %s74, 1
    %p78 = scmp.eq.s32.totalorder %s14, 1
    %p79 = scmp.ne.s32.totalorder %s74, %s76
    %p80 = scmp.eq.s32.totalorder %s14, 0
    %p81 = por %p79, %p80
    %p82 = scmp.ne.s32.totalorder %s74, %s76
    %p83 = scmp.eq.s32.totalorder %s19, 1
    %p84 = por %p82, %p83
    %p85 = scmp.ne.s32.totalorder %s76, %s77
    %p86 = scmp.eq.s32.totalorder %s19, 0
    %p87 = por %p85, %p86
    %p88 = scmp.ne.s32.totalorder %s76, %s77
    %p89 = scmp.eq.s32.totalorder %s20, 1
    %p90 = por %p88, %p89
    %p92 = scmp.ne.s32.totalorder %s77, %s91
    %p93 = scmp.eq.s32.totalorder %s20, 0
    %p94 = por %p92, %p93
    %s96 = sadd.s32 %s95, 1
    %p99 = scmp.eq.s32.totalorder %s14, 1
    %p100 = scmp.ne.s32.totalorder %s95, %s97
    %p101 = scmp.eq.s32.totalorder %s14, 0
    %p102 = por %p100, %p101
    %p103 = scmp.ne.s32.totalorder %s95, %s97
    %p104 = scmp.eq.s32.totalorder %s19, 1
    %p105 = por %p103, %p104
    %p106 = scmp.ne.s32.totalorder %s97, %s98
    %p107 = scmp.eq.s32.totalorder %s19, 0
    %p108 = por %p106, %p107
    %p109 = scmp.ne.s32.totalorder %s97, %s98
    %p110 = scmp.eq.s32.totalorder %s20, 1
    %p111 = por %p109, %p110
    %p113 = scmp.ne.s32.totalorder %s98, %s112
    %p114 = scmp.eq.s32.totalorder %s20, 0
    %p115 = por %p113, %p114
    %s117 = sadd.s32 %s116, 1
    %p120 = scmp.eq.s32.totalorder %s14, 1
    %p121 = scmp.ne.s32.totalorder %s116, %s118
    %p122 = scmp.eq.s32.totalorder %s14, 0
    %p123 = por %p121, %p122
    %p124 = scmp.ne.s32.totalorder %s116, %s118
    %p125 = scmp.eq.s32.totalorder %s19, 1
    %p126 = por %p124, %p125
    %p127 = scmp.ne.s32.totalorder %s118, %s119
    %p128 = scmp.eq.s32.totalorder %s19, 0
    %p129 = por %p127, %p128
    %p130 = scmp.ne.s32.totalorder %s118, %s119
    %p131 = scmp.eq.s32.totalorder %s20, 1
    %p132 = por %p130, %p131
    %p134 = scmp.ne.s32.totalorder %s119, %s133
    %p135 = scmp.eq.s32.totalorder %s20, 0
    %p136 = por %p134, %p135
    %s138 = sadd.s32 %s137, 1
    %p141 = scmp.eq.s32.totalorder %s14, 1
    %p142 = scmp.ne.s32.totalorder %s137, %s139
    %p143 = scmp.eq.s32.totalorder %s14, 0
    %p144 = por %p142, %p143
    %p145 = scmp.ne.s32.totalorder %s137, %s139
    %p146 = scmp.eq.s32.totalorder %s19, 1
    %p147 = por %p145, %p146
    %p148 = scmp.ne.s32.totalorder %s139, %s140
    %p149 = scmp.eq.s32.totalorder %s19, 0
    %p150 = por %p148, %p149
    %p151 = scmp.ne.s32.totalorder %s139, %s140
    %p152 = scmp.eq.s32.totalorder %s20, 1
    %p153 = por %p151, %p152
    %p155 = scmp.ne.s32.totalorder %s140, %s154
    %p156 = scmp.eq.s32.totalorder %s20, 0
    %p157 = por %p155, %p156
    %s159 = sadd.s32 %s158, 1
    %p162 = scmp.eq.s32.totalorder %s14, 1
    %p163 = scmp.ne.s32.totalorder %s158, %s160
    %p164 = scmp.eq.s32.totalorder %s14, 0
    %p165 = por %p163, %p164
    %p166 = scmp.ne.s32.totalorder %s158, %s160
    %p167 = scmp.eq.s32.totalorder %s19, 1
    %p168 = por %p166, %p167
    %p169 = scmp.ne.s32.totalorder %s160, %s161
    %p170 = scmp.eq.s32.totalorder %s19, 0
    %p171 = por %p169, %p170
    %p172 = scmp.ne.s32.totalorder %s160, %s161
    %p173 = scmp.eq.s32.totalorder %s20, 1
    %p174 = por %p172, %p173
    %p176 = scmp.ne.s32.totalorder %s161, %s175
    %p177 = scmp.eq.s32.totalorder %s20, 0
    %p178 = por %p176, %p177
    %s180 = sadd.s32 %s179, 1
    %p183 = scmp.eq.s32.totalorder %s14, 1
    %p184 = scmp.ne.s32.totalorder %s179, %s181
    %p185 = scmp.eq.s32.totalorder %s14, 0
    %p186 = por %p184, %p185
    %p187 = scmp.ne.s32.totalorder %s179, %s181
    %p188 = scmp.eq.s32.totalorder %s19, 1
    %p189 = por %p187, %p188
    %p190 = scmp.ne.s32.totalorder %s181, %s182
    %p191 = scmp.eq.s32.totalorder %s19, 0
    %p192 = por %p190, %p191
    %p193 = scmp.ne.s32.totalorder %s181, %s182
    %p194 = scmp.eq.s32.totalorder %s20, 1
    %p195 = por %p193, %p194
    %p197 = scmp.ne.s32.totalorder %s182, %s196
    %p198 = scmp.eq.s32.totalorder %s20, 0
    %p199 = por %p197, %p198
    %s200 = ssub.s32 %s14, %s21
    %p201 = scmp.eq.s32.totalorder %s200, 0
    %s203 = sadd.s32 %s202, 1
    %s204 = scalar_select %p201, %s202, %s203
    %p207 = pneg %p201
    %p208 = scmp.eq.s32.totalorder %s14, 1
    %p209 = por %p207, %p208
    %p210 = scmp.ne.s32.totalorder %s202, %s205
    %p211 = scmp.eq.s32.totalorder %s14, 0
    %p212 = por %p210, %p211
    %p213 = scmp.ne.s32.totalorder %s202, %s205
    %p214 = scmp.eq.s32.totalorder %s19, 1
    %p215 = por %p213, %p214
    %p216 = scmp.ne.s32.totalorder %s205, %s206
    %p217 = scmp.eq.s32.totalorder %s19, 0
    %p218 = por %p216, %p217
    %p219 = scmp.ne.s32.totalorder %s205, %s206
    %p220 = scmp.eq.s32.totalorder %s20, 1
    %p221 = por %p219, %p220
    %p223 = scmp.ne.s32.totalorder %s206, %s222
    %p224 = scmp.eq.s32.totalorder %s20, 0
    %p225 = por %p223, %p224
    %p226 = scmp.le.s32.totalorder 1, %s14
    %p227 = scmp.lt.s32.totalorder %s14, 3
    %p228 = pnand %p226, %p227
    %p229 = pneg %p228
    // Predicated region
    $region9: #{densenet_pallas.20} parent=5 // pred_check
      _
    $region10: #{densenet_pallas.20} parent=5 // pred_check_branch
      %231 = sbr.rel (%p228) target = $region12
    $region11: #{densenet_pallas.20} parent=5 // pred_region
      %s232 = ssub.s32 %s14, 1
      // Predicated region
      $region13: #{densenet_pallas.20} parent=11 // pred_check
        %p233 = pneg %p87
      $region14: #{densenet_pallas.20} parent=11 // pred_check_branch
        %235 = sbr.rel (%p233) target = $region16
      $region15: #{densenet_pallas.20} parent=11 // pred_region
        _
      $region16: #{densenet_pallas.20} parent=11 // pred_fallthru
        _
      // Predicated region
      $region17: #{densenet_pallas.20} parent=11 // pred_check
        %p236 = pneg %p108
      $region18: #{densenet_pallas.20} parent=11 // pred_check_branch
        %238 = sbr.rel (%p236) target = $region20
      $region19: #{densenet_pallas.20} parent=11 // pred_region
        _
      $region20: #{densenet_pallas.20} parent=11 // pred_fallthru
        _
      // Predicated region
      $region21: #{densenet_pallas.20} parent=11 // pred_check
        %p239 = pneg %p129
      $region22: #{densenet_pallas.20} parent=11 // pred_check_branch
        %241 = sbr.rel (%p239) target = $region24
      $region23: #{densenet_pallas.20} parent=11 // pred_region
        _
      $region24: #{densenet_pallas.20} parent=11 // pred_fallthru
        _
      // Predicated region
      $region25: #{densenet_pallas.20} parent=11 // pred_check
        %p242 = pneg %p150
      $region26: #{densenet_pallas.20} parent=11 // pred_check_branch
        %244 = sbr.rel (%p242) target = $region28
      $region27: #{densenet_pallas.20} parent=11 // pred_region
        _
      $region28: #{densenet_pallas.20} parent=11 // pred_fallthru
        _
      // Predicated region
      $region29: #{densenet_pallas.20} parent=11 // pred_check
        %p245 = pneg %p171
      $region30: #{densenet_pallas.20} parent=11 // pred_check_branch
        %247 = sbr.rel (%p245) target = $region32
      $region31: #{densenet_pallas.20} parent=11 // pred_region
        _
      $region32: #{densenet_pallas.20} parent=11 // pred_fallthru
        _
      // Predicated region
      $region33: #{densenet_pallas.20} parent=11 // pred_check
        %p248 = pneg %p192
      $region34: #{densenet_pallas.20} parent=11 // pred_check_branch
        %250 = sbr.rel (%p248) target = $region36
      $region35: #{densenet_pallas.20} parent=11 // pred_region
        _
      $region36: #{densenet_pallas.20} parent=11 // pred_fallthru
        _
    $region12: #{densenet_pallas.20} parent=5 // pred_fallthru
      _
    %p251 = scmp.lt.s32.totalorder %s14, 2
    // Predicated region
    $region37: #{densenet_pallas.20} parent=5 // pred_check
      %p252 = pneg %p251
    $region38: #{densenet_pallas.20} parent=5 // pred_check_branch
      %254 = sbr.rel (%p252) target = $region40
    $region39: #{densenet_pallas.20} parent=5 // pred_region
      // Predicated region
      $region41: #{densenet_pallas.20} parent=39 // pred_check
        %p255 = pneg %p34
      $region42: #{densenet_pallas.20} parent=39 // pred_check_branch
        %257 = sbr.rel (%p255) target = $region44
      $region43: #{densenet_pallas.20} parent=39 // pred_region
        %p258 = scmp.lt.s32.totalorder %s14, 1
        %s259 = scalar_select %p258, %s14, 1
        %s260 = smul.addr %s259, 2
        %s261 = smul.addr %s260, 8
        %s262 = scalar_lea.vmem %s0, %s261
      $region44: #{densenet_pallas.20} parent=39 // pred_fallthru
        _
      // Predicated region
      $region45: #{densenet_pallas.20} parent=39 // pred_check
        %p263 = pneg %p60
      $region46: #{densenet_pallas.20} parent=39 // pred_check_branch
        %265 = sbr.rel (%p263) target = $region48
      $region47: #{densenet_pallas.20} parent=39 // pred_region
        %p266 = scmp.lt.s32.totalorder %s14, 1
        %s267 = scalar_select %p266, %s14, 1
        %s268 = smul.addr %s267, 2
        %s269 = smul.addr %s268, 8
        %s270 = scalar_lea.vmem %s1, %s269
      $region48: #{densenet_pallas.20} parent=39 // pred_fallthru
        _
    $region40: #{densenet_pallas.20} parent=5 // pred_fallthru
      _
    %p271 = scmp.le.s32.totalorder 1, %s14
    %p272 = scmp.lt.s32.totalorder %s14, 3
    %p273 = pnand %p271, %p272
    %p274 = pneg %p273
    // Predicated region
    $region49: #{densenet_pallas.20} parent=5 // pred_check
      _
    $region50: #{densenet_pallas.20} parent=5 // pred_check_branch
      %276 = sbr.rel (%p273) target = $region52
    $region51: #{densenet_pallas.20} parent=5 // pred_region
      %s277 = ssub.s32 %s14, 1
      %p278 = scmp.lt.s32.totalorder %s19, 1
      %s279 = scalar_select %p278, %s19, 1
      %s280 = smul.addr %s279, 2
      %s281 = smul.addr %s280, 8
      %s282 = scalar_lea.vmem %s0, %s281
      %p283 = pneg %p40
      %p284 = pneg %p37
      %p285 = scmp.lt.s32.totalorder %s19, 1
      %s286 = scalar_select %p285, %s19, 1
      %s287 = smul.addr %s286, 2
      %s288 = smul.addr %s287, 8
      %s289 = scalar_lea.vmem %s1, %s288
      %p290 = pneg %p66
      %p291 = pneg %p63
      %p292 = pneg %p87
      %p293 = pneg %p84
      %p294 = pneg %p108
      %p295 = pneg %p105
      %p296 = pneg %p129
      %p297 = pneg %p126
      %p298 = pneg %p150
      %p299 = pneg %p147
      %p300 = pneg %p171
      %p301 = pneg %p168
      %p302 = pneg %p192
      %p303 = pneg %p189
      %p304 = pneg %p218
      %p305 = pneg %p215
      %p306 = scmp.lt.s32.totalorder %s19, 1
      %s307 = scalar_select %p306, %s19, 1
      %s308 = smul.addr %s307, 2
      %s309 = smul.addr %s308, 8
      %s310 = scalar_lea.vmem %s8, %s309
      %p311 = scmp.lt.s32.totalorder %s19, 1
      %s312 = scalar_select %p311, %s19, 1
      %s313 = smul.addr %s312, 2
      %s314 = smul.addr %s313, 8
      %s315 = scalar_lea.vmem %s0, %s314
      %p316 = scmp.lt.s32.totalorder %s19, 1
      %s317 = scalar_select %p316, %s19, 1
      %s318 = smul.addr %s317, 2
      %s319 = smul.addr %s318, 8
      %s320 = scalar_lea.vmem %s1, %s319
      %p321 = scmp.lt.s32.totalorder %s19, 1
      %s322 = scalar_select %p321, %s19, 1
      %s323 = smul.addr %s322, 2
      %s324 = smul.addr %s323, 8
      %s325 = scalar_lea.vmem %s8, %s324
      %v326 = vld [vmem:[%s315] sm:$0xff]
      %v327 = vld [vmem:[%s315 + $0x8] sm:$0xf]
      %v328 = vld [vmem:[%s3] sm:$0x1]
      %v330 = vperm.slane %v328, 0
      %v332 = vmul.f32 %v326, %v330
      %v333 = vmul.f32 %v327, %v330
      %v334 = vld [vmem:[%s4] sm:$0x1]
      %v336 = vperm.slane %v334, 0
      %v338 = vadd.f32 %v332, %v336
      %v339 = vadd.f32 %v333, %v336
      %v340 = vmax.f32 %v338, 0.0
      %v341 = vmax.f32 %v339, 0.0
      %v342 = vld [vmem:[%s2] sm:$0xff]
      %v343 = vld [vmem:[%s2 + $0x8] sm:$0xff]
      %v344 = vld [vmem:[%s2 + $0x10] sm:$0xff]
      %v345 = vld [vmem:[%s2 + $0x18] sm:$0xff]
      %v346 = vld [vmem:[%s2 + $0x20] sm:$0xff]
      %v347 = vld [vmem:[%s2 + $0x28] sm:$0xff]
      %v348 = vld [vmem:[%s2 + $0x30] sm:$0xff]
      %v349 = vld [vmem:[%s2 + $0x38] sm:$0xff]
      %v350 = vld [vmem:[%s320] sm:$0xff]
      %v351 = vld [vmem:[%s320 + $0x8] sm:$0xf]
      %352 = vrot.lane.b32.xlu0 %v330, 64
      %v353 = vpop.permute.xlu0 %352
      %v355 = vmul.f32 %v350, %v353
      %v356 = vmul.f32 %v351, %v353
      %357 = vrot.lane.b32.xlu0 %v336, 64
      %v358 = vpop.permute.xlu0 %357
      %v360 = vadd.f32 %v355, %v358
      %v361 = vadd.f32 %v356, %v358
      %v362 = vmax.f32 %v360, 0.0
      %v363 = vmax.f32 %v361, 0.0
      %v364 = vld [vmem:[%s2 + $0x40] sm:$0xff]
      %v365 = vld [vmem:[%s2 + $0x48] sm:$0xff]
      %v366 = vld [vmem:[%s2 + $0x50] sm:$0xff]
      %v367 = vld [vmem:[%s2 + $0x58] sm:$0xff]
      %vm368 = vcmask 261120
      %v370 = vsel %vm368, %v362, 0
      %v373 = vsel %vm368, %v363, 0
      %375 = vmatpush.msra.mxu0 0.0
      %376 = vmatpush.msra.mxu0 0.0
      %377 = vmatpush.msra.mxu0 0.0
      %378 = vmatpush.msra.mxu0 0.0
      %379 = vmatpush.msra.mxu0 0.0
      %380 = vmatpush.msra.mxu0 0.0
      %381 = vmatpush.msra.mxu0 0.0
      %382 = vmatpush.msra.mxu0 0.0
      %383 = vmatpush.msra.mxu0 0.0
      %384 = vmatpush.msra.mxu0 0.0
      %385 = vmatpush.msra.mxu0 0.0
      %386 = vmatpush.msra.mxu0 0.0
      %387 = vmatpush.msra.mxu0 %v367
      %388 = vmatpush.msra.mxu0 %v366
      %389 = vmatpush.msra.mxu0 %v365
      %390 = vmatpush.msra.mxu0 %v364
      %391 = vmatmul.f32.gmra.mxu0 %v370
      %v392 = vpop.f32.mrf.mxu0
      %v393 = vadd.f32 0.0, %v392
      %394 = vmatmul.f32.gmra.mxu0 %v373
      %v395 = vpop.f32.mrf.mxu0
      %v396 = vadd.f32 0.0, %v395
      %397 = vdwg.mxu0
      %vm398 = vcmask 523264
      %v400 = vsel %vm398, %v340, 0
      %v403 = vsel %vm398, %v341, 0
      %405 = vmatpush.msra.mxu0 0.0
      %406 = vmatpush.msra.mxu0 0.0
      %407 = vmatpush.msra.mxu0 0.0
      %408 = vmatpush.msra.mxu0 0.0
      %409 = vmatpush.msra.mxu0 0.0
      %410 = vmatpush.msra.mxu0 0.0
      %411 = vmatpush.msra.mxu0 0.0
      %412 = vmatpush.msra.mxu0 0.0
      %413 = vmatpush.msra.mxu0 %v349
      %414 = vmatpush.msra.mxu0 %v348
      %415 = vmatpush.msra.mxu0 %v347
      %416 = vmatpush.msra.mxu0 %v346
      %417 = vmatpush.msra.mxu0 %v345
      %418 = vmatpush.msra.mxu0 %v344
      %419 = vmatpush.msra.mxu0 %v343
      %420 = vmatpush.msra.mxu0 %v342
      %421 = vmatmul.f32.gmra.mxu0 %v400
      %v422 = vpop.f32.mrf.mxu0
      %v423 = vadd.f32 %v393, %v422
      %424 = vmatmul.f32.gmra.mxu0 %v403
      %v425 = vpop.f32.mrf.mxu0
      %v426 = vadd.f32 %v396, %v425
      %427 = vdwg.mxu0
      %v428 = vld [vmem:[%s5] sm:$0x1]
      %v430 = vperm.slane %v428, 0
      %v432 = vmul.f32 %v423, %v430
      %v433 = vmul.f32 %v426, %v430
      %v434 = vld [vmem:[%s6] sm:$0x1]
      %v436 = vperm.slane %v434, 0
      %v438 = vadd.f32 %v432, %v436
      %v439 = vadd.f32 %v433, %v436
      %v440 = vmax.f32 %v438, 0.0
      %v441 = vmax.f32 %v439, 0.0
      %442 = vst [vmem:[#allocation2] sm:$0xff] 0.0
      %443 = vst [vmem:[#allocation2 + $0x8] sm:$0x1] 0.0
      %444 = vst [vmem:[#allocation2 + $0xf] sm:$0x3] 0.0
      %445 = vst [vmem:[#allocation2 + $0x17] sm:$0xff] 0.0
      %446 = vst [vmem:[#allocation2 + $0x1f] sm:$0x1] 0.0
      %447 = vst [vmem:[#allocation2 + $0x9] sm:$0x3f] %v440
      %448 = vst [vmem:[#allocation2 + $0xb] sm:$0xc0] %v440
      %449 = vst [vmem:[#allocation2 + $0x13] sm:$0xf] %v441
      %v450 = vld [vmem:[#allocation2] sm:$0xff]
      %v451 = vld [vmem:[#allocation2 + $0x8] sm:$0xff]
      %v452 = vld [vmem:[#allocation2 + $0x10] sm:$0xff]
      %v453 = vld [vmem:[#allocation2 + $0x18] sm:$0xff]
      %v454 = vld [vmem:[%s7] sm:$0xff]
      %v455 = vld [vmem:[%s7 + $0x8] sm:$0xff]
      %v456 = vld [vmem:[%s7 + $0x10] sm:$0xff]
      %v457 = vld [vmem:[%s7 + $0x18] sm:$0xff]
      %v458 = vld [vmem:[%s7 + $0x20] sm:$0xff]
      %v459 = vld [vmem:[%s7 + $0x28] sm:$0xff]
      %v460 = vld [vmem:[%s7 + $0x30] sm:$0xff]
      %v461 = vld [vmem:[%s7 + $0x38] sm:$0xff]
      %v462 = vld [vmem:[%s7 + $0x40] sm:$0xff]
      %v463 = vld [vmem:[%s7 + $0x48] sm:$0xff]
      %v464 = vld [vmem:[%s7 + $0x50] sm:$0xff]
      %v465 = vld [vmem:[%s7 + $0x58] sm:$0xff]
      %v466 = vld [vmem:[%s7 + $0x60] sm:$0xff]
      %v467 = vld [vmem:[%s7 + $0x68] sm:$0xff]
      %v468 = vld [vmem:[%s7 + $0x70] sm:$0xff]
      %v469 = vld [vmem:[%s7 + $0x78] sm:$0xff]
      %v470 = vld [vmem:[%s7 + $0x80] sm:$0xff]
      %v471 = vld [vmem:[%s7 + $0x88] sm:$0xff]
      %v472 = vld [vmem:[%s7 + $0x90] sm:$0xff]
      %v473 = vld [vmem:[%s7 + $0x98] sm:$0xff]
      %v474 = vld [vmem:[%s7 + $0xa0] sm:$0xff]
      %v475 = vld [vmem:[%s7 + $0xa8] sm:$0xff]
      %v476 = vld [vmem:[%s7 + $0xb0] sm:$0xff]
      %v477 = vld [vmem:[%s7 + $0xb8] sm:$0xff]
      %v478 = vld [vmem:[%s7 + $0xc0] sm:$0xff]
      %v479 = vld [vmem:[%s7 + $0xc8] sm:$0xff]
      %v480 = vld [vmem:[%s7 + $0xd0] sm:$0xff]
      %v481 = vld [vmem:[%s7 + $0xd8] sm:$0xff]
      %v482 = vld [vmem:[%s7 + $0xe0] sm:$0xff]
      %v483 = vld [vmem:[%s7 + $0xe8] sm:$0xff]
      %v484 = vld [vmem:[%s7 + $0xf0] sm:$0xff]
      %v485 = vld [vmem:[%s7 + $0xf8] sm:$0xff]
      %v486 = vld [vmem:[%s7 + $0x100] sm:$0xff]
      %v487 = vld [vmem:[%s7 + $0x108] sm:$0xff]
      %v488 = vld [vmem:[%s7 + $0x110] sm:$0xff]
      %v489 = vld [vmem:[%s7 + $0x118] sm:$0xff]
      %v490 = vld [vmem:[%s7 + $0x120] sm:$0xff]
      %v491 = vld [vmem:[%s7 + $0x128] sm:$0xff]
      %v492 = vld [vmem:[%s7 + $0x130] sm:$0xff]
      %v493 = vld [vmem:[%s7 + $0x138] sm:$0xff]
      %v494 = vld [vmem:[%s7 + $0x140] sm:$0xff]
      %v495 = vld [vmem:[%s7 + $0x148] sm:$0xff]
      %v496 = vld [vmem:[%s7 + $0x150] sm:$0xff]
      %v497 = vld [vmem:[%s7 + $0x158] sm:$0xff]
      %v498 = vld [vmem:[%s7 + $0x160] sm:$0xff]
      %v499 = vld [vmem:[%s7 + $0x168] sm:$0xff]
      %v500 = vld [vmem:[%s7 + $0x170] sm:$0xff]
      %v501 = vld [vmem:[%s7 + $0x178] sm:$0xff]
      %502 = vmatpush.msra.mxu0 %v499
      %503 = vmatpush.msra.mxu0 %v496
      %504 = vmatpush.msra.mxu0 %v493
      %505 = vmatpush.msra.mxu0 %v490
      %506 = vmatpush.msra.mxu0 %v487
      %507 = vmatpush.msra.mxu0 %v484
      %508 = vmatpush.msra.mxu0 %v481
      %509 = vmatpush.msra.mxu0 %v478
      %510 = vmatpush.msra.mxu0 %v475
      %511 = vmatpush.msra.mxu0 %v472
      %512 = vmatpush.msra.mxu0 %v469
      %513 = vmatpush.msra.mxu0 %v466
      %514 = vmatpush.msra.mxu0 %v463
      %515 = vmatpush.msra.mxu0 %v460
      %516 = vmatpush.msra.mxu0 %v457
      %517 = vmatpush.msra.mxu0 %v454
      %518 = vmatmul.f32.gmra.mxu0 %v450
      %v519 = vpop.f32.mrf.mxu0
      %v520 = vadd.f32 0.0, %v519
      %521 = vmatmul.f32.gmra.mxu0 %v451
      %v522 = vpop.f32.mrf.mxu0
      %v523 = vadd.f32 0.0, %v522
      %524 = vmatmul.f32.gmra.mxu0 %v452
      %v525 = vpop.f32.mrf.mxu0
      %v526 = vadd.f32 0.0, %v525
      %527 = vmatmul.f32.gmra.mxu0 %v453
      %v528 = vpop.f32.mrf.mxu0
      %529 = vdwg.mxu0
      %530 = vmatpush.msra.mxu0 %v500
      %531 = vmatpush.msra.mxu0 %v497
      %532 = vmatpush.msra.mxu0 %v494
      %533 = vmatpush.msra.mxu0 %v491
      %534 = vmatpush.msra.mxu0 %v488
      %535 = vmatpush.msra.mxu0 %v485
      %536 = vmatpush.msra.mxu0 %v482
      %537 = vmatpush.msra.mxu0 %v479
      %538 = vmatpush.msra.mxu0 %v476
      %539 = vmatpush.msra.mxu0 %v473
      %540 = vmatpush.msra.mxu0 %v470
      %541 = vmatpush.msra.mxu0 %v467
      %542 = vmatpush.msra.mxu0 %v464
      %543 = vmatpush.msra.mxu0 %v461
      %544 = vmatpush.msra.mxu0 %v458
      %545 = vmatpush.msra.mxu0 %v455
      %546 = vmatmul.f32.gmra.mxu0 %v450
      %v547 = vpop.f32.mrf.mxu0
      %548 = vmatmul.f32.gmra.mxu0 %v451
      %v549 = vpop.f32.mrf.mxu0
      %v550 = vadd.f32 0.0, %v549
      %551 = vmatmul.f32.gmra.mxu0 %v452
      %v552 = vpop.f32.mrf.mxu0
      %v553 = vadd.f32 0.0, %v552
      %554 = vmatmul.f32.gmra.mxu0 %v453
      %v555 = vpop.f32.mrf.mxu0
      %v556 = vadd.f32 0.0, %v555
      %557 = vdwg.mxu0
      %558 = vmatpush.msra.mxu0 %v501
      %559 = vmatpush.msra.mxu0 %v498
      %560 = vmatpush.msra.mxu0 %v495
      %561 = vmatpush.msra.mxu0 %v492
      %562 = vmatpush.msra.mxu0 %v489
      %563 = vmatpush.msra.mxu0 %v486
      %564 = vmatpush.msra.mxu0 %v483
      %565 = vmatpush.msra.mxu0 %v480
      %566 = vmatpush.msra.mxu0 %v477
      %567 = vmatpush.msra.mxu0 %v474
      %568 = vmatpush.msra.mxu0 %v471
      %569 = vmatpush.msra.mxu0 %v468
      %570 = vmatpush.msra.mxu0 %v465
      %571 = vmatpush.msra.mxu0 %v462
      %572 = vmatpush.msra.mxu0 %v459
      %573 = vmatpush.msra.mxu0 %v456
      %574 = vmatmul.f32.gmra.mxu0 %v450
      %v575 = vpop.f32.mrf.mxu0
      %576 = vmatmul.f32.gmra.mxu0 %v451
      %v577 = vpop.f32.mrf.mxu0
      %578 = vmatmul.f32.gmra.mxu0 %v452
      %v579 = vpop.f32.mrf.mxu0
      %v580 = vadd.f32 0.0, %v579
      %581 = vmatmul.f32.gmra.mxu0 %v453
      %v582 = vpop.f32.mrf.mxu0
      %v583 = vadd.f32 0.0, %v582
      %584 = vdwg.mxu0
      %v586 = vrot.slane %v520, 1
      %587 = vrot.lane.b32.xlu0 %v586, 96
      %v588 = vpop.permute.xlu0 %587
      %v590 = vadd.f32 %v520, %v588
      %v591 = vrot.slane %v520, 2
      %592 = vrot.lane.b32.xlu0 %v591, 64
      %v593 = vpop.permute.xlu0 %592
      %v595 = vadd.f32 %v590, %v593
      %597 = vrot.lane.b32.xlu0 %v523, 32
      %v598 = vpop.permute.xlu0 %597
      %v600 = vadd.f32 %v595, %v598
      %v602 = vrot.slane %v550, 1
      %v604 = vadd.f32 %v600, %v602
      %v605 = vrot.slane %v550, 2
      %606 = vrot.lane.b32.xlu0 %v605, 96
      %v607 = vpop.permute.xlu0 %606
      %v609 = vadd.f32 %v604, %v607
      %611 = vrot.lane.b32.xlu0 %v553, 64
      %v612 = vpop.permute.xlu0 %611
      %v614 = vadd.f32 %v609, %v612
      %v615 = vrot.slane %v553, 1
      %616 = vrot.lane.b32.xlu0 %v615, 32
      %v617 = vpop.permute.xlu0 %616
      %v619 = vadd.f32 %v614, %v617
      %v621 = vrot.slane %v580, 2
      %v623 = vadd.f32 %v619, %v621
      %vm624 = vcmask 259072
      %625 = vst.msk [vmem:[%s325] sm:$0x3f] %vm624, %v623
      %v626 = vrot.slane %v523, 1
      %627 = vrot.lane.b32.xlu0 %v626, 96
      %v628 = vpop.permute.xlu0 %627
      %v630 = vadd.f32 %v523, %v628
      %v631 = vrot.slane %v523, 2
      %632 = vrot.lane.b32.xlu0 %v631, 64
      %v633 = vpop.permute.xlu0 %632
      %v635 = vadd.f32 %v630, %v633
      %637 = vrot.lane.b32.xlu0 %v526, 32
      %v638 = vpop.permute.xlu0 %637
      %v640 = vadd.f32 %v635, %v638
      %v642 = vadd.f32 %v640, %v615
      %v643 = vrot.slane %v553, 2
      %644 = vrot.lane.b32.xlu0 %v643, 96
      %v645 = vpop.permute.xlu0 %644
      %v647 = vadd.f32 %v642, %v645
      %649 = vrot.lane.b32.xlu0 %v556, 64
      %v650 = vpop.permute.xlu0 %649
      %v652 = vadd.f32 %v647, %v650
      %v653 = vrot.slane %v556, 1
      %654 = vrot.lane.b32.xlu0 %v653, 32
      %v655 = vpop.permute.xlu0 %654
      %v657 = vadd.f32 %v652, %v655
      %v659 = vrot.slane %v583, 2
      %v661 = vadd.f32 %v657, %v659
      %662 = vst.msk [vmem:[%s325 + $0x6] sm:$0x3f] %vm624, %v661
      %p663 = scmp.lt.s32.totalorder %s19, 1
      %s664 = scalar_select %p663, %s19, 1
      %s665 = smul.addr %s664, 2
      %s666 = smul.addr %s665, 8
      %s667 = scalar_lea.vmem %s8, %s666
      // Predicated region
      $region53: #{densenet_pallas.20} parent=51 // pred_check
        %p668 = pneg %p215
      $region54: #{densenet_pallas.20} parent=51 // pred_check_branch
        %670 = sbr.rel (%p668) target = $region56
      $region55: #{densenet_pallas.20} parent=51 // pred_region
        _
      $region56: #{densenet_pallas.20} parent=51 // pred_fallthru
        _
    $region52: #{densenet_pallas.20} parent=5 // pred_fallthru
      _
    %p671 = scmp.le.s32.totalorder 2, %s14
    // Predicated region
    $region57: #{densenet_pallas.20} parent=5 // pred_check
      %p672 = pneg %p671
    $region58: #{densenet_pallas.20} parent=5 // pred_check_branch
      %674 = sbr.rel (%p672) target = $region60
    $region59: #{densenet_pallas.20} parent=5 // pred_region
      %s675 = ssub.s32 %s14, 2
      // Predicated region
      $region61: #{densenet_pallas.20} parent=59 // pred_check
        %p676 = pneg %p221
      $region62: #{densenet_pallas.20} parent=59 // pred_check_branch
        %678 = sbr.rel (%p676) target = $region64
      $region63: #{densenet_pallas.20} parent=59 // pred_region
        %p679 = scmp.lt.s32.totalorder %s20, 1
        %s680 = scalar_select %p679, %s20, 1
        %s681 = smul.addr %s680, 2
        %s682 = smul.addr %s681, 8
        %s683 = scalar_lea.vmem %s8, %s682
      $region64: #{densenet_pallas.20} parent=59 // pred_fallthru
        _
    $region60: #{densenet_pallas.20} parent=5 // pred_fallthru
      _
  $region6: #{densenet_pallas.20} parent=0 // loop_footer
    %s18 = sadd.s32 1, %s14
  $region7: #{densenet_pallas.20} parent=0 // loop_footer_branch
    %13 = sbr.rel target = $region3
  $region8: #{densenet_pallas.20} parent=0 // loop_exit
    _

// kernel: densenet_pallas.22
$region0: #{densenet_pallas.22}
  #allocation0 [shape = 'u32[]', space=smem, size = 0x4, offset = 0x4, fixed_abs, tag = 'smem constant byte address 0x4 - core index']
  #allocation1 [shape = 'u32[72,128]{1,0:T(1,128)}', space=vmem, size = 0x9000, scoped, tag = 'internal scratch']
  #allocation2 [shape = 'f32[2,8,64]{2,1,0:T(8,128)}', space=vmem, size = 0x2000, scoped, tag = 'scratch operand']
  %s0 = inlined_call_operand.vmem [shape: f32[2,2,6,64], index: 0, kind: input, shape index: {}]
  %s1 = inlined_call_operand.vmem [shape: f32[2,1,7,64], index: 1, kind: output, shape index: {}]
  %s2 = sld [smem:[#allocation0]]
  $region37: #{densenet_pallas.22} parent=0
    _
  %s4 = ssub.s32 1, %s2
  %s5 = scalar_select 0, %s4, %s2
  loop: start=0, step=1, limit=4
  $region2: #{densenet_pallas.22} parent=0 // loop_pre_header
    _
  $region3: #{densenet_pallas.22} parent=0 // loop_header
    %s7 = sphi 0, %s11
    %p8 = scmp.ge.s32.totalorder %s7, 4
    %s17 = sphi 0, %s19
    %s20 = sphi 0, %s17
    %s21 = sphi 0, %s20
    %s37 = sphi 0, %s21
    %s43 = sphi 0, %s45
    %s46 = sphi 0, %s43
    %s47 = sphi 0, %s46
    %s63 = sphi 0, %s47
  $region4: #{densenet_pallas.22} parent=0 // loop_header_branch
    %10 = sbr.rel (%p8) target = $region8
  $region5: #{densenet_pallas.22} parent=0 // loop_body
    %s12 = ssub.s32 %s7, 1
    %s13 = ssub.s32 %s7, 2
    %s14 = sadd.s32 %s7, 1
    %s15 = ssub.s32 %s7, %s14
    %p16 = scmp.eq.s32.totalorder %s15, 0
    %s18 = sadd.s32 %s17, 1
    %s19 = scalar_select %p16, %s17, %s18
    %p22 = pneg %p16
    %p23 = scmp.eq.s32.totalorder %s7, 1
    %p24 = por %p22, %p23
    %p25 = scmp.ne.s32.totalorder %s17, %s20
    %p26 = scmp.eq.s32.totalorder %s7, 0
    %p27 = por %p25, %p26
    %p28 = scmp.ne.s32.totalorder %s17, %s20
    %p29 = scmp.eq.s32.totalorder %s12, 1
    %p30 = por %p28, %p29
    %p31 = scmp.ne.s32.totalorder %s20, %s21
    %p32 = scmp.eq.s32.totalorder %s12, 0
    %p33 = por %p31, %p32
    %p34 = scmp.ne.s32.totalorder %s20, %s21
    %p35 = scmp.eq.s32.totalorder %s13, 1
    %p36 = por %p34, %p35
    %p38 = scmp.ne.s32.totalorder %s21, %s37
    %p39 = scmp.eq.s32.totalorder %s13, 0
    %p40 = por %p38, %p39
    %s41 = ssub.s32 %s7, %s14
    %p42 = scmp.eq.s32.totalorder %s41, 0
    %s44 = sadd.s32 %s43, 1
    %s45 = scalar_select %p42, %s43, %s44
    %p48 = pneg %p42
    %p49 = scmp.eq.s32.totalorder %s7, 1
    %p50 = por %p48, %p49
    %p51 = scmp.ne.s32.totalorder %s43, %s46
    %p52 = scmp.eq.s32.totalorder %s7, 0
    %p53 = por %p51, %p52
    %p54 = scmp.ne.s32.totalorder %s43, %s46
    %p55 = scmp.eq.s32.totalorder %s12, 1
    %p56 = por %p54, %p55
    %p57 = scmp.ne.s32.totalorder %s46, %s47
    %p58 = scmp.eq.s32.totalorder %s12, 0
    %p59 = por %p57, %p58
    %p60 = scmp.ne.s32.totalorder %s46, %s47
    %p61 = scmp.eq.s32.totalorder %s13, 1
    %p62 = por %p60, %p61
    %p64 = scmp.ne.s32.totalorder %s47, %s63
    %p65 = scmp.eq.s32.totalorder %s13, 0
    %p66 = por %p64, %p65
    %p67 = scmp.le.s32.totalorder 1, %s7
    %p68 = scmp.lt.s32.totalorder %s7, 3
    %p69 = pnand %p67, %p68
    %p70 = pneg %p69
    // Predicated region
    $region9: #{densenet_pallas.22} parent=5 // pred_check
      _
    $region10: #{densenet_pallas.22} parent=5 // pred_check_branch
      %72 = sbr.rel (%p69) target = $region12
    $region11: #{densenet_pallas.22} parent=5 // pred_region
      %s73 = ssub.s32 %s7, 1
    $region12: #{densenet_pallas.22} parent=5 // pred_fallthru
      _
    %p74 = scmp.lt.s32.totalorder %s7, 2
    // Predicated region
    $region13: #{densenet_pallas.22} parent=5 // pred_check
      %p75 = pneg %p74
    $region14: #{densenet_pallas.22} parent=5 // pred_check_branch
      %77 = sbr.rel (%p75) target = $region16
    $region15: #{densenet_pallas.22} parent=5 // pred_region
      // Predicated region
      $region17: #{densenet_pallas.22} parent=15 // pred_check
        %p78 = pneg %p27
      $region18: #{densenet_pallas.22} parent=15 // pred_check_branch
        %80 = sbr.rel (%p78) target = $region20
      $region19: #{densenet_pallas.22} parent=15 // pred_region
        %p81 = scmp.lt.s32.totalorder %s7, 1
        %s82 = scalar_select %p81, %s7, 1
        %s83 = smul.addr %s82, 2
        %s84 = smul.addr %s83, 8
        %s85 = scalar_lea.vmem %s0, %s84
      $region20: #{densenet_pallas.22} parent=15 // pred_fallthru
        _
    $region16: #{densenet_pallas.22} parent=5 // pred_fallthru
      _
    %p86 = scmp.le.s32.totalorder 1, %s7
    %p87 = scmp.lt.s32.totalorder %s7, 3
    %p88 = pnand %p86, %p87
    %p89 = pneg %p88
    // Predicated region
    $region21: #{densenet_pallas.22} parent=5 // pred_check
      _
    $region22: #{densenet_pallas.22} parent=5 // pred_check_branch
      %91 = sbr.rel (%p88) target = $region24
    $region23: #{densenet_pallas.22} parent=5 // pred_region
      %s92 = ssub.s32 %s7, 1
      %p93 = scmp.lt.s32.totalorder %s12, 1
      %s94 = scalar_select %p93, %s12, 1
      %s95 = smul.addr %s94, 2
      %s96 = smul.addr %s95, 8
      %s97 = scalar_lea.vmem %s0, %s96
      %p98 = pneg %p33
      %p99 = pneg %p30
      %p100 = pneg %p59
      %p101 = pneg %p56
      %p102 = scmp.lt.s32.totalorder %s12, 1
      %s103 = scalar_select %p102, %s12, 1
      %s104 = smul.addr %s103, 8
      %s105 = scalar_lea.vmem %s1, %s104
      %p106 = scmp.lt.s32.totalorder %s12, 1
      %s107 = scalar_select %p106, %s12, 1
      %s108 = smul.addr %s107, 2
      %s109 = smul.addr %s108, 8
      %s110 = scalar_lea.vmem %s0, %s109
      %p111 = scmp.lt.s32.totalorder %s12, 1
      %s112 = scalar_select %p111, %s12, 1
      %s113 = smul.addr %s112, 8
      %s114 = scalar_lea.vmem %s1, %s113
      %vm115 = vcmask 516096
      %116 = vst.msk [vmem:[#allocation2] sm:$0x1] %vm115, -inf
      %117 = vst.msk [vmem:[#allocation2 + $0x8] sm:$0x1] %vm115, -inf
      %118 = vst.msk [vmem:[#allocation2 + $0x7] sm:$0x1] %vm115, -inf
      %119 = vst.msk [vmem:[#allocation2 + $0xf] sm:$0x1] %vm115, -inf
      %v120 = vld [vmem:[%s110] sm:$0x3f]
      %v121 = vld [vmem:[%s110 + $0x8] sm:$0x3f]
      %vm122 = vcmask 521216
      %123 = vst.msk [vmem:[#allocation2 + $0x1] sm:$0x3f] %vm122, %v120
      %124 = vst.msk [vmem:[#allocation2 + $0x9] sm:$0x3f] %vm122, %v121
      %v125 = vld [vmem:[#allocation2] sm:$0xff]
      %v126 = vld [vmem:[#allocation2 + $0x8] sm:$0xff]
      %v128 = vrot.slane %v125, 1
      %v130 = vmax.f32 %v125, %v128
      %v132 = vrot.slane %v126, 1
      %v134 = vmax.f32 %v126, %v132
      %v135 = vmax.f32 %v130, %v134
      %vm136 = vcmask 522240
      %137 = vst.msk [vmem:[%s114] sm:$0x7f] %vm136, %v135
      %p138 = scmp.lt.s32.totalorder %s12, 1
      %s139 = scalar_select %p138, %s12, 1
      %s140 = smul.addr %s139, 8
      %s141 = scalar_lea.vmem %s1, %s140
      // Predicated region
      $region25: #{densenet_pallas.22} parent=23 // pred_check
        %p142 = pneg %p56
      $region26: #{densenet_pallas.22} parent=23 // pred_check_branch
        %144 = sbr.rel (%p142) target = $region28
      $region27: #{densenet_pallas.22} parent=23 // pred_region
        _
      $region28: #{densenet_pallas.22} parent=23 // pred_fallthru
        _
    $region24: #{densenet_pallas.22} parent=5 // pred_fallthru
      _
    %p145 = scmp.le.s32.totalorder 2, %s7
    // Predicated region
    $region29: #{densenet_pallas.22} parent=5 // pred_check
      %p146 = pneg %p145
    $region30: #{densenet_pallas.22} parent=5 // pred_check_branch
      %148 = sbr.rel (%p146) target = $region32
    $region31: #{densenet_pallas.22} parent=5 // pred_region
      %s149 = ssub.s32 %s7, 2
      // Predicated region
      $region33: #{densenet_pallas.22} parent=31 // pred_check
        %p150 = pneg %p62
      $region34: #{densenet_pallas.22} parent=31 // pred_check_branch
        %152 = sbr.rel (%p150) target = $region36
      $region35: #{densenet_pallas.22} parent=31 // pred_region
        %p153 = scmp.lt.s32.totalorder %s13, 1
        %s154 = scalar_select %p153, %s13, 1
        %s155 = smul.addr %s154, 8
        %s156 = scalar_lea.vmem %s1, %s155
      $region36: #{densenet_pallas.22} parent=31 // pred_fallthru
        _
    $region32: #{densenet_pallas.22} parent=5 // pred_fallthru
      _
  $region6: #{densenet_pallas.22} parent=0 // loop_footer
    %s11 = sadd.s32 1, %s7
  $region7: #{densenet_pallas.22} parent=0 // loop_footer_branch
    %6 = sbr.rel target = $region3
  $region8: #{densenet_pallas.22} parent=0 // loop_exit
    _

// kernel: densenet_pallas.21
$region0: #{densenet_pallas.21}
  #allocation0 [shape = 'u32[]', space=smem, size = 0x4, offset = 0x4, fixed_abs, tag = 'smem constant byte address 0x4 - core index']
  #allocation1 [shape = 'u32[72,128]{1,0:T(1,128)}', space=vmem, size = 0x9000, scoped, tag = 'internal scratch']
  %s0 = inlined_call_operand.vmem [shape: f32[2,12,64], index: 0, kind: input, shape index: {}]
  %s1 = inlined_call_operand.vmem [shape: f32[2,12,32], index: 1, kind: input, shape index: {}]
  %s2 = inlined_call_operand.vmem [shape: f32[2,12,32], index: 2, kind: input, shape index: {}]
  %s3 = inlined_call_operand.vmem [shape: f32[128,64], index: 3, kind: input, shape index: {}]
  %s4 = inlined_call_operand.vmem [shape: f32[1,128], index: 4, kind: input, shape index: {}]
  %s5 = inlined_call_operand.vmem [shape: f32[1,128], index: 5, kind: input, shape index: {}]
  %s6 = inlined_call_operand.vmem [shape: f32[1,64], index: 6, kind: input, shape index: {}]
  %s7 = inlined_call_operand.vmem [shape: f32[1,64], index: 7, kind: input, shape index: {}]
  %s8 = inlined_call_operand.vmem [shape: f32[2,12,64], index: 8, kind: output, shape index: {}]
  %s9 = sld [smem:[#allocation0]]
  $region65: #{densenet_pallas.21} parent=0
    _
  %s11 = ssub.s32 1, %s9
  %s12 = scalar_select 0, %s11, %s9
  loop: start=0, step=1, limit=4
  $region2: #{densenet_pallas.21} parent=0 // loop_pre_header
    _
  $region3: #{densenet_pallas.21} parent=0 // loop_header
    %s14 = sphi 0, %s18
    %p15 = scmp.ge.s32.totalorder %s14, 4
    %s24 = sphi 0, %s26
    %s27 = sphi 0, %s24
    %s28 = sphi 0, %s27
    %s44 = sphi 0, %s28
    %s50 = sphi 0, %s52
    %s53 = sphi 0, %s50
    %s54 = sphi 0, %s53
    %s70 = sphi 0, %s54
    %s76 = sphi 0, %s78
    %s79 = sphi 0, %s76
    %s80 = sphi 0, %s79
    %s96 = sphi 0, %s80
    %s100 = sphi 0, %s100
    %s102 = sphi 0, %s100
    %s103 = sphi 0, %s102
    %s117 = sphi 0, %s103
    %s121 = sphi 0, %s121
    %s123 = sphi 0, %s121
    %s124 = sphi 0, %s123
    %s138 = sphi 0, %s124
    %s142 = sphi 0, %s142
    %s144 = sphi 0, %s142
    %s145 = sphi 0, %s144
    %s159 = sphi 0, %s145
    %s163 = sphi 0, %s163
    %s165 = sphi 0, %s163
    %s166 = sphi 0, %s165
    %s180 = sphi 0, %s166
    %s184 = sphi 0, %s184
    %s186 = sphi 0, %s184
    %s187 = sphi 0, %s186
    %s201 = sphi 0, %s187
    %s207 = sphi 0, %s209
    %s210 = sphi 0, %s207
    %s211 = sphi 0, %s210
    %s227 = sphi 0, %s211
  $region4: #{densenet_pallas.21} parent=0 // loop_header_branch
    %17 = sbr.rel (%p15) target = $region8
  $region5: #{densenet_pallas.21} parent=0 // loop_body
    %s19 = ssub.s32 %s14, 1
    %s20 = ssub.s32 %s14, 2
    %s21 = sadd.s32 %s14, 1
    %s22 = ssub.s32 %s14, %s21
    %p23 = scmp.eq.s32.totalorder %s22, 0
    %s25 = sadd.s32 %s24, 1
    %s26 = scalar_select %p23, %s24, %s25
    %p29 = pneg %p23
    %p30 = scmp.eq.s32.totalorder %s14, 1
    %p31 = por %p29, %p30
    %p32 = scmp.ne.s32.totalorder %s24, %s27
    %p33 = scmp.eq.s32.totalorder %s14, 0
    %p34 = por %p32, %p33
    %p35 = scmp.ne.s32.totalorder %s24, %s27
    %p36 = scmp.eq.s32.totalorder %s19, 1
    %p37 = por %p35, %p36
    %p38 = scmp.ne.s32.totalorder %s27, %s28
    %p39 = scmp.eq.s32.totalorder %s19, 0
    %p40 = por %p38, %p39
    %p41 = scmp.ne.s32.totalorder %s27, %s28
    %p42 = scmp.eq.s32.totalorder %s20, 1
    %p43 = por %p41, %p42
    %p45 = scmp.ne.s32.totalorder %s28, %s44
    %p46 = scmp.eq.s32.totalorder %s20, 0
    %p47 = por %p45, %p46
    %s48 = ssub.s32 %s14, %s21
    %p49 = scmp.eq.s32.totalorder %s48, 0
    %s51 = sadd.s32 %s50, 1
    %s52 = scalar_select %p49, %s50, %s51
    %p55 = pneg %p49
    %p56 = scmp.eq.s32.totalorder %s14, 1
    %p57 = por %p55, %p56
    %p58 = scmp.ne.s32.totalorder %s50, %s53
    %p59 = scmp.eq.s32.totalorder %s14, 0
    %p60 = por %p58, %p59
    %p61 = scmp.ne.s32.totalorder %s50, %s53
    %p62 = scmp.eq.s32.totalorder %s19, 1
    %p63 = por %p61, %p62
    %p64 = scmp.ne.s32.totalorder %s53, %s54
    %p65 = scmp.eq.s32.totalorder %s19, 0
    %p66 = por %p64, %p65
    %p67 = scmp.ne.s32.totalorder %s53, %s54
    %p68 = scmp.eq.s32.totalorder %s20, 1
    %p69 = por %p67, %p68
    %p71 = scmp.ne.s32.totalorder %s54, %s70
    %p72 = scmp.eq.s32.totalorder %s20, 0
    %p73 = por %p71, %p72
    %s74 = ssub.s32 %s14, %s21
    %p75 = scmp.eq.s32.totalorder %s74, 0
    %s77 = sadd.s32 %s76, 1
    %s78 = scalar_select %p75, %s76, %s77
    %p81 = pneg %p75
    %p82 = scmp.eq.s32.totalorder %s14, 1
    %p83 = por %p81, %p82
    %p84 = scmp.ne.s32.totalorder %s76, %s79
    %p85 = scmp.eq.s32.totalorder %s14, 0
    %p86 = por %p84, %p85
    %p87 = scmp.ne.s32.totalorder %s76, %s79
    %p88 = scmp.eq.s32.totalorder %s19, 1
    %p89 = por %p87, %p88
    %p90 = scmp.ne.s32.totalorder %s79, %s80
    %p91 = scmp.eq.s32.totalorder %s19, 0
    %p92 = por %p90, %p91
    %p93 = scmp.ne.s32.totalorder %s79, %s80
    %p94 = scmp.eq.s32.totalorder %s20, 1
    %p95 = por %p93, %p94
    %p97 = scmp.ne.s32.totalorder %s80, %s96
    %p98 = scmp.eq.s32.totalorder %s20, 0
    %p99 = por %p97, %p98
    %s101 = sadd.s32 %s100, 1
    %p104 = scmp.eq.s32.totalorder %s14, 1
    %p105 = scmp.ne.s32.totalorder %s100, %s102
    %p106 = scmp.eq.s32.totalorder %s14, 0
    %p107 = por %p105, %p106
    %p108 = scmp.ne.s32.totalorder %s100, %s102
    %p109 = scmp.eq.s32.totalorder %s19, 1
    %p110 = por %p108, %p109
    %p111 = scmp.ne.s32.totalorder %s102, %s103
    %p112 = scmp.eq.s32.totalorder %s19, 0
    %p113 = por %p111, %p112
    %p114 = scmp.ne.s32.totalorder %s102, %s103
    %p115 = scmp.eq.s32.totalorder %s20, 1
    %p116 = por %p114, %p115
    %p118 = scmp.ne.s32.totalorder %s103, %s117
    %p119 = scmp.eq.s32.totalorder %s20, 0
    %p120 = por %p118, %p119
    %s122 = sadd.s32 %s121, 1
    %p125 = scmp.eq.s32.totalorder %s14, 1
    %p126 = scmp.ne.s32.totalorder %s121, %s123
    %p127 = scmp.eq.s32.totalorder %s14, 0
    %p128 = por %p126, %p127
    %p129 = scmp.ne.s32.totalorder %s121, %s123
    %p130 = scmp.eq.s32.totalorder %s19, 1
    %p131 = por %p129, %p130
    %p132 = scmp.ne.s32.totalorder %s123, %s124
    %p133 = scmp.eq.s32.totalorder %s19, 0
    %p134 = por %p132, %p133
    %p135 = scmp.ne.s32.totalorder %s123, %s124
    %p136 = scmp.eq.s32.totalorder %s20, 1
    %p137 = por %p135, %p136
    %p139 = scmp.ne.s32.totalorder %s124, %s138
    %p140 = scmp.eq.s32.totalorder %s20, 0
    %p141 = por %p139, %p140
    %s143 = sadd.s32 %s142, 1
    %p146 = scmp.eq.s32.totalorder %s14, 1
    %p147 = scmp.ne.s32.totalorder %s142, %s144
    %p148 = scmp.eq.s32.totalorder %s14, 0
    %p149 = por %p147, %p148
    %p150 = scmp.ne.s32.totalorder %s142, %s144
    %p151 = scmp.eq.s32.totalorder %s19, 1
    %p152 = por %p150, %p151
    %p153 = scmp.ne.s32.totalorder %s144, %s145
    %p154 = scmp.eq.s32.totalorder %s19, 0
    %p155 = por %p153, %p154
    %p156 = scmp.ne.s32.totalorder %s144, %s145
    %p157 = scmp.eq.s32.totalorder %s20, 1
    %p158 = por %p156, %p157
    %p160 = scmp.ne.s32.totalorder %s145, %s159
    %p161 = scmp.eq.s32.totalorder %s20, 0
    %p162 = por %p160, %p161
    %s164 = sadd.s32 %s163, 1
    %p167 = scmp.eq.s32.totalorder %s14, 1
    %p168 = scmp.ne.s32.totalorder %s163, %s165
    %p169 = scmp.eq.s32.totalorder %s14, 0
    %p170 = por %p168, %p169
    %p171 = scmp.ne.s32.totalorder %s163, %s165
    %p172 = scmp.eq.s32.totalorder %s19, 1
    %p173 = por %p171, %p172
    %p174 = scmp.ne.s32.totalorder %s165, %s166
    %p175 = scmp.eq.s32.totalorder %s19, 0
    %p176 = por %p174, %p175
    %p177 = scmp.ne.s32.totalorder %s165, %s166
    %p178 = scmp.eq.s32.totalorder %s20, 1
    %p179 = por %p177, %p178
    %p181 = scmp.ne.s32.totalorder %s166, %s180
    %p182 = scmp.eq.s32.totalorder %s20, 0
    %p183 = por %p181, %p182
    %s185 = sadd.s32 %s184, 1
    %p188 = scmp.eq.s32.totalorder %s14, 1
    %p189 = scmp.ne.s32.totalorder %s184, %s186
    %p190 = scmp.eq.s32.totalorder %s14, 0
    %p191 = por %p189, %p190
    %p192 = scmp.ne.s32.totalorder %s184, %s186
    %p193 = scmp.eq.s32.totalorder %s19, 1
    %p194 = por %p192, %p193
    %p195 = scmp.ne.s32.totalorder %s186, %s187
    %p196 = scmp.eq.s32.totalorder %s19, 0
    %p197 = por %p195, %p196
    %p198 = scmp.ne.s32.totalorder %s186, %s187
    %p199 = scmp.eq.s32.totalorder %s20, 1
    %p200 = por %p198, %p199
    %p202 = scmp.ne.s32.totalorder %s187, %s201
    %p203 = scmp.eq.s32.totalorder %s20, 0
    %p204 = por %p202, %p203
    %s205 = ssub.s32 %s14, %s21
    %p206 = scmp.eq.s32.totalorder %s205, 0
    %s208 = sadd.s32 %s207, 1
    %s209 = scalar_select %p206, %s207, %s208
    %p212 = pneg %p206
    %p213 = scmp.eq.s32.totalorder %s14, 1
    %p214 = por %p212, %p213
    %p215 = scmp.ne.s32.totalorder %s207, %s210
    %p216 = scmp.eq.s32.totalorder %s14, 0
    %p217 = por %p215, %p216
    %p218 = scmp.ne.s32.totalorder %s207, %s210
    %p219 = scmp.eq.s32.totalorder %s19, 1
    %p220 = por %p218, %p219
    %p221 = scmp.ne.s32.totalorder %s210, %s211
    %p222 = scmp.eq.s32.totalorder %s19, 0
    %p223 = por %p221, %p222
    %p224 = scmp.ne.s32.totalorder %s210, %s211
    %p225 = scmp.eq.s32.totalorder %s20, 1
    %p226 = por %p224, %p225
    %p228 = scmp.ne.s32.totalorder %s211, %s227
    %p229 = scmp.eq.s32.totalorder %s20, 0
    %p230 = por %p228, %p229
    %p231 = scmp.le.s32.totalorder 1, %s14
    %p232 = scmp.lt.s32.totalorder %s14, 3
    %p233 = pnand %p231, %p232
    %p234 = pneg %p233
    // Predicated region
    $region9: #{densenet_pallas.21} parent=5 // pred_check
      _
    $region10: #{densenet_pallas.21} parent=5 // pred_check_branch
      %236 = sbr.rel (%p233) target = $region12
    $region11: #{densenet_pallas.21} parent=5 // pred_region
      %s237 = ssub.s32 %s14, 1
      // Predicated region
      $region13: #{densenet_pallas.21} parent=11 // pred_check
        %p238 = pneg %p113
      $region14: #{densenet_pallas.21} parent=11 // pred_check_branch
        %240 = sbr.rel (%p238) target = $region16
      $region15: #{densenet_pallas.21} parent=11 // pred_region
        _
      $region16: #{densenet_pallas.21} parent=11 // pred_fallthru
        _
      // Predicated region
      $region17: #{densenet_pallas.21} parent=11 // pred_check
        %p241 = pneg %p134
      $region18: #{densenet_pallas.21} parent=11 // pred_check_branch
        %243 = sbr.rel (%p241) target = $region20
      $region19: #{densenet_pallas.21} parent=11 // pred_region
        _
      $region20: #{densenet_pallas.21} parent=11 // pred_fallthru
        _
      // Predicated region
      $region21: #{densenet_pallas.21} parent=11 // pred_check
        %p244 = pneg %p155
      $region22: #{densenet_pallas.21} parent=11 // pred_check_branch
        %246 = sbr.rel (%p244) target = $region24
      $region23: #{densenet_pallas.21} parent=11 // pred_region
        _
      $region24: #{densenet_pallas.21} parent=11 // pred_fallthru
        _
      // Predicated region
      $region25: #{densenet_pallas.21} parent=11 // pred_check
        %p247 = pneg %p176
      $region26: #{densenet_pallas.21} parent=11 // pred_check_branch
        %249 = sbr.rel (%p247) target = $region28
      $region27: #{densenet_pallas.21} parent=11 // pred_region
        _
      $region28: #{densenet_pallas.21} parent=11 // pred_fallthru
        _
      // Predicated region
      $region29: #{densenet_pallas.21} parent=11 // pred_check
        %p250 = pneg %p197
      $region30: #{densenet_pallas.21} parent=11 // pred_check_branch
        %252 = sbr.rel (%p250) target = $region32
      $region31: #{densenet_pallas.21} parent=11 // pred_region
        _
      $region32: #{densenet_pallas.21} parent=11 // pred_fallthru
        _
    $region12: #{densenet_pallas.21} parent=5 // pred_fallthru
      _
    %p253 = scmp.lt.s32.totalorder %s14, 2
    // Predicated region
    $region33: #{densenet_pallas.21} parent=5 // pred_check
      %p254 = pneg %p253
    $region34: #{densenet_pallas.21} parent=5 // pred_check_branch
      %256 = sbr.rel (%p254) target = $region36
    $region35: #{densenet_pallas.21} parent=5 // pred_region
      // Predicated region
      $region37: #{densenet_pallas.21} parent=35 // pred_check
        %p257 = pneg %p34
      $region38: #{densenet_pallas.21} parent=35 // pred_check_branch
        %259 = sbr.rel (%p257) target = $region40
      $region39: #{densenet_pallas.21} parent=35 // pred_region
        %p260 = scmp.lt.s32.totalorder %s14, 1
        %s261 = scalar_select %p260, %s14, 1
        %s262 = smul.addr %s261, 2
        %s263 = smul.addr %s262, 8
        %s264 = scalar_lea.vmem %s0, %s263
      $region40: #{densenet_pallas.21} parent=35 // pred_fallthru
        _
      // Predicated region
      $region41: #{densenet_pallas.21} parent=35 // pred_check
        %p265 = pneg %p60
      $region42: #{densenet_pallas.21} parent=35 // pred_check_branch
        %267 = sbr.rel (%p265) target = $region44
      $region43: #{densenet_pallas.21} parent=35 // pred_region
        %p268 = scmp.lt.s32.totalorder %s14, 1
        %s269 = scalar_select %p268, %s14, 1
        %s270 = smul.addr %s269, 2
        %s271 = smul.addr %s270, 8
        %s272 = scalar_lea.vmem %s1, %s271
      $region44: #{densenet_pallas.21} parent=35 // pred_fallthru
        _
      // Predicated region
      $region45: #{densenet_pallas.21} parent=35 // pred_check
        %p273 = pneg %p86
      $region46: #{densenet_pallas.21} parent=35 // pred_check_branch
        %275 = sbr.rel (%p273) target = $region48
      $region47: #{densenet_pallas.21} parent=35 // pred_region
        %p276 = scmp.lt.s32.totalorder %s14, 1
        %s277 = scalar_select %p276, %s14, 1
        %s278 = smul.addr %s277, 2
        %s279 = smul.addr %s278, 8
        %s280 = scalar_lea.vmem %s2, %s279
      $region48: #{densenet_pallas.21} parent=35 // pred_fallthru
        _
    $region36: #{densenet_pallas.21} parent=5 // pred_fallthru
      _
    %p281 = scmp.le.s32.totalorder 1, %s14
    %p282 = scmp.lt.s32.totalorder %s14, 3
    %p283 = pnand %p281, %p282
    %p284 = pneg %p283
    // Predicated region
    $region49: #{densenet_pallas.21} parent=5 // pred_check
      _
    $region50: #{densenet_pallas.21} parent=5 // pred_check_branch
      %286 = sbr.rel (%p283) target = $region52
    $region51: #{densenet_pallas.21} parent=5 // pred_region
      %s287 = ssub.s32 %s14, 1
      %p288 = scmp.lt.s32.totalorder %s19, 1
      %s289 = scalar_select %p288, %s19, 1
      %s290 = smul.addr %s289, 2
      %s291 = smul.addr %s290, 8
      %s292 = scalar_lea.vmem %s0, %s291
      %p293 = pneg %p40
      %p294 = pneg %p37
      %p295 = scmp.lt.s32.totalorder %s19, 1
      %s296 = scalar_select %p295, %s19, 1
      %s297 = smul.addr %s296, 2
      %s298 = smul.addr %s297, 8
      %s299 = scalar_lea.vmem %s1, %s298
      %p300 = pneg %p66
      %p301 = pneg %p63
      %p302 = scmp.lt.s32.totalorder %s19, 1
      %s303 = scalar_select %p302, %s19, 1
      %s304 = smul.addr %s303, 2
      %s305 = smul.addr %s304, 8
      %s306 = scalar_lea.vmem %s2, %s305
      %p307 = pneg %p92
      %p308 = pneg %p89
      %p309 = pneg %p113
      %p310 = pneg %p110
      %p311 = pneg %p134
      %p312 = pneg %p131
      %p313 = pneg %p155
      %p314 = pneg %p152
      %p315 = pneg %p176
      %p316 = pneg %p173
      %p317 = pneg %p197
      %p318 = pneg %p194
      %p319 = pneg %p223
      %p320 = pneg %p220
      %p321 = scmp.lt.s32.totalorder %s19, 1
      %s322 = scalar_select %p321, %s19, 1
      %s323 = smul.addr %s322, 2
      %s324 = smul.addr %s323, 8
      %s325 = scalar_lea.vmem %s8, %s324
      %p326 = scmp.lt.s32.totalorder %s19, 1
      %s327 = scalar_select %p326, %s19, 1
      %s328 = smul.addr %s327, 2
      %s329 = smul.addr %s328, 8
      %s330 = scalar_lea.vmem %s0, %s329
      %p331 = scmp.lt.s32.totalorder %s19, 1
      %s332 = scalar_select %p331, %s19, 1
      %s333 = smul.addr %s332, 2
      %s334 = smul.addr %s333, 8
      %s335 = scalar_lea.vmem %s1, %s334
      %p336 = scmp.lt.s32.totalorder %s19, 1
      %s337 = scalar_select %p336, %s19, 1
      %s338 = smul.addr %s337, 2
      %s339 = smul.addr %s338, 8
      %s340 = scalar_lea.vmem %s2, %s339
      %p341 = scmp.lt.s32.totalorder %s19, 1
      %s342 = scalar_select %p341, %s19, 1
      %s343 = smul.addr %s342, 2
      %s344 = smul.addr %s343, 8
      %s345 = scalar_lea.vmem %s8, %s344
      %v346 = vld [vmem:[%s330] sm:$0xff]
      %v347 = vld [vmem:[%s330 + $0x8] sm:$0xf]
      %v348 = vld [vmem:[%s4] sm:$0x1]
      %v350 = vperm.slane %v348, 0
      %v352 = vmul.f32 %v346, %v350
      %v353 = vmul.f32 %v347, %v350
      %v354 = vld [vmem:[%s5] sm:$0x1]
      %v356 = vperm.slane %v354, 0
      %v358 = vadd.f32 %v352, %v356
      %v359 = vadd.f32 %v353, %v356
      %v360 = vmax.f32 %v358, 0.0
      %v361 = vmax.f32 %v359, 0.0
      %v362 = vld [vmem:[%s3] sm:$0xff]
      %v363 = vld [vmem:[%s3 + $0x8] sm:$0xff]
      %v364 = vld [vmem:[%s3 + $0x10] sm:$0xff]
      %v365 = vld [vmem:[%s3 + $0x18] sm:$0xff]
      %v366 = vld [vmem:[%s3 + $0x20] sm:$0xff]
      %v367 = vld [vmem:[%s3 + $0x28] sm:$0xff]
      %v368 = vld [vmem:[%s3 + $0x30] sm:$0xff]
      %v369 = vld [vmem:[%s3 + $0x38] sm:$0xff]
      %v370 = vld [vmem:[%s335] sm:$0xff]
      %v371 = vld [vmem:[%s335 + $0x8] sm:$0xf]
      %372 = vrot.lane.b32.xlu0 %v350, 64
      %v373 = vpop.permute.xlu0 %372
      %v375 = vmul.f32 %v370, %v373
      %v376 = vmul.f32 %v371, %v373
      %377 = vrot.lane.b32.xlu0 %v356, 64
      %v378 = vpop.permute.xlu0 %377
      %v380 = vadd.f32 %v375, %v378
      %v381 = vadd.f32 %v376, %v378
      %v382 = vmax.f32 %v380, 0.0
      %v383 = vmax.f32 %v381, 0.0
      %v384 = vld [vmem:[%s3 + $0x40] sm:$0xff]
      %v385 = vld [vmem:[%s3 + $0x48] sm:$0xff]
      %v386 = vld [vmem:[%s3 + $0x50] sm:$0xff]
      %v387 = vld [vmem:[%s3 + $0x58] sm:$0xff]
      %vm388 = vcmask 261120
      %v390 = vsel %vm388, %v382, 0
      %v393 = vsel %vm388, %v383, 0
      %395 = vmatpush.msra.mxu0 0.0
      %396 = vmatpush.msra.mxu0 0.0
      %397 = vmatpush.msra.mxu0 0.0
      %398 = vmatpush.msra.mxu0 0.0
      %399 = vmatpush.msra.mxu0 0.0
      %400 = vmatpush.msra.mxu0 0.0
      %401 = vmatpush.msra.mxu0 0.0
      %402 = vmatpush.msra.mxu0 0.0
      %403 = vmatpush.msra.mxu0 0.0
      %404 = vmatpush.msra.mxu0 0.0
      %405 = vmatpush.msra.mxu0 0.0
      %406 = vmatpush.msra.mxu0 0.0
      %407 = vmatpush.msra.mxu0 %v387
      %408 = vmatpush.msra.mxu0 %v386
      %409 = vmatpush.msra.mxu0 %v385
      %410 = vmatpush.msra.mxu0 %v384
      %411 = vmatmul.f32.gmra.mxu0 %v390
      %v412 = vpop.f32.mrf.mxu0
      %v413 = vadd.f32 0.0, %v412
      %414 = vmatmul.f32.gmra.mxu0 %v393
      %v415 = vpop.f32.mrf.mxu0
      %v416 = vadd.f32 0.0, %v415
      %417 = vdwg.mxu0
      %vm418 = vcmask 523264
      %v420 = vsel %vm418, %v360, 0
      %v423 = vsel %vm418, %v361, 0
      %425 = vmatpush.msra.mxu0 0.0
      %426 = vmatpush.msra.mxu0 0.0
      %427 = vmatpush.msra.mxu0 0.0
      %428 = vmatpush.msra.mxu0 0.0
      %429 = vmatpush.msra.mxu0 0.0
      %430 = vmatpush.msra.mxu0 0.0
      %431 = vmatpush.msra.mxu0 0.0
      %432 = vmatpush.msra.mxu0 0.0
      %433 = vmatpush.msra.mxu0 %v369
      %434 = vmatpush.msra.mxu0 %v368
      %435 = vmatpush.msra.mxu0 %v367
      %436 = vmatpush.msra.mxu0 %v366
      %437 = vmatpush.msra.mxu0 %v365
      %438 = vmatpush.msra.mxu0 %v364
      %439 = vmatpush.msra.mxu0 %v363
      %440 = vmatpush.msra.mxu0 %v362
      %441 = vmatmul.f32.gmra.mxu0 %v420
      %v442 = vpop.f32.mrf.mxu0
      %v443 = vadd.f32 %v413, %v442
      %444 = vmatmul.f32.gmra.mxu0 %v423
      %v445 = vpop.f32.mrf.mxu0
      %v446 = vadd.f32 %v416, %v445
      %447 = vdwg.mxu0
      %v448 = vld [vmem:[%s340] sm:$0xff]
      %v449 = vld [vmem:[%s340 + $0x8] sm:$0xf]
      %450 = vrot.lane.b32.xlu0 %v350, 32
      %v451 = vpop.permute.xlu0 %450
      %v453 = vmul.f32 %v448, %v451
      %v454 = vmul.f32 %v449, %v451
      %455 = vrot.lane.b32.xlu0 %v356, 32
      %v456 = vpop.permute.xlu0 %455
      %v458 = vadd.f32 %v453, %v456
      %v459 = vadd.f32 %v454, %v456
      %v460 = vmax.f32 %v458, 0.0
      %v461 = vmax.f32 %v459, 0.0
      %v462 = vld [vmem:[%s3 + $0x60] sm:$0xff]
      %v463 = vld [vmem:[%s3 + $0x68] sm:$0xff]
      %v464 = vld [vmem:[%s3 + $0x70] sm:$0xff]
      %v465 = vld [vmem:[%s3 + $0x78] sm:$0xff]
      %v467 = vsel %vm388, %v460, 0
      %v470 = vsel %vm388, %v461, 0
      %472 = vmatpush.msra.mxu0 0.0
      %473 = vmatpush.msra.mxu0 0.0
      %474 = vmatpush.msra.mxu0 0.0
      %475 = vmatpush.msra.mxu0 0.0
      %476 = vmatpush.msra.mxu0 0.0
      %477 = vmatpush.msra.mxu0 0.0
      %478 = vmatpush.msra.mxu0 0.0
      %479 = vmatpush.msra.mxu0 0.0
      %480 = vmatpush.msra.mxu0 0.0
      %481 = vmatpush.msra.mxu0 0.0
      %482 = vmatpush.msra.mxu0 0.0
      %483 = vmatpush.msra.mxu0 0.0
      %484 = vmatpush.msra.mxu0 %v465
      %485 = vmatpush.msra.mxu0 %v464
      %486 = vmatpush.msra.mxu0 %v463
      %487 = vmatpush.msra.mxu0 %v462
      %488 = vmatmul.f32.gmra.mxu0 %v467
      %v489 = vpop.f32.mrf.mxu0
      %v490 = vadd.f32 0.0, %v489
      %491 = vmatmul.f32.gmra.mxu0 %v470
      %v492 = vpop.f32.mrf.mxu0
      %v493 = vadd.f32 0.0, %v492
      %494 = vdwg.mxu0
      %v495 = vadd.f32 %v443, %v490
      %v496 = vadd.f32 %v446, %v493
      %v497 = vld [vmem:[%s6] sm:$0x1]
      %v499 = vperm.slane %v497, 0
      %v501 = vmul.f32 %v495, %v499
      %v502 = vmul.f32 %v496, %v499
      %v503 = vld [vmem:[%s7] sm:$0x1]
      %v505 = vperm.slane %v503, 0
      %v507 = vadd.f32 %v501, %v505
      %v508 = vadd.f32 %v502, %v505
      %509 = vst.msk [vmem:[%s345] sm:$0xff] %vm418, %v507
      %vm510 = vcmask 519168
      %511 = vst.msk [vmem:[%s345 + $0x8] sm:$0xf] %vm510, %v508
      %p512 = scmp.lt.s32.totalorder %s19, 1
      %s513 = scalar_select %p512, %s19, 1
      %s514 = smul.addr %s513, 2
      %s515 = smul.addr %s514, 8
      %s516 = scalar_lea.vmem %s8, %s515
      // Predicated region
      $region53: #{densenet_pallas.21} parent=51 // pred_check
        %p517 = pneg %p220
      $region54: #{densenet_pallas.21} parent=51 // pred_check_branch
        %519 = sbr.rel (%p517) target = $region56
      $region55: #{densenet_pallas.21} parent=51 // pred_region
        _
      $region56: #{densenet_pallas.21} parent=51 // pred_fallthru
        _
    $region52: #{densenet_pallas.21} parent=5 // pred_fallthru
      _
    %p520 = scmp.le.s32.totalorder 2, %s14
    // Predicated region
    $region57: #{densenet_pallas.21} parent=5 // pred_check
      %p521 = pneg %p520
    $region58: #{densenet_pallas.21} parent=5 // pred_check_branch
      %523 = sbr.rel (%p521) target = $region60
    $region59: #{densenet_pallas.21} parent=5 // pred_region
      %s524 = ssub.s32 %s14, 2
      // Predicated region
      $region61: #{densenet_pallas.21} parent=59 // pred_check
        %p525 = pneg %p226
      $region62: #{densenet_pallas.21} parent=59 // pred_check_branch
        %527 = sbr.rel (%p525) target = $region64
      $region63: #{densenet_pallas.21} parent=59 // pred_region
        %p528 = scmp.lt.s32.totalorder %s20, 1
        %s529 = scalar_select %p528, %s20, 1
        %s530 = smul.addr %s529, 2
        %s531 = smul.addr %s530, 8
        %s532 = scalar_lea.vmem %s8, %s531
      $region64: #{densenet_pallas.21} parent=59 // pred_fallthru
        _
    $region60: #{densenet_pallas.21} parent=5 // pred_fallthru
      _
  $region6: #{densenet_pallas.21} parent=0 // loop_footer
    %s18 = sadd.s32 1, %s14
  $region7: #{densenet_pallas.21} parent=0 // loop_footer_branch
    %13 = sbr.rel target = $region3
  $region8: #{densenet_pallas.21} parent=0 // loop_exit
    _

// kernel: densenet_pallas.23
$region0: #{densenet_pallas.23}
  #allocation0 [shape = 'u32[]', space=smem, size = 0x4, offset = 0x4, fixed_abs, tag = 'smem constant byte address 0x4 - core index']
  #allocation1 [shape = 'u32[72,128]{1,0:T(1,128)}', space=vmem, size = 0x9000, scoped, tag = 'internal scratch']
  #allocation2 [shape = 'f32[27,128]{1,0:T(8,128)}', space=vmem, size = 0x4000, scoped, tag = 'scratch operand']
  %s0 = inlined_call_operand.vmem [shape: f32[2,7,64], index: 0, kind: input, shape index: {}]
  %s1 = inlined_call_operand.vmem [shape: f32[64,128], index: 1, kind: input, shape index: {}]
  %s2 = inlined_call_operand.vmem [shape: f32[1,64], index: 2, kind: input, shape index: {}]
  %s3 = inlined_call_operand.vmem [shape: f32[1,64], index: 3, kind: input, shape index: {}]
  %s4 = inlined_call_operand.vmem [shape: f32[1,128], index: 4, kind: input, shape index: {}]
  %s5 = inlined_call_operand.vmem [shape: f32[1,128], index: 5, kind: input, shape index: {}]
  %s6 = inlined_call_operand.vmem [shape: f32[128,288], index: 6, kind: input, shape index: {}]
  %s7 = inlined_call_operand.vmem [shape: f32[2,7,32], index: 7, kind: output, shape index: {}]
  %s8 = sld [smem:[#allocation0]]
  $region61: #{densenet_pallas.23} parent=0
    _
  %s10 = ssub.s32 1, %s8
  %s11 = scalar_select 0, %s10, %s8
  loop: start=0, step=1, limit=4
  $region2: #{densenet_pallas.23} parent=0 // loop_pre_header
    _
  $region3: #{densenet_pallas.23} parent=0 // loop_header
    %s13 = sphi 0, %s17
    %p14 = scmp.ge.s32.totalorder %s13, 4
    %s23 = sphi 0, %s25
    %s26 = sphi 0, %s23
    %s27 = sphi 0, %s26
    %s43 = sphi 0, %s27
    %s47 = sphi 0, %s47
    %s49 = sphi 0, %s47
    %s50 = sphi 0, %s49
    %s64 = sphi 0, %s50
    %s68 = sphi 0, %s68
    %s70 = sphi 0, %s68
    %s71 = sphi 0, %s70
    %s85 = sphi 0, %s71
    %s89 = sphi 0, %s89
    %s91 = sphi 0, %s89
    %s92 = sphi 0, %s91
    %s106 = sphi 0, %s92
    %s110 = sphi 0, %s110
    %s112 = sphi 0, %s110
    %s113 = sphi 0, %s112
    %s127 = sphi 0, %s113
    %s131 = sphi 0, %s131
    %s133 = sphi 0, %s131
    %s134 = sphi 0, %s133
    %s148 = sphi 0, %s134
    %s152 = sphi 0, %s152
    %s154 = sphi 0, %s152
    %s155 = sphi 0, %s154
    %s169 = sphi 0, %s155
    %s175 = sphi 0, %s177
    %s178 = sphi 0, %s175
    %s179 = sphi 0, %s178
    %s195 = sphi 0, %s179
  $region4: #{densenet_pallas.23} parent=0 // loop_header_branch
    %16 = sbr.rel (%p14) target = $region8
  $region5: #{densenet_pallas.23} parent=0 // loop_body
    %s18 = ssub.s32 %s13, 1
    %s19 = ssub.s32 %s13, 2
    %s20 = sadd.s32 %s13, 1
    %s21 = ssub.s32 %s13, %s20
    %p22 = scmp.eq.s32.totalorder %s21, 0
    %s24 = sadd.s32 %s23, 1
    %s25 = scalar_select %p22, %s23, %s24
    %p28 = pneg %p22
    %p29 = scmp.eq.s32.totalorder %s13, 1
    %p30 = por %p28, %p29
    %p31 = scmp.ne.s32.totalorder %s23, %s26
    %p32 = scmp.eq.s32.totalorder %s13, 0
    %p33 = por %p31, %p32
    %p34 = scmp.ne.s32.totalorder %s23, %s26
    %p35 = scmp.eq.s32.totalorder %s18, 1
    %p36 = por %p34, %p35
    %p37 = scmp.ne.s32.totalorder %s26, %s27
    %p38 = scmp.eq.s32.totalorder %s18, 0
    %p39 = por %p37, %p38
    %p40 = scmp.ne.s32.totalorder %s26, %s27
    %p41 = scmp.eq.s32.totalorder %s19, 1
    %p42 = por %p40, %p41
    %p44 = scmp.ne.s32.totalorder %s27, %s43
    %p45 = scmp.eq.s32.totalorder %s19, 0
    %p46 = por %p44, %p45
    %s48 = sadd.s32 %s47, 1
    %p51 = scmp.eq.s32.totalorder %s13, 1
    %p52 = scmp.ne.s32.totalorder %s47, %s49
    %p53 = scmp.eq.s32.totalorder %s13, 0
    %p54 = por %p52, %p53
    %p55 = scmp.ne.s32.totalorder %s47, %s49
    %p56 = scmp.eq.s32.totalorder %s18, 1
    %p57 = por %p55, %p56
    %p58 = scmp.ne.s32.totalorder %s49, %s50
    %p59 = scmp.eq.s32.totalorder %s18, 0
    %p60 = por %p58, %p59
    %p61 = scmp.ne.s32.totalorder %s49, %s50
    %p62 = scmp.eq.s32.totalorder %s19, 1
    %p63 = por %p61, %p62
    %p65 = scmp.ne.s32.totalorder %s50, %s64
    %p66 = scmp.eq.s32.totalorder %s19, 0
    %p67 = por %p65, %p66
    %s69 = sadd.s32 %s68, 1
    %p72 = scmp.eq.s32.totalorder %s13, 1
    %p73 = scmp.ne.s32.totalorder %s68, %s70
    %p74 = scmp.eq.s32.totalorder %s13, 0
    %p75 = por %p73, %p74
    %p76 = scmp.ne.s32.totalorder %s68, %s70
    %p77 = scmp.eq.s32.totalorder %s18, 1
    %p78 = por %p76, %p77
    %p79 = scmp.ne.s32.totalorder %s70, %s71
    %p80 = scmp.eq.s32.totalorder %s18, 0
    %p81 = por %p79, %p80
    %p82 = scmp.ne.s32.totalorder %s70, %s71
    %p83 = scmp.eq.s32.totalorder %s19, 1
    %p84 = por %p82, %p83
    %p86 = scmp.ne.s32.totalorder %s71, %s85
    %p87 = scmp.eq.s32.totalorder %s19, 0
    %p88 = por %p86, %p87
    %s90 = sadd.s32 %s89, 1
    %p93 = scmp.eq.s32.totalorder %s13, 1
    %p94 = scmp.ne.s32.totalorder %s89, %s91
    %p95 = scmp.eq.s32.totalorder %s13, 0
    %p96 = por %p94, %p95
    %p97 = scmp.ne.s32.totalorder %s89, %s91
    %p98 = scmp.eq.s32.totalorder %s18, 1
    %p99 = por %p97, %p98
    %p100 = scmp.ne.s32.totalorder %s91, %s92
    %p101 = scmp.eq.s32.totalorder %s18, 0
    %p102 = por %p100, %p101
    %p103 = scmp.ne.s32.totalorder %s91, %s92
    %p104 = scmp.eq.s32.totalorder %s19, 1
    %p105 = por %p103, %p104
    %p107 = scmp.ne.s32.totalorder %s92, %s106
    %p108 = scmp.eq.s32.totalorder %s19, 0
    %p109 = por %p107, %p108
    %s111 = sadd.s32 %s110, 1
    %p114 = scmp.eq.s32.totalorder %s13, 1
    %p115 = scmp.ne.s32.totalorder %s110, %s112
    %p116 = scmp.eq.s32.totalorder %s13, 0
    %p117 = por %p115, %p116
    %p118 = scmp.ne.s32.totalorder %s110, %s112
    %p119 = scmp.eq.s32.totalorder %s18, 1
    %p120 = por %p118, %p119
    %p121 = scmp.ne.s32.totalorder %s112, %s113
    %p122 = scmp.eq.s32.totalorder %s18, 0
    %p123 = por %p121, %p122
    %p124 = scmp.ne.s32.totalorder %s112, %s113
    %p125 = scmp.eq.s32.totalorder %s19, 1
    %p126 = por %p124, %p125
    %p128 = scmp.ne.s32.totalorder %s113, %s127
    %p129 = scmp.eq.s32.totalorder %s19, 0
    %p130 = por %p128, %p129
    %s132 = sadd.s32 %s131, 1
    %p135 = scmp.eq.s32.totalorder %s13, 1
    %p136 = scmp.ne.s32.totalorder %s131, %s133
    %p137 = scmp.eq.s32.totalorder %s13, 0
    %p138 = por %p136, %p137
    %p139 = scmp.ne.s32.totalorder %s131, %s133
    %p140 = scmp.eq.s32.totalorder %s18, 1
    %p141 = por %p139, %p140
    %p142 = scmp.ne.s32.totalorder %s133, %s134
    %p143 = scmp.eq.s32.totalorder %s18, 0
    %p144 = por %p142, %p143
    %p145 = scmp.ne.s32.totalorder %s133, %s134
    %p146 = scmp.eq.s32.totalorder %s19, 1
    %p147 = por %p145, %p146
    %p149 = scmp.ne.s32.totalorder %s134, %s148
    %p150 = scmp.eq.s32.totalorder %s19, 0
    %p151 = por %p149, %p150
    %s153 = sadd.s32 %s152, 1
    %p156 = scmp.eq.s32.totalorder %s13, 1
    %p157 = scmp.ne.s32.totalorder %s152, %s154
    %p158 = scmp.eq.s32.totalorder %s13, 0
    %p159 = por %p157, %p158
    %p160 = scmp.ne.s32.totalorder %s152, %s154
    %p161 = scmp.eq.s32.totalorder %s18, 1
    %p162 = por %p160, %p161
    %p163 = scmp.ne.s32.totalorder %s154, %s155
    %p164 = scmp.eq.s32.totalorder %s18, 0
    %p165 = por %p163, %p164
    %p166 = scmp.ne.s32.totalorder %s154, %s155
    %p167 = scmp.eq.s32.totalorder %s19, 1
    %p168 = por %p166, %p167
    %p170 = scmp.ne.s32.totalorder %s155, %s169
    %p171 = scmp.eq.s32.totalorder %s19, 0
    %p172 = por %p170, %p171
    %s173 = ssub.s32 %s13, %s20
    %p174 = scmp.eq.s32.totalorder %s173, 0
    %s176 = sadd.s32 %s175, 1
    %s177 = scalar_select %p174, %s175, %s176
    %p180 = pneg %p174
    %p181 = scmp.eq.s32.totalorder %s13, 1
    %p182 = por %p180, %p181
    %p183 = scmp.ne.s32.totalorder %s175, %s178
    %p184 = scmp.eq.s32.totalorder %s13, 0
    %p185 = por %p183, %p184
    %p186 = scmp.ne.s32.totalorder %s175, %s178
    %p187 = scmp.eq.s32.totalorder %s18, 1
    %p188 = por %p186, %p187
    %p189 = scmp.ne.s32.totalorder %s178, %s179
    %p190 = scmp.eq.s32.totalorder %s18, 0
    %p191 = por %p189, %p190
    %p192 = scmp.ne.s32.totalorder %s178, %s179
    %p193 = scmp.eq.s32.totalorder %s19, 1
    %p194 = por %p192, %p193
    %p196 = scmp.ne.s32.totalorder %s179, %s195
    %p197 = scmp.eq.s32.totalorder %s19, 0
    %p198 = por %p196, %p197
    %p199 = scmp.le.s32.totalorder 1, %s13
    %p200 = scmp.lt.s32.totalorder %s13, 3
    %p201 = pnand %p199, %p200
    %p202 = pneg %p201
    // Predicated region
    $region9: #{densenet_pallas.23} parent=5 // pred_check
      _
    $region10: #{densenet_pallas.23} parent=5 // pred_check_branch
      %204 = sbr.rel (%p201) target = $region12
    $region11: #{densenet_pallas.23} parent=5 // pred_region
      %s205 = ssub.s32 %s13, 1
      // Predicated region
      $region13: #{densenet_pallas.23} parent=11 // pred_check
        %p206 = pneg %p60
      $region14: #{densenet_pallas.23} parent=11 // pred_check_branch
        %208 = sbr.rel (%p206) target = $region16
      $region15: #{densenet_pallas.23} parent=11 // pred_region
        _
      $region16: #{densenet_pallas.23} parent=11 // pred_fallthru
        _
      // Predicated region
      $region17: #{densenet_pallas.23} parent=11 // pred_check
        %p209 = pneg %p81
      $region18: #{densenet_pallas.23} parent=11 // pred_check_branch
        %211 = sbr.rel (%p209) target = $region20
      $region19: #{densenet_pallas.23} parent=11 // pred_region
        _
      $region20: #{densenet_pallas.23} parent=11 // pred_fallthru
        _
      // Predicated region
      $region21: #{densenet_pallas.23} parent=11 // pred_check
        %p212 = pneg %p102
      $region22: #{densenet_pallas.23} parent=11 // pred_check_branch
        %214 = sbr.rel (%p212) target = $region24
      $region23: #{densenet_pallas.23} parent=11 // pred_region
        _
      $region24: #{densenet_pallas.23} parent=11 // pred_fallthru
        _
      // Predicated region
      $region25: #{densenet_pallas.23} parent=11 // pred_check
        %p215 = pneg %p123
      $region26: #{densenet_pallas.23} parent=11 // pred_check_branch
        %217 = sbr.rel (%p215) target = $region28
      $region27: #{densenet_pallas.23} parent=11 // pred_region
        _
      $region28: #{densenet_pallas.23} parent=11 // pred_fallthru
        _
      // Predicated region
      $region29: #{densenet_pallas.23} parent=11 // pred_check
        %p218 = pneg %p144
      $region30: #{densenet_pallas.23} parent=11 // pred_check_branch
        %220 = sbr.rel (%p218) target = $region32
      $region31: #{densenet_pallas.23} parent=11 // pred_region
        _
      $region32: #{densenet_pallas.23} parent=11 // pred_fallthru
        _
      // Predicated region
      $region33: #{densenet_pallas.23} parent=11 // pred_check
        %p221 = pneg %p165
      $region34: #{densenet_pallas.23} parent=11 // pred_check_branch
        %223 = sbr.rel (%p221) target = $region36
      $region35: #{densenet_pallas.23} parent=11 // pred_region
        _
      $region36: #{densenet_pallas.23} parent=11 // pred_fallthru
        _
    $region12: #{densenet_pallas.23} parent=5 // pred_fallthru
      _
    %p224 = scmp.lt.s32.totalorder %s13, 2
    // Predicated region
    $region37: #{densenet_pallas.23} parent=5 // pred_check
      %p225 = pneg %p224
    $region38: #{densenet_pallas.23} parent=5 // pred_check_branch
      %227 = sbr.rel (%p225) target = $region40
    $region39: #{densenet_pallas.23} parent=5 // pred_region
      // Predicated region
      $region41: #{densenet_pallas.23} parent=39 // pred_check
        %p228 = pneg %p33
      $region42: #{densenet_pallas.23} parent=39 // pred_check_branch
        %230 = sbr.rel (%p228) target = $region44
      $region43: #{densenet_pallas.23} parent=39 // pred_region
        %p231 = scmp.lt.s32.totalorder %s13, 1
        %s232 = scalar_select %p231, %s13, 1
        %s233 = smul.addr %s232, 8
        %s234 = scalar_lea.vmem %s0, %s233
      $region44: #{densenet_pallas.23} parent=39 // pred_fallthru
        _
    $region40: #{densenet_pallas.23} parent=5 // pred_fallthru
      _
    %p235 = scmp.le.s32.totalorder 1, %s13
    %p236 = scmp.lt.s32.totalorder %s13, 3
    %p237 = pnand %p235, %p236
    %p238 = pneg %p237
    // Predicated region
    $region45: #{densenet_pallas.23} parent=5 // pred_check
      _
    $region46: #{densenet_pallas.23} parent=5 // pred_check_branch
      %240 = sbr.rel (%p237) target = $region48
    $region47: #{densenet_pallas.23} parent=5 // pred_region
      %s241 = ssub.s32 %s13, 1
      %p242 = scmp.lt.s32.totalorder %s18, 1
      %s243 = scalar_select %p242, %s18, 1
      %s244 = smul.addr %s243, 8
      %s245 = scalar_lea.vmem %s0, %s244
      %p246 = pneg %p39
      %p247 = pneg %p36
      %p248 = pneg %p60
      %p249 = pneg %p57
      %p250 = pneg %p81
      %p251 = pneg %p78
      %p252 = pneg %p102
      %p253 = pneg %p99
      %p254 = pneg %p123
      %p255 = pneg %p120
      %p256 = pneg %p144
      %p257 = pneg %p141
      %p258 = pneg %p165
      %p259 = pneg %p162
      %p260 = pneg %p191
      %p261 = pneg %p188
      %p262 = scmp.lt.s32.totalorder %s18, 1
      %s263 = scalar_select %p262, %s18, 1
      %s264 = smul.addr %s263, 8
      %s265 = scalar_lea.vmem %s7, %s264
      %p266 = scmp.lt.s32.totalorder %s18, 1
      %s267 = scalar_select %p266, %s18, 1
      %s268 = smul.addr %s267, 8
      %s269 = scalar_lea.vmem %s0, %s268
      %p270 = scmp.lt.s32.totalorder %s18, 1
      %s271 = scalar_select %p270, %s18, 1
      %s272 = smul.addr %s271, 8
      %s273 = scalar_lea.vmem %s7, %s272
      %v274 = vld [vmem:[%s269] sm:$0x7f]
      %v275 = vld [vmem:[%s2] sm:$0x1]
      %v277 = vperm.slane %v275, 0
      %v279 = vmul.f32 %v274, %v277
      %v280 = vld [vmem:[%s3] sm:$0x1]
      %v282 = vperm.slane %v280, 0
      %v284 = vadd.f32 %v279, %v282
      %v285 = vmax.f32 %v284, 0.0
      %v286 = vld [vmem:[%s1] sm:$0xff]
      %v287 = vld [vmem:[%s1 + $0x8] sm:$0xff]
      %v288 = vld [vmem:[%s1 + $0x10] sm:$0xff]
      %v289 = vld [vmem:[%s1 + $0x18] sm:$0xff]
      %v290 = vld [vmem:[%s1 + $0x20] sm:$0xff]
      %v291 = vld [vmem:[%s1 + $0x28] sm:$0xff]
      %v292 = vld [vmem:[%s1 + $0x30] sm:$0xff]
      %v293 = vld [vmem:[%s1 + $0x38] sm:$0xff]
      %vm294 = vcmask 523264
      %v296 = vsel %vm294, %v285, 0
      %298 = vmatpush.msra.mxu0 0.0
      %299 = vmatpush.msra.mxu0 0.0
      %300 = vmatpush.msra.mxu0 0.0
      %301 = vmatpush.msra.mxu0 0.0
      %302 = vmatpush.msra.mxu0 0.0
      %303 = vmatpush.msra.mxu0 0.0
      %304 = vmatpush.msra.mxu0 0.0
      %305 = vmatpush.msra.mxu0 0.0
      %306 = vmatpush.msra.mxu0 %v293
      %307 = vmatpush.msra.mxu0 %v292
      %308 = vmatpush.msra.mxu0 %v291
      %309 = vmatpush.msra.mxu0 %v290
      %310 = vmatpush.msra.mxu0 %v289
      %311 = vmatpush.msra.mxu0 %v288
      %312 = vmatpush.msra.mxu0 %v287
      %313 = vmatpush.msra.mxu0 %v286
      %314 = vmatmul.f32.gmra.mxu0 %v296
      %v315 = vpop.f32.mrf.mxu0
      %v316 = vadd.f32 0.0, %v315
      %317 = vdwg.mxu0
      %v318 = vld [vmem:[%s4] sm:$0x1]
      %v320 = vperm.slane %v318, 0
      %v322 = vmul.f32 %v316, %v320
      %v323 = vld [vmem:[%s5] sm:$0x1]
      %v325 = vperm.slane %v323, 0
      %v327 = vadd.f32 %v322, %v325
      %v328 = vmax.f32 %v327, 0.0
      %329 = vst [vmem:[#allocation2] sm:$0xff] 0.0
      %330 = vst [vmem:[#allocation2 + $0x8] sm:$0x3] 0.0
      %331 = vst [vmem:[#allocation2 + $0x11] sm:$0xff] 0.0
      %332 = vst [vmem:[#allocation2 + $0x19] sm:$0x3] 0.0
      %333 = vst [vmem:[#allocation2 + $0xa] sm:$0x7f] %v328
      %v334 = vld [vmem:[#allocation2] sm:$0xff]
      %v335 = vld [vmem:[#allocation2 + $0x8] sm:$0xff]
      %v336 = vld [vmem:[#allocation2 + $0x10] sm:$0xff]
      %v337 = vld [vmem:[#allocation2 + $0x18] sm:$0x7]
      %v338 = vld [vmem:[%s6] sm:$0xff]
      %v339 = vld [vmem:[%s6 + $0x8] sm:$0xff]
      %v340 = vld [vmem:[%s6 + $0x10] sm:$0xff]
      %v341 = vld [vmem:[%s6 + $0x18] sm:$0xff]
      %v342 = vld [vmem:[%s6 + $0x20] sm:$0xff]
      %v343 = vld [vmem:[%s6 + $0x28] sm:$0xff]
      %v344 = vld [vmem:[%s6 + $0x30] sm:$0xff]
      %v345 = vld [vmem:[%s6 + $0x38] sm:$0xff]
      %v346 = vld [vmem:[%s6 + $0x40] sm:$0xff]
      %v347 = vld [vmem:[%s6 + $0x48] sm:$0xff]
      %v348 = vld [vmem:[%s6 + $0x50] sm:$0xff]
      %v349 = vld [vmem:[%s6 + $0x58] sm:$0xff]
      %v350 = vld [vmem:[%s6 + $0x60] sm:$0xff]
      %v351 = vld [vmem:[%s6 + $0x68] sm:$0xff]
      %v352 = vld [vmem:[%s6 + $0x70] sm:$0xff]
      %v353 = vld [vmem:[%s6 + $0x78] sm:$0xff]
      %v354 = vld [vmem:[%s6 + $0x80] sm:$0xff]
      %v355 = vld [vmem:[%s6 + $0x88] sm:$0xff]
      %v356 = vld [vmem:[%s6 + $0x90] sm:$0xff]
      %v357 = vld [vmem:[%s6 + $0x98] sm:$0xff]
      %v358 = vld [vmem:[%s6 + $0xa0] sm:$0xff]
      %v359 = vld [vmem:[%s6 + $0xa8] sm:$0xff]
      %v360 = vld [vmem:[%s6 + $0xb0] sm:$0xff]
      %v361 = vld [vmem:[%s6 + $0xb8] sm:$0xff]
      %v362 = vld [vmem:[%s6 + $0xc0] sm:$0xff]
      %v363 = vld [vmem:[%s6 + $0xc8] sm:$0xff]
      %v364 = vld [vmem:[%s6 + $0xd0] sm:$0xff]
      %v365 = vld [vmem:[%s6 + $0xd8] sm:$0xff]
      %v366 = vld [vmem:[%s6 + $0xe0] sm:$0xff]
      %v367 = vld [vmem:[%s6 + $0xe8] sm:$0xff]
      %v368 = vld [vmem:[%s6 + $0xf0] sm:$0xff]
      %v369 = vld [vmem:[%s6 + $0xf8] sm:$0xff]
      %v370 = vld [vmem:[%s6 + $0x100] sm:$0xff]
      %v371 = vld [vmem:[%s6 + $0x108] sm:$0xff]
      %v372 = vld [vmem:[%s6 + $0x110] sm:$0xff]
      %v373 = vld [vmem:[%s6 + $0x118] sm:$0xff]
      %v374 = vld [vmem:[%s6 + $0x120] sm:$0xff]
      %v375 = vld [vmem:[%s6 + $0x128] sm:$0xff]
      %v376 = vld [vmem:[%s6 + $0x130] sm:$0xff]
      %v377 = vld [vmem:[%s6 + $0x138] sm:$0xff]
      %v378 = vld [vmem:[%s6 + $0x140] sm:$0xff]
      %v379 = vld [vmem:[%s6 + $0x148] sm:$0xff]
      %v380 = vld [vmem:[%s6 + $0x150] sm:$0xff]
      %v381 = vld [vmem:[%s6 + $0x158] sm:$0xff]
      %v382 = vld [vmem:[%s6 + $0x160] sm:$0xff]
      %v383 = vld [vmem:[%s6 + $0x168] sm:$0xff]
      %v384 = vld [vmem:[%s6 + $0x170] sm:$0xff]
      %v385 = vld [vmem:[%s6 + $0x178] sm:$0xff]
      %386 = vmatpush.msra.mxu0 %v383
      %387 = vmatpush.msra.mxu0 %v380
      %388 = vmatpush.msra.mxu0 %v377
      %389 = vmatpush.msra.mxu0 %v374
      %390 = vmatpush.msra.mxu0 %v371
      %391 = vmatpush.msra.mxu0 %v368
      %392 = vmatpush.msra.mxu0 %v365
      %393 = vmatpush.msra.mxu0 %v362
      %394 = vmatpush.msra.mxu0 %v359
      %395 = vmatpush.msra.mxu0 %v356
      %396 = vmatpush.msra.mxu0 %v353
      %397 = vmatpush.msra.mxu0 %v350
      %398 = vmatpush.msra.mxu0 %v347
      %399 = vmatpush.msra.mxu0 %v344
      %400 = vmatpush.msra.mxu0 %v341
      %401 = vmatpush.msra.mxu0 %v338
      %402 = vmatmul.f32.gmra.mxu0 %v334
      %v403 = vpop.f32.mrf.mxu0
      %v404 = vadd.f32 0.0, %v403
      %405 = vmatmul.f32.gmra.mxu0 %v335
      %v406 = vpop.f32.mrf.mxu0
      %v407 = vadd.f32 0.0, %v406
      %408 = vmatmul.f32.gmra.mxu0 %v336
      %v409 = vpop.f32.mrf.mxu0
      %410 = vmatmul.f32.gmra.mxu0 %v337
      %v411 = vpop.f32.mrf.mxu0
      %412 = vdwg.mxu0
      %413 = vmatpush.msra.mxu0 %v384
      %414 = vmatpush.msra.mxu0 %v381
      %415 = vmatpush.msra.mxu0 %v378
      %416 = vmatpush.msra.mxu0 %v375
      %417 = vmatpush.msra.mxu0 %v372
      %418 = vmatpush.msra.mxu0 %v369
      %419 = vmatpush.msra.mxu0 %v366
      %420 = vmatpush.msra.mxu0 %v363
      %421 = vmatpush.msra.mxu0 %v360
      %422 = vmatpush.msra.mxu0 %v357
      %423 = vmatpush.msra.mxu0 %v354
      %424 = vmatpush.msra.mxu0 %v351
      %425 = vmatpush.msra.mxu0 %v348
      %426 = vmatpush.msra.mxu0 %v345
      %427 = vmatpush.msra.mxu0 %v342
      %428 = vmatpush.msra.mxu0 %v339
      %429 = vmatmul.f32.gmra.mxu0 %v334
      %v430 = vpop.f32.mrf.mxu0
      %431 = vmatmul.f32.gmra.mxu0 %v335
      %v432 = vpop.f32.mrf.mxu0
      %v433 = vadd.f32 0.0, %v432
      %434 = vmatmul.f32.gmra.mxu0 %v336
      %v435 = vpop.f32.mrf.mxu0
      %v436 = vadd.f32 0.0, %v435
      %437 = vmatmul.f32.gmra.mxu0 %v337
      %v438 = vpop.f32.mrf.mxu0
      %v439 = vadd.f32 0.0, %v438
      %440 = vdwg.mxu0
      %441 = vmatpush.msra.mxu0 %v385
      %442 = vmatpush.msra.mxu0 %v382
      %443 = vmatpush.msra.mxu0 %v379
      %444 = vmatpush.msra.mxu0 %v376
      %445 = vmatpush.msra.mxu0 %v373
      %446 = vmatpush.msra.mxu0 %v370
      %447 = vmatpush.msra.mxu0 %v367
      %448 = vmatpush.msra.mxu0 %v364
      %449 = vmatpush.msra.mxu0 %v361
      %450 = vmatpush.msra.mxu0 %v358
      %451 = vmatpush.msra.mxu0 %v355
      %452 = vmatpush.msra.mxu0 %v352
      %453 = vmatpush.msra.mxu0 %v349
      %454 = vmatpush.msra.mxu0 %v346
      %455 = vmatpush.msra.mxu0 %v343
      %456 = vmatpush.msra.mxu0 %v340
      %457 = vmatmul.f32.gmra.mxu0 %v334
      %v458 = vpop.f32.mrf.mxu0
      %459 = vmatmul.f32.gmra.mxu0 %v335
      %v460 = vpop.f32.mrf.mxu0
      %461 = vmatmul.f32.gmra.mxu0 %v336
      %v462 = vpop.f32.mrf.mxu0
      %v463 = vadd.f32 0.0, %v462
      %464 = vmatmul.f32.gmra.mxu0 %v337
      %v465 = vpop.f32.mrf.mxu0
      %v466 = vadd.f32 0.0, %v465
      %467 = vdwg.mxu0
      %v469 = vrot.slane %v404, 1
      %470 = vrot.lane.b32.xlu0 %v469, 96
      %v471 = vpop.permute.xlu0 %470
      %v473 = vadd.f32 %v404, %v471
      %vm475 = vcmask 1045504
      %v476 = vrot.slane %v404, 2
      %v477 = vrot.slane %v407, 2
      %v478 = vsel %vm475, %v476, %v477
      %479 = vrot.lane.b32.xlu0 %v478, 64
      %v480 = vpop.permute.xlu0 %479
      %v482 = vadd.f32 %v473, %v480
      %v483 = vrot.slane %v407, 1
      %484 = vrot.lane.b32.xlu0 %v483, 32
      %v485 = vpop.permute.xlu0 %484
      %v487 = vadd.f32 %v482, %v485
      %v490 = vrot.slane %v433, 2
      %v491 = vrot.slane %v436, 2
      %v492 = vsel %vm475, %v490, %v491
      %v494 = vadd.f32 %v487, %v492
      %vm495 = vcmask 1044480
      %v496 = vrot.slane %v433, 3
      %v497 = vrot.slane %v436, 3
      %v498 = vsel %vm495, %v496, %v497
      %499 = vrot.lane.b32.xlu0 %v498, 96
      %v500 = vpop.permute.xlu0 %499
      %v502 = vadd.f32 %v494, %v500
      %v504 = vrot.slane %v439, 2
      %v505 = vsel %vm475, %v491, %v504
      %506 = vrot.lane.b32.xlu0 %v505, 64
      %v507 = vpop.permute.xlu0 %506
      %v509 = vadd.f32 %v502, %v507
      %v510 = vrot.slane %v439, 3
      %v511 = vsel %vm495, %v497, %v510
      %512 = vrot.lane.b32.xlu0 %v511, 32
      %v513 = vpop.permute.xlu0 %512
      %v515 = vadd.f32 %v509, %v513
      %vm518 = vcmask 1043456
      %v519 = vrot.slane %v463, 4
      %v520 = vrot.slane %v466, 4
      %v521 = vsel %vm518, %v519, %v520
      %v523 = vadd.f32 %v515, %v521
      %vm524 = vcmask 260096
      %525 = vst.msk [vmem:[%s273] sm:$0x7f] %vm524, %v523
      %p526 = scmp.lt.s32.totalorder %s18, 1
      %s527 = scalar_select %p526, %s18, 1
      %s528 = smul.addr %s527, 8
      %s529 = scalar_lea.vmem %s7, %s528
      // Predicated region
      $region49: #{densenet_pallas.23} parent=47 // pred_check
        %p530 = pneg %p188
      $region50: #{densenet_pallas.23} parent=47 // pred_check_branch
        %532 = sbr.rel (%p530) target = $region52
      $region51: #{densenet_pallas.23} parent=47 // pred_region
        _
      $region52: #{densenet_pallas.23} parent=47 // pred_fallthru
        _
    $region48: #{densenet_pallas.23} parent=5 // pred_fallthru
      _
    %p533 = scmp.le.s32.totalorder 2, %s13
    // Predicated region
    $region53: #{densenet_pallas.23} parent=5 // pred_check
      %p534 = pneg %p533
    $region54: #{densenet_pallas.23} parent=5 // pred_check_branch
      %536 = sbr.rel (%p534) target = $region56
    $region55: #{densenet_pallas.23} parent=5 // pred_region
      %s537 = ssub.s32 %s13, 2
      // Predicated region
      $region57: #{densenet_pallas.23} parent=55 // pred_check
        %p538 = pneg %p194
      $region58: #{densenet_pallas.23} parent=55 // pred_check_branch
        %540 = sbr.rel (%p538) target = $region60
      $region59: #{densenet_pallas.23} parent=55 // pred_region
        %p541 = scmp.lt.s32.totalorder %s19, 1
        %s542 = scalar_select %p541, %s19, 1
        %s543 = smul.addr %s542, 8
        %s544 = scalar_lea.vmem %s7, %s543
      $region60: #{densenet_pallas.23} parent=55 // pred_fallthru
        _
    $region56: #{densenet_pallas.23} parent=5 // pred_fallthru
      _
  $region6: #{densenet_pallas.23} parent=0 // loop_footer
    %s17 = sadd.s32 1, %s13
  $region7: #{densenet_pallas.23} parent=0 // loop_footer_branch
    %12 = sbr.rel target = $region3
  $region8: #{densenet_pallas.23} parent=0 // loop_exit
    _

// kernel: densenet_pallas.25
$region0: #{densenet_pallas.25}
  #allocation0 [shape = 'u32[]', space=smem, size = 0x4, offset = 0x4, fixed_abs, tag = 'smem constant byte address 0x4 - core index']
  #allocation1 [shape = 'u32[72,128]{1,0:T(1,128)}', space=vmem, size = 0x9000, scoped, tag = 'internal scratch']
  %s0 = inlined_call_operand.vmem [shape: f32[2,7,64], index: 0, kind: input, shape index: {}]
  %s1 = inlined_call_operand.vmem [shape: f32[2,7,32], index: 1, kind: input, shape index: {}]
  %s2 = inlined_call_operand.vmem [shape: f32[2,7,32], index: 2, kind: input, shape index: {}]
  %s3 = inlined_call_operand.vmem [shape: f32[1,128], index: 3, kind: input, shape index: {}]
  %s4 = inlined_call_operand.vmem [shape: f32[1,128], index: 4, kind: input, shape index: {}]
  %s5 = inlined_call_operand.vmem [shape: f32[2,7,128], index: 5, kind: output, shape index: {}]
  %s6 = sld [smem:[#allocation0]]
  $region53: #{densenet_pallas.25} parent=0
    _
  %s8 = ssub.s32 1, %s6
  %s9 = scalar_select 0, %s8, %s6
  loop: start=0, step=1, limit=4
  $region2: #{densenet_pallas.25} parent=0 // loop_pre_header
    _
  $region3: #{densenet_pallas.25} parent=0 // loop_header
    %s11 = sphi 0, %s15
    %p12 = scmp.ge.s32.totalorder %s11, 4
    %s21 = sphi 0, %s23
    %s24 = sphi 0, %s21
    %s25 = sphi 0, %s24
    %s41 = sphi 0, %s25
    %s47 = sphi 0, %s49
    %s50 = sphi 0, %s47
    %s51 = sphi 0, %s50
    %s67 = sphi 0, %s51
    %s73 = sphi 0, %s75
    %s76 = sphi 0, %s73
    %s77 = sphi 0, %s76
    %s93 = sphi 0, %s77
    %s97 = sphi 0, %s97
    %s99 = sphi 0, %s97
    %s100 = sphi 0, %s99
    %s114 = sphi 0, %s100
    %s118 = sphi 0, %s118
    %s120 = sphi 0, %s118
    %s121 = sphi 0, %s120
    %s135 = sphi 0, %s121
    %s141 = sphi 0, %s143
    %s144 = sphi 0, %s141
    %s145 = sphi 0, %s144
    %s161 = sphi 0, %s145
  $region4: #{densenet_pallas.25} parent=0 // loop_header_branch
    %14 = sbr.rel (%p12) target = $region8
  $region5: #{densenet_pallas.25} parent=0 // loop_body
    %s16 = ssub.s32 %s11, 1
    %s17 = ssub.s32 %s11, 2
    %s18 = sadd.s32 %s11, 1
    %s19 = ssub.s32 %s11, %s18
    %p20 = scmp.eq.s32.totalorder %s19, 0
    %s22 = sadd.s32 %s21, 1
    %s23 = scalar_select %p20, %s21, %s22
    %p26 = pneg %p20
    %p27 = scmp.eq.s32.totalorder %s11, 1
    %p28 = por %p26, %p27
    %p29 = scmp.ne.s32.totalorder %s21, %s24
    %p30 = scmp.eq.s32.totalorder %s11, 0
    %p31 = por %p29, %p30
    %p32 = scmp.ne.s32.totalorder %s21, %s24
    %p33 = scmp.eq.s32.totalorder %s16, 1
    %p34 = por %p32, %p33
    %p35 = scmp.ne.s32.totalorder %s24, %s25
    %p36 = scmp.eq.s32.totalorder %s16, 0
    %p37 = por %p35, %p36
    %p38 = scmp.ne.s32.totalorder %s24, %s25
    %p39 = scmp.eq.s32.totalorder %s17, 1
    %p40 = por %p38, %p39
    %p42 = scmp.ne.s32.totalorder %s25, %s41
    %p43 = scmp.eq.s32.totalorder %s17, 0
    %p44 = por %p42, %p43
    %s45 = ssub.s32 %s11, %s18
    %p46 = scmp.eq.s32.totalorder %s45, 0
    %s48 = sadd.s32 %s47, 1
    %s49 = scalar_select %p46, %s47, %s48
    %p52 = pneg %p46
    %p53 = scmp.eq.s32.totalorder %s11, 1
    %p54 = por %p52, %p53
    %p55 = scmp.ne.s32.totalorder %s47, %s50
    %p56 = scmp.eq.s32.totalorder %s11, 0
    %p57 = por %p55, %p56
    %p58 = scmp.ne.s32.totalorder %s47, %s50
    %p59 = scmp.eq.s32.totalorder %s16, 1
    %p60 = por %p58, %p59
    %p61 = scmp.ne.s32.totalorder %s50, %s51
    %p62 = scmp.eq.s32.totalorder %s16, 0
    %p63 = por %p61, %p62
    %p64 = scmp.ne.s32.totalorder %s50, %s51
    %p65 = scmp.eq.s32.totalorder %s17, 1
    %p66 = por %p64, %p65
    %p68 = scmp.ne.s32.totalorder %s51, %s67
    %p69 = scmp.eq.s32.totalorder %s17, 0
    %p70 = por %p68, %p69
    %s71 = ssub.s32 %s11, %s18
    %p72 = scmp.eq.s32.totalorder %s71, 0
    %s74 = sadd.s32 %s73, 1
    %s75 = scalar_select %p72, %s73, %s74
    %p78 = pneg %p72
    %p79 = scmp.eq.s32.totalorder %s11, 1
    %p80 = por %p78, %p79
    %p81 = scmp.ne.s32.totalorder %s73, %s76
    %p82 = scmp.eq.s32.totalorder %s11, 0
    %p83 = por %p81, %p82
    %p84 = scmp.ne.s32.totalorder %s73, %s76
    %p85 = scmp.eq.s32.totalorder %s16, 1
    %p86 = por %p84, %p85
    %p87 = scmp.ne.s32.totalorder %s76, %s77
    %p88 = scmp.eq.s32.totalorder %s16, 0
    %p89 = por %p87, %p88
    %p90 = scmp.ne.s32.totalorder %s76, %s77
    %p91 = scmp.eq.s32.totalorder %s17, 1
    %p92 = por %p90, %p91
    %p94 = scmp.ne.s32.totalorder %s77, %s93
    %p95 = scmp.eq.s32.totalorder %s17, 0
    %p96 = por %p94, %p95
    %s98 = sadd.s32 %s97, 1
    %p101 = scmp.eq.s32.totalorder %s11, 1
    %p102 = scmp.ne.s32.totalorder %s97, %s99
    %p103 = scmp.eq.s32.totalorder %s11, 0
    %p104 = por %p102, %p103
    %p105 = scmp.ne.s32.totalorder %s97, %s99
    %p106 = scmp.eq.s32.totalorder %s16, 1
    %p107 = por %p105, %p106
    %p108 = scmp.ne.s32.totalorder %s99, %s100
    %p109 = scmp.eq.s32.totalorder %s16, 0
    %p110 = por %p108, %p109
    %p111 = scmp.ne.s32.totalorder %s99, %s100
    %p112 = scmp.eq.s32.totalorder %s17, 1
    %p113 = por %p111, %p112
    %p115 = scmp.ne.s32.totalorder %s100, %s114
    %p116 = scmp.eq.s32.totalorder %s17, 0
    %p117 = por %p115, %p116
    %s119 = sadd.s32 %s118, 1
    %p122 = scmp.eq.s32.totalorder %s11, 1
    %p123 = scmp.ne.s32.totalorder %s118, %s120
    %p124 = scmp.eq.s32.totalorder %s11, 0
    %p125 = por %p123, %p124
    %p126 = scmp.ne.s32.totalorder %s118, %s120
    %p127 = scmp.eq.s32.totalorder %s16, 1
    %p128 = por %p126, %p127
    %p129 = scmp.ne.s32.totalorder %s120, %s121
    %p130 = scmp.eq.s32.totalorder %s16, 0
    %p131 = por %p129, %p130
    %p132 = scmp.ne.s32.totalorder %s120, %s121
    %p133 = scmp.eq.s32.totalorder %s17, 1
    %p134 = por %p132, %p133
    %p136 = scmp.ne.s32.totalorder %s121, %s135
    %p137 = scmp.eq.s32.totalorder %s17, 0
    %p138 = por %p136, %p137
    %s139 = ssub.s32 %s11, %s18
    %p140 = scmp.eq.s32.totalorder %s139, 0
    %s142 = sadd.s32 %s141, 1
    %s143 = scalar_select %p140, %s141, %s142
    %p146 = pneg %p140
    %p147 = scmp.eq.s32.totalorder %s11, 1
    %p148 = por %p146, %p147
    %p149 = scmp.ne.s32.totalorder %s141, %s144
    %p150 = scmp.eq.s32.totalorder %s11, 0
    %p151 = por %p149, %p150
    %p152 = scmp.ne.s32.totalorder %s141, %s144
    %p153 = scmp.eq.s32.totalorder %s16, 1
    %p154 = por %p152, %p153
    %p155 = scmp.ne.s32.totalorder %s144, %s145
    %p156 = scmp.eq.s32.totalorder %s16, 0
    %p157 = por %p155, %p156
    %p158 = scmp.ne.s32.totalorder %s144, %s145
    %p159 = scmp.eq.s32.totalorder %s17, 1
    %p160 = por %p158, %p159
    %p162 = scmp.ne.s32.totalorder %s145, %s161
    %p163 = scmp.eq.s32.totalorder %s17, 0
    %p164 = por %p162, %p163
    %p165 = scmp.le.s32.totalorder 1, %s11
    %p166 = scmp.lt.s32.totalorder %s11, 3
    %p167 = pnand %p165, %p166
    %p168 = pneg %p167
    // Predicated region
    $region9: #{densenet_pallas.25} parent=5 // pred_check
      _
    $region10: #{densenet_pallas.25} parent=5 // pred_check_branch
      %170 = sbr.rel (%p167) target = $region12
    $region11: #{densenet_pallas.25} parent=5 // pred_region
      %s171 = ssub.s32 %s11, 1
      // Predicated region
      $region13: #{densenet_pallas.25} parent=11 // pred_check
        %p172 = pneg %p110
      $region14: #{densenet_pallas.25} parent=11 // pred_check_branch
        %174 = sbr.rel (%p172) target = $region16
      $region15: #{densenet_pallas.25} parent=11 // pred_region
        _
      $region16: #{densenet_pallas.25} parent=11 // pred_fallthru
        _
      // Predicated region
      $region17: #{densenet_pallas.25} parent=11 // pred_check
        %p175 = pneg %p131
      $region18: #{densenet_pallas.25} parent=11 // pred_check_branch
        %177 = sbr.rel (%p175) target = $region20
      $region19: #{densenet_pallas.25} parent=11 // pred_region
        _
      $region20: #{densenet_pallas.25} parent=11 // pred_fallthru
        _
    $region12: #{densenet_pallas.25} parent=5 // pred_fallthru
      _
    %p178 = scmp.lt.s32.totalorder %s11, 2
    // Predicated region
    $region21: #{densenet_pallas.25} parent=5 // pred_check
      %p179 = pneg %p178
    $region22: #{densenet_pallas.25} parent=5 // pred_check_branch
      %181 = sbr.rel (%p179) target = $region24
    $region23: #{densenet_pallas.25} parent=5 // pred_region
      // Predicated region
      $region25: #{densenet_pallas.25} parent=23 // pred_check
        %p182 = pneg %p31
      $region26: #{densenet_pallas.25} parent=23 // pred_check_branch
        %184 = sbr.rel (%p182) target = $region28
      $region27: #{densenet_pallas.25} parent=23 // pred_region
        %p185 = scmp.lt.s32.totalorder %s11, 1
        %s186 = scalar_select %p185, %s11, 1
        %s187 = smul.addr %s186, 8
        %s188 = scalar_lea.vmem %s0, %s187
      $region28: #{densenet_pallas.25} parent=23 // pred_fallthru
        _
      // Predicated region
      $region29: #{densenet_pallas.25} parent=23 // pred_check
        %p189 = pneg %p57
      $region30: #{densenet_pallas.25} parent=23 // pred_check_branch
        %191 = sbr.rel (%p189) target = $region32
      $region31: #{densenet_pallas.25} parent=23 // pred_region
        %p192 = scmp.lt.s32.totalorder %s11, 1
        %s193 = scalar_select %p192, %s11, 1
        %s194 = smul.addr %s193, 8
        %s195 = scalar_lea.vmem %s1, %s194
      $region32: #{densenet_pallas.25} parent=23 // pred_fallthru
        _
      // Predicated region
      $region33: #{densenet_pallas.25} parent=23 // pred_check
        %p196 = pneg %p83
      $region34: #{densenet_pallas.25} parent=23 // pred_check_branch
        %198 = sbr.rel (%p196) target = $region36
      $region35: #{densenet_pallas.25} parent=23 // pred_region
        %p199 = scmp.lt.s32.totalorder %s11, 1
        %s200 = scalar_select %p199, %s11, 1
        %s201 = smul.addr %s200, 8
        %s202 = scalar_lea.vmem %s2, %s201
      $region36: #{densenet_pallas.25} parent=23 // pred_fallthru
        _
    $region24: #{densenet_pallas.25} parent=5 // pred_fallthru
      _
    %p203 = scmp.le.s32.totalorder 1, %s11
    %p204 = scmp.lt.s32.totalorder %s11, 3
    %p205 = pnand %p203, %p204
    %p206 = pneg %p205
    // Predicated region
    $region37: #{densenet_pallas.25} parent=5 // pred_check
      _
    $region38: #{densenet_pallas.25} parent=5 // pred_check_branch
      %208 = sbr.rel (%p205) target = $region40
    $region39: #{densenet_pallas.25} parent=5 // pred_region
      %s209 = ssub.s32 %s11, 1
      %p210 = scmp.lt.s32.totalorder %s16, 1
      %s211 = scalar_select %p210, %s16, 1
      %s212 = smul.addr %s211, 8
      %s213 = scalar_lea.vmem %s0, %s212
      %p214 = pneg %p37
      %p215 = pneg %p34
      %p216 = scmp.lt.s32.totalorder %s16, 1
      %s217 = scalar_select %p216, %s16, 1
      %s218 = smul.addr %s217, 8
      %s219 = scalar_lea.vmem %s1, %s218
      %p220 = pneg %p63
      %p221 = pneg %p60
      %p222 = scmp.lt.s32.totalorder %s16, 1
      %s223 = scalar_select %p222, %s16, 1
      %s224 = smul.addr %s223, 8
      %s225 = scalar_lea.vmem %s2, %s224
      %p226 = pneg %p89
      %p227 = pneg %p86
      %p228 = pneg %p110
      %p229 = pneg %p107
      %p230 = pneg %p131
      %p231 = pneg %p128
      %p232 = pneg %p157
      %p233 = pneg %p154
      %p234 = scmp.lt.s32.totalorder %s16, 1
      %s235 = scalar_select %p234, %s16, 1
      %s236 = smul.addr %s235, 8
      %s237 = scalar_lea.vmem %s5, %s236
      %p238 = scmp.lt.s32.totalorder %s16, 1
      %s239 = scalar_select %p238, %s16, 1
      %s240 = smul.addr %s239, 8
      %s241 = scalar_lea.vmem %s0, %s240
      %p242 = scmp.lt.s32.totalorder %s16, 1
      %s243 = scalar_select %p242, %s16, 1
      %s244 = smul.addr %s243, 8
      %s245 = scalar_lea.vmem %s1, %s244
      %p246 = scmp.lt.s32.totalorder %s16, 1
      %s247 = scalar_select %p246, %s16, 1
      %s248 = smul.addr %s247, 8
      %s249 = scalar_lea.vmem %s2, %s248
      %p250 = scmp.lt.s32.totalorder %s16, 1
      %s251 = scalar_select %p250, %s16, 1
      %s252 = smul.addr %s251, 8
      %s253 = scalar_lea.vmem %s5, %s252
      %v254 = vld [vmem:[%s241] sm:$0x7f]
      %v255 = vld [vmem:[%s3] sm:$0x1]
      %v257 = vperm.slane %v255, 0
      %v259 = vmul.f32 %v254, %v257
      %v260 = vld [vmem:[%s4] sm:$0x1]
      %v262 = vperm.slane %v260, 0
      %v264 = vadd.f32 %v259, %v262
      %v265 = vld [vmem:[%s245] sm:$0x7f]
      %266 = vrot.lane.b32.xlu0 %v257, 64
      %v267 = vpop.permute.xlu0 %266
      %v269 = vmul.f32 %v265, %v267
      %270 = vrot.lane.b32.xlu0 %v262, 64
      %v271 = vpop.permute.xlu0 %270
      %v273 = vadd.f32 %v269, %v271
      %v274 = vld [vmem:[%s249] sm:$0x7f]
      %275 = vrot.lane.b32.xlu0 %v257, 32
      %v276 = vpop.permute.xlu0 %275
      %v278 = vmul.f32 %v274, %v276
      %279 = vrot.lane.b32.xlu0 %v262, 32
      %v280 = vpop.permute.xlu0 %279
      %v282 = vadd.f32 %v278, %v280
      %284 = vrot.lane.b32.xlu0 %v273, 64
      %v285 = vpop.permute.xlu0 %284
      %288 = vrot.lane.b32.xlu0 %v282, 96
      %v289 = vpop.permute.xlu0 %288
      %vm291 = vcmask 523264
      %v292 = vsel %vm291, %v264, %v285
      %vm293 = vcmask 785408
      %v294 = vsel %vm293, %v292, %v289
      %295 = vst [vmem:[%s253] sm:$0x7f] %v294
      %p296 = scmp.lt.s32.totalorder %s16, 1
      %s297 = scalar_select %p296, %s16, 1
      %s298 = smul.addr %s297, 8
      %s299 = scalar_lea.vmem %s5, %s298
      // Predicated region
      $region41: #{densenet_pallas.25} parent=39 // pred_check
        %p300 = pneg %p154
      $region42: #{densenet_pallas.25} parent=39 // pred_check_branch
        %302 = sbr.rel (%p300) target = $region44
      $region43: #{densenet_pallas.25} parent=39 // pred_region
        _
      $region44: #{densenet_pallas.25} parent=39 // pred_fallthru
        _
    $region40: #{densenet_pallas.25} parent=5 // pred_fallthru
      _
    %p303 = scmp.le.s32.totalorder 2, %s11
    // Predicated region
    $region45: #{densenet_pallas.25} parent=5 // pred_check
      %p304 = pneg %p303
    $region46: #{densenet_pallas.25} parent=5 // pred_check_branch
      %306 = sbr.rel (%p304) target = $region48
    $region47: #{densenet_pallas.25} parent=5 // pred_region
      %s307 = ssub.s32 %s11, 2
      // Predicated region
      $region49: #{densenet_pallas.25} parent=47 // pred_check
        %p308 = pneg %p160
      $region50: #{densenet_pallas.25} parent=47 // pred_check_branch
        %310 = sbr.rel (%p308) target = $region52
      $region51: #{densenet_pallas.25} parent=47 // pred_region
        %p311 = scmp.lt.s32.totalorder %s17, 1
        %s312 = scalar_select %p311, %s17, 1
        %s313 = smul.addr %s312, 8
        %s314 = scalar_lea.vmem %s5, %s313
      $region52: #{densenet_pallas.25} parent=47 // pred_fallthru
        _
    $region48: #{densenet_pallas.25} parent=5 // pred_fallthru
      _
  $region6: #{densenet_pallas.25} parent=0 // loop_footer
    %s15 = sadd.s32 1, %s11
  $region7: #{densenet_pallas.25} parent=0 // loop_footer_branch
    %10 = sbr.rel target = $region3
  $region8: #{densenet_pallas.25} parent=0 // loop_exit
    _

// kernel: densenet_pallas.24
$region0: #{densenet_pallas.24}
  #allocation0 [shape = 'u32[]', space=smem, size = 0x4, offset = 0x4, fixed_abs, tag = 'smem constant byte address 0x4 - core index']
  #allocation1 [shape = 'u32[72,128]{1,0:T(1,128)}', space=vmem, size = 0x9000, scoped, tag = 'internal scratch']
  #allocation2 [shape = 'f32[27,128]{1,0:T(8,128)}', space=vmem, size = 0x4000, scoped, tag = 'scratch operand']
  %s0 = inlined_call_operand.vmem [shape: f32[2,7,64], index: 0, kind: input, shape index: {}]
  %s1 = inlined_call_operand.vmem [shape: f32[2,7,32], index: 1, kind: input, shape index: {}]
  %s2 = inlined_call_operand.vmem [shape: f32[96,128], index: 2, kind: input, shape index: {}]
  %s3 = inlined_call_operand.vmem [shape: f32[1,96], index: 3, kind: input, shape index: {}]
  %s4 = inlined_call_operand.vmem [shape: f32[1,96], index: 4, kind: input, shape index: {}]
  %s5 = inlined_call_operand.vmem [shape: f32[1,128], index: 5, kind: input, shape index: {}]
  %s6 = inlined_call_operand.vmem [shape: f32[1,128], index: 6, kind: input, shape index: {}]
  %s7 = inlined_call_operand.vmem [shape: f32[128,288], index: 7, kind: input, shape index: {}]
  %s8 = inlined_call_operand.vmem [shape: f32[2,7,32], index: 8, kind: output, shape index: {}]
  %s9 = sld [smem:[#allocation0]]
  $region65: #{densenet_pallas.24} parent=0
    _
  %s11 = ssub.s32 1, %s9
  %s12 = scalar_select 0, %s11, %s9
  loop: start=0, step=1, limit=4
  $region2: #{densenet_pallas.24} parent=0 // loop_pre_header
    _
  $region3: #{densenet_pallas.24} parent=0 // loop_header
    %s14 = sphi 0, %s18
    %p15 = scmp.ge.s32.totalorder %s14, 4
    %s24 = sphi 0, %s26
    %s27 = sphi 0, %s24
    %s28 = sphi 0, %s27
    %s44 = sphi 0, %s28
    %s50 = sphi 0, %s52
    %s53 = sphi 0, %s50
    %s54 = sphi 0, %s53
    %s70 = sphi 0, %s54
    %s74 = sphi 0, %s74
    %s76 = sphi 0, %s74
    %s77 = sphi 0, %s76
    %s91 = sphi 0, %s77
    %s95 = sphi 0, %s95
    %s97 = sphi 0, %s95
    %s98 = sphi 0, %s97
    %s112 = sphi 0, %s98
    %s116 = sphi 0, %s116
    %s118 = sphi 0, %s116
    %s119 = sphi 0, %s118
    %s133 = sphi 0, %s119
    %s137 = sphi 0, %s137
    %s139 = sphi 0, %s137
    %s140 = sphi 0, %s139
    %s154 = sphi 0, %s140
    %s158 = sphi 0, %s158
    %s160 = sphi 0, %s158
    %s161 = sphi 0, %s160
    %s175 = sphi 0, %s161
    %s179 = sphi 0, %s179
    %s181 = sphi 0, %s179
    %s182 = sphi 0, %s181
    %s196 = sphi 0, %s182
    %s202 = sphi 0, %s204
    %s205 = sphi 0, %s202
    %s206 = sphi 0, %s205
    %s222 = sphi 0, %s206
  $region4: #{densenet_pallas.24} parent=0 // loop_header_branch
    %17 = sbr.rel (%p15) target = $region8
  $region5: #{densenet_pallas.24} parent=0 // loop_body
    %s19 = ssub.s32 %s14, 1
    %s20 = ssub.s32 %s14, 2
    %s21 = sadd.s32 %s14, 1
    %s22 = ssub.s32 %s14, %s21
    %p23 = scmp.eq.s32.totalorder %s22, 0
    %s25 = sadd.s32 %s24, 1
    %s26 = scalar_select %p23, %s24, %s25
    %p29 = pneg %p23
    %p30 = scmp.eq.s32.totalorder %s14, 1
    %p31 = por %p29, %p30
    %p32 = scmp.ne.s32.totalorder %s24, %s27
    %p33 = scmp.eq.s32.totalorder %s14, 0
    %p34 = por %p32, %p33
    %p35 = scmp.ne.s32.totalorder %s24, %s27
    %p36 = scmp.eq.s32.totalorder %s19, 1
    %p37 = por %p35, %p36
    %p38 = scmp.ne.s32.totalorder %s27, %s28
    %p39 = scmp.eq.s32.totalorder %s19, 0
    %p40 = por %p38, %p39
    %p41 = scmp.ne.s32.totalorder %s27, %s28
    %p42 = scmp.eq.s32.totalorder %s20, 1
    %p43 = por %p41, %p42
    %p45 = scmp.ne.s32.totalorder %s28, %s44
    %p46 = scmp.eq.s32.totalorder %s20, 0
    %p47 = por %p45, %p46
    %s48 = ssub.s32 %s14, %s21
    %p49 = scmp.eq.s32.totalorder %s48, 0
    %s51 = sadd.s32 %s50, 1
    %s52 = scalar_select %p49, %s50, %s51
    %p55 = pneg %p49
    %p56 = scmp.eq.s32.totalorder %s14, 1
    %p57 = por %p55, %p56
    %p58 = scmp.ne.s32.totalorder %s50, %s53
    %p59 = scmp.eq.s32.totalorder %s14, 0
    %p60 = por %p58, %p59
    %p61 = scmp.ne.s32.totalorder %s50, %s53
    %p62 = scmp.eq.s32.totalorder %s19, 1
    %p63 = por %p61, %p62
    %p64 = scmp.ne.s32.totalorder %s53, %s54
    %p65 = scmp.eq.s32.totalorder %s19, 0
    %p66 = por %p64, %p65
    %p67 = scmp.ne.s32.totalorder %s53, %s54
    %p68 = scmp.eq.s32.totalorder %s20, 1
    %p69 = por %p67, %p68
    %p71 = scmp.ne.s32.totalorder %s54, %s70
    %p72 = scmp.eq.s32.totalorder %s20, 0
    %p73 = por %p71, %p72
    %s75 = sadd.s32 %s74, 1
    %p78 = scmp.eq.s32.totalorder %s14, 1
    %p79 = scmp.ne.s32.totalorder %s74, %s76
    %p80 = scmp.eq.s32.totalorder %s14, 0
    %p81 = por %p79, %p80
    %p82 = scmp.ne.s32.totalorder %s74, %s76
    %p83 = scmp.eq.s32.totalorder %s19, 1
    %p84 = por %p82, %p83
    %p85 = scmp.ne.s32.totalorder %s76, %s77
    %p86 = scmp.eq.s32.totalorder %s19, 0
    %p87 = por %p85, %p86
    %p88 = scmp.ne.s32.totalorder %s76, %s77
    %p89 = scmp.eq.s32.totalorder %s20, 1
    %p90 = por %p88, %p89
    %p92 = scmp.ne.s32.totalorder %s77, %s91
    %p93 = scmp.eq.s32.totalorder %s20, 0
    %p94 = por %p92, %p93
    %s96 = sadd.s32 %s95, 1
    %p99 = scmp.eq.s32.totalorder %s14, 1
    %p100 = scmp.ne.s32.totalorder %s95, %s97
    %p101 = scmp.eq.s32.totalorder %s14, 0
    %p102 = por %p100, %p101
    %p103 = scmp.ne.s32.totalorder %s95, %s97
    %p104 = scmp.eq.s32.totalorder %s19, 1
    %p105 = por %p103, %p104
    %p106 = scmp.ne.s32.totalorder %s97, %s98
    %p107 = scmp.eq.s32.totalorder %s19, 0
    %p108 = por %p106, %p107
    %p109 = scmp.ne.s32.totalorder %s97, %s98
    %p110 = scmp.eq.s32.totalorder %s20, 1
    %p111 = por %p109, %p110
    %p113 = scmp.ne.s32.totalorder %s98, %s112
    %p114 = scmp.eq.s32.totalorder %s20, 0
    %p115 = por %p113, %p114
    %s117 = sadd.s32 %s116, 1
    %p120 = scmp.eq.s32.totalorder %s14, 1
    %p121 = scmp.ne.s32.totalorder %s116, %s118
    %p122 = scmp.eq.s32.totalorder %s14, 0
    %p123 = por %p121, %p122
    %p124 = scmp.ne.s32.totalorder %s116, %s118
    %p125 = scmp.eq.s32.totalorder %s19, 1
    %p126 = por %p124, %p125
    %p127 = scmp.ne.s32.totalorder %s118, %s119
    %p128 = scmp.eq.s32.totalorder %s19, 0
    %p129 = por %p127, %p128
    %p130 = scmp.ne.s32.totalorder %s118, %s119
    %p131 = scmp.eq.s32.totalorder %s20, 1
    %p132 = por %p130, %p131
    %p134 = scmp.ne.s32.totalorder %s119, %s133
    %p135 = scmp.eq.s32.totalorder %s20, 0
    %p136 = por %p134, %p135
    %s138 = sadd.s32 %s137, 1
    %p141 = scmp.eq.s32.totalorder %s14, 1
    %p142 = scmp.ne.s32.totalorder %s137, %s139
    %p143 = scmp.eq.s32.totalorder %s14, 0
    %p144 = por %p142, %p143
    %p145 = scmp.ne.s32.totalorder %s137, %s139
    %p146 = scmp.eq.s32.totalorder %s19, 1
    %p147 = por %p145, %p146
    %p148 = scmp.ne.s32.totalorder %s139, %s140
    %p149 = scmp.eq.s32.totalorder %s19, 0
    %p150 = por %p148, %p149
    %p151 = scmp.ne.s32.totalorder %s139, %s140
    %p152 = scmp.eq.s32.totalorder %s20, 1
    %p153 = por %p151, %p152
    %p155 = scmp.ne.s32.totalorder %s140, %s154
    %p156 = scmp.eq.s32.totalorder %s20, 0
    %p157 = por %p155, %p156
    %s159 = sadd.s32 %s158, 1
    %p162 = scmp.eq.s32.totalorder %s14, 1
    %p163 = scmp.ne.s32.totalorder %s158, %s160
    %p164 = scmp.eq.s32.totalorder %s14, 0
    %p165 = por %p163, %p164
    %p166 = scmp.ne.s32.totalorder %s158, %s160
    %p167 = scmp.eq.s32.totalorder %s19, 1
    %p168 = por %p166, %p167
    %p169 = scmp.ne.s32.totalorder %s160, %s161
    %p170 = scmp.eq.s32.totalorder %s19, 0
    %p171 = por %p169, %p170
    %p172 = scmp.ne.s32.totalorder %s160, %s161
    %p173 = scmp.eq.s32.totalorder %s20, 1
    %p174 = por %p172, %p173
    %p176 = scmp.ne.s32.totalorder %s161, %s175
    %p177 = scmp.eq.s32.totalorder %s20, 0
    %p178 = por %p176, %p177
    %s180 = sadd.s32 %s179, 1
    %p183 = scmp.eq.s32.totalorder %s14, 1
    %p184 = scmp.ne.s32.totalorder %s179, %s181
    %p185 = scmp.eq.s32.totalorder %s14, 0
    %p186 = por %p184, %p185
    %p187 = scmp.ne.s32.totalorder %s179, %s181
    %p188 = scmp.eq.s32.totalorder %s19, 1
    %p189 = por %p187, %p188
    %p190 = scmp.ne.s32.totalorder %s181, %s182
    %p191 = scmp.eq.s32.totalorder %s19, 0
    %p192 = por %p190, %p191
    %p193 = scmp.ne.s32.totalorder %s181, %s182
    %p194 = scmp.eq.s32.totalorder %s20, 1
    %p195 = por %p193, %p194
    %p197 = scmp.ne.s32.totalorder %s182, %s196
    %p198 = scmp.eq.s32.totalorder %s20, 0
    %p199 = por %p197, %p198
    %s200 = ssub.s32 %s14, %s21
    %p201 = scmp.eq.s32.totalorder %s200, 0
    %s203 = sadd.s32 %s202, 1
    %s204 = scalar_select %p201, %s202, %s203
    %p207 = pneg %p201
    %p208 = scmp.eq.s32.totalorder %s14, 1
    %p209 = por %p207, %p208
    %p210 = scmp.ne.s32.totalorder %s202, %s205
    %p211 = scmp.eq.s32.totalorder %s14, 0
    %p212 = por %p210, %p211
    %p213 = scmp.ne.s32.totalorder %s202, %s205
    %p214 = scmp.eq.s32.totalorder %s19, 1
    %p215 = por %p213, %p214
    %p216 = scmp.ne.s32.totalorder %s205, %s206
    %p217 = scmp.eq.s32.totalorder %s19, 0
    %p218 = por %p216, %p217
    %p219 = scmp.ne.s32.totalorder %s205, %s206
    %p220 = scmp.eq.s32.totalorder %s20, 1
    %p221 = por %p219, %p220
    %p223 = scmp.ne.s32.totalorder %s206, %s222
    %p224 = scmp.eq.s32.totalorder %s20, 0
    %p225 = por %p223, %p224
    %p226 = scmp.le.s32.totalorder 1, %s14
    %p227 = scmp.lt.s32.totalorder %s14, 3
    %p228 = pnand %p226, %p227
    %p229 = pneg %p228
    // Predicated region
    $region9: #{densenet_pallas.24} parent=5 // pred_check
      _
    $region10: #{densenet_pallas.24} parent=5 // pred_check_branch
      %231 = sbr.rel (%p228) target = $region12
    $region11: #{densenet_pallas.24} parent=5 // pred_region
      %s232 = ssub.s32 %s14, 1
      // Predicated region
      $region13: #{densenet_pallas.24} parent=11 // pred_check
        %p233 = pneg %p87
      $region14: #{densenet_pallas.24} parent=11 // pred_check_branch
        %235 = sbr.rel (%p233) target = $region16
      $region15: #{densenet_pallas.24} parent=11 // pred_region
        _
      $region16: #{densenet_pallas.24} parent=11 // pred_fallthru
        _
      // Predicated region
      $region17: #{densenet_pallas.24} parent=11 // pred_check
        %p236 = pneg %p108
      $region18: #{densenet_pallas.24} parent=11 // pred_check_branch
        %238 = sbr.rel (%p236) target = $region20
      $region19: #{densenet_pallas.24} parent=11 // pred_region
        _
      $region20: #{densenet_pallas.24} parent=11 // pred_fallthru
        _
      // Predicated region
      $region21: #{densenet_pallas.24} parent=11 // pred_check
        %p239 = pneg %p129
      $region22: #{densenet_pallas.24} parent=11 // pred_check_branch
        %241 = sbr.rel (%p239) target = $region24
      $region23: #{densenet_pallas.24} parent=11 // pred_region
        _
      $region24: #{densenet_pallas.24} parent=11 // pred_fallthru
        _
      // Predicated region
      $region25: #{densenet_pallas.24} parent=11 // pred_check
        %p242 = pneg %p150
      $region26: #{densenet_pallas.24} parent=11 // pred_check_branch
        %244 = sbr.rel (%p242) target = $region28
      $region27: #{densenet_pallas.24} parent=11 // pred_region
        _
      $region28: #{densenet_pallas.24} parent=11 // pred_fallthru
        _
      // Predicated region
      $region29: #{densenet_pallas.24} parent=11 // pred_check
        %p245 = pneg %p171
      $region30: #{densenet_pallas.24} parent=11 // pred_check_branch
        %247 = sbr.rel (%p245) target = $region32
      $region31: #{densenet_pallas.24} parent=11 // pred_region
        _
      $region32: #{densenet_pallas.24} parent=11 // pred_fallthru
        _
      // Predicated region
      $region33: #{densenet_pallas.24} parent=11 // pred_check
        %p248 = pneg %p192
      $region34: #{densenet_pallas.24} parent=11 // pred_check_branch
        %250 = sbr.rel (%p248) target = $region36
      $region35: #{densenet_pallas.24} parent=11 // pred_region
        _
      $region36: #{densenet_pallas.24} parent=11 // pred_fallthru
        _
    $region12: #{densenet_pallas.24} parent=5 // pred_fallthru
      _
    %p251 = scmp.lt.s32.totalorder %s14, 2
    // Predicated region
    $region37: #{densenet_pallas.24} parent=5 // pred_check
      %p252 = pneg %p251
    $region38: #{densenet_pallas.24} parent=5 // pred_check_branch
      %254 = sbr.rel (%p252) target = $region40
    $region39: #{densenet_pallas.24} parent=5 // pred_region
      // Predicated region
      $region41: #{densenet_pallas.24} parent=39 // pred_check
        %p255 = pneg %p34
      $region42: #{densenet_pallas.24} parent=39 // pred_check_branch
        %257 = sbr.rel (%p255) target = $region44
      $region43: #{densenet_pallas.24} parent=39 // pred_region
        %p258 = scmp.lt.s32.totalorder %s14, 1
        %s259 = scalar_select %p258, %s14, 1
        %s260 = smul.addr %s259, 8
        %s261 = scalar_lea.vmem %s0, %s260
      $region44: #{densenet_pallas.24} parent=39 // pred_fallthru
        _
      // Predicated region
      $region45: #{densenet_pallas.24} parent=39 // pred_check
        %p262 = pneg %p60
      $region46: #{densenet_pallas.24} parent=39 // pred_check_branch
        %264 = sbr.rel (%p262) target = $region48
      $region47: #{densenet_pallas.24} parent=39 // pred_region
        %p265 = scmp.lt.s32.totalorder %s14, 1
        %s266 = scalar_select %p265, %s14, 1
        %s267 = smul.addr %s266, 8
        %s268 = scalar_lea.vmem %s1, %s267
      $region48: #{densenet_pallas.24} parent=39 // pred_fallthru
        _
    $region40: #{densenet_pallas.24} parent=5 // pred_fallthru
      _
    %p269 = scmp.le.s32.totalorder 1, %s14
    %p270 = scmp.lt.s32.totalorder %s14, 3
    %p271 = pnand %p269, %p270
    %p272 = pneg %p271
    // Predicated region
    $region49: #{densenet_pallas.24} parent=5 // pred_check
      _
    $region50: #{densenet_pallas.24} parent=5 // pred_check_branch
      %274 = sbr.rel (%p271) target = $region52
    $region51: #{densenet_pallas.24} parent=5 // pred_region
      %s275 = ssub.s32 %s14, 1
      %p276 = scmp.lt.s32.totalorder %s19, 1
      %s277 = scalar_select %p276, %s19, 1
      %s278 = smul.addr %s277, 8
      %s279 = scalar_lea.vmem %s0, %s278
      %p280 = pneg %p40
      %p281 = pneg %p37
      %p282 = scmp.lt.s32.totalorder %s19, 1
      %s283 = scalar_select %p282, %s19, 1
      %s284 = smul.addr %s283, 8
      %s285 = scalar_lea.vmem %s1, %s284
      %p286 = pneg %p66
      %p287 = pneg %p63
      %p288 = pneg %p87
      %p289 = pneg %p84
      %p290 = pneg %p108
      %p291 = pneg %p105
      %p292 = pneg %p129
      %p293 = pneg %p126
      %p294 = pneg %p150
      %p295 = pneg %p147
      %p296 = pneg %p171
      %p297 = pneg %p168
      %p298 = pneg %p192
      %p299 = pneg %p189
      %p300 = pneg %p218
      %p301 = pneg %p215
      %p302 = scmp.lt.s32.totalorder %s19, 1
      %s303 = scalar_select %p302, %s19, 1
      %s304 = smul.addr %s303, 8
      %s305 = scalar_lea.vmem %s8, %s304
      %p306 = scmp.lt.s32.totalorder %s19, 1
      %s307 = scalar_select %p306, %s19, 1
      %s308 = smul.addr %s307, 8
      %s309 = scalar_lea.vmem %s0, %s308
      %p310 = scmp.lt.s32.totalorder %s19, 1
      %s311 = scalar_select %p310, %s19, 1
      %s312 = smul.addr %s311, 8
      %s313 = scalar_lea.vmem %s1, %s312
      %p314 = scmp.lt.s32.totalorder %s19, 1
      %s315 = scalar_select %p314, %s19, 1
      %s316 = smul.addr %s315, 8
      %s317 = scalar_lea.vmem %s8, %s316
      %v318 = vld [vmem:[%s309] sm:$0x7f]
      %v319 = vld [vmem:[%s3] sm:$0x1]
      %v321 = vperm.slane %v319, 0
      %v323 = vmul.f32 %v318, %v321
      %v324 = vld [vmem:[%s4] sm:$0x1]
      %v326 = vperm.slane %v324, 0
      %v328 = vadd.f32 %v323, %v326
      %v329 = vmax.f32 %v328, 0.0
      %v330 = vld [vmem:[%s2] sm:$0xff]
      %v331 = vld [vmem:[%s2 + $0x8] sm:$0xff]
      %v332 = vld [vmem:[%s2 + $0x10] sm:$0xff]
      %v333 = vld [vmem:[%s2 + $0x18] sm:$0xff]
      %v334 = vld [vmem:[%s2 + $0x20] sm:$0xff]
      %v335 = vld [vmem:[%s2 + $0x28] sm:$0xff]
      %v336 = vld [vmem:[%s2 + $0x30] sm:$0xff]
      %v337 = vld [vmem:[%s2 + $0x38] sm:$0xff]
      %v338 = vld [vmem:[%s313] sm:$0x7f]
      %339 = vrot.lane.b32.xlu0 %v321, 64
      %v340 = vpop.permute.xlu0 %339
      %v342 = vmul.f32 %v338, %v340
      %343 = vrot.lane.b32.xlu0 %v326, 64
      %v344 = vpop.permute.xlu0 %343
      %v346 = vadd.f32 %v342, %v344
      %v347 = vmax.f32 %v346, 0.0
      %v348 = vld [vmem:[%s2 + $0x40] sm:$0xff]
      %v349 = vld [vmem:[%s2 + $0x48] sm:$0xff]
      %v350 = vld [vmem:[%s2 + $0x50] sm:$0xff]
      %v351 = vld [vmem:[%s2 + $0x58] sm:$0xff]
      %vm352 = vcmask 261120
      %v354 = vsel %vm352, %v347, 0
      %356 = vmatpush.msra.mxu0 0.0
      %357 = vmatpush.msra.mxu0 0.0
      %358 = vmatpush.msra.mxu0 0.0
      %359 = vmatpush.msra.mxu0 0.0
      %360 = vmatpush.msra.mxu0 0.0
      %361 = vmatpush.msra.mxu0 0.0
      %362 = vmatpush.msra.mxu0 0.0
      %363 = vmatpush.msra.mxu0 0.0
      %364 = vmatpush.msra.mxu0 0.0
      %365 = vmatpush.msra.mxu0 0.0
      %366 = vmatpush.msra.mxu0 0.0
      %367 = vmatpush.msra.mxu0 0.0
      %368 = vmatpush.msra.mxu0 %v351
      %369 = vmatpush.msra.mxu0 %v350
      %370 = vmatpush.msra.mxu0 %v349
      %371 = vmatpush.msra.mxu0 %v348
      %372 = vmatmul.f32.gmra.mxu0 %v354
      %v373 = vpop.f32.mrf.mxu0
      %v374 = vadd.f32 0.0, %v373
      %375 = vdwg.mxu0
      %vm376 = vcmask 523264
      %v378 = vsel %vm376, %v329, 0
      %380 = vmatpush.msra.mxu0 0.0
      %381 = vmatpush.msra.mxu0 0.0
      %382 = vmatpush.msra.mxu0 0.0
      %383 = vmatpush.msra.mxu0 0.0
      %384 = vmatpush.msra.mxu0 0.0
      %385 = vmatpush.msra.mxu0 0.0
      %386 = vmatpush.msra.mxu0 0.0
      %387 = vmatpush.msra.mxu0 0.0
      %388 = vmatpush.msra.mxu0 %v337
      %389 = vmatpush.msra.mxu0 %v336
      %390 = vmatpush.msra.mxu0 %v335
      %391 = vmatpush.msra.mxu0 %v334
      %392 = vmatpush.msra.mxu0 %v333
      %393 = vmatpush.msra.mxu0 %v332
      %394 = vmatpush.msra.mxu0 %v331
      %395 = vmatpush.msra.mxu0 %v330
      %396 = vmatmul.f32.gmra.mxu0 %v378
      %v397 = vpop.f32.mrf.mxu0
      %v398 = vadd.f32 %v374, %v397
      %399 = vdwg.mxu0
      %v400 = vld [vmem:[%s5] sm:$0x1]
      %v402 = vperm.slane %v400, 0
      %v404 = vmul.f32 %v398, %v402
      %v405 = vld [vmem:[%s6] sm:$0x1]
      %v407 = vperm.slane %v405, 0
      %v409 = vadd.f32 %v404, %v407
      %v410 = vmax.f32 %v409, 0.0
      %411 = vst [vmem:[#allocation2] sm:$0xff] 0.0
      %412 = vst [vmem:[#allocation2 + $0x8] sm:$0x3] 0.0
      %413 = vst [vmem:[#allocation2 + $0x11] sm:$0xff] 0.0
      %414 = vst [vmem:[#allocation2 + $0x19] sm:$0x3] 0.0
      %415 = vst [vmem:[#allocation2 + $0xa] sm:$0x7f] %v410
      %v416 = vld [vmem:[#allocation2] sm:$0xff]
      %v417 = vld [vmem:[#allocation2 + $0x8] sm:$0xff]
      %v418 = vld [vmem:[#allocation2 + $0x10] sm:$0xff]
      %v419 = vld [vmem:[#allocation2 + $0x18] sm:$0x7]
      %v420 = vld [vmem:[%s7] sm:$0xff]
      %v421 = vld [vmem:[%s7 + $0x8] sm:$0xff]
      %v422 = vld [vmem:[%s7 + $0x10] sm:$0xff]
      %v423 = vld [vmem:[%s7 + $0x18] sm:$0xff]
      %v424 = vld [vmem:[%s7 + $0x20] sm:$0xff]
      %v425 = vld [vmem:[%s7 + $0x28] sm:$0xff]
      %v426 = vld [vmem:[%s7 + $0x30] sm:$0xff]
      %v427 = vld [vmem:[%s7 + $0x38] sm:$0xff]
      %v428 = vld [vmem:[%s7 + $0x40] sm:$0xff]
      %v429 = vld [vmem:[%s7 + $0x48] sm:$0xff]
      %v430 = vld [vmem:[%s7 + $0x50] sm:$0xff]
      %v431 = vld [vmem:[%s7 + $0x58] sm:$0xff]
      %v432 = vld [vmem:[%s7 + $0x60] sm:$0xff]
      %v433 = vld [vmem:[%s7 + $0x68] sm:$0xff]
      %v434 = vld [vmem:[%s7 + $0x70] sm:$0xff]
      %v435 = vld [vmem:[%s7 + $0x78] sm:$0xff]
      %v436 = vld [vmem:[%s7 + $0x80] sm:$0xff]
      %v437 = vld [vmem:[%s7 + $0x88] sm:$0xff]
      %v438 = vld [vmem:[%s7 + $0x90] sm:$0xff]
      %v439 = vld [vmem:[%s7 + $0x98] sm:$0xff]
      %v440 = vld [vmem:[%s7 + $0xa0] sm:$0xff]
      %v441 = vld [vmem:[%s7 + $0xa8] sm:$0xff]
      %v442 = vld [vmem:[%s7 + $0xb0] sm:$0xff]
      %v443 = vld [vmem:[%s7 + $0xb8] sm:$0xff]
      %v444 = vld [vmem:[%s7 + $0xc0] sm:$0xff]
      %v445 = vld [vmem:[%s7 + $0xc8] sm:$0xff]
      %v446 = vld [vmem:[%s7 + $0xd0] sm:$0xff]
      %v447 = vld [vmem:[%s7 + $0xd8] sm:$0xff]
      %v448 = vld [vmem:[%s7 + $0xe0] sm:$0xff]
      %v449 = vld [vmem:[%s7 + $0xe8] sm:$0xff]
      %v450 = vld [vmem:[%s7 + $0xf0] sm:$0xff]
      %v451 = vld [vmem:[%s7 + $0xf8] sm:$0xff]
      %v452 = vld [vmem:[%s7 + $0x100] sm:$0xff]
      %v453 = vld [vmem:[%s7 + $0x108] sm:$0xff]
      %v454 = vld [vmem:[%s7 + $0x110] sm:$0xff]
      %v455 = vld [vmem:[%s7 + $0x118] sm:$0xff]
      %v456 = vld [vmem:[%s7 + $0x120] sm:$0xff]
      %v457 = vld [vmem:[%s7 + $0x128] sm:$0xff]
      %v458 = vld [vmem:[%s7 + $0x130] sm:$0xff]
      %v459 = vld [vmem:[%s7 + $0x138] sm:$0xff]
      %v460 = vld [vmem:[%s7 + $0x140] sm:$0xff]
      %v461 = vld [vmem:[%s7 + $0x148] sm:$0xff]
      %v462 = vld [vmem:[%s7 + $0x150] sm:$0xff]
      %v463 = vld [vmem:[%s7 + $0x158] sm:$0xff]
      %v464 = vld [vmem:[%s7 + $0x160] sm:$0xff]
      %v465 = vld [vmem:[%s7 + $0x168] sm:$0xff]
      %v466 = vld [vmem:[%s7 + $0x170] sm:$0xff]
      %v467 = vld [vmem:[%s7 + $0x178] sm:$0xff]
      %468 = vmatpush.msra.mxu0 %v465
      %469 = vmatpush.msra.mxu0 %v462
      %470 = vmatpush.msra.mxu0 %v459
      %471 = vmatpush.msra.mxu0 %v456
      %472 = vmatpush.msra.mxu0 %v453
      %473 = vmatpush.msra.mxu0 %v450
      %474 = vmatpush.msra.mxu0 %v447
      %475 = vmatpush.msra.mxu0 %v444
      %476 = vmatpush.msra.mxu0 %v441
      %477 = vmatpush.msra.mxu0 %v438
      %478 = vmatpush.msra.mxu0 %v435
      %479 = vmatpush.msra.mxu0 %v432
      %480 = vmatpush.msra.mxu0 %v429
      %481 = vmatpush.msra.mxu0 %v426
      %482 = vmatpush.msra.mxu0 %v423
      %483 = vmatpush.msra.mxu0 %v420
      %484 = vmatmul.f32.gmra.mxu0 %v416
      %v485 = vpop.f32.mrf.mxu0
      %v486 = vadd.f32 0.0, %v485
      %487 = vmatmul.f32.gmra.mxu0 %v417
      %v488 = vpop.f32.mrf.mxu0
      %v489 = vadd.f32 0.0, %v488
      %490 = vmatmul.f32.gmra.mxu0 %v418
      %v491 = vpop.f32.mrf.mxu0
      %492 = vmatmul.f32.gmra.mxu0 %v419
      %v493 = vpop.f32.mrf.mxu0
      %494 = vdwg.mxu0
      %495 = vmatpush.msra.mxu0 %v466
      %496 = vmatpush.msra.mxu0 %v463
      %497 = vmatpush.msra.mxu0 %v460
      %498 = vmatpush.msra.mxu0 %v457
      %499 = vmatpush.msra.mxu0 %v454
      %500 = vmatpush.msra.mxu0 %v451
      %501 = vmatpush.msra.mxu0 %v448
      %502 = vmatpush.msra.mxu0 %v445
      %503 = vmatpush.msra.mxu0 %v442
      %504 = vmatpush.msra.mxu0 %v439
      %505 = vmatpush.msra.mxu0 %v436
      %506 = vmatpush.msra.mxu0 %v433
      %507 = vmatpush.msra.mxu0 %v430
      %508 = vmatpush.msra.mxu0 %v427
      %509 = vmatpush.msra.mxu0 %v424
      %510 = vmatpush.msra.mxu0 %v421
      %511 = vmatmul.f32.gmra.mxu0 %v416
      %v512 = vpop.f32.mrf.mxu0
      %513 = vmatmul.f32.gmra.mxu0 %v417
      %v514 = vpop.f32.mrf.mxu0
      %v515 = vadd.f32 0.0, %v514
      %516 = vmatmul.f32.gmra.mxu0 %v418
      %v517 = vpop.f32.mrf.mxu0
      %v518 = vadd.f32 0.0, %v517
      %519 = vmatmul.f32.gmra.mxu0 %v419
      %v520 = vpop.f32.mrf.mxu0
      %v521 = vadd.f32 0.0, %v520
      %522 = vdwg.mxu0
      %523 = vmatpush.msra.mxu0 %v467
      %524 = vmatpush.msra.mxu0 %v464
      %525 = vmatpush.msra.mxu0 %v461
      %526 = vmatpush.msra.mxu0 %v458
      %527 = vmatpush.msra.mxu0 %v455
      %528 = vmatpush.msra.mxu0 %v452
      %529 = vmatpush.msra.mxu0 %v449
      %530 = vmatpush.msra.mxu0 %v446
      %531 = vmatpush.msra.mxu0 %v443
      %532 = vmatpush.msra.mxu0 %v440
      %533 = vmatpush.msra.mxu0 %v437
      %534 = vmatpush.msra.mxu0 %v434
      %535 = vmatpush.msra.mxu0 %v431
      %536 = vmatpush.msra.mxu0 %v428
      %537 = vmatpush.msra.mxu0 %v425
      %538 = vmatpush.msra.mxu0 %v422
      %539 = vmatmul.f32.gmra.mxu0 %v416
      %v540 = vpop.f32.mrf.mxu0
      %541 = vmatmul.f32.gmra.mxu0 %v417
      %v542 = vpop.f32.mrf.mxu0
      %543 = vmatmul.f32.gmra.mxu0 %v418
      %v544 = vpop.f32.mrf.mxu0
      %v545 = vadd.f32 0.0, %v544
      %546 = vmatmul.f32.gmra.mxu0 %v419
      %v547 = vpop.f32.mrf.mxu0
      %v548 = vadd.f32 0.0, %v547
      %549 = vdwg.mxu0
      %v551 = vrot.slane %v486, 1
      %552 = vrot.lane.b32.xlu0 %v551, 96
      %v553 = vpop.permute.xlu0 %552
      %v555 = vadd.f32 %v486, %v553
      %vm557 = vcmask 1045504
      %v558 = vrot.slane %v486, 2
      %v559 = vrot.slane %v489, 2
      %v560 = vsel %vm557, %v558, %v559
      %561 = vrot.lane.b32.xlu0 %v560, 64
      %v562 = vpop.permute.xlu0 %561
      %v564 = vadd.f32 %v555, %v562
      %v565 = vrot.slane %v489, 1
      %566 = vrot.lane.b32.xlu0 %v565, 32
      %v567 = vpop.permute.xlu0 %566
      %v569 = vadd.f32 %v564, %v567
      %v572 = vrot.slane %v515, 2
      %v573 = vrot.slane %v518, 2
      %v574 = vsel %vm557, %v572, %v573
      %v576 = vadd.f32 %v569, %v574
      %vm577 = vcmask 1044480
      %v578 = vrot.slane %v515, 3
      %v579 = vrot.slane %v518, 3
      %v580 = vsel %vm577, %v578, %v579
      %581 = vrot.lane.b32.xlu0 %v580, 96
      %v582 = vpop.permute.xlu0 %581
      %v584 = vadd.f32 %v576, %v582
      %v586 = vrot.slane %v521, 2
      %v587 = vsel %vm557, %v573, %v586
      %588 = vrot.lane.b32.xlu0 %v587, 64
      %v589 = vpop.permute.xlu0 %588
      %v591 = vadd.f32 %v584, %v589
      %v592 = vrot.slane %v521, 3
      %v593 = vsel %vm577, %v579, %v592
      %594 = vrot.lane.b32.xlu0 %v593, 32
      %v595 = vpop.permute.xlu0 %594
      %v597 = vadd.f32 %v591, %v595
      %vm600 = vcmask 1043456
      %v601 = vrot.slane %v545, 4
      %v602 = vrot.slane %v548, 4
      %v603 = vsel %vm600, %v601, %v602
      %v605 = vadd.f32 %v597, %v603
      %vm606 = vcmask 260096
      %607 = vst.msk [vmem:[%s317] sm:$0x7f] %vm606, %v605
      %p608 = scmp.lt.s32.totalorder %s19, 1
      %s609 = scalar_select %p608, %s19, 1
      %s610 = smul.addr %s609, 8
      %s611 = scalar_lea.vmem %s8, %s610
      // Predicated region
      $region53: #{densenet_pallas.24} parent=51 // pred_check
        %p612 = pneg %p215
      $region54: #{densenet_pallas.24} parent=51 // pred_check_branch
        %614 = sbr.rel (%p612) target = $region56
      $region55: #{densenet_pallas.24} parent=51 // pred_region
        _
      $region56: #{densenet_pallas.24} parent=51 // pred_fallthru
        _
    $region52: #{densenet_pallas.24} parent=5 // pred_fallthru
      _
    %p615 = scmp.le.s32.totalorder 2, %s14
    // Predicated region
    $region57: #{densenet_pallas.24} parent=5 // pred_check
      %p616 = pneg %p615
    $region58: #{densenet_pallas.24} parent=5 // pred_check_branch
      %618 = sbr.rel (%p616) target = $region60
    $region59: #{densenet_pallas.24} parent=5 // pred_region
      %s619 = ssub.s32 %s14, 2
      // Predicated region
      $region61: #{densenet_pallas.24} parent=59 // pred_check
        %p620 = pneg %p221
      $region62: #{densenet_pallas.24} parent=59 // pred_check_branch
        %622 = sbr.rel (%p620) target = $region64
      $region63: #{densenet_pallas.24} parent=59 // pred_region
        %p623 = scmp.lt.s32.totalorder %s20, 1
        %s624 = scalar_select %p623, %s20, 1
        %s625 = smul.addr %s624, 8
        %s626 = scalar_lea.vmem %s8, %s625
      $region64: #{densenet_pallas.24} parent=59 // pred_fallthru
        _
    $region60: #{densenet_pallas.24} parent=5 // pred_fallthru
      _
  $region6: #{densenet_pallas.24} parent=0 // loop_footer
    %s18 = sadd.s32 1, %s14
  $region7: #{densenet_pallas.24} parent=0 // loop_footer_branch
    %13 = sbr.rel target = $region3
  $region8: #{densenet_pallas.24} parent=0 // loop_exit
    _

</llo_original>
